<compile_context>
chip_gen: v7x
topology: tpu7x:2x2x1
jax: 0.10.0
libtpu: 0.0.40
codegen_flags: <defaults>
</compile_context>

<pallas_src>
import jax
import jax.numpy as jnp
from jax.experimental import pallas as pl
from jax.experimental.pallas import tpu as pltpu


def _round_up(x, m):
    return ((x + m - 1) // m) * m


def _block_diag2(a):
    """blockdiag(a, a) built from concatenates (no scipy dependency)."""
    z = jnp.zeros_like(a)
    top = jnp.concatenate([a, z], axis=1)
    bot = jnp.concatenate([z, a], axis=1)
    return jnp.concatenate([top, bot], axis=0)


def fragment_matcher_kernel(x_ref, w1_ref, w2_ref, wc1_ref, b_ref, out_ref):
    # x_ref : (tile_b, 2*k_half) bf16  -- lane-concat [x1_pad | x2_pad]
    # w1_ref: (2*k_half, 2H) bf16      -- blockdiag(w1, w1)
    # w2_ref: (2H, 2H)       bf16      -- blockdiag(w2, w2)
    # wc1_ref: (2H, H)       bf16
    # b_ref : (4, 2H)        f32       -- [b1|b1], [b2|b2], [bc1|wc2], [bc2,...]
    hidden = wc1_ref.shape[1]

    b1 = b_ref[0:1, :]                   # (1, 2H)
    b2 = b_ref[1:2, :]                   # (1, 2H)
    bc1 = b_ref[2:3, :hidden]            # (1, H)
    wc2 = b_ref[2:3, hidden:]            # (1, H)   Linear(H->1) weight row (f32)
    bc2 = b_ref[3:4, 0:1]                # (1, 1)

    # ---- shared encoder on both inputs at once (block-diagonal weights) ----
    h = jnp.dot(x_ref[...], w1_ref[...], preferred_element_type=jnp.float32) + b1
    h = jnp.maximum(h, 0.0)                                   # (tile_b, 2H) f32
    h = jnp.dot(h.astype(jnp.bfloat16), w2_ref[...],
                preferred_element_type=jnp.float32) + b2
    e = jnp.maximum(h, 0.0).astype(jnp.bfloat16)              # (tile_b, 2H) = [e1|e2]

    # ---- classifier: [e1|e2] @ wc1 is a single K=2H matmul (no relayouts) ----
    hc = jnp.dot(e, wc1_ref[...], preferred_element_type=jnp.float32) + bc1
    hc = jnp.maximum(hc, 0.0)                                 # (tile_b, H) f32

    # ---- Linear(H -> 1): VPU multiply + lane reduce; lane-dense output row ----
    logits = jnp.sum(hc * wc2, axis=-1)[None, :] + bc2        # (1, tile_b)
    out_ref[...] = jax.nn.sigmoid(logits)


def fragment_matcher_forward(x1, x2, kparams, *, tile_b=None,
                             max_tile_b=2048, min_num_tiles=1):
    w1_bd = kparams["w1_bd"]      # (2*k_half, 2H) bf16
    w2_bd = kparams["w2_bd"]      # (2H, 2H)       bf16
    wc1 = kparams["wc1"]          # (2H, H)        bf16
    b_pack = kparams["b_pack"]    # (4, 2H)        f32

    B, in_dim = x1.shape
    k_half = w1_bd.shape[0] // 2
    assert x2.shape == (B, in_dim) and in_dim <= k_half

    if tile_b is None:
        # One big tile for small/medium batches (this model is overhead-bound,
        # not FLOP/byte bound).  On v7x pass min_num_tiles=2 so the grid stays
        # even and "parallel" shards it across both TensorCores.
        tile_b = min(max_tile_b, _round_up(B, 256))
        if min_num_tiles > 1:
            per_core = -(-_round_up(B, 256) // min_num_tiles)
            tile_b = min(tile_b, max(256, _round_up(per_core, 256)))
    b_pad = _round_up(B, tile_b)
    num_tiles = b_pad // tile_b

    # Lane-concat, zero-pad to k_half lanes each, cast to bf16.
    # allow_input_fusion lets XLA fuse this prep into the pallas operand
    # instead of paying a separate HBM round trip for it.
    def prep(x):
        return jnp.pad(x, ((0, b_pad - B), (0, k_half - in_dim)))
    x_cat = jnp.concatenate([prep(x1), prep(x2)], axis=1).astype(jnp.bfloat16)

    out = pl.pallas_call(
        fragment_matcher_kernel,
        out_shape=jax.ShapeDtypeStruct((1, b_pad), jnp.float32),
        grid=(num_tiles,),
        in_specs=[
            pl.BlockSpec((tile_b, 2 * k_half), lambda i: (i, 0)),   # activations (tiled)
            pl.BlockSpec(w1_bd.shape, lambda i: (0, 0)),            # w1 blockdiag (resident)
            pl.BlockSpec(w2_bd.shape, lambda i: (0, 0)),            # w2 blockdiag
            pl.BlockSpec(wc1.shape, lambda i: (0, 0)),              # wc1
            pl.BlockSpec(b_pack.shape, lambda i: (0, 0)),           # biases + wc2 + bc2
        ],
        out_specs=pl.BlockSpec((1, tile_b), lambda i: (0, i)),
        compiler_params=pltpu.CompilerParams(
            dimension_semantics=("parallel",),
            allow_input_fusion=[True, False, False, False, False],
        ),
    )(x_cat, w1_bd, w2_bd, wc1, b_pack)

    # matches torch's out.squeeze(): -> (B,)
    return out[0, :B]


def init_params(key, input_dim=33, hidden_dim=128):
    """Deterministic f32 params in (in, out) layout; biases are (out,) vectors."""
    ks = jax.random.split(key, 8)

    def linear(kw, kb, fan_in, fan_out):
        w = jax.random.normal(kw, (fan_in, fan_out), jnp.float32) / jnp.sqrt(fan_in)
        b = jax.random.normal(kb, (fan_out,), jnp.float32) * 0.01
        return w, b

    w1, b1 = linear(ks[0], ks[1], input_dim, hidden_dim)
    w2, b2 = linear(ks[2], ks[3], hidden_dim, hidden_dim)
    wc1, bc1 = linear(ks[4], ks[5], 2 * hidden_dim, hidden_dim)
    wc2, bc2 = linear(ks[6], ks[7], hidden_dim, 1)
    return dict(w1=w1, b1=b1, w2=w2, b2=b2, wc1=wc1, bc1=bc1, wc2=wc2, bc2=bc2)


def pack_params(p):
    """Pad / block-diagonalize / pack / cast the f32 params into kernel layout."""
    input_dim, hidden = p["w1"].shape
    k_half = _round_up(input_dim, 64)                                 # 33 -> 64
    w1_pad = jnp.pad(p["w1"], ((0, k_half - input_dim), (0, 0)))      # (64, 128)

    w1_bd = _block_diag2(w1_pad).astype(jnp.bfloat16)                 # (128, 256)
    w2_bd = _block_diag2(p["w2"]).astype(jnp.bfloat16)                # (256, 256)
    wc1 = p["wc1"].astype(jnp.bfloat16)                               # (256, 128)

    b_pack = jnp.stack([
        jnp.concatenate([p["b1"], p["b1"]]),                          # [b1 | b1]
        jnp.concatenate([p["b2"], p["b2"]]),                          # [b2 | b2]
        jnp.concatenate([p["bc1"], p["wc2"][:, 0]]),                  # [bc1 | wc2]
        jnp.full((2 * hidden,), p["bc2"][0]),                         # bc2 (broadcast)
    ], axis=0).astype(jnp.float32)                                    # (4, 256)

    return dict(w1_bd=w1_bd, w2_bd=w2_bd, wc1=wc1, b_pack=b_pack)


def reference_forward_f32(x1, x2, p):
    def enc(x):
        h = jnp.maximum(x @ p["w1"] + p["b1"], 0.0)
        return jnp.maximum(h @ p["w2"] + p["b2"], 0.0)

    e1, e2 = enc(x1), enc(x2)
    comb = jnp.concatenate([e1, e2], axis=1)
    h = jnp.maximum(comb @ p["wc1"] + p["bc1"], 0.0)
    return jax.nn.sigmoid(h @ p["wc2"] + p["bc2"])[:, 0]


def reference_forward_bf16_policy(x1, x2, p):
    """Mirrors the kernel's dtype policy: bf16 matmul operands, f32 accumulation."""
    bf = jnp.bfloat16

    def mm(a, w):
        return jnp.dot(a.astype(bf), w.astype(bf), preferred_element_type=jnp.float32)

    def enc(x):
        h = jnp.maximum(mm(x, p["w1"]) + p["b1"], 0.0)
        return jnp.maximum(mm(h, p["w2"]) + p["b2"], 0.0)

    e1, e2 = enc(x1), enc(x2)
    comb = jnp.concatenate([e1, e2], axis=1)
    h = jnp.maximum(mm(comb, p["wc1"]) + p["bc1"], 0.0)
    logits = jnp.sum(h * p["wc2"][:, 0][None, :], axis=-1) + p["bc2"]
    return jax.nn.sigmoid(logits)


if __name__ == "__main__":
    key = jax.random.PRNGKey(0)
    k_params, k1, k2 = jax.random.split(key, 3)

    INPUT_DIM, HIDDEN_DIM = 33, 128
    params = init_params(k_params, INPUT_DIM, HIDDEN_DIM)
    kernel_params = pack_params(params)

    B = 512
    x1 = jax.random.normal(k1, (B, INPUT_DIM), jnp.float32)
    x2 = jax.random.normal(k2, (B, INPUT_DIM), jnp.float32)

    ref_bf16 = reference_forward_bf16_policy(x1, x2, params)
    ref_f32 = reference_forward_f32(x1, x2, params)

    # Default tiling: a single large grid step (overhead amortized away).
    out = jax.block_until_ready(fragment_matcher_forward(x1, x2, kernel_params))
    assert out.shape == (B,)
    assert jnp.allclose(out, ref_bf16, atol=2e-3, rtol=0), "mismatch vs bf16-policy reference"
    assert jnp.allclose(out, ref_f32, atol=2e-2, rtol=0), "mismatch vs f32 reference"

    # Even multi-tile grid (what a v7x caller would use to engage both TCs).
    out2 = jax.block_until_ready(
        fragment_matcher_forward(x1, x2, kernel_params, min_num_tiles=2))
    assert out2.shape == (B,)
    assert jnp.allclose(out2, ref_bf16, atol=2e-3, rtol=0), "multi-tile mismatch"

    # Ragged batch: exercises batch padding + the out[:B] slice.
    Br = 300
    out3 = jax.block_until_ready(
        fragment_matcher_forward(x1[:Br], x2[:Br], kernel_params))
    assert out3.shape == (Br,)
    assert jnp.allclose(out3, ref_bf16[:Br], atol=2e-3, rtol=0), "ragged-batch mismatch"

    print("KERNEL_OK")
</pallas_src>

<mosaic_0001>
module attributes {stable_mosaic.version = 11 : i64} {
  func.func @fragment_matcher_kernel(%arg0: i32, %arg1: memref<512x128xbf16, #tpu.memory_space<vmem>>, %arg2: memref<128x256xbf16, #tpu.memory_space<vmem>>, %arg3: memref<256x256xbf16, #tpu.memory_space<vmem>>, %arg4: memref<256x128xbf16, #tpu.memory_space<vmem>>, %arg5: memref<4x256xf32, #tpu.memory_space<vmem>>, %arg6: memref<1x512xf32, #tpu.memory_space<vmem>>) attributes {dimension_semantics = [#tpu.dimension_semantics<parallel>], iteration_bounds = array<i64: 1>, scalar_prefetch = 0 : i64, scratch_operands = 0 : i64, tpu.core_type = #tpu.core_type<tc>, window_params = [{transform_indices = @transform_0, window_bounds = array<i64: 512, 128>}, {pipeline_mode = #tpu.pipeline_mode<synchronous>, transform_indices = @transform_1, window_bounds = array<i64: 128, 256>}, {pipeline_mode = #tpu.pipeline_mode<synchronous>, transform_indices = @transform_2, window_bounds = array<i64: 256, 256>}, {pipeline_mode = #tpu.pipeline_mode<synchronous>, transform_indices = @transform_3, window_bounds = array<i64: 256, 128>}, {pipeline_mode = #tpu.pipeline_mode<synchronous>, transform_indices = @transform_4, window_bounds = array<i64: 4, 256>}, {transform_indices = @transform_5, window_bounds = array<i64: 1, 512>}]} {
    %c0 = arith.constant 0 : index
    %c0_0 = arith.constant 0 : index
    %0 = vector.load %arg5[%c0, %c0_0] : memref<4x256xf32, #tpu.memory_space<vmem>>, vector<1x256xf32>
    %c1 = arith.constant 1 : index
    %c0_1 = arith.constant 0 : index
    %1 = vector.load %arg5[%c1, %c0_1] : memref<4x256xf32, #tpu.memory_space<vmem>>, vector<1x256xf32>
    %c2 = arith.constant 2 : index
    %c0_2 = arith.constant 0 : index
    %2 = vector.load %arg5[%c2, %c0_2] : memref<4x256xf32, #tpu.memory_space<vmem>>, vector<1x128xf32>
    %c2_3 = arith.constant 2 : index
    %c128 = arith.constant 128 : index
    %3 = vector.load %arg5[%c2_3, %c128] : memref<4x256xf32, #tpu.memory_space<vmem>>, vector<1x128xf32>
    %c3 = arith.constant 3 : index
    %c0_4 = arith.constant 0 : index
    %4 = vector.load %arg5[%c3, %c0_4] : memref<4x256xf32, #tpu.memory_space<vmem>>, vector<1x1xf32>
    %c0_5 = arith.constant 0 : index
    %c0_6 = arith.constant 0 : index
    %5 = vector.load %arg1[%c0_5, %c0_6] : memref<512x128xbf16, #tpu.memory_space<vmem>>, vector<512x128xbf16>
    %c0_7 = arith.constant 0 : index
    %c0_8 = arith.constant 0 : index
    %6 = vector.load %arg2[%c0_7, %c0_8] : memref<128x256xbf16, #tpu.memory_space<vmem>>, vector<128x256xbf16>
    %cst = arith.constant dense<0.000000e+00> : vector<512x256xf32>
    %7 = tpu.matmul %5, %6, %cst {dimension_numbers = #tpu.dot_dimension_numbers<[1], [0], [0], [1], [0, 0, 1, 1], [], []>} : vector<512x128xbf16>, vector<128x256xbf16>, vector<512x256xf32> -> vector<512x256xf32>
    %8 = vector.broadcast %0 : vector<1x256xf32> to vector<512x256xf32>
    %9 = arith.addf %7, %8 : vector<512x256xf32>
    %cst_9 = arith.constant 0.000000e+00 : f32
    %10 = vector.broadcast %cst_9 : f32 to vector<512x256xf32>
    %11 = arith.maximumf %9, %10 : vector<512x256xf32>
    %12 = arith.truncf %11 : vector<512x256xf32> to vector<512x256xbf16>
    %c0_10 = arith.constant 0 : index
    %c0_11 = arith.constant 0 : index
    %13 = vector.load %arg3[%c0_10, %c0_11] : memref<256x256xbf16, #tpu.memory_space<vmem>>, vector<256x256xbf16>
    %cst_12 = arith.constant dense<0.000000e+00> : vector<512x256xf32>
    %14 = tpu.matmul %12, %13, %cst_12 {dimension_numbers = #tpu.dot_dimension_numbers<[1], [0], [0], [1], [0, 0, 1, 1], [], []>} : vector<512x256xbf16>, vector<256x256xbf16>, vector<512x256xf32> -> vector<512x256xf32>
    %15 = vector.broadcast %1 : vector<1x256xf32> to vector<512x256xf32>
    %16 = arith.addf %14, %15 : vector<512x256xf32>
    %cst_13 = arith.constant 0.000000e+00 : f32
    %17 = vector.broadcast %cst_13 : f32 to vector<512x256xf32>
    %18 = arith.maximumf %16, %17 : vector<512x256xf32>
    %19 = arith.truncf %18 : vector<512x256xf32> to vector<512x256xbf16>
    %c0_14 = arith.constant 0 : index
    %c0_15 = arith.constant 0 : index
    %20 = vector.load %arg4[%c0_14, %c0_15] : memref<256x128xbf16, #tpu.memory_space<vmem>>, vector<256x128xbf16>
    %cst_16 = arith.constant dense<0.000000e+00> : vector<512x128xf32>
    %21 = tpu.matmul %19, %20, %cst_16 {dimension_numbers = #tpu.dot_dimension_numbers<[1], [0], [0], [1], [0, 0, 1, 1], [], []>} : vector<512x256xbf16>, vector<256x128xbf16>, vector<512x128xf32> -> vector<512x128xf32>
    %22 = vector.broadcast %2 : vector<1x128xf32> to vector<512x128xf32>
    %23 = arith.addf %21, %22 : vector<512x128xf32>
    %cst_17 = arith.constant 0.000000e+00 : f32
    %24 = vector.broadcast %cst_17 : f32 to vector<512x128xf32>
    %25 = arith.maximumf %23, %24 : vector<512x128xf32>
    %26 = vector.broadcast %3 : vector<1x128xf32> to vector<512x128xf32>
    %27 = arith.mulf %25, %26 : vector<512x128xf32>
    %cst_18 = arith.constant dense<0.000000e+00> : vector<512xf32>
    %28 = vector.multi_reduction <add>, %27, %cst_18 [1] : vector<512x128xf32> to vector<512xf32>
    %29 = vector.shape_cast %28 : vector<512xf32> to vector<1x512xf32>
    %30 = vector.broadcast %4 : vector<1x1xf32> to vector<1x512xf32>
    %31 = arith.addf %29, %30 : vector<1x512xf32>
    %32 = arith.negf %31 : vector<1x512xf32>
    %33 = math.exp %32 : vector<1x512xf32>
    %cst_19 = arith.constant 1.000000e+00 : f32
    %34 = vector.broadcast %cst_19 : f32 to vector<1x512xf32>
    %35 = arith.addf %34, %33 : vector<1x512xf32>
    %36 = arith.divf %34, %35 : vector<1x512xf32>
    %c0_20 = arith.constant 0 : index
    %c0_21 = arith.constant 0 : index
    %37 = vector.load %arg6[%c0_20, %c0_21] : memref<1x512xf32, #tpu.memory_space<vmem>>, vector<1x512xf32>
    tpu.vector_store %arg6[%c0_20, %c0_21], %36 {strides = array<i32>} : memref<1x512xf32, #tpu.memory_space<vmem>>, vector<1x512xf32>,
    return
  }
  func.func @transform_0(%arg0: i32) -> (i32, i32) {
    %c0_i32 = arith.constant 0 : i32
    %c0_i32_0 = arith.constant 0 : i32
    return %arg0, %c0_i32 : i32, i32
  }
  func.func @transform_1(%arg0: i32) -> (i32, i32) {
    %c0_i32 = arith.constant 0 : i32
    %c0_i32_0 = arith.constant 0 : i32
    %c0_i32_1 = arith.constant 0 : i32
    return %c0_i32, %c0_i32_0 : i32, i32
  }
  func.func @transform_2(%arg0: i32) -> (i32, i32) {
    %c0_i32 = arith.constant 0 : i32
    %c0_i32_0 = arith.constant 0 : i32
    %c0_i32_1 = arith.constant 0 : i32
    return %c0_i32, %c0_i32_0 : i32, i32
  }
  func.func @transform_3(%arg0: i32) -> (i32, i32) {
    %c0_i32 = arith.constant 0 : i32
    %c0_i32_0 = arith.constant 0 : i32
    %c0_i32_1 = arith.constant 0 : i32
    return %c0_i32, %c0_i32_0 : i32, i32
  }
  func.func @transform_4(%arg0: i32) -> (i32, i32) {
    %c0_i32 = arith.constant 0 : i32
    %c0_i32_0 = arith.constant 0 : i32
    %c0_i32_1 = arith.constant 0 : i32
    return %c0_i32, %c0_i32_0 : i32, i32
  }
  func.func @transform_5(%arg0: i32) -> (i32, i32) {
    %c0_i32 = arith.constant 0 : i32
    %c0_i32_0 = arith.constant 0 : i32
    return %c0_i32, %arg0 : i32, i32
  }
}

</mosaic_0001>

<llo_original>
// kernel: tpu_custom_call.1
$region0: #{tpu_custom_call.1}
  #allocation0 [shape = 'u32[]', space=smem, size = 0x4, offset = 0x4, fixed_abs, tag = 'smem constant byte address 0x4 - core index']
  #allocation1 [shape = 'u32[144,128]{1,0:T(1,128)}', space=vmem, size = 0x12000, scoped, tag = 'internal scratch']
  %s0 = inlined_call_operand.hbm [shape: bf16[512,128], index: 0, kind: input, shape index: {}]
  %s1 = inlined_call_operand.hbm [shape: bf16[128,256], index: 1, kind: input, shape index: {}]
  %s2 = inlined_call_operand.hbm [shape: bf16[256,256], index: 2, kind: input, shape index: {}]
  %s3 = inlined_call_operand.hbm [shape: bf16[256,128], index: 3, kind: input, shape index: {}]
  %s4 = inlined_call_operand.vmem [shape: f32[4,256], index: 4, kind: input, shape index: {}]
  %s5 = inlined_call_operand.hbm [shape: f32[1,512], index: 5, kind: output, shape index: {}]
  %s6 = sld [smem:[#allocation0]]
  $region46: #{tpu_custom_call.1} parent=0
    _
  %s8 = ssub.s32 1, %s6
  %s9 = scalar_select 0, %s8, %s6
  $region1: #{tpu_custom_call.1} parent=0
    #allocation2 [shape = 'u8[131072]{0}', space=vmem, size = 0x20000, scoped, tag = 'input window, operand 0, single buffered']
    #allocation3 [shape = 's32[1]{0}', space=sflag, size = 0x4, scoped, tag = 'scoped memory for tpu_custom_call.1']
    #allocation4 [shape = 's32[1]{0}', space=sflag, size = 0x4, scoped, tag = 'scoped memory for tpu_custom_call.1']
    #allocation5 [shape = 'u8[65536]{0}', space=vmem, size = 0x10000, scoped, tag = 'input window, operand 1, single buffered']
    #allocation6 [shape = 's32[1]{0}', space=sflag, size = 0x4, scoped, tag = 'scoped memory for tpu_custom_call.1']
    #allocation7 [shape = 'u8[131072]{0}', space=vmem, size = 0x20000, scoped, tag = 'input window, operand 2, single buffered']
    #allocation8 [shape = 'u8[65536]{0}', space=vmem, size = 0x10000, scoped, tag = 'input window, operand 3, single buffered']
    #allocation9 [shape = 's32[1]{0}', space=sflag, size = 0x4, scoped, tag = 'scoped memory for tpu_custom_call.1']
    #allocation10 [shape = 'u8[2048]{0}', space=vmem, size = 0x800, scoped, tag = 'output window, operand 0, single buffered']
    %10 = vsyncpa [#allocation3], 0
    %11 = vsyncpa [#allocation6], 0
    %12 = vsyncpa [#allocation9], 0
    %13 = vsyncpa [#allocation4], 0
    // Predicated region
    $region2: #{tpu_custom_call.1} parent=1 // pred_check
      _
    $region3: #{tpu_custom_call.1} parent=1 // pred_check_branch
      %15 = sbr.rel (0) target = $region5
    $region4: #{tpu_custom_call.1} parent=1 // pred_region
      %s17 = ssub.s32 4096, 4096
      %18 = vsyncadd [#allocation3], %s17
      %s19 = sshll.u32 [#allocation2], 4
      %s20 = int_to_ptr.vmem [resolvable:$true] %s19
      %25 = dma.hbm_to_vmem [thread:$0]  %s0, 4096, %s20, [#allocation3], 64, 64, 4
    $region5: #{tpu_custom_call.1} parent=1 // pred_fallthru
      _
    // Predicated region
    $region6: #{tpu_custom_call.1} parent=1 // pred_check
      _
    $region7: #{tpu_custom_call.1} parent=1 // pred_check_branch
      %27 = sbr.rel (0) target = $region9
    $region8: #{tpu_custom_call.1} parent=1 // pred_region
      %s29 = ssub.s32 2048, 2048
      %30 = vsyncadd [#allocation6], %s29
      %s31 = sshll.u32 [#allocation5], 4
      %s32 = int_to_ptr.vmem [resolvable:$true] %s31
      %37 = dma.hbm_to_vmem [thread:$0]  %s1, 2048, %s32, [#allocation6], 128, 128, 8
    $region9: #{tpu_custom_call.1} parent=1 // pred_fallthru
      _
    // Predicated region
    $region10: #{tpu_custom_call.1} parent=1 // pred_check
      _
    $region11: #{tpu_custom_call.1} parent=1 // pred_check_branch
      %39 = sbr.rel (0) target = $region13
    $region12: #{tpu_custom_call.1} parent=1 // pred_region
      %s41 = ssub.s32 4096, 4096
      %42 = vsyncadd [#allocation6], %s41
      %s43 = sshll.u32 [#allocation7], 4
      %s44 = int_to_ptr.vmem [resolvable:$true] %s43
      %49 = dma.hbm_to_vmem [thread:$0]  %s2, 4096, %s44, [#allocation6], 128, 128, 8
    $region13: #{tpu_custom_call.1} parent=1 // pred_fallthru
      _
    // Predicated region
    $region14: #{tpu_custom_call.1} parent=1 // pred_check
      _
    $region15: #{tpu_custom_call.1} parent=1 // pred_check_branch
      %51 = sbr.rel (0) target = $region17
    $region16: #{tpu_custom_call.1} parent=1 // pred_region
      %s53 = ssub.s32 2048, 2048
      %54 = vsyncadd [#allocation9], %s53
      %s55 = sshll.u32 [#allocation8], 4
      %s56 = int_to_ptr.vmem [resolvable:$true] %s55
      %61 = dma.hbm_to_vmem [thread:$0]  %s3, 2048, %s56, [#allocation9], 64, 64, 4
    $region17: #{tpu_custom_call.1} parent=1 // pred_fallthru
      _
    // Predicated region
    $region18: #{tpu_custom_call.1} parent=1 // pred_check
      _
    $region19: #{tpu_custom_call.1} parent=1 // pred_check_branch
      %63 = sbr.rel (0) target = $region21
    $region20: #{tpu_custom_call.1} parent=1 // pred_region
      _
    $region21: #{tpu_custom_call.1} parent=1 // pred_fallthru
      _
    // Predicated region
    $region22: #{tpu_custom_call.1} parent=1 // pred_check
      _
    $region23: #{tpu_custom_call.1} parent=1 // pred_check_branch
      %65 = sbr.rel (0) target = $region25
    $region24: #{tpu_custom_call.1} parent=1 // pred_region
      %66 = dma.done [#allocation3], 4096
    $region25: #{tpu_custom_call.1} parent=1 // pred_fallthru
      _
    // Predicated region
    $region26: #{tpu_custom_call.1} parent=1 // pred_check
      _
    $region27: #{tpu_custom_call.1} parent=1 // pred_check_branch
      %68 = sbr.rel (0) target = $region29
    $region28: #{tpu_custom_call.1} parent=1 // pred_region
      %69 = dma.done [#allocation6], 2048
    $region29: #{tpu_custom_call.1} parent=1 // pred_fallthru
      _
    // Predicated region
    $region30: #{tpu_custom_call.1} parent=1 // pred_check
      _
    $region31: #{tpu_custom_call.1} parent=1 // pred_check_branch
      %71 = sbr.rel (0) target = $region33
    $region32: #{tpu_custom_call.1} parent=1 // pred_region
      %72 = dma.done [#allocation6], 4096
    $region33: #{tpu_custom_call.1} parent=1 // pred_fallthru
      _
    // Predicated region
    $region34: #{tpu_custom_call.1} parent=1 // pred_check
      _
    $region35: #{tpu_custom_call.1} parent=1 // pred_check_branch
      %74 = sbr.rel (0) target = $region37
    $region36: #{tpu_custom_call.1} parent=1 // pred_region
      %75 = dma.done [#allocation9], 2048
    $region37: #{tpu_custom_call.1} parent=1 // pred_fallthru
      _
    %v77 = vld [vmem:[%s4] ss:$4 sm:$0x3]
    %s78 = scalar_lea.vmem %s4, 1
    %v79 = vld [vmem:[%s78] ss:$4 sm:$0x3]
    %v80 = vld [vmem:[%s4 + $0x2] sm:$0x1]
    %v81 = vld [vmem:[%s4 + $0x6] sm:$0x1]
    %v82 = vld [vmem:[%s4 + $0x3] sm:$0x1]
    %v83 = vld [vmem:[#allocation2] sm:$0xf]
    %v84 = vld [vmem:[#allocation2 + $0x4] sm:$0xf]
    %v85 = vld [vmem:[#allocation2 + $0x8] sm:$0xf]
    %v86 = vld [vmem:[#allocation2 + $0xc] sm:$0xf]
    %v87 = vld [vmem:[#allocation2 + $0x10] sm:$0xf]
    %v88 = vld [vmem:[#allocation2 + $0x14] sm:$0xf]
    %v89 = vld [vmem:[#allocation2 + $0x18] sm:$0xf]
    %v90 = vld [vmem:[#allocation2 + $0x1c] sm:$0xf]
    %v91 = vld [vmem:[#allocation2 + $0x20] sm:$0xf]
    %v92 = vld [vmem:[#allocation2 + $0x24] sm:$0xf]
    %v93 = vld [vmem:[#allocation2 + $0x28] sm:$0xf]
    %v94 = vld [vmem:[#allocation2 + $0x2c] sm:$0xf]
    %v95 = vld [vmem:[#allocation2 + $0x30] sm:$0xf]
    %v96 = vld [vmem:[#allocation2 + $0x34] sm:$0xf]
    %v97 = vld [vmem:[#allocation2 + $0x38] sm:$0xf]
    %v98 = vld [vmem:[#allocation2 + $0x3c] sm:$0xf]
    %v99 = vld [vmem:[#allocation2 + $0x40] sm:$0xf]
    %v100 = vld [vmem:[#allocation2 + $0x44] sm:$0xf]
    %v101 = vld [vmem:[#allocation2 + $0x48] sm:$0xf]
    %v102 = vld [vmem:[#allocation2 + $0x4c] sm:$0xf]
    %v103 = vld [vmem:[#allocation2 + $0x50] sm:$0xf]
    %v104 = vld [vmem:[#allocation2 + $0x54] sm:$0xf]
    %v105 = vld [vmem:[#allocation2 + $0x58] sm:$0xf]
    %v106 = vld [vmem:[#allocation2 + $0x5c] sm:$0xf]
    %v107 = vld [vmem:[#allocation2 + $0x60] sm:$0xf]
    %v108 = vld [vmem:[#allocation2 + $0x64] sm:$0xf]
    %v109 = vld [vmem:[#allocation2 + $0x68] sm:$0xf]
    %v110 = vld [vmem:[#allocation2 + $0x6c] sm:$0xf]
    %v111 = vld [vmem:[#allocation2 + $0x70] sm:$0xf]
    %v112 = vld [vmem:[#allocation2 + $0x74] sm:$0xf]
    %v113 = vld [vmem:[#allocation2 + $0x78] sm:$0xf]
    %v114 = vld [vmem:[#allocation2 + $0x7c] sm:$0xf]
    %v115 = vld [vmem:[#allocation2 + $0x80] sm:$0xf]
    %v116 = vld [vmem:[#allocation2 + $0x84] sm:$0xf]
    %v117 = vld [vmem:[#allocation2 + $0x88] sm:$0xf]
    %v118 = vld [vmem:[#allocation2 + $0x8c] sm:$0xf]
    %v119 = vld [vmem:[#allocation2 + $0x90] sm:$0xf]
    %v120 = vld [vmem:[#allocation2 + $0x94] sm:$0xf]
    %v121 = vld [vmem:[#allocation2 + $0x98] sm:$0xf]
    %v122 = vld [vmem:[#allocation2 + $0x9c] sm:$0xf]
    %v123 = vld [vmem:[#allocation2 + $0xa0] sm:$0xf]
    %v124 = vld [vmem:[#allocation2 + $0xa4] sm:$0xf]
    %v125 = vld [vmem:[#allocation2 + $0xa8] sm:$0xf]
    %v126 = vld [vmem:[#allocation2 + $0xac] sm:$0xf]
    %v127 = vld [vmem:[#allocation2 + $0xb0] sm:$0xf]
    %v128 = vld [vmem:[#allocation2 + $0xb4] sm:$0xf]
    %v129 = vld [vmem:[#allocation2 + $0xb8] sm:$0xf]
    %v130 = vld [vmem:[#allocation2 + $0xbc] sm:$0xf]
    %v131 = vld [vmem:[#allocation2 + $0xc0] sm:$0xf]
    %v132 = vld [vmem:[#allocation2 + $0xc4] sm:$0xf]
    %v133 = vld [vmem:[#allocation2 + $0xc8] sm:$0xf]
    %v134 = vld [vmem:[#allocation2 + $0xcc] sm:$0xf]
    %v135 = vld [vmem:[#allocation2 + $0xd0] sm:$0xf]
    %v136 = vld [vmem:[#allocation2 + $0xd4] sm:$0xf]
    %v137 = vld [vmem:[#allocation2 + $0xd8] sm:$0xf]
    %v138 = vld [vmem:[#allocation2 + $0xdc] sm:$0xf]
    %v139 = vld [vmem:[#allocation2 + $0xe0] sm:$0xf]
    %v140 = vld [vmem:[#allocation2 + $0xe4] sm:$0xf]
    %v141 = vld [vmem:[#allocation2 + $0xe8] sm:$0xf]
    %v142 = vld [vmem:[#allocation2 + $0xec] sm:$0xf]
    %v143 = vld [vmem:[#allocation2 + $0xf0] sm:$0xf]
    %v144 = vld [vmem:[#allocation2 + $0xf4] sm:$0xf]
    %v145 = vld [vmem:[#allocation2 + $0xf8] sm:$0xf]
    %v146 = vld [vmem:[#allocation2 + $0xfc] sm:$0xf]
    %v147 = vld [vmem:[#allocation5] sm:$0xff]
    %v148 = vld [vmem:[#allocation5 + $0x8] sm:$0xff]
    %v149 = vld [vmem:[#allocation5 + $0x10] sm:$0xff]
    %v150 = vld [vmem:[#allocation5 + $0x18] sm:$0xff]
    %v151 = vld [vmem:[#allocation5 + $0x20] sm:$0xff]
    %v152 = vld [vmem:[#allocation5 + $0x28] sm:$0xff]
    %v153 = vld [vmem:[#allocation5 + $0x30] sm:$0xff]
    %v154 = vld [vmem:[#allocation5 + $0x38] sm:$0xff]
    %v155 = vld [vmem:[#allocation5 + $0x40] sm:$0xff]
    %v156 = vld [vmem:[#allocation5 + $0x48] sm:$0xff]
    %v157 = vld [vmem:[#allocation5 + $0x50] sm:$0xff]
    %v158 = vld [vmem:[#allocation5 + $0x58] sm:$0xff]
    %v159 = vld [vmem:[#allocation5 + $0x60] sm:$0xff]
    %v160 = vld [vmem:[#allocation5 + $0x68] sm:$0xff]
    %v161 = vld [vmem:[#allocation5 + $0x70] sm:$0xff]
    %v162 = vld [vmem:[#allocation5 + $0x78] sm:$0xff]
    %v164 = vlaneseq
    %v165 = vshrl.u32 %v164, 7
    %v166 = vsub.s32 0, %v165
    %v167 = vrot.slane %v77, %v166
    %v168 = vlaneseq
    %v169 = vshrl.u32 %v168, 7
    %v170 = vsub.s32 1, %v169
    %v171 = vrot.slane %v77, %v170
    %v238 = vunpack.c.l.b16 %v83
    %v239 = vunpack.c.l.b16 %v84
    %v240 = vunpack.c.l.b16 %v85
    %v241 = vunpack.c.l.b16 %v86
    %v242 = vunpack.c.l.b16 %v87
    %v243 = vunpack.c.l.b16 %v88
    %v244 = vunpack.c.l.b16 %v89
    %v245 = vunpack.c.l.b16 %v90
    %v246 = vunpack.c.l.b16 %v91
    %v247 = vunpack.c.l.b16 %v92
    %v248 = vunpack.c.l.b16 %v93
    %v249 = vunpack.c.l.b16 %v94
    %v250 = vunpack.c.l.b16 %v95
    %v251 = vunpack.c.l.b16 %v96
    %v252 = vunpack.c.l.b16 %v97
    %v253 = vunpack.c.l.b16 %v98
    %v254 = vunpack.c.l.b16 %v99
    %v255 = vunpack.c.l.b16 %v100
    %v256 = vunpack.c.l.b16 %v101
    %v257 = vunpack.c.l.b16 %v102
    %v258 = vunpack.c.l.b16 %v103
    %v259 = vunpack.c.l.b16 %v104
    %v260 = vunpack.c.l.b16 %v105
    %v261 = vunpack.c.l.b16 %v106
    %v262 = vunpack.c.l.b16 %v107
    %v263 = vunpack.c.l.b16 %v108
    %v264 = vunpack.c.l.b16 %v109
    %v265 = vunpack.c.l.b16 %v110
    %v266 = vunpack.c.l.b16 %v111
    %v267 = vunpack.c.l.b16 %v112
    %v268 = vunpack.c.l.b16 %v113
    %v269 = vunpack.c.l.b16 %v114
    %v270 = vunpack.c.l.b16 %v115
    %v271 = vunpack.c.l.b16 %v116
    %v272 = vunpack.c.l.b16 %v117
    %v273 = vunpack.c.l.b16 %v118
    %v274 = vunpack.c.l.b16 %v119
    %v275 = vunpack.c.l.b16 %v120
    %v276 = vunpack.c.l.b16 %v121
    %v277 = vunpack.c.l.b16 %v122
    %v278 = vunpack.c.l.b16 %v123
    %v279 = vunpack.c.l.b16 %v124
    %v280 = vunpack.c.l.b16 %v125
    %v281 = vunpack.c.l.b16 %v126
    %v282 = vunpack.c.l.b16 %v127
    %v283 = vunpack.c.l.b16 %v128
    %v284 = vunpack.c.l.b16 %v129
    %v285 = vunpack.c.l.b16 %v130
    %v286 = vunpack.c.l.b16 %v131
    %v287 = vunpack.c.l.b16 %v132
    %v288 = vunpack.c.l.b16 %v133
    %v289 = vunpack.c.l.b16 %v134
    %v290 = vunpack.c.l.b16 %v135
    %v291 = vunpack.c.l.b16 %v136
    %v292 = vunpack.c.l.b16 %v137
    %v293 = vunpack.c.l.b16 %v138
    %v294 = vunpack.c.l.b16 %v139
    %v295 = vunpack.c.l.b16 %v140
    %v296 = vunpack.c.l.b16 %v141
    %v297 = vunpack.c.l.b16 %v142
    %v298 = vunpack.c.l.b16 %v143
    %v299 = vunpack.c.l.b16 %v144
    %v300 = vunpack.c.l.b16 %v145
    %v301 = vunpack.c.l.b16 %v146
    %v302 = vpack.c.b16 %v239, %v238
    %v303 = vpack.c.b16 %v241, %v240
    %v304 = vpack.c.b16 %v243, %v242
    %v305 = vpack.c.b16 %v245, %v244
    %v306 = vpack.c.b16 %v247, %v246
    %v307 = vpack.c.b16 %v249, %v248
    %v308 = vpack.c.b16 %v251, %v250
    %v309 = vpack.c.b16 %v253, %v252
    %v310 = vpack.c.b16 %v255, %v254
    %v311 = vpack.c.b16 %v257, %v256
    %v312 = vpack.c.b16 %v259, %v258
    %v313 = vpack.c.b16 %v261, %v260
    %v314 = vpack.c.b16 %v263, %v262
    %v315 = vpack.c.b16 %v265, %v264
    %v316 = vpack.c.b16 %v267, %v266
    %v317 = vpack.c.b16 %v269, %v268
    %v318 = vpack.c.b16 %v271, %v270
    %v319 = vpack.c.b16 %v273, %v272
    %v320 = vpack.c.b16 %v275, %v274
    %v321 = vpack.c.b16 %v277, %v276
    %v322 = vpack.c.b16 %v279, %v278
    %v323 = vpack.c.b16 %v281, %v280
    %v324 = vpack.c.b16 %v283, %v282
    %v325 = vpack.c.b16 %v285, %v284
    %v326 = vpack.c.b16 %v287, %v286
    %v327 = vpack.c.b16 %v289, %v288
    %v328 = vpack.c.b16 %v291, %v290
    %v329 = vpack.c.b16 %v293, %v292
    %v330 = vpack.c.b16 %v295, %v294
    %v331 = vpack.c.b16 %v297, %v296
    %v332 = vpack.c.b16 %v299, %v298
    %v333 = vpack.c.b16 %v301, %v300
    %v382 = vunpack.c.l.b16 %v147
    %v383 = vunpack.c.h.b16 %v147
    %v384 = vunpack.c.l.b16 %v148
    %v385 = vunpack.c.h.b16 %v148
    %v386 = vunpack.c.l.b16 %v149
    %v387 = vunpack.c.h.b16 %v149
    %v388 = vunpack.c.l.b16 %v150
    %v389 = vunpack.c.h.b16 %v150
    %v390 = vunpack.c.l.b16 %v151
    %v391 = vunpack.c.h.b16 %v151
    %v392 = vunpack.c.l.b16 %v152
    %v393 = vunpack.c.h.b16 %v152
    %v394 = vunpack.c.l.b16 %v153
    %v395 = vunpack.c.h.b16 %v153
    %v396 = vunpack.c.l.b16 %v154
    %v397 = vunpack.c.h.b16 %v154
    %v398 = vunpack.c.l.b16 %v155
    %v399 = vunpack.c.h.b16 %v155
    %v400 = vunpack.c.l.b16 %v156
    %v401 = vunpack.c.h.b16 %v156
    %v402 = vunpack.c.l.b16 %v157
    %v403 = vunpack.c.h.b16 %v157
    %v404 = vunpack.c.l.b16 %v158
    %v405 = vunpack.c.h.b16 %v158
    %v406 = vunpack.c.l.b16 %v159
    %v407 = vunpack.c.h.b16 %v159
    %v408 = vunpack.c.l.b16 %v160
    %v409 = vunpack.c.h.b16 %v160
    %v410 = vunpack.c.l.b16 %v161
    %v411 = vunpack.c.h.b16 %v161
    %v412 = vunpack.c.l.b16 %v162
    %v413 = vunpack.c.h.b16 %v162
    %v414 = vpack.c.b16 %v384, %v382
    %v415 = vpack.c.b16 %v385, %v383
    %v416 = vpack.c.b16 %v388, %v386
    %v417 = vpack.c.b16 %v389, %v387
    %v418 = vpack.c.b16 %v392, %v390
    %v419 = vpack.c.b16 %v393, %v391
    %v420 = vpack.c.b16 %v396, %v394
    %v421 = vpack.c.b16 %v397, %v395
    %v422 = vpack.c.b16 %v400, %v398
    %v423 = vpack.c.b16 %v401, %v399
    %v424 = vpack.c.b16 %v404, %v402
    %v425 = vpack.c.b16 %v405, %v403
    %v426 = vpack.c.b16 %v408, %v406
    %v427 = vpack.c.b16 %v409, %v407
    %v428 = vpack.c.b16 %v412, %v410
    %v429 = vpack.c.b16 %v413, %v411
    %446 = vmatprep.subr.bf16.mxu0 %v415
    %447 = vmatpush1.bf16.msra.mxu0 %v414
    %448 = vmatprep.subr.bf16.mxu0 %v417
    %449 = vmatpush1.bf16.msra.mxu0 %v416
    %450 = vmatprep.subr.bf16.mxu0 %v419
    %451 = vmatpush1.bf16.msra.mxu0 %v418
    %452 = vmatprep.subr.bf16.mxu0 %v421
    %453 = vmatpush1.bf16.msra.mxu0 %v420
    %454 = vmatprep.subr.bf16.mxu0 %v423
    %455 = vmatpush1.bf16.msra.mxu0 %v422
    %456 = vmatprep.subr.bf16.mxu0 %v425
    %457 = vmatpush1.bf16.msra.mxu0 %v424
    %458 = vmatprep.subr.bf16.mxu0 %v427
    %459 = vmatpush1.bf16.msra.mxu0 %v426
    %460 = vmatprep.subr.bf16.mxu0 %v429
    %461 = vmatpush1.bf16.msra.mxu0 %v428
    %462 = vmatprep.subr.bf16.mxu0 0
    %463 = vmatpush1.bf16.msra.mxu0 0
    %464 = vmatprep.subr.bf16.mxu0 0
    %465 = vmatpush1.bf16.msra.mxu0 0
    %466 = vmatprep.subr.bf16.mxu0 0
    %467 = vmatpush1.bf16.msra.mxu0 0
    %468 = vmatprep.subr.bf16.mxu0 0
    %469 = vmatpush1.bf16.msra.mxu0 0
    %470 = vmatprep.subr.bf16.mxu0 0
    %471 = vmatpush1.bf16.msra.mxu0 0
    %472 = vmatprep.subr.bf16.mxu0 0
    %473 = vmatpush1.bf16.msra.mxu0 0
    %474 = vmatprep.subr.bf16.mxu0 0
    %475 = vmatpush1.bf16.msra.mxu0 0
    %476 = vmatprep.subr.bf16.mxu0 0
    %477 = vmatpush1.bf16.msra.mxu0 0
    %478 = vmatprep.mubr.bf16.mxu0 0
    %479 = vmatmul.mubr.bf16.gmra.mrb[0].mxu0 %v302
    %v480 = vpop.f32.mrb[0].mxu0
    %v481 = vadd.f32 %v167, %v480
    %v482 = vpop.f32.mrb[0].mxu0
    %v483 = vadd.f32 %v171, %v482
    %v484 = vpop.f32.mrb[0].mxu0
    %v485 = vadd.f32 %v167, %v484
    %v486 = vpop.f32.mrb[0].mxu0
    %v487 = vadd.f32 %v171, %v486
    %488 = vmatprep.mubr.bf16.mxu0 0
    %489 = vmatmul.mubr.bf16.gmra.mrb[0].mxu0 %v303
    %v490 = vpop.f32.mrb[0].mxu0
    %v491 = vadd.f32 %v167, %v490
    %v492 = vpop.f32.mrb[0].mxu0
    %v493 = vadd.f32 %v171, %v492
    %v494 = vpop.f32.mrb[0].mxu0
    %v495 = vadd.f32 %v167, %v494
    %v496 = vpop.f32.mrb[0].mxu0
    %v497 = vadd.f32 %v171, %v496
    %498 = vmatprep.mubr.bf16.mxu0 0
    %499 = vmatmul.mubr.bf16.gmra.mrb[0].mxu0 %v304
    %v500 = vpop.f32.mrb[0].mxu0
    %v501 = vadd.f32 %v167, %v500
    %v502 = vpop.f32.mrb[0].mxu0
    %v503 = vadd.f32 %v171, %v502
    %v504 = vpop.f32.mrb[0].mxu0
    %v505 = vadd.f32 %v167, %v504
    %v506 = vpop.f32.mrb[0].mxu0
    %v507 = vadd.f32 %v171, %v506
    %508 = vmatprep.mubr.bf16.mxu0 0
    %509 = vmatmul.mubr.bf16.gmra.mrb[0].mxu0 %v305
    %v510 = vpop.f32.mrb[0].mxu0
    %v511 = vadd.f32 %v167, %v510
    %v512 = vpop.f32.mrb[0].mxu0
    %v513 = vadd.f32 %v171, %v512
    %v514 = vpop.f32.mrb[0].mxu0
    %v515 = vadd.f32 %v167, %v514
    %v516 = vpop.f32.mrb[0].mxu0
    %v517 = vadd.f32 %v171, %v516
    %518 = vmatprep.mubr.bf16.mxu0 0
    %519 = vmatmul.mubr.bf16.gmra.mrb[0].mxu0 %v306
    %v520 = vpop.f32.mrb[0].mxu0
    %v521 = vadd.f32 %v167, %v520
    %v522 = vpop.f32.mrb[0].mxu0
    %v523 = vadd.f32 %v171, %v522
    %v524 = vpop.f32.mrb[0].mxu0
    %v525 = vadd.f32 %v167, %v524
    %v526 = vpop.f32.mrb[0].mxu0
    %v527 = vadd.f32 %v171, %v526
    %528 = vmatprep.mubr.bf16.mxu0 0
    %529 = vmatmul.mubr.bf16.gmra.mrb[0].mxu0 %v307
    %v530 = vpop.f32.mrb[0].mxu0
    %v531 = vadd.f32 %v167, %v530
    %v532 = vpop.f32.mrb[0].mxu0
    %v533 = vadd.f32 %v171, %v532
    %v534 = vpop.f32.mrb[0].mxu0
    %v535 = vadd.f32 %v167, %v534
    %v536 = vpop.f32.mrb[0].mxu0
    %v537 = vadd.f32 %v171, %v536
    %538 = vmatprep.mubr.bf16.mxu0 0
    %539 = vmatmul.mubr.bf16.gmra.mrb[0].mxu0 %v308
    %v540 = vpop.f32.mrb[0].mxu0
    %v541 = vadd.f32 %v167, %v540
    %v542 = vpop.f32.mrb[0].mxu0
    %v543 = vadd.f32 %v171, %v542
    %v544 = vpop.f32.mrb[0].mxu0
    %v545 = vadd.f32 %v167, %v544
    %v546 = vpop.f32.mrb[0].mxu0
    %v547 = vadd.f32 %v171, %v546
    %548 = vmatprep.mubr.bf16.mxu0 0
    %549 = vmatmul.mubr.bf16.gmra.mrb[0].mxu0 %v309
    %v550 = vpop.f32.mrb[0].mxu0
    %v551 = vadd.f32 %v167, %v550
    %v552 = vpop.f32.mrb[0].mxu0
    %v553 = vadd.f32 %v171, %v552
    %v554 = vpop.f32.mrb[0].mxu0
    %v555 = vadd.f32 %v167, %v554
    %v556 = vpop.f32.mrb[0].mxu0
    %v557 = vadd.f32 %v171, %v556
    %558 = vmatprep.mubr.bf16.mxu0 0
    %559 = vmatmul.mubr.bf16.gmra.mrb[0].mxu0 %v310
    %v560 = vpop.f32.mrb[0].mxu0
    %v561 = vadd.f32 %v167, %v560
    %v562 = vpop.f32.mrb[0].mxu0
    %v563 = vadd.f32 %v171, %v562
    %v564 = vpop.f32.mrb[0].mxu0
    %v565 = vadd.f32 %v167, %v564
    %v566 = vpop.f32.mrb[0].mxu0
    %v567 = vadd.f32 %v171, %v566
    %568 = vmatprep.mubr.bf16.mxu0 0
    %569 = vmatmul.mubr.bf16.gmra.mrb[0].mxu0 %v311
    %v570 = vpop.f32.mrb[0].mxu0
    %v571 = vadd.f32 %v167, %v570
    %v572 = vpop.f32.mrb[0].mxu0
    %v573 = vadd.f32 %v171, %v572
    %v574 = vpop.f32.mrb[0].mxu0
    %v575 = vadd.f32 %v167, %v574
    %v576 = vpop.f32.mrb[0].mxu0
    %v577 = vadd.f32 %v171, %v576
    %578 = vmatprep.mubr.bf16.mxu0 0
    %579 = vmatmul.mubr.bf16.gmra.mrb[0].mxu0 %v312
    %v580 = vpop.f32.mrb[0].mxu0
    %v581 = vadd.f32 %v167, %v580
    %v582 = vpop.f32.mrb[0].mxu0
    %v583 = vadd.f32 %v171, %v582
    %v584 = vpop.f32.mrb[0].mxu0
    %v585 = vadd.f32 %v167, %v584
    %v586 = vpop.f32.mrb[0].mxu0
    %v587 = vadd.f32 %v171, %v586
    %588 = vmatprep.mubr.bf16.mxu0 0
    %589 = vmatmul.mubr.bf16.gmra.mrb[0].mxu0 %v313
    %v590 = vpop.f32.mrb[0].mxu0
    %v591 = vadd.f32 %v167, %v590
    %v592 = vpop.f32.mrb[0].mxu0
    %v593 = vadd.f32 %v171, %v592
    %v594 = vpop.f32.mrb[0].mxu0
    %v595 = vadd.f32 %v167, %v594
    %v596 = vpop.f32.mrb[0].mxu0
    %v597 = vadd.f32 %v171, %v596
    %598 = vmatprep.mubr.bf16.mxu0 0
    %599 = vmatmul.mubr.bf16.gmra.mrb[0].mxu0 %v314
    %v600 = vpop.f32.mrb[0].mxu0
    %v601 = vadd.f32 %v167, %v600
    %v602 = vpop.f32.mrb[0].mxu0
    %v603 = vadd.f32 %v171, %v602
    %v604 = vpop.f32.mrb[0].mxu0
    %v605 = vadd.f32 %v167, %v604
    %v606 = vpop.f32.mrb[0].mxu0
    %v607 = vadd.f32 %v171, %v606
    %608 = vmatprep.mubr.bf16.mxu0 0
    %609 = vmatmul.mubr.bf16.gmra.mrb[0].mxu0 %v315
    %v610 = vpop.f32.mrb[0].mxu0
    %v611 = vadd.f32 %v167, %v610
    %v612 = vpop.f32.mrb[0].mxu0
    %v613 = vadd.f32 %v171, %v612
    %v614 = vpop.f32.mrb[0].mxu0
    %v615 = vadd.f32 %v167, %v614
    %v616 = vpop.f32.mrb[0].mxu0
    %v617 = vadd.f32 %v171, %v616
    %618 = vmatprep.mubr.bf16.mxu0 0
    %619 = vmatmul.mubr.bf16.gmra.mrb[0].mxu0 %v316
    %v620 = vpop.f32.mrb[0].mxu0
    %v621 = vadd.f32 %v167, %v620
    %v622 = vpop.f32.mrb[0].mxu0
    %v623 = vadd.f32 %v171, %v622
    %v624 = vpop.f32.mrb[0].mxu0
    %v625 = vadd.f32 %v167, %v624
    %v626 = vpop.f32.mrb[0].mxu0
    %v627 = vadd.f32 %v171, %v626
    %628 = vmatprep.mubr.bf16.mxu0 0
    %629 = vmatmul.mubr.bf16.gmra.mrb[0].mxu0 %v317
    %v630 = vpop.f32.mrb[0].mxu0
    %v631 = vadd.f32 %v167, %v630
    %v632 = vpop.f32.mrb[0].mxu0
    %v633 = vadd.f32 %v171, %v632
    %v634 = vpop.f32.mrb[0].mxu0
    %v635 = vadd.f32 %v167, %v634
    %v636 = vpop.f32.mrb[0].mxu0
    %v637 = vadd.f32 %v171, %v636
    %638 = vmatprep.mubr.bf16.mxu0 0
    %639 = vmatmul.mubr.bf16.gmra.mrb[0].mxu0 %v318
    %v640 = vpop.f32.mrb[0].mxu0
    %v641 = vadd.f32 %v167, %v640
    %v642 = vpop.f32.mrb[0].mxu0
    %v643 = vadd.f32 %v171, %v642
    %v644 = vpop.f32.mrb[0].mxu0
    %v645 = vadd.f32 %v167, %v644
    %v646 = vpop.f32.mrb[0].mxu0
    %v647 = vadd.f32 %v171, %v646
    %648 = vmatprep.mubr.bf16.mxu0 0
    %649 = vmatmul.mubr.bf16.gmra.mrb[0].mxu0 %v319
    %v650 = vpop.f32.mrb[0].mxu0
    %v651 = vadd.f32 %v167, %v650
    %v652 = vpop.f32.mrb[0].mxu0
    %v653 = vadd.f32 %v171, %v652
    %v654 = vpop.f32.mrb[0].mxu0
    %v655 = vadd.f32 %v167, %v654
    %v656 = vpop.f32.mrb[0].mxu0
    %v657 = vadd.f32 %v171, %v656
    %658 = vmatprep.mubr.bf16.mxu0 0
    %659 = vmatmul.mubr.bf16.gmra.mrb[0].mxu0 %v320
    %v660 = vpop.f32.mrb[0].mxu0
    %v661 = vadd.f32 %v167, %v660
    %v662 = vpop.f32.mrb[0].mxu0
    %v663 = vadd.f32 %v171, %v662
    %v664 = vpop.f32.mrb[0].mxu0
    %v665 = vadd.f32 %v167, %v664
    %v666 = vpop.f32.mrb[0].mxu0
    %v667 = vadd.f32 %v171, %v666
    %668 = vmatprep.mubr.bf16.mxu0 0
    %669 = vmatmul.mubr.bf16.gmra.mrb[0].mxu0 %v321
    %v670 = vpop.f32.mrb[0].mxu0
    %v671 = vadd.f32 %v167, %v670
    %v672 = vpop.f32.mrb[0].mxu0
    %v673 = vadd.f32 %v171, %v672
    %v674 = vpop.f32.mrb[0].mxu0
    %v675 = vadd.f32 %v167, %v674
    %v676 = vpop.f32.mrb[0].mxu0
    %v677 = vadd.f32 %v171, %v676
    %678 = vmatprep.mubr.bf16.mxu0 0
    %679 = vmatmul.mubr.bf16.gmra.mrb[0].mxu0 %v322
    %v680 = vpop.f32.mrb[0].mxu0
    %v681 = vadd.f32 %v167, %v680
    %v682 = vpop.f32.mrb[0].mxu0
    %v683 = vadd.f32 %v171, %v682
    %v684 = vpop.f32.mrb[0].mxu0
    %v685 = vadd.f32 %v167, %v684
    %v686 = vpop.f32.mrb[0].mxu0
    %v687 = vadd.f32 %v171, %v686
    %688 = vmatprep.mubr.bf16.mxu0 0
    %689 = vmatmul.mubr.bf16.gmra.mrb[0].mxu0 %v323
    %v690 = vpop.f32.mrb[0].mxu0
    %v691 = vadd.f32 %v167, %v690
    %v692 = vpop.f32.mrb[0].mxu0
    %v693 = vadd.f32 %v171, %v692
    %v694 = vpop.f32.mrb[0].mxu0
    %v695 = vadd.f32 %v167, %v694
    %v696 = vpop.f32.mrb[0].mxu0
    %v697 = vadd.f32 %v171, %v696
    %698 = vmatprep.mubr.bf16.mxu0 0
    %699 = vmatmul.mubr.bf16.gmra.mrb[0].mxu0 %v324
    %v700 = vpop.f32.mrb[0].mxu0
    %v701 = vadd.f32 %v167, %v700
    %v702 = vpop.f32.mrb[0].mxu0
    %v703 = vadd.f32 %v171, %v702
    %v704 = vpop.f32.mrb[0].mxu0
    %v705 = vadd.f32 %v167, %v704
    %v706 = vpop.f32.mrb[0].mxu0
    %v707 = vadd.f32 %v171, %v706
    %708 = vmatprep.mubr.bf16.mxu0 0
    %709 = vmatmul.mubr.bf16.gmra.mrb[0].mxu0 %v325
    %v710 = vpop.f32.mrb[0].mxu0
    %v711 = vadd.f32 %v167, %v710
    %v712 = vpop.f32.mrb[0].mxu0
    %v713 = vadd.f32 %v171, %v712
    %v714 = vpop.f32.mrb[0].mxu0
    %v715 = vadd.f32 %v167, %v714
    %v716 = vpop.f32.mrb[0].mxu0
    %v717 = vadd.f32 %v171, %v716
    %718 = vmatprep.mubr.bf16.mxu0 0
    %719 = vmatmul.mubr.bf16.gmra.mrb[0].mxu0 %v326
    %v720 = vpop.f32.mrb[0].mxu0
    %v721 = vadd.f32 %v167, %v720
    %v722 = vpop.f32.mrb[0].mxu0
    %v723 = vadd.f32 %v171, %v722
    %v724 = vpop.f32.mrb[0].mxu0
    %v725 = vadd.f32 %v167, %v724
    %v726 = vpop.f32.mrb[0].mxu0
    %v727 = vadd.f32 %v171, %v726
    %728 = vmatprep.mubr.bf16.mxu0 0
    %729 = vmatmul.mubr.bf16.gmra.mrb[0].mxu0 %v327
    %v730 = vpop.f32.mrb[0].mxu0
    %v731 = vadd.f32 %v167, %v730
    %v732 = vpop.f32.mrb[0].mxu0
    %v733 = vadd.f32 %v171, %v732
    %v734 = vpop.f32.mrb[0].mxu0
    %v735 = vadd.f32 %v167, %v734
    %v736 = vpop.f32.mrb[0].mxu0
    %v737 = vadd.f32 %v171, %v736
    %738 = vmatprep.mubr.bf16.mxu0 0
    %739 = vmatmul.mubr.bf16.gmra.mrb[0].mxu0 %v328
    %v740 = vpop.f32.mrb[0].mxu0
    %v741 = vadd.f32 %v167, %v740
    %v742 = vpop.f32.mrb[0].mxu0
    %v743 = vadd.f32 %v171, %v742
    %v744 = vpop.f32.mrb[0].mxu0
    %v745 = vadd.f32 %v167, %v744
    %v746 = vpop.f32.mrb[0].mxu0
    %v747 = vadd.f32 %v171, %v746
    %748 = vmatprep.mubr.bf16.mxu0 0
    %749 = vmatmul.mubr.bf16.gmra.mrb[0].mxu0 %v329
    %v750 = vpop.f32.mrb[0].mxu0
    %v751 = vadd.f32 %v167, %v750
    %v752 = vpop.f32.mrb[0].mxu0
    %v753 = vadd.f32 %v171, %v752
    %v754 = vpop.f32.mrb[0].mxu0
    %v755 = vadd.f32 %v167, %v754
    %v756 = vpop.f32.mrb[0].mxu0
    %v757 = vadd.f32 %v171, %v756
    %758 = vmatprep.mubr.bf16.mxu0 0
    %759 = vmatmul.mubr.bf16.gmra.mrb[0].mxu0 %v330
    %v760 = vpop.f32.mrb[0].mxu0
    %v761 = vadd.f32 %v167, %v760
    %v762 = vpop.f32.mrb[0].mxu0
    %v763 = vadd.f32 %v171, %v762
    %v764 = vpop.f32.mrb[0].mxu0
    %v765 = vadd.f32 %v167, %v764
    %v766 = vpop.f32.mrb[0].mxu0
    %v767 = vadd.f32 %v171, %v766
    %768 = vmatprep.mubr.bf16.mxu0 0
    %769 = vmatmul.mubr.bf16.gmra.mrb[0].mxu0 %v331
    %v770 = vpop.f32.mrb[0].mxu0
    %v771 = vadd.f32 %v167, %v770
    %v772 = vpop.f32.mrb[0].mxu0
    %v773 = vadd.f32 %v171, %v772
    %v774 = vpop.f32.mrb[0].mxu0
    %v775 = vadd.f32 %v167, %v774
    %v776 = vpop.f32.mrb[0].mxu0
    %v777 = vadd.f32 %v171, %v776
    %778 = vmatprep.mubr.bf16.mxu0 0
    %779 = vmatmul.mubr.bf16.gmra.mrb[0].mxu0 %v332
    %v780 = vpop.f32.mrb[0].mxu0
    %v781 = vadd.f32 %v167, %v780
    %v782 = vpop.f32.mrb[0].mxu0
    %v783 = vadd.f32 %v171, %v782
    %v784 = vpop.f32.mrb[0].mxu0
    %v785 = vadd.f32 %v167, %v784
    %v786 = vpop.f32.mrb[0].mxu0
    %v787 = vadd.f32 %v171, %v786
    %788 = vmatprep.mubr.bf16.mxu0 0
    %789 = vmatmul.mubr.bf16.gmra.mrb[0].mxu0 %v333
    %v790 = vpop.f32.mrb[0].mxu0
    %v791 = vadd.f32 %v167, %v790
    %v792 = vpop.f32.mrb[0].mxu0
    %v793 = vadd.f32 %v171, %v792
    %v794 = vpop.f32.mrb[0].mxu0
    %v795 = vadd.f32 %v167, %v794
    %v796 = vpop.f32.mrb[0].mxu0
    %v797 = vadd.f32 %v171, %v796
    %798 = vdwg.mxu0
    %v799 = vmax.f32 %v481, 0.0
    %v800 = vmax.f32 %v483, 0.0
    %v801 = vmax.f32 %v485, 0.0
    %v802 = vmax.f32 %v487, 0.0
    %v803 = vmax.f32 %v491, 0.0
    %v804 = vmax.f32 %v493, 0.0
    %v805 = vmax.f32 %v495, 0.0
    %v806 = vmax.f32 %v497, 0.0
    %v807 = vmax.f32 %v501, 0.0
    %v808 = vmax.f32 %v503, 0.0
    %v809 = vmax.f32 %v505, 0.0
    %v810 = vmax.f32 %v507, 0.0
    %v811 = vmax.f32 %v511, 0.0
    %v812 = vmax.f32 %v513, 0.0
    %v813 = vmax.f32 %v515, 0.0
    %v814 = vmax.f32 %v517, 0.0
    %v815 = vmax.f32 %v521, 0.0
    %v816 = vmax.f32 %v523, 0.0
    %v817 = vmax.f32 %v525, 0.0
    %v818 = vmax.f32 %v527, 0.0
    %v819 = vmax.f32 %v531, 0.0
    %v820 = vmax.f32 %v533, 0.0
    %v821 = vmax.f32 %v535, 0.0
    %v822 = vmax.f32 %v537, 0.0
    %v823 = vmax.f32 %v541, 0.0
    %v824 = vmax.f32 %v543, 0.0
    %v825 = vmax.f32 %v545, 0.0
    %v826 = vmax.f32 %v547, 0.0
    %v827 = vmax.f32 %v551, 0.0
    %v828 = vmax.f32 %v553, 0.0
    %v829 = vmax.f32 %v555, 0.0
    %v830 = vmax.f32 %v557, 0.0
    %v831 = vmax.f32 %v561, 0.0
    %v832 = vmax.f32 %v563, 0.0
    %v833 = vmax.f32 %v565, 0.0
    %v834 = vmax.f32 %v567, 0.0
    %v835 = vmax.f32 %v571, 0.0
    %v836 = vmax.f32 %v573, 0.0
    %v837 = vmax.f32 %v575, 0.0
    %v838 = vmax.f32 %v577, 0.0
    %v839 = vmax.f32 %v581, 0.0
    %v840 = vmax.f32 %v583, 0.0
    %v841 = vmax.f32 %v585, 0.0
    %v842 = vmax.f32 %v587, 0.0
    %v843 = vmax.f32 %v591, 0.0
    %v844 = vmax.f32 %v593, 0.0
    %v845 = vmax.f32 %v595, 0.0
    %v846 = vmax.f32 %v597, 0.0
    %v847 = vmax.f32 %v601, 0.0
    %v848 = vmax.f32 %v603, 0.0
    %v849 = vmax.f32 %v605, 0.0
    %v850 = vmax.f32 %v607, 0.0
    %v851 = vmax.f32 %v611, 0.0
    %v852 = vmax.f32 %v613, 0.0
    %v853 = vmax.f32 %v615, 0.0
    %v854 = vmax.f32 %v617, 0.0
    %v855 = vmax.f32 %v621, 0.0
    %v856 = vmax.f32 %v623, 0.0
    %v857 = vmax.f32 %v625, 0.0
    %v858 = vmax.f32 %v627, 0.0
    %v859 = vmax.f32 %v631, 0.0
    %v860 = vmax.f32 %v633, 0.0
    %v861 = vmax.f32 %v635, 0.0
    %v862 = vmax.f32 %v637, 0.0
    %v863 = vmax.f32 %v641, 0.0
    %v864 = vmax.f32 %v643, 0.0
    %v865 = vmax.f32 %v645, 0.0
    %v866 = vmax.f32 %v647, 0.0
    %v867 = vmax.f32 %v651, 0.0
    %v868 = vmax.f32 %v653, 0.0
    %v869 = vmax.f32 %v655, 0.0
    %v870 = vmax.f32 %v657, 0.0
    %v871 = vmax.f32 %v661, 0.0
    %v872 = vmax.f32 %v663, 0.0
    %v873 = vmax.f32 %v665, 0.0
    %v874 = vmax.f32 %v667, 0.0
    %v875 = vmax.f32 %v671, 0.0
    %v876 = vmax.f32 %v673, 0.0
    %v877 = vmax.f32 %v675, 0.0
    %v878 = vmax.f32 %v677, 0.0
    %v879 = vmax.f32 %v681, 0.0
    %v880 = vmax.f32 %v683, 0.0
    %v881 = vmax.f32 %v685, 0.0
    %v882 = vmax.f32 %v687, 0.0
    %v883 = vmax.f32 %v691, 0.0
    %v884 = vmax.f32 %v693, 0.0
    %v885 = vmax.f32 %v695, 0.0
    %v886 = vmax.f32 %v697, 0.0
    %v887 = vmax.f32 %v701, 0.0
    %v888 = vmax.f32 %v703, 0.0
    %v889 = vmax.f32 %v705, 0.0
    %v890 = vmax.f32 %v707, 0.0
    %v891 = vmax.f32 %v711, 0.0
    %v892 = vmax.f32 %v713, 0.0
    %v893 = vmax.f32 %v715, 0.0
    %v894 = vmax.f32 %v717, 0.0
    %v895 = vmax.f32 %v721, 0.0
    %v896 = vmax.f32 %v723, 0.0
    %v897 = vmax.f32 %v725, 0.0
    %v898 = vmax.f32 %v727, 0.0
    %v899 = vmax.f32 %v731, 0.0
    %v900 = vmax.f32 %v733, 0.0
    %v901 = vmax.f32 %v735, 0.0
    %v902 = vmax.f32 %v737, 0.0
    %v903 = vmax.f32 %v741, 0.0
    %v904 = vmax.f32 %v743, 0.0
    %v905 = vmax.f32 %v745, 0.0
    %v906 = vmax.f32 %v747, 0.0
    %v907 = vmax.f32 %v751, 0.0
    %v908 = vmax.f32 %v753, 0.0
    %v909 = vmax.f32 %v755, 0.0
    %v910 = vmax.f32 %v757, 0.0
    %v911 = vmax.f32 %v761, 0.0
    %v912 = vmax.f32 %v763, 0.0
    %v913 = vmax.f32 %v765, 0.0
    %v914 = vmax.f32 %v767, 0.0
    %v915 = vmax.f32 %v771, 0.0
    %v916 = vmax.f32 %v773, 0.0
    %v917 = vmax.f32 %v775, 0.0
    %v918 = vmax.f32 %v777, 0.0
    %v919 = vmax.f32 %v781, 0.0
    %v920 = vmax.f32 %v783, 0.0
    %v921 = vmax.f32 %v785, 0.0
    %v922 = vmax.f32 %v787, 0.0
    %v923 = vmax.f32 %v791, 0.0
    %v924 = vmax.f32 %v793, 0.0
    %v925 = vmax.f32 %v795, 0.0
    %v926 = vmax.f32 %v797, 0.0
    %v927 = vpack.c.bf16 %v801, %v799
    %v928 = vpack.c.bf16 %v802, %v800
    %v929 = vpack.c.bf16 %v805, %v803
    %v930 = vpack.c.bf16 %v806, %v804
    %v931 = vpack.c.bf16 %v809, %v807
    %v932 = vpack.c.bf16 %v810, %v808
    %v933 = vpack.c.bf16 %v813, %v811
    %v934 = vpack.c.bf16 %v814, %v812
    %v935 = vpack.c.bf16 %v817, %v815
    %v936 = vpack.c.bf16 %v818, %v816
    %v937 = vpack.c.bf16 %v821, %v819
    %v938 = vpack.c.bf16 %v822, %v820
    %v939 = vpack.c.bf16 %v825, %v823
    %v940 = vpack.c.bf16 %v826, %v824
    %v941 = vpack.c.bf16 %v829, %v827
    %v942 = vpack.c.bf16 %v830, %v828
    %v943 = vpack.c.bf16 %v833, %v831
    %v944 = vpack.c.bf16 %v834, %v832
    %v945 = vpack.c.bf16 %v837, %v835
    %v946 = vpack.c.bf16 %v838, %v836
    %v947 = vpack.c.bf16 %v841, %v839
    %v948 = vpack.c.bf16 %v842, %v840
    %v949 = vpack.c.bf16 %v845, %v843
    %v950 = vpack.c.bf16 %v846, %v844
    %v951 = vpack.c.bf16 %v849, %v847
    %v952 = vpack.c.bf16 %v850, %v848
    %v953 = vpack.c.bf16 %v853, %v851
    %v954 = vpack.c.bf16 %v854, %v852
    %v955 = vpack.c.bf16 %v857, %v855
    %v956 = vpack.c.bf16 %v858, %v856
    %v957 = vpack.c.bf16 %v861, %v859
    %v958 = vpack.c.bf16 %v862, %v860
    %v959 = vpack.c.bf16 %v865, %v863
    %v960 = vpack.c.bf16 %v866, %v864
    %v961 = vpack.c.bf16 %v869, %v867
    %v962 = vpack.c.bf16 %v870, %v868
    %v963 = vpack.c.bf16 %v873, %v871
    %v964 = vpack.c.bf16 %v874, %v872
    %v965 = vpack.c.bf16 %v877, %v875
    %v966 = vpack.c.bf16 %v878, %v876
    %v967 = vpack.c.bf16 %v881, %v879
    %v968 = vpack.c.bf16 %v882, %v880
    %v969 = vpack.c.bf16 %v885, %v883
    %v970 = vpack.c.bf16 %v886, %v884
    %v971 = vpack.c.bf16 %v889, %v887
    %v972 = vpack.c.bf16 %v890, %v888
    %v973 = vpack.c.bf16 %v893, %v891
    %v974 = vpack.c.bf16 %v894, %v892
    %v975 = vpack.c.bf16 %v897, %v895
    %v976 = vpack.c.bf16 %v898, %v896
    %v977 = vpack.c.bf16 %v901, %v899
    %v978 = vpack.c.bf16 %v902, %v900
    %v979 = vpack.c.bf16 %v905, %v903
    %v980 = vpack.c.bf16 %v906, %v904
    %v981 = vpack.c.bf16 %v909, %v907
    %v982 = vpack.c.bf16 %v910, %v908
    %v983 = vpack.c.bf16 %v913, %v911
    %v984 = vpack.c.bf16 %v914, %v912
    %v985 = vpack.c.bf16 %v917, %v915
    %v986 = vpack.c.bf16 %v918, %v916
    %v987 = vpack.c.bf16 %v921, %v919
    %v988 = vpack.c.bf16 %v922, %v920
    %v989 = vpack.c.bf16 %v925, %v923
    %v990 = vpack.c.bf16 %v926, %v924
    %v991 = vld [vmem:[#allocation7] sm:$0xff]
    %v992 = vld [vmem:[#allocation7 + $0x8] sm:$0xff]
    %v993 = vld [vmem:[#allocation7 + $0x10] sm:$0xff]
    %v994 = vld [vmem:[#allocation7 + $0x18] sm:$0xff]
    %v995 = vld [vmem:[#allocation7 + $0x20] sm:$0xff]
    %v996 = vld [vmem:[#allocation7 + $0x28] sm:$0xff]
    %v997 = vld [vmem:[#allocation7 + $0x30] sm:$0xff]
    %v998 = vld [vmem:[#allocation7 + $0x38] sm:$0xff]
    %v999 = vld [vmem:[#allocation7 + $0x40] sm:$0xff]
    %v1000 = vld [vmem:[#allocation7 + $0x48] sm:$0xff]
    %v1001 = vld [vmem:[#allocation7 + $0x50] sm:$0xff]
    %v1002 = vld [vmem:[#allocation7 + $0x58] sm:$0xff]
    %v1003 = vld [vmem:[#allocation7 + $0x60] sm:$0xff]
    %v1004 = vld [vmem:[#allocation7 + $0x68] sm:$0xff]
    %v1005 = vld [vmem:[#allocation7 + $0x70] sm:$0xff]
    %v1006 = vld [vmem:[#allocation7 + $0x78] sm:$0xff]
    %v1007 = vld [vmem:[#allocation7 + $0x80] sm:$0xff]
    %v1008 = vld [vmem:[#allocation7 + $0x88] sm:$0xff]
    %v1009 = vld [vmem:[#allocation7 + $0x90] sm:$0xff]
    %v1010 = vld [vmem:[#allocation7 + $0x98] sm:$0xff]
    %v1011 = vld [vmem:[#allocation7 + $0xa0] sm:$0xff]
    %v1012 = vld [vmem:[#allocation7 + $0xa8] sm:$0xff]
    %v1013 = vld [vmem:[#allocation7 + $0xb0] sm:$0xff]
    %v1014 = vld [vmem:[#allocation7 + $0xb8] sm:$0xff]
    %v1015 = vld [vmem:[#allocation7 + $0xc0] sm:$0xff]
    %v1016 = vld [vmem:[#allocation7 + $0xc8] sm:$0xff]
    %v1017 = vld [vmem:[#allocation7 + $0xd0] sm:$0xff]
    %v1018 = vld [vmem:[#allocation7 + $0xd8] sm:$0xff]
    %v1019 = vld [vmem:[#allocation7 + $0xe0] sm:$0xff]
    %v1020 = vld [vmem:[#allocation7 + $0xe8] sm:$0xff]
    %v1021 = vld [vmem:[#allocation7 + $0xf0] sm:$0xff]
    %v1022 = vld [vmem:[#allocation7 + $0xf8] sm:$0xff]
    %v1024 = vlaneseq
    %v1025 = vshrl.u32 %v1024, 7
    %v1026 = vsub.s32 0, %v1025
    %v1027 = vrot.slane %v79, %v1026
    %v1028 = vlaneseq
    %v1029 = vshrl.u32 %v1028, 7
    %v1030 = vsub.s32 1, %v1029
    %v1031 = vrot.slane %v79, %v1030
    %v1066 = vunpack.c.l.b16 %v991
    %v1067 = vunpack.c.h.b16 %v991
    %v1068 = vunpack.c.l.b16 %v992
    %v1069 = vunpack.c.h.b16 %v992
    %v1070 = vunpack.c.l.b16 %v993
    %v1071 = vunpack.c.h.b16 %v993
    %v1072 = vunpack.c.l.b16 %v994
    %v1073 = vunpack.c.h.b16 %v994
    %v1074 = vunpack.c.l.b16 %v995
    %v1075 = vunpack.c.h.b16 %v995
    %v1076 = vunpack.c.l.b16 %v996
    %v1077 = vunpack.c.h.b16 %v996
    %v1078 = vunpack.c.l.b16 %v997
    %v1079 = vunpack.c.h.b16 %v997
    %v1080 = vunpack.c.l.b16 %v998
    %v1081 = vunpack.c.h.b16 %v998
    %v1082 = vunpack.c.l.b16 %v999
    %v1083 = vunpack.c.h.b16 %v999
    %v1084 = vunpack.c.l.b16 %v1000
    %v1085 = vunpack.c.h.b16 %v1000
    %v1086 = vunpack.c.l.b16 %v1001
    %v1087 = vunpack.c.h.b16 %v1001
    %v1088 = vunpack.c.l.b16 %v1002
    %v1089 = vunpack.c.h.b16 %v1002
    %v1090 = vunpack.c.l.b16 %v1003
    %v1091 = vunpack.c.h.b16 %v1003
    %v1092 = vunpack.c.l.b16 %v1004
    %v1093 = vunpack.c.h.b16 %v1004
    %v1094 = vunpack.c.l.b16 %v1005
    %v1095 = vunpack.c.h.b16 %v1005
    %v1096 = vunpack.c.l.b16 %v1006
    %v1097 = vunpack.c.h.b16 %v1006
    %v1098 = vunpack.c.l.b16 %v1007
    %v1099 = vunpack.c.h.b16 %v1007
    %v1100 = vunpack.c.l.b16 %v1008
    %v1101 = vunpack.c.h.b16 %v1008
    %v1102 = vunpack.c.l.b16 %v1009
    %v1103 = vunpack.c.h.b16 %v1009
    %v1104 = vunpack.c.l.b16 %v1010
    %v1105 = vunpack.c.h.b16 %v1010
    %v1106 = vunpack.c.l.b16 %v1011
    %v1107 = vunpack.c.h.b16 %v1011
    %v1108 = vunpack.c.l.b16 %v1012
    %v1109 = vunpack.c.h.b16 %v1012
    %v1110 = vunpack.c.l.b16 %v1013
    %v1111 = vunpack.c.h.b16 %v1013
    %v1112 = vunpack.c.l.b16 %v1014
    %v1113 = vunpack.c.h.b16 %v1014
    %v1114 = vunpack.c.l.b16 %v1015
    %v1115 = vunpack.c.h.b16 %v1015
    %v1116 = vunpack.c.l.b16 %v1016
    %v1117 = vunpack.c.h.b16 %v1016
    %v1118 = vunpack.c.l.b16 %v1017
    %v1119 = vunpack.c.h.b16 %v1017
    %v1120 = vunpack.c.l.b16 %v1018
    %v1121 = vunpack.c.h.b16 %v1018
    %v1122 = vunpack.c.l.b16 %v1019
    %v1123 = vunpack.c.h.b16 %v1019
    %v1124 = vunpack.c.l.b16 %v1020
    %v1125 = vunpack.c.h.b16 %v1020
    %v1126 = vunpack.c.l.b16 %v1021
    %v1127 = vunpack.c.h.b16 %v1021
    %v1128 = vunpack.c.l.b16 %v1022
    %v1129 = vunpack.c.h.b16 %v1022
    %v1130 = vpack.c.b16 %v1068, %v1066
    %v1131 = vpack.c.b16 %v1069, %v1067
    %v1132 = vpack.c.b16 %v1072, %v1070
    %v1133 = vpack.c.b16 %v1073, %v1071
    %v1134 = vpack.c.b16 %v1076, %v1074
    %v1135 = vpack.c.b16 %v1077, %v1075
    %v1136 = vpack.c.b16 %v1080, %v1078
    %v1137 = vpack.c.b16 %v1081, %v1079
    %v1138 = vpack.c.b16 %v1084, %v1082
    %v1139 = vpack.c.b16 %v1085, %v1083
    %v1140 = vpack.c.b16 %v1088, %v1086
    %v1141 = vpack.c.b16 %v1089, %v1087
    %v1142 = vpack.c.b16 %v1092, %v1090
    %v1143 = vpack.c.b16 %v1093, %v1091
    %v1144 = vpack.c.b16 %v1096, %v1094
    %v1145 = vpack.c.b16 %v1097, %v1095
    %v1146 = vpack.c.b16 %v1100, %v1098
    %v1147 = vpack.c.b16 %v1101, %v1099
    %v1148 = vpack.c.b16 %v1104, %v1102
    %v1149 = vpack.c.b16 %v1105, %v1103
    %v1150 = vpack.c.b16 %v1108, %v1106
    %v1151 = vpack.c.b16 %v1109, %v1107
    %v1152 = vpack.c.b16 %v1112, %v1110
    %v1153 = vpack.c.b16 %v1113, %v1111
    %v1154 = vpack.c.b16 %v1116, %v1114
    %v1155 = vpack.c.b16 %v1117, %v1115
    %v1156 = vpack.c.b16 %v1120, %v1118
    %v1157 = vpack.c.b16 %v1121, %v1119
    %v1158 = vpack.c.b16 %v1124, %v1122
    %v1159 = vpack.c.b16 %v1125, %v1123
    %v1160 = vpack.c.b16 %v1128, %v1126
    %v1161 = vpack.c.b16 %v1129, %v1127
    %1194 = vmatprep.subr.bf16.mxu0 %v1131
    %1195 = vmatpush1.bf16.msra.mxu0 %v1130
    %1196 = vmatprep.subr.bf16.mxu0 %v1133
    %1197 = vmatpush1.bf16.msra.mxu0 %v1132
    %1198 = vmatprep.subr.bf16.mxu0 %v1135
    %1199 = vmatpush1.bf16.msra.mxu0 %v1134
    %1200 = vmatprep.subr.bf16.mxu0 %v1137
    %1201 = vmatpush1.bf16.msra.mxu0 %v1136
    %1202 = vmatprep.subr.bf16.mxu0 %v1139
    %1203 = vmatpush1.bf16.msra.mxu0 %v1138
    %1204 = vmatprep.subr.bf16.mxu0 %v1141
    %1205 = vmatpush1.bf16.msra.mxu0 %v1140
    %1206 = vmatprep.subr.bf16.mxu0 %v1143
    %1207 = vmatpush1.bf16.msra.mxu0 %v1142
    %1208 = vmatprep.subr.bf16.mxu0 %v1145
    %1209 = vmatpush1.bf16.msra.mxu0 %v1144
    %1210 = vmatprep.subr.bf16.mxu0 %v1147
    %1211 = vmatpush1.bf16.msra.mxu0 %v1146
    %1212 = vmatprep.subr.bf16.mxu0 %v1149
    %1213 = vmatpush1.bf16.msra.mxu0 %v1148
    %1214 = vmatprep.subr.bf16.mxu0 %v1151
    %1215 = vmatpush1.bf16.msra.mxu0 %v1150
    %1216 = vmatprep.subr.bf16.mxu0 %v1153
    %1217 = vmatpush1.bf16.msra.mxu0 %v1152
    %1218 = vmatprep.subr.bf16.mxu0 %v1155
    %1219 = vmatpush1.bf16.msra.mxu0 %v1154
    %1220 = vmatprep.subr.bf16.mxu0 %v1157
    %1221 = vmatpush1.bf16.msra.mxu0 %v1156
    %1222 = vmatprep.subr.bf16.mxu0 %v1159
    %1223 = vmatpush1.bf16.msra.mxu0 %v1158
    %1224 = vmatprep.subr.bf16.mxu0 %v1161
    %1225 = vmatpush1.bf16.msra.mxu0 %v1160
    %1226 = vmatprep.mubr.bf16.mxu0 %v928
    %1227 = vmatmul.mubr.bf16.gmra.mrb[0].mxu0 %v927
    %v1228 = vpop.f32.mrb[0].mxu0
    %v1229 = vadd.f32 %v1027, %v1228
    %v1230 = vpop.f32.mrb[0].mxu0
    %v1231 = vadd.f32 %v1031, %v1230
    %v1232 = vpop.f32.mrb[0].mxu0
    %v1233 = vadd.f32 %v1027, %v1232
    %v1234 = vpop.f32.mrb[0].mxu0
    %v1235 = vadd.f32 %v1031, %v1234
    %1236 = vmatprep.mubr.bf16.mxu0 %v930
    %1237 = vmatmul.mubr.bf16.gmra.mrb[0].mxu0 %v929
    %v1238 = vpop.f32.mrb[0].mxu0
    %v1239 = vadd.f32 %v1027, %v1238
    %v1240 = vpop.f32.mrb[0].mxu0
    %v1241 = vadd.f32 %v1031, %v1240
    %v1242 = vpop.f32.mrb[0].mxu0
    %v1243 = vadd.f32 %v1027, %v1242
    %v1244 = vpop.f32.mrb[0].mxu0
    %v1245 = vadd.f32 %v1031, %v1244
    %1246 = vmatprep.mubr.bf16.mxu0 %v932
    %1247 = vmatmul.mubr.bf16.gmra.mrb[0].mxu0 %v931
    %v1248 = vpop.f32.mrb[0].mxu0
    %v1249 = vadd.f32 %v1027, %v1248
    %v1250 = vpop.f32.mrb[0].mxu0
    %v1251 = vadd.f32 %v1031, %v1250
    %v1252 = vpop.f32.mrb[0].mxu0
    %v1253 = vadd.f32 %v1027, %v1252
    %v1254 = vpop.f32.mrb[0].mxu0
    %v1255 = vadd.f32 %v1031, %v1254
    %1256 = vmatprep.mubr.bf16.mxu0 %v934
    %1257 = vmatmul.mubr.bf16.gmra.mrb[0].mxu0 %v933
    %v1258 = vpop.f32.mrb[0].mxu0
    %v1259 = vadd.f32 %v1027, %v1258
    %v1260 = vpop.f32.mrb[0].mxu0
    %v1261 = vadd.f32 %v1031, %v1260
    %v1262 = vpop.f32.mrb[0].mxu0
    %v1263 = vadd.f32 %v1027, %v1262
    %v1264 = vpop.f32.mrb[0].mxu0
    %v1265 = vadd.f32 %v1031, %v1264
    %1266 = vmatprep.mubr.bf16.mxu0 %v936
    %1267 = vmatmul.mubr.bf16.gmra.mrb[0].mxu0 %v935
    %v1268 = vpop.f32.mrb[0].mxu0
    %v1269 = vadd.f32 %v1027, %v1268
    %v1270 = vpop.f32.mrb[0].mxu0
    %v1271 = vadd.f32 %v1031, %v1270
    %v1272 = vpop.f32.mrb[0].mxu0
    %v1273 = vadd.f32 %v1027, %v1272
    %v1274 = vpop.f32.mrb[0].mxu0
    %v1275 = vadd.f32 %v1031, %v1274
    %1276 = vmatprep.mubr.bf16.mxu0 %v938
    %1277 = vmatmul.mubr.bf16.gmra.mrb[0].mxu0 %v937
    %v1278 = vpop.f32.mrb[0].mxu0
    %v1279 = vadd.f32 %v1027, %v1278
    %v1280 = vpop.f32.mrb[0].mxu0
    %v1281 = vadd.f32 %v1031, %v1280
    %v1282 = vpop.f32.mrb[0].mxu0
    %v1283 = vadd.f32 %v1027, %v1282
    %v1284 = vpop.f32.mrb[0].mxu0
    %v1285 = vadd.f32 %v1031, %v1284
    %1286 = vmatprep.mubr.bf16.mxu0 %v940
    %1287 = vmatmul.mubr.bf16.gmra.mrb[0].mxu0 %v939
    %v1288 = vpop.f32.mrb[0].mxu0
    %v1289 = vadd.f32 %v1027, %v1288
    %v1290 = vpop.f32.mrb[0].mxu0
    %v1291 = vadd.f32 %v1031, %v1290
    %v1292 = vpop.f32.mrb[0].mxu0
    %v1293 = vadd.f32 %v1027, %v1292
    %v1294 = vpop.f32.mrb[0].mxu0
    %v1295 = vadd.f32 %v1031, %v1294
    %1296 = vmatprep.mubr.bf16.mxu0 %v942
    %1297 = vmatmul.mubr.bf16.gmra.mrb[0].mxu0 %v941
    %v1298 = vpop.f32.mrb[0].mxu0
    %v1299 = vadd.f32 %v1027, %v1298
    %v1300 = vpop.f32.mrb[0].mxu0
    %v1301 = vadd.f32 %v1031, %v1300
    %v1302 = vpop.f32.mrb[0].mxu0
    %v1303 = vadd.f32 %v1027, %v1302
    %v1304 = vpop.f32.mrb[0].mxu0
    %v1305 = vadd.f32 %v1031, %v1304
    %1306 = vmatprep.mubr.bf16.mxu0 %v944
    %1307 = vmatmul.mubr.bf16.gmra.mrb[0].mxu0 %v943
    %v1308 = vpop.f32.mrb[0].mxu0
    %v1309 = vadd.f32 %v1027, %v1308
    %v1310 = vpop.f32.mrb[0].mxu0
    %v1311 = vadd.f32 %v1031, %v1310
    %v1312 = vpop.f32.mrb[0].mxu0
    %v1313 = vadd.f32 %v1027, %v1312
    %v1314 = vpop.f32.mrb[0].mxu0
    %v1315 = vadd.f32 %v1031, %v1314
    %1316 = vmatprep.mubr.bf16.mxu0 %v946
    %1317 = vmatmul.mubr.bf16.gmra.mrb[0].mxu0 %v945
    %v1318 = vpop.f32.mrb[0].mxu0
    %v1319 = vadd.f32 %v1027, %v1318
    %v1320 = vpop.f32.mrb[0].mxu0
    %v1321 = vadd.f32 %v1031, %v1320
    %v1322 = vpop.f32.mrb[0].mxu0
    %v1323 = vadd.f32 %v1027, %v1322
    %v1324 = vpop.f32.mrb[0].mxu0
    %v1325 = vadd.f32 %v1031, %v1324
    %1326 = vmatprep.mubr.bf16.mxu0 %v948
    %1327 = vmatmul.mubr.bf16.gmra.mrb[0].mxu0 %v947
    %v1328 = vpop.f32.mrb[0].mxu0
    %v1329 = vadd.f32 %v1027, %v1328
    %v1330 = vpop.f32.mrb[0].mxu0
    %v1331 = vadd.f32 %v1031, %v1330
    %v1332 = vpop.f32.mrb[0].mxu0
    %v1333 = vadd.f32 %v1027, %v1332
    %v1334 = vpop.f32.mrb[0].mxu0
    %v1335 = vadd.f32 %v1031, %v1334
    %1336 = vmatprep.mubr.bf16.mxu0 %v950
    %1337 = vmatmul.mubr.bf16.gmra.mrb[0].mxu0 %v949
    %v1338 = vpop.f32.mrb[0].mxu0
    %v1339 = vadd.f32 %v1027, %v1338
    %v1340 = vpop.f32.mrb[0].mxu0
    %v1341 = vadd.f32 %v1031, %v1340
    %v1342 = vpop.f32.mrb[0].mxu0
    %v1343 = vadd.f32 %v1027, %v1342
    %v1344 = vpop.f32.mrb[0].mxu0
    %v1345 = vadd.f32 %v1031, %v1344
    %1346 = vmatprep.mubr.bf16.mxu0 %v952
    %1347 = vmatmul.mubr.bf16.gmra.mrb[0].mxu0 %v951
    %v1348 = vpop.f32.mrb[0].mxu0
    %v1349 = vadd.f32 %v1027, %v1348
    %v1350 = vpop.f32.mrb[0].mxu0
    %v1351 = vadd.f32 %v1031, %v1350
    %v1352 = vpop.f32.mrb[0].mxu0
    %v1353 = vadd.f32 %v1027, %v1352
    %v1354 = vpop.f32.mrb[0].mxu0
    %v1355 = vadd.f32 %v1031, %v1354
    %1356 = vmatprep.mubr.bf16.mxu0 %v954
    %1357 = vmatmul.mubr.bf16.gmra.mrb[0].mxu0 %v953
    %v1358 = vpop.f32.mrb[0].mxu0
    %v1359 = vadd.f32 %v1027, %v1358
    %v1360 = vpop.f32.mrb[0].mxu0
    %v1361 = vadd.f32 %v1031, %v1360
    %v1362 = vpop.f32.mrb[0].mxu0
    %v1363 = vadd.f32 %v1027, %v1362
    %v1364 = vpop.f32.mrb[0].mxu0
    %v1365 = vadd.f32 %v1031, %v1364
    %1366 = vmatprep.mubr.bf16.mxu0 %v956
    %1367 = vmatmul.mubr.bf16.gmra.mrb[0].mxu0 %v955
    %v1368 = vpop.f32.mrb[0].mxu0
    %v1369 = vadd.f32 %v1027, %v1368
    %v1370 = vpop.f32.mrb[0].mxu0
    %v1371 = vadd.f32 %v1031, %v1370
    %v1372 = vpop.f32.mrb[0].mxu0
    %v1373 = vadd.f32 %v1027, %v1372
    %v1374 = vpop.f32.mrb[0].mxu0
    %v1375 = vadd.f32 %v1031, %v1374
    %1376 = vmatprep.mubr.bf16.mxu0 %v958
    %1377 = vmatmul.mubr.bf16.gmra.mrb[0].mxu0 %v957
    %v1378 = vpop.f32.mrb[0].mxu0
    %v1379 = vadd.f32 %v1027, %v1378
    %v1380 = vpop.f32.mrb[0].mxu0
    %v1381 = vadd.f32 %v1031, %v1380
    %v1382 = vpop.f32.mrb[0].mxu0
    %v1383 = vadd.f32 %v1027, %v1382
    %v1384 = vpop.f32.mrb[0].mxu0
    %v1385 = vadd.f32 %v1031, %v1384
    %1386 = vmatprep.mubr.bf16.mxu0 %v960
    %1387 = vmatmul.mubr.bf16.gmra.mrb[0].mxu0 %v959
    %v1388 = vpop.f32.mrb[0].mxu0
    %v1389 = vadd.f32 %v1027, %v1388
    %v1390 = vpop.f32.mrb[0].mxu0
    %v1391 = vadd.f32 %v1031, %v1390
    %v1392 = vpop.f32.mrb[0].mxu0
    %v1393 = vadd.f32 %v1027, %v1392
    %v1394 = vpop.f32.mrb[0].mxu0
    %v1395 = vadd.f32 %v1031, %v1394
    %1396 = vmatprep.mubr.bf16.mxu0 %v962
    %1397 = vmatmul.mubr.bf16.gmra.mrb[0].mxu0 %v961
    %v1398 = vpop.f32.mrb[0].mxu0
    %v1399 = vadd.f32 %v1027, %v1398
    %v1400 = vpop.f32.mrb[0].mxu0
    %v1401 = vadd.f32 %v1031, %v1400
    %v1402 = vpop.f32.mrb[0].mxu0
    %v1403 = vadd.f32 %v1027, %v1402
    %v1404 = vpop.f32.mrb[0].mxu0
    %v1405 = vadd.f32 %v1031, %v1404
    %1406 = vmatprep.mubr.bf16.mxu0 %v964
    %1407 = vmatmul.mubr.bf16.gmra.mrb[0].mxu0 %v963
    %v1408 = vpop.f32.mrb[0].mxu0
    %v1409 = vadd.f32 %v1027, %v1408
    %v1410 = vpop.f32.mrb[0].mxu0
    %v1411 = vadd.f32 %v1031, %v1410
    %v1412 = vpop.f32.mrb[0].mxu0
    %v1413 = vadd.f32 %v1027, %v1412
    %v1414 = vpop.f32.mrb[0].mxu0
    %v1415 = vadd.f32 %v1031, %v1414
    %1416 = vmatprep.mubr.bf16.mxu0 %v966
    %1417 = vmatmul.mubr.bf16.gmra.mrb[0].mxu0 %v965
    %v1418 = vpop.f32.mrb[0].mxu0
    %v1419 = vadd.f32 %v1027, %v1418
    %v1420 = vpop.f32.mrb[0].mxu0
    %v1421 = vadd.f32 %v1031, %v1420
    %v1422 = vpop.f32.mrb[0].mxu0
    %v1423 = vadd.f32 %v1027, %v1422
    %v1424 = vpop.f32.mrb[0].mxu0
    %v1425 = vadd.f32 %v1031, %v1424
    %1426 = vmatprep.mubr.bf16.mxu0 %v968
    %1427 = vmatmul.mubr.bf16.gmra.mrb[0].mxu0 %v967
    %v1428 = vpop.f32.mrb[0].mxu0
    %v1429 = vadd.f32 %v1027, %v1428
    %v1430 = vpop.f32.mrb[0].mxu0
    %v1431 = vadd.f32 %v1031, %v1430
    %v1432 = vpop.f32.mrb[0].mxu0
    %v1433 = vadd.f32 %v1027, %v1432
    %v1434 = vpop.f32.mrb[0].mxu0
    %v1435 = vadd.f32 %v1031, %v1434
    %1436 = vmatprep.mubr.bf16.mxu0 %v970
    %1437 = vmatmul.mubr.bf16.gmra.mrb[0].mxu0 %v969
    %v1438 = vpop.f32.mrb[0].mxu0
    %v1439 = vadd.f32 %v1027, %v1438
    %v1440 = vpop.f32.mrb[0].mxu0
    %v1441 = vadd.f32 %v1031, %v1440
    %v1442 = vpop.f32.mrb[0].mxu0
    %v1443 = vadd.f32 %v1027, %v1442
    %v1444 = vpop.f32.mrb[0].mxu0
    %v1445 = vadd.f32 %v1031, %v1444
    %1446 = vmatprep.mubr.bf16.mxu0 %v972
    %1447 = vmatmul.mubr.bf16.gmra.mrb[0].mxu0 %v971
    %v1448 = vpop.f32.mrb[0].mxu0
    %v1449 = vadd.f32 %v1027, %v1448
    %v1450 = vpop.f32.mrb[0].mxu0
    %v1451 = vadd.f32 %v1031, %v1450
    %v1452 = vpop.f32.mrb[0].mxu0
    %v1453 = vadd.f32 %v1027, %v1452
    %v1454 = vpop.f32.mrb[0].mxu0
    %v1455 = vadd.f32 %v1031, %v1454
    %1456 = vmatprep.mubr.bf16.mxu0 %v974
    %1457 = vmatmul.mubr.bf16.gmra.mrb[0].mxu0 %v973
    %v1458 = vpop.f32.mrb[0].mxu0
    %v1459 = vadd.f32 %v1027, %v1458
    %v1460 = vpop.f32.mrb[0].mxu0
    %v1461 = vadd.f32 %v1031, %v1460
    %v1462 = vpop.f32.mrb[0].mxu0
    %v1463 = vadd.f32 %v1027, %v1462
    %v1464 = vpop.f32.mrb[0].mxu0
    %v1465 = vadd.f32 %v1031, %v1464
    %1466 = vmatprep.mubr.bf16.mxu0 %v976
    %1467 = vmatmul.mubr.bf16.gmra.mrb[0].mxu0 %v975
    %v1468 = vpop.f32.mrb[0].mxu0
    %v1469 = vadd.f32 %v1027, %v1468
    %v1470 = vpop.f32.mrb[0].mxu0
    %v1471 = vadd.f32 %v1031, %v1470
    %v1472 = vpop.f32.mrb[0].mxu0
    %v1473 = vadd.f32 %v1027, %v1472
    %v1474 = vpop.f32.mrb[0].mxu0
    %v1475 = vadd.f32 %v1031, %v1474
    %1476 = vmatprep.mubr.bf16.mxu0 %v978
    %1477 = vmatmul.mubr.bf16.gmra.mrb[0].mxu0 %v977
    %v1478 = vpop.f32.mrb[0].mxu0
    %v1479 = vadd.f32 %v1027, %v1478
    %v1480 = vpop.f32.mrb[0].mxu0
    %v1481 = vadd.f32 %v1031, %v1480
    %v1482 = vpop.f32.mrb[0].mxu0
    %v1483 = vadd.f32 %v1027, %v1482
    %v1484 = vpop.f32.mrb[0].mxu0
    %v1485 = vadd.f32 %v1031, %v1484
    %1486 = vmatprep.mubr.bf16.mxu0 %v980
    %1487 = vmatmul.mubr.bf16.gmra.mrb[0].mxu0 %v979
    %v1488 = vpop.f32.mrb[0].mxu0
    %v1489 = vadd.f32 %v1027, %v1488
    %v1490 = vpop.f32.mrb[0].mxu0
    %v1491 = vadd.f32 %v1031, %v1490
    %v1492 = vpop.f32.mrb[0].mxu0
    %v1493 = vadd.f32 %v1027, %v1492
    %v1494 = vpop.f32.mrb[0].mxu0
    %v1495 = vadd.f32 %v1031, %v1494
    %1496 = vmatprep.mubr.bf16.mxu0 %v982
    %1497 = vmatmul.mubr.bf16.gmra.mrb[0].mxu0 %v981
    %v1498 = vpop.f32.mrb[0].mxu0
    %v1499 = vadd.f32 %v1027, %v1498
    %v1500 = vpop.f32.mrb[0].mxu0
    %v1501 = vadd.f32 %v1031, %v1500
    %v1502 = vpop.f32.mrb[0].mxu0
    %v1503 = vadd.f32 %v1027, %v1502
    %v1504 = vpop.f32.mrb[0].mxu0
    %v1505 = vadd.f32 %v1031, %v1504
    %1506 = vmatprep.mubr.bf16.mxu0 %v984
    %1507 = vmatmul.mubr.bf16.gmra.mrb[0].mxu0 %v983
    %v1508 = vpop.f32.mrb[0].mxu0
    %v1509 = vadd.f32 %v1027, %v1508
    %v1510 = vpop.f32.mrb[0].mxu0
    %v1511 = vadd.f32 %v1031, %v1510
    %v1512 = vpop.f32.mrb[0].mxu0
    %v1513 = vadd.f32 %v1027, %v1512
    %v1514 = vpop.f32.mrb[0].mxu0
    %v1515 = vadd.f32 %v1031, %v1514
    %1516 = vmatprep.mubr.bf16.mxu0 %v986
    %1517 = vmatmul.mubr.bf16.gmra.mrb[0].mxu0 %v985
    %v1518 = vpop.f32.mrb[0].mxu0
    %v1519 = vadd.f32 %v1027, %v1518
    %v1520 = vpop.f32.mrb[0].mxu0
    %v1521 = vadd.f32 %v1031, %v1520
    %v1522 = vpop.f32.mrb[0].mxu0
    %v1523 = vadd.f32 %v1027, %v1522
    %v1524 = vpop.f32.mrb[0].mxu0
    %v1525 = vadd.f32 %v1031, %v1524
    %1526 = vmatprep.mubr.bf16.mxu0 %v988
    %1527 = vmatmul.mubr.bf16.gmra.mrb[0].mxu0 %v987
    %v1528 = vpop.f32.mrb[0].mxu0
    %v1529 = vadd.f32 %v1027, %v1528
    %v1530 = vpop.f32.mrb[0].mxu0
    %v1531 = vadd.f32 %v1031, %v1530
    %v1532 = vpop.f32.mrb[0].mxu0
    %v1533 = vadd.f32 %v1027, %v1532
    %v1534 = vpop.f32.mrb[0].mxu0
    %v1535 = vadd.f32 %v1031, %v1534
    %1536 = vmatprep.mubr.bf16.mxu0 %v990
    %1537 = vmatmul.mubr.bf16.gmra.mrb[0].mxu0 %v989
    %v1538 = vpop.f32.mrb[0].mxu0
    %v1539 = vadd.f32 %v1027, %v1538
    %v1540 = vpop.f32.mrb[0].mxu0
    %v1541 = vadd.f32 %v1031, %v1540
    %v1542 = vpop.f32.mrb[0].mxu0
    %v1543 = vadd.f32 %v1027, %v1542
    %v1544 = vpop.f32.mrb[0].mxu0
    %v1545 = vadd.f32 %v1031, %v1544
    %1546 = vdwg.mxu0
    %v1547 = vmax.f32 %v1229, 0.0
    %v1548 = vmax.f32 %v1231, 0.0
    %v1549 = vmax.f32 %v1233, 0.0
    %v1550 = vmax.f32 %v1235, 0.0
    %v1551 = vmax.f32 %v1239, 0.0
    %v1552 = vmax.f32 %v1241, 0.0
    %v1553 = vmax.f32 %v1243, 0.0
    %v1554 = vmax.f32 %v1245, 0.0
    %v1555 = vmax.f32 %v1249, 0.0
    %v1556 = vmax.f32 %v1251, 0.0
    %v1557 = vmax.f32 %v1253, 0.0
    %v1558 = vmax.f32 %v1255, 0.0
    %v1559 = vmax.f32 %v1259, 0.0
    %v1560 = vmax.f32 %v1261, 0.0
    %v1561 = vmax.f32 %v1263, 0.0
    %v1562 = vmax.f32 %v1265, 0.0
    %v1563 = vmax.f32 %v1269, 0.0
    %v1564 = vmax.f32 %v1271, 0.0
    %v1565 = vmax.f32 %v1273, 0.0
    %v1566 = vmax.f32 %v1275, 0.0
    %v1567 = vmax.f32 %v1279, 0.0
    %v1568 = vmax.f32 %v1281, 0.0
    %v1569 = vmax.f32 %v1283, 0.0
    %v1570 = vmax.f32 %v1285, 0.0
    %v1571 = vmax.f32 %v1289, 0.0
    %v1572 = vmax.f32 %v1291, 0.0
    %v1573 = vmax.f32 %v1293, 0.0
    %v1574 = vmax.f32 %v1295, 0.0
    %v1575 = vmax.f32 %v1299, 0.0
    %v1576 = vmax.f32 %v1301, 0.0
    %v1577 = vmax.f32 %v1303, 0.0
    %v1578 = vmax.f32 %v1305, 0.0
    %v1579 = vmax.f32 %v1309, 0.0
    %v1580 = vmax.f32 %v1311, 0.0
    %v1581 = vmax.f32 %v1313, 0.0
    %v1582 = vmax.f32 %v1315, 0.0
    %v1583 = vmax.f32 %v1319, 0.0
    %v1584 = vmax.f32 %v1321, 0.0
    %v1585 = vmax.f32 %v1323, 0.0
    %v1586 = vmax.f32 %v1325, 0.0
    %v1587 = vmax.f32 %v1329, 0.0
    %v1588 = vmax.f32 %v1331, 0.0
    %v1589 = vmax.f32 %v1333, 0.0
    %v1590 = vmax.f32 %v1335, 0.0
    %v1591 = vmax.f32 %v1339, 0.0
    %v1592 = vmax.f32 %v1341, 0.0
    %v1593 = vmax.f32 %v1343, 0.0
    %v1594 = vmax.f32 %v1345, 0.0
    %v1595 = vmax.f32 %v1349, 0.0
    %v1596 = vmax.f32 %v1351, 0.0
    %v1597 = vmax.f32 %v1353, 0.0
    %v1598 = vmax.f32 %v1355, 0.0
    %v1599 = vmax.f32 %v1359, 0.0
    %v1600 = vmax.f32 %v1361, 0.0
    %v1601 = vmax.f32 %v1363, 0.0
    %v1602 = vmax.f32 %v1365, 0.0
    %v1603 = vmax.f32 %v1369, 0.0
    %v1604 = vmax.f32 %v1371, 0.0
    %v1605 = vmax.f32 %v1373, 0.0
    %v1606 = vmax.f32 %v1375, 0.0
    %v1607 = vmax.f32 %v1379, 0.0
    %v1608 = vmax.f32 %v1381, 0.0
    %v1609 = vmax.f32 %v1383, 0.0
    %v1610 = vmax.f32 %v1385, 0.0
    %v1611 = vmax.f32 %v1389, 0.0
    %v1612 = vmax.f32 %v1391, 0.0
    %v1613 = vmax.f32 %v1393, 0.0
    %v1614 = vmax.f32 %v1395, 0.0
    %v1615 = vmax.f32 %v1399, 0.0
    %v1616 = vmax.f32 %v1401, 0.0
    %v1617 = vmax.f32 %v1403, 0.0
    %v1618 = vmax.f32 %v1405, 0.0
    %v1619 = vmax.f32 %v1409, 0.0
    %v1620 = vmax.f32 %v1411, 0.0
    %v1621 = vmax.f32 %v1413, 0.0
    %v1622 = vmax.f32 %v1415, 0.0
    %v1623 = vmax.f32 %v1419, 0.0
    %v1624 = vmax.f32 %v1421, 0.0
    %v1625 = vmax.f32 %v1423, 0.0
    %v1626 = vmax.f32 %v1425, 0.0
    %v1627 = vmax.f32 %v1429, 0.0
    %v1628 = vmax.f32 %v1431, 0.0
    %v1629 = vmax.f32 %v1433, 0.0
    %v1630 = vmax.f32 %v1435, 0.0
    %v1631 = vmax.f32 %v1439, 0.0
    %v1632 = vmax.f32 %v1441, 0.0
    %v1633 = vmax.f32 %v1443, 0.0
    %v1634 = vmax.f32 %v1445, 0.0
    %v1635 = vmax.f32 %v1449, 0.0
    %v1636 = vmax.f32 %v1451, 0.0
    %v1637 = vmax.f32 %v1453, 0.0
    %v1638 = vmax.f32 %v1455, 0.0
    %v1639 = vmax.f32 %v1459, 0.0
    %v1640 = vmax.f32 %v1461, 0.0
    %v1641 = vmax.f32 %v1463, 0.0
    %v1642 = vmax.f32 %v1465, 0.0
    %v1643 = vmax.f32 %v1469, 0.0
    %v1644 = vmax.f32 %v1471, 0.0
    %v1645 = vmax.f32 %v1473, 0.0
    %v1646 = vmax.f32 %v1475, 0.0
    %v1647 = vmax.f32 %v1479, 0.0
    %v1648 = vmax.f32 %v1481, 0.0
    %v1649 = vmax.f32 %v1483, 0.0
    %v1650 = vmax.f32 %v1485, 0.0
    %v1651 = vmax.f32 %v1489, 0.0
    %v1652 = vmax.f32 %v1491, 0.0
    %v1653 = vmax.f32 %v1493, 0.0
    %v1654 = vmax.f32 %v1495, 0.0
    %v1655 = vmax.f32 %v1499, 0.0
    %v1656 = vmax.f32 %v1501, 0.0
    %v1657 = vmax.f32 %v1503, 0.0
    %v1658 = vmax.f32 %v1505, 0.0
    %v1659 = vmax.f32 %v1509, 0.0
    %v1660 = vmax.f32 %v1511, 0.0
    %v1661 = vmax.f32 %v1513, 0.0
    %v1662 = vmax.f32 %v1515, 0.0
    %v1663 = vmax.f32 %v1519, 0.0
    %v1664 = vmax.f32 %v1521, 0.0
    %v1665 = vmax.f32 %v1523, 0.0
    %v1666 = vmax.f32 %v1525, 0.0
    %v1667 = vmax.f32 %v1529, 0.0
    %v1668 = vmax.f32 %v1531, 0.0
    %v1669 = vmax.f32 %v1533, 0.0
    %v1670 = vmax.f32 %v1535, 0.0
    %v1671 = vmax.f32 %v1539, 0.0
    %v1672 = vmax.f32 %v1541, 0.0
    %v1673 = vmax.f32 %v1543, 0.0
    %v1674 = vmax.f32 %v1545, 0.0
    %v1675 = vpack.c.bf16 %v1549, %v1547
    %v1676 = vpack.c.bf16 %v1550, %v1548
    %v1677 = vpack.c.bf16 %v1553, %v1551
    %v1678 = vpack.c.bf16 %v1554, %v1552
    %v1679 = vpack.c.bf16 %v1557, %v1555
    %v1680 = vpack.c.bf16 %v1558, %v1556
    %v1681 = vpack.c.bf16 %v1561, %v1559
    %v1682 = vpack.c.bf16 %v1562, %v1560
    %v1683 = vpack.c.bf16 %v1565, %v1563
    %v1684 = vpack.c.bf16 %v1566, %v1564
    %v1685 = vpack.c.bf16 %v1569, %v1567
    %v1686 = vpack.c.bf16 %v1570, %v1568
    %v1687 = vpack.c.bf16 %v1573, %v1571
    %v1688 = vpack.c.bf16 %v1574, %v1572
    %v1689 = vpack.c.bf16 %v1577, %v1575
    %v1690 = vpack.c.bf16 %v1578, %v1576
    %v1691 = vpack.c.bf16 %v1581, %v1579
    %v1692 = vpack.c.bf16 %v1582, %v1580
    %v1693 = vpack.c.bf16 %v1585, %v1583
    %v1694 = vpack.c.bf16 %v1586, %v1584
    %v1695 = vpack.c.bf16 %v1589, %v1587
    %v1696 = vpack.c.bf16 %v1590, %v1588
    %v1697 = vpack.c.bf16 %v1593, %v1591
    %v1698 = vpack.c.bf16 %v1594, %v1592
    %v1699 = vpack.c.bf16 %v1597, %v1595
    %v1700 = vpack.c.bf16 %v1598, %v1596
    %v1701 = vpack.c.bf16 %v1601, %v1599
    %v1702 = vpack.c.bf16 %v1602, %v1600
    %v1703 = vpack.c.bf16 %v1605, %v1603
    %v1704 = vpack.c.bf16 %v1606, %v1604
    %v1705 = vpack.c.bf16 %v1609, %v1607
    %v1706 = vpack.c.bf16 %v1610, %v1608
    %v1707 = vpack.c.bf16 %v1613, %v1611
    %v1708 = vpack.c.bf16 %v1614, %v1612
    %v1709 = vpack.c.bf16 %v1617, %v1615
    %v1710 = vpack.c.bf16 %v1618, %v1616
    %v1711 = vpack.c.bf16 %v1621, %v1619
    %v1712 = vpack.c.bf16 %v1622, %v1620
    %v1713 = vpack.c.bf16 %v1625, %v1623
    %v1714 = vpack.c.bf16 %v1626, %v1624
    %v1715 = vpack.c.bf16 %v1629, %v1627
    %v1716 = vpack.c.bf16 %v1630, %v1628
    %v1717 = vpack.c.bf16 %v1633, %v1631
    %v1718 = vpack.c.bf16 %v1634, %v1632
    %v1719 = vpack.c.bf16 %v1637, %v1635
    %v1720 = vpack.c.bf16 %v1638, %v1636
    %v1721 = vpack.c.bf16 %v1641, %v1639
    %v1722 = vpack.c.bf16 %v1642, %v1640
    %v1723 = vpack.c.bf16 %v1645, %v1643
    %v1724 = vpack.c.bf16 %v1646, %v1644
    %v1725 = vpack.c.bf16 %v1649, %v1647
    %v1726 = vpack.c.bf16 %v1650, %v1648
    %v1727 = vpack.c.bf16 %v1653, %v1651
    %v1728 = vpack.c.bf16 %v1654, %v1652
    %v1729 = vpack.c.bf16 %v1657, %v1655
    %v1730 = vpack.c.bf16 %v1658, %v1656
    %v1731 = vpack.c.bf16 %v1661, %v1659
    %v1732 = vpack.c.bf16 %v1662, %v1660
    %v1733 = vpack.c.bf16 %v1665, %v1663
    %v1734 = vpack.c.bf16 %v1666, %v1664
    %v1735 = vpack.c.bf16 %v1669, %v1667
    %v1736 = vpack.c.bf16 %v1670, %v1668
    %v1737 = vpack.c.bf16 %v1673, %v1671
    %v1738 = vpack.c.bf16 %v1674, %v1672
    %v1739 = vld [vmem:[#allocation8] sm:$0xf]
    %v1740 = vld [vmem:[#allocation8 + $0x4] sm:$0xf]
    %v1741 = vld [vmem:[#allocation8 + $0x8] sm:$0xf]
    %v1742 = vld [vmem:[#allocation8 + $0xc] sm:$0xf]
    %v1743 = vld [vmem:[#allocation8 + $0x10] sm:$0xf]
    %v1744 = vld [vmem:[#allocation8 + $0x14] sm:$0xf]
    %v1745 = vld [vmem:[#allocation8 + $0x18] sm:$0xf]
    %v1746 = vld [vmem:[#allocation8 + $0x1c] sm:$0xf]
    %v1747 = vld [vmem:[#allocation8 + $0x20] sm:$0xf]
    %v1748 = vld [vmem:[#allocation8 + $0x24] sm:$0xf]
    %v1749 = vld [vmem:[#allocation8 + $0x28] sm:$0xf]
    %v1750 = vld [vmem:[#allocation8 + $0x2c] sm:$0xf]
    %v1751 = vld [vmem:[#allocation8 + $0x30] sm:$0xf]
    %v1752 = vld [vmem:[#allocation8 + $0x34] sm:$0xf]
    %v1753 = vld [vmem:[#allocation8 + $0x38] sm:$0xf]
    %v1754 = vld [vmem:[#allocation8 + $0x3c] sm:$0xf]
    %v1755 = vld [vmem:[#allocation8 + $0x40] sm:$0xf]
    %v1756 = vld [vmem:[#allocation8 + $0x44] sm:$0xf]
    %v1757 = vld [vmem:[#allocation8 + $0x48] sm:$0xf]
    %v1758 = vld [vmem:[#allocation8 + $0x4c] sm:$0xf]
    %v1759 = vld [vmem:[#allocation8 + $0x50] sm:$0xf]
    %v1760 = vld [vmem:[#allocation8 + $0x54] sm:$0xf]
    %v1761 = vld [vmem:[#allocation8 + $0x58] sm:$0xf]
    %v1762 = vld [vmem:[#allocation8 + $0x5c] sm:$0xf]
    %v1763 = vld [vmem:[#allocation8 + $0x60] sm:$0xf]
    %v1764 = vld [vmem:[#allocation8 + $0x64] sm:$0xf]
    %v1765 = vld [vmem:[#allocation8 + $0x68] sm:$0xf]
    %v1766 = vld [vmem:[#allocation8 + $0x6c] sm:$0xf]
    %v1767 = vld [vmem:[#allocation8 + $0x70] sm:$0xf]
    %v1768 = vld [vmem:[#allocation8 + $0x74] sm:$0xf]
    %v1769 = vld [vmem:[#allocation8 + $0x78] sm:$0xf]
    %v1770 = vld [vmem:[#allocation8 + $0x7c] sm:$0xf]
    %v1771 = vlaneseq
    %v1772 = vshrl.u32 %v1771, 7
    %v1773 = vsub.s32 0, %v1772
    %v1774 = vrot.slane %v80, %v1773
    %v1807 = vunpack.c.l.b16 %v1739
    %v1808 = vunpack.c.l.b16 %v1740
    %v1809 = vunpack.c.l.b16 %v1741
    %v1810 = vunpack.c.l.b16 %v1742
    %v1811 = vunpack.c.l.b16 %v1743
    %v1812 = vunpack.c.l.b16 %v1744
    %v1813 = vunpack.c.l.b16 %v1745
    %v1814 = vunpack.c.l.b16 %v1746
    %v1815 = vunpack.c.l.b16 %v1747
    %v1816 = vunpack.c.l.b16 %v1748
    %v1817 = vunpack.c.l.b16 %v1749
    %v1818 = vunpack.c.l.b16 %v1750
    %v1819 = vunpack.c.l.b16 %v1751
    %v1820 = vunpack.c.l.b16 %v1752
    %v1821 = vunpack.c.l.b16 %v1753
    %v1822 = vunpack.c.l.b16 %v1754
    %v1823 = vunpack.c.l.b16 %v1755
    %v1824 = vunpack.c.l.b16 %v1756
    %v1825 = vunpack.c.l.b16 %v1757
    %v1826 = vunpack.c.l.b16 %v1758
    %v1827 = vunpack.c.l.b16 %v1759
    %v1828 = vunpack.c.l.b16 %v1760
    %v1829 = vunpack.c.l.b16 %v1761
    %v1830 = vunpack.c.l.b16 %v1762
    %v1831 = vunpack.c.l.b16 %v1763
    %v1832 = vunpack.c.l.b16 %v1764
    %v1833 = vunpack.c.l.b16 %v1765
    %v1834 = vunpack.c.l.b16 %v1766
    %v1835 = vunpack.c.l.b16 %v1767
    %v1836 = vunpack.c.l.b16 %v1768
    %v1837 = vunpack.c.l.b16 %v1769
    %v1838 = vunpack.c.l.b16 %v1770
    %v1839 = vpack.c.b16 %v1808, %v1807
    %v1840 = vpack.c.b16 %v1810, %v1809
    %v1841 = vpack.c.b16 %v1812, %v1811
    %v1842 = vpack.c.b16 %v1814, %v1813
    %v1843 = vpack.c.b16 %v1816, %v1815
    %v1844 = vpack.c.b16 %v1818, %v1817
    %v1845 = vpack.c.b16 %v1820, %v1819
    %v1846 = vpack.c.b16 %v1822, %v1821
    %v1847 = vpack.c.b16 %v1824, %v1823
    %v1848 = vpack.c.b16 %v1826, %v1825
    %v1849 = vpack.c.b16 %v1828, %v1827
    %v1850 = vpack.c.b16 %v1830, %v1829
    %v1851 = vpack.c.b16 %v1832, %v1831
    %v1852 = vpack.c.b16 %v1834, %v1833
    %v1853 = vpack.c.b16 %v1836, %v1835
    %v1854 = vpack.c.b16 %v1838, %v1837
    %1871 = vmatprep.subr.bf16.mxu0 0
    %1872 = vmatpush1.bf16.msra.mxu0 %v1839
    %1873 = vmatprep.subr.bf16.mxu0 0
    %1874 = vmatpush1.bf16.msra.mxu0 %v1840
    %1875 = vmatprep.subr.bf16.mxu0 0
    %1876 = vmatpush1.bf16.msra.mxu0 %v1841
    %1877 = vmatprep.subr.bf16.mxu0 0
    %1878 = vmatpush1.bf16.msra.mxu0 %v1842
    %1879 = vmatprep.subr.bf16.mxu0 0
    %1880 = vmatpush1.bf16.msra.mxu0 %v1843
    %1881 = vmatprep.subr.bf16.mxu0 0
    %1882 = vmatpush1.bf16.msra.mxu0 %v1844
    %1883 = vmatprep.subr.bf16.mxu0 0
    %1884 = vmatpush1.bf16.msra.mxu0 %v1845
    %1885 = vmatprep.subr.bf16.mxu0 0
    %1886 = vmatpush1.bf16.msra.mxu0 %v1846
    %1887 = vmatprep.subr.bf16.mxu0 0
    %1888 = vmatpush1.bf16.msra.mxu0 %v1847
    %1889 = vmatprep.subr.bf16.mxu0 0
    %1890 = vmatpush1.bf16.msra.mxu0 %v1848
    %1891 = vmatprep.subr.bf16.mxu0 0
    %1892 = vmatpush1.bf16.msra.mxu0 %v1849
    %1893 = vmatprep.subr.bf16.mxu0 0
    %1894 = vmatpush1.bf16.msra.mxu0 %v1850
    %1895 = vmatprep.subr.bf16.mxu0 0
    %1896 = vmatpush1.bf16.msra.mxu0 %v1851
    %1897 = vmatprep.subr.bf16.mxu0 0
    %1898 = vmatpush1.bf16.msra.mxu0 %v1852
    %1899 = vmatprep.subr.bf16.mxu0 0
    %1900 = vmatpush1.bf16.msra.mxu0 %v1853
    %1901 = vmatprep.subr.bf16.mxu0 0
    %1902 = vmatpush1.bf16.msra.mxu0 %v1854
    %1903 = vmatprep.mubr.bf16.mxu0 %v1676
    %1904 = vmatmul.mubr.bf16.gmra.mrb[0].mxu0 %v1675
    %v1905 = vpop.f32.mrb[0].mxu0
    %v1906 = vadd.f32 %v1774, %v1905
    %v1907 = vpop.f32.mrb[0].mxu0
    %v1908 = vpop.f32.mrb[0].mxu0
    %v1909 = vadd.f32 %v1774, %v1908
    %v1910 = vpop.f32.mrb[0].mxu0
    %1911 = vmatprep.mubr.bf16.mxu0 %v1678
    %1912 = vmatmul.mubr.bf16.gmra.mrb[0].mxu0 %v1677
    %v1913 = vpop.f32.mrb[0].mxu0
    %v1914 = vadd.f32 %v1774, %v1913
    %v1915 = vpop.f32.mrb[0].mxu0
    %v1916 = vpop.f32.mrb[0].mxu0
    %v1917 = vadd.f32 %v1774, %v1916
    %v1918 = vpop.f32.mrb[0].mxu0
    %1919 = vmatprep.mubr.bf16.mxu0 %v1680
    %1920 = vmatmul.mubr.bf16.gmra.mrb[0].mxu0 %v1679
    %v1921 = vpop.f32.mrb[0].mxu0
    %v1922 = vadd.f32 %v1774, %v1921
    %v1923 = vpop.f32.mrb[0].mxu0
    %v1924 = vpop.f32.mrb[0].mxu0
    %v1925 = vadd.f32 %v1774, %v1924
    %v1926 = vpop.f32.mrb[0].mxu0
    %1927 = vmatprep.mubr.bf16.mxu0 %v1682
    %1928 = vmatmul.mubr.bf16.gmra.mrb[0].mxu0 %v1681
    %v1929 = vpop.f32.mrb[0].mxu0
    %v1930 = vadd.f32 %v1774, %v1929
    %v1931 = vpop.f32.mrb[0].mxu0
    %v1932 = vpop.f32.mrb[0].mxu0
    %v1933 = vadd.f32 %v1774, %v1932
    %v1934 = vpop.f32.mrb[0].mxu0
    %1935 = vmatprep.mubr.bf16.mxu0 %v1684
    %1936 = vmatmul.mubr.bf16.gmra.mrb[0].mxu0 %v1683
    %v1937 = vpop.f32.mrb[0].mxu0
    %v1938 = vadd.f32 %v1774, %v1937
    %v1939 = vpop.f32.mrb[0].mxu0
    %v1940 = vpop.f32.mrb[0].mxu0
    %v1941 = vadd.f32 %v1774, %v1940
    %v1942 = vpop.f32.mrb[0].mxu0
    %1943 = vmatprep.mubr.bf16.mxu0 %v1686
    %1944 = vmatmul.mubr.bf16.gmra.mrb[0].mxu0 %v1685
    %v1945 = vpop.f32.mrb[0].mxu0
    %v1946 = vadd.f32 %v1774, %v1945
    %v1947 = vpop.f32.mrb[0].mxu0
    %v1948 = vpop.f32.mrb[0].mxu0
    %v1949 = vadd.f32 %v1774, %v1948
    %v1950 = vpop.f32.mrb[0].mxu0
    %1951 = vmatprep.mubr.bf16.mxu0 %v1688
    %1952 = vmatmul.mubr.bf16.gmra.mrb[0].mxu0 %v1687
    %v1953 = vpop.f32.mrb[0].mxu0
    %v1954 = vadd.f32 %v1774, %v1953
    %v1955 = vpop.f32.mrb[0].mxu0
    %v1956 = vpop.f32.mrb[0].mxu0
    %v1957 = vadd.f32 %v1774, %v1956
    %v1958 = vpop.f32.mrb[0].mxu0
    %1959 = vmatprep.mubr.bf16.mxu0 %v1690
    %1960 = vmatmul.mubr.bf16.gmra.mrb[0].mxu0 %v1689
    %v1961 = vpop.f32.mrb[0].mxu0
    %v1962 = vadd.f32 %v1774, %v1961
    %v1963 = vpop.f32.mrb[0].mxu0
    %v1964 = vpop.f32.mrb[0].mxu0
    %v1965 = vadd.f32 %v1774, %v1964
    %v1966 = vpop.f32.mrb[0].mxu0
    %1967 = vmatprep.mubr.bf16.mxu0 %v1692
    %1968 = vmatmul.mubr.bf16.gmra.mrb[0].mxu0 %v1691
    %v1969 = vpop.f32.mrb[0].mxu0
    %v1970 = vadd.f32 %v1774, %v1969
    %v1971 = vpop.f32.mrb[0].mxu0
    %v1972 = vpop.f32.mrb[0].mxu0
    %v1973 = vadd.f32 %v1774, %v1972
    %v1974 = vpop.f32.mrb[0].mxu0
    %1975 = vmatprep.mubr.bf16.mxu0 %v1694
    %1976 = vmatmul.mubr.bf16.gmra.mrb[0].mxu0 %v1693
    %v1977 = vpop.f32.mrb[0].mxu0
    %v1978 = vadd.f32 %v1774, %v1977
    %v1979 = vpop.f32.mrb[0].mxu0
    %v1980 = vpop.f32.mrb[0].mxu0
    %v1981 = vadd.f32 %v1774, %v1980
    %v1982 = vpop.f32.mrb[0].mxu0
    %1983 = vmatprep.mubr.bf16.mxu0 %v1696
    %1984 = vmatmul.mubr.bf16.gmra.mrb[0].mxu0 %v1695
    %v1985 = vpop.f32.mrb[0].mxu0
    %v1986 = vadd.f32 %v1774, %v1985
    %v1987 = vpop.f32.mrb[0].mxu0
    %v1988 = vpop.f32.mrb[0].mxu0
    %v1989 = vadd.f32 %v1774, %v1988
    %v1990 = vpop.f32.mrb[0].mxu0
    %1991 = vmatprep.mubr.bf16.mxu0 %v1698
    %1992 = vmatmul.mubr.bf16.gmra.mrb[0].mxu0 %v1697
    %v1993 = vpop.f32.mrb[0].mxu0
    %v1994 = vadd.f32 %v1774, %v1993
    %v1995 = vpop.f32.mrb[0].mxu0
    %v1996 = vpop.f32.mrb[0].mxu0
    %v1997 = vadd.f32 %v1774, %v1996
    %v1998 = vpop.f32.mrb[0].mxu0
    %1999 = vmatprep.mubr.bf16.mxu0 %v1700
    %2000 = vmatmul.mubr.bf16.gmra.mrb[0].mxu0 %v1699
    %v2001 = vpop.f32.mrb[0].mxu0
    %v2002 = vadd.f32 %v1774, %v2001
    %v2003 = vpop.f32.mrb[0].mxu0
    %v2004 = vpop.f32.mrb[0].mxu0
    %v2005 = vadd.f32 %v1774, %v2004
    %v2006 = vpop.f32.mrb[0].mxu0
    %2007 = vmatprep.mubr.bf16.mxu0 %v1702
    %2008 = vmatmul.mubr.bf16.gmra.mrb[0].mxu0 %v1701
    %v2009 = vpop.f32.mrb[0].mxu0
    %v2010 = vadd.f32 %v1774, %v2009
    %v2011 = vpop.f32.mrb[0].mxu0
    %v2012 = vpop.f32.mrb[0].mxu0
    %v2013 = vadd.f32 %v1774, %v2012
    %v2014 = vpop.f32.mrb[0].mxu0
    %2015 = vmatprep.mubr.bf16.mxu0 %v1704
    %2016 = vmatmul.mubr.bf16.gmra.mrb[0].mxu0 %v1703
    %v2017 = vpop.f32.mrb[0].mxu0
    %v2018 = vadd.f32 %v1774, %v2017
    %v2019 = vpop.f32.mrb[0].mxu0
    %v2020 = vpop.f32.mrb[0].mxu0
    %v2021 = vadd.f32 %v1774, %v2020
    %v2022 = vpop.f32.mrb[0].mxu0
    %2023 = vmatprep.mubr.bf16.mxu0 %v1706
    %2024 = vmatmul.mubr.bf16.gmra.mrb[0].mxu0 %v1705
    %v2025 = vpop.f32.mrb[0].mxu0
    %v2026 = vadd.f32 %v1774, %v2025
    %v2027 = vpop.f32.mrb[0].mxu0
    %v2028 = vpop.f32.mrb[0].mxu0
    %v2029 = vadd.f32 %v1774, %v2028
    %v2030 = vpop.f32.mrb[0].mxu0
    %2031 = vmatprep.mubr.bf16.mxu0 %v1708
    %2032 = vmatmul.mubr.bf16.gmra.mrb[0].mxu0 %v1707
    %v2033 = vpop.f32.mrb[0].mxu0
    %v2034 = vadd.f32 %v1774, %v2033
    %v2035 = vpop.f32.mrb[0].mxu0
    %v2036 = vpop.f32.mrb[0].mxu0
    %v2037 = vadd.f32 %v1774, %v2036
    %v2038 = vpop.f32.mrb[0].mxu0
    %2039 = vmatprep.mubr.bf16.mxu0 %v1710
    %2040 = vmatmul.mubr.bf16.gmra.mrb[0].mxu0 %v1709
    %v2041 = vpop.f32.mrb[0].mxu0
    %v2042 = vadd.f32 %v1774, %v2041
    %v2043 = vpop.f32.mrb[0].mxu0
    %v2044 = vpop.f32.mrb[0].mxu0
    %v2045 = vadd.f32 %v1774, %v2044
    %v2046 = vpop.f32.mrb[0].mxu0
    %2047 = vmatprep.mubr.bf16.mxu0 %v1712
    %2048 = vmatmul.mubr.bf16.gmra.mrb[0].mxu0 %v1711
    %v2049 = vpop.f32.mrb[0].mxu0
    %v2050 = vadd.f32 %v1774, %v2049
    %v2051 = vpop.f32.mrb[0].mxu0
    %v2052 = vpop.f32.mrb[0].mxu0
    %v2053 = vadd.f32 %v1774, %v2052
    %v2054 = vpop.f32.mrb[0].mxu0
    %2055 = vmatprep.mubr.bf16.mxu0 %v1714
    %2056 = vmatmul.mubr.bf16.gmra.mrb[0].mxu0 %v1713
    %v2057 = vpop.f32.mrb[0].mxu0
    %v2058 = vadd.f32 %v1774, %v2057
    %v2059 = vpop.f32.mrb[0].mxu0
    %v2060 = vpop.f32.mrb[0].mxu0
    %v2061 = vadd.f32 %v1774, %v2060
    %v2062 = vpop.f32.mrb[0].mxu0
    %2063 = vmatprep.mubr.bf16.mxu0 %v1716
    %2064 = vmatmul.mubr.bf16.gmra.mrb[0].mxu0 %v1715
    %v2065 = vpop.f32.mrb[0].mxu0
    %v2066 = vadd.f32 %v1774, %v2065
    %v2067 = vpop.f32.mrb[0].mxu0
    %v2068 = vpop.f32.mrb[0].mxu0
    %v2069 = vadd.f32 %v1774, %v2068
    %v2070 = vpop.f32.mrb[0].mxu0
    %2071 = vmatprep.mubr.bf16.mxu0 %v1718
    %2072 = vmatmul.mubr.bf16.gmra.mrb[0].mxu0 %v1717
    %v2073 = vpop.f32.mrb[0].mxu0
    %v2074 = vadd.f32 %v1774, %v2073
    %v2075 = vpop.f32.mrb[0].mxu0
    %v2076 = vpop.f32.mrb[0].mxu0
    %v2077 = vadd.f32 %v1774, %v2076
    %v2078 = vpop.f32.mrb[0].mxu0
    %2079 = vmatprep.mubr.bf16.mxu0 %v1720
    %2080 = vmatmul.mubr.bf16.gmra.mrb[0].mxu0 %v1719
    %v2081 = vpop.f32.mrb[0].mxu0
    %v2082 = vadd.f32 %v1774, %v2081
    %v2083 = vpop.f32.mrb[0].mxu0
    %v2084 = vpop.f32.mrb[0].mxu0
    %v2085 = vadd.f32 %v1774, %v2084
    %v2086 = vpop.f32.mrb[0].mxu0
    %2087 = vmatprep.mubr.bf16.mxu0 %v1722
    %2088 = vmatmul.mubr.bf16.gmra.mrb[0].mxu0 %v1721
    %v2089 = vpop.f32.mrb[0].mxu0
    %v2090 = vadd.f32 %v1774, %v2089
    %v2091 = vpop.f32.mrb[0].mxu0
    %v2092 = vpop.f32.mrb[0].mxu0
    %v2093 = vadd.f32 %v1774, %v2092
    %v2094 = vpop.f32.mrb[0].mxu0
    %2095 = vmatprep.mubr.bf16.mxu0 %v1724
    %2096 = vmatmul.mubr.bf16.gmra.mrb[0].mxu0 %v1723
    %v2097 = vpop.f32.mrb[0].mxu0
    %v2098 = vadd.f32 %v1774, %v2097
    %v2099 = vpop.f32.mrb[0].mxu0
    %v2100 = vpop.f32.mrb[0].mxu0
    %v2101 = vadd.f32 %v1774, %v2100
    %v2102 = vpop.f32.mrb[0].mxu0
    %2103 = vmatprep.mubr.bf16.mxu0 %v1726
    %2104 = vmatmul.mubr.bf16.gmra.mrb[0].mxu0 %v1725
    %v2105 = vpop.f32.mrb[0].mxu0
    %v2106 = vadd.f32 %v1774, %v2105
    %v2107 = vpop.f32.mrb[0].mxu0
    %v2108 = vpop.f32.mrb[0].mxu0
    %v2109 = vadd.f32 %v1774, %v2108
    %v2110 = vpop.f32.mrb[0].mxu0
    %2111 = vmatprep.mubr.bf16.mxu0 %v1728
    %2112 = vmatmul.mubr.bf16.gmra.mrb[0].mxu0 %v1727
    %v2113 = vpop.f32.mrb[0].mxu0
    %v2114 = vadd.f32 %v1774, %v2113
    %v2115 = vpop.f32.mrb[0].mxu0
    %v2116 = vpop.f32.mrb[0].mxu0
    %v2117 = vadd.f32 %v1774, %v2116
    %v2118 = vpop.f32.mrb[0].mxu0
    %2119 = vmatprep.mubr.bf16.mxu0 %v1730
    %2120 = vmatmul.mubr.bf16.gmra.mrb[0].mxu0 %v1729
    %v2121 = vpop.f32.mrb[0].mxu0
    %v2122 = vadd.f32 %v1774, %v2121
    %v2123 = vpop.f32.mrb[0].mxu0
    %v2124 = vpop.f32.mrb[0].mxu0
    %v2125 = vadd.f32 %v1774, %v2124
    %v2126 = vpop.f32.mrb[0].mxu0
    %2127 = vmatprep.mubr.bf16.mxu0 %v1732
    %2128 = vmatmul.mubr.bf16.gmra.mrb[0].mxu0 %v1731
    %v2129 = vpop.f32.mrb[0].mxu0
    %v2130 = vadd.f32 %v1774, %v2129
    %v2131 = vpop.f32.mrb[0].mxu0
    %v2132 = vpop.f32.mrb[0].mxu0
    %v2133 = vadd.f32 %v1774, %v2132
    %v2134 = vpop.f32.mrb[0].mxu0
    %2135 = vmatprep.mubr.bf16.mxu0 %v1734
    %2136 = vmatmul.mubr.bf16.gmra.mrb[0].mxu0 %v1733
    %v2137 = vpop.f32.mrb[0].mxu0
    %v2138 = vadd.f32 %v1774, %v2137
    %v2139 = vpop.f32.mrb[0].mxu0
    %v2140 = vpop.f32.mrb[0].mxu0
    %v2141 = vadd.f32 %v1774, %v2140
    %v2142 = vpop.f32.mrb[0].mxu0
    %2143 = vmatprep.mubr.bf16.mxu0 %v1736
    %2144 = vmatmul.mubr.bf16.gmra.mrb[0].mxu0 %v1735
    %v2145 = vpop.f32.mrb[0].mxu0
    %v2146 = vadd.f32 %v1774, %v2145
    %v2147 = vpop.f32.mrb[0].mxu0
    %v2148 = vpop.f32.mrb[0].mxu0
    %v2149 = vadd.f32 %v1774, %v2148
    %v2150 = vpop.f32.mrb[0].mxu0
    %2151 = vmatprep.mubr.bf16.mxu0 %v1738
    %2152 = vmatmul.mubr.bf16.gmra.mrb[0].mxu0 %v1737
    %v2153 = vpop.f32.mrb[0].mxu0
    %v2154 = vadd.f32 %v1774, %v2153
    %v2155 = vpop.f32.mrb[0].mxu0
    %v2156 = vpop.f32.mrb[0].mxu0
    %v2157 = vadd.f32 %v1774, %v2156
    %v2158 = vpop.f32.mrb[0].mxu0
    %2159 = vdwg.mxu0
    %v2160 = vmax.f32 %v1906, 0.0
    %v2161 = vmax.f32 %v1909, 0.0
    %v2162 = vmax.f32 %v1914, 0.0
    %v2163 = vmax.f32 %v1917, 0.0
    %v2164 = vmax.f32 %v1922, 0.0
    %v2165 = vmax.f32 %v1925, 0.0
    %v2166 = vmax.f32 %v1930, 0.0
    %v2167 = vmax.f32 %v1933, 0.0
    %v2168 = vmax.f32 %v1938, 0.0
    %v2169 = vmax.f32 %v1941, 0.0
    %v2170 = vmax.f32 %v1946, 0.0
    %v2171 = vmax.f32 %v1949, 0.0
    %v2172 = vmax.f32 %v1954, 0.0
    %v2173 = vmax.f32 %v1957, 0.0
    %v2174 = vmax.f32 %v1962, 0.0
    %v2175 = vmax.f32 %v1965, 0.0
    %v2176 = vmax.f32 %v1970, 0.0
    %v2177 = vmax.f32 %v1973, 0.0
    %v2178 = vmax.f32 %v1978, 0.0
    %v2179 = vmax.f32 %v1981, 0.0
    %v2180 = vmax.f32 %v1986, 0.0
    %v2181 = vmax.f32 %v1989, 0.0
    %v2182 = vmax.f32 %v1994, 0.0
    %v2183 = vmax.f32 %v1997, 0.0
    %v2184 = vmax.f32 %v2002, 0.0
    %v2185 = vmax.f32 %v2005, 0.0
    %v2186 = vmax.f32 %v2010, 0.0
    %v2187 = vmax.f32 %v2013, 0.0
    %v2188 = vmax.f32 %v2018, 0.0
    %v2189 = vmax.f32 %v2021, 0.0
    %v2190 = vmax.f32 %v2026, 0.0
    %v2191 = vmax.f32 %v2029, 0.0
    %v2192 = vmax.f32 %v2034, 0.0
    %v2193 = vmax.f32 %v2037, 0.0
    %v2194 = vmax.f32 %v2042, 0.0
    %v2195 = vmax.f32 %v2045, 0.0
    %v2196 = vmax.f32 %v2050, 0.0
    %v2197 = vmax.f32 %v2053, 0.0
    %v2198 = vmax.f32 %v2058, 0.0
    %v2199 = vmax.f32 %v2061, 0.0
    %v2200 = vmax.f32 %v2066, 0.0
    %v2201 = vmax.f32 %v2069, 0.0
    %v2202 = vmax.f32 %v2074, 0.0
    %v2203 = vmax.f32 %v2077, 0.0
    %v2204 = vmax.f32 %v2082, 0.0
    %v2205 = vmax.f32 %v2085, 0.0
    %v2206 = vmax.f32 %v2090, 0.0
    %v2207 = vmax.f32 %v2093, 0.0
    %v2208 = vmax.f32 %v2098, 0.0
    %v2209 = vmax.f32 %v2101, 0.0
    %v2210 = vmax.f32 %v2106, 0.0
    %v2211 = vmax.f32 %v2109, 0.0
    %v2212 = vmax.f32 %v2114, 0.0
    %v2213 = vmax.f32 %v2117, 0.0
    %v2214 = vmax.f32 %v2122, 0.0
    %v2215 = vmax.f32 %v2125, 0.0
    %v2216 = vmax.f32 %v2130, 0.0
    %v2217 = vmax.f32 %v2133, 0.0
    %v2218 = vmax.f32 %v2138, 0.0
    %v2219 = vmax.f32 %v2141, 0.0
    %v2220 = vmax.f32 %v2146, 0.0
    %v2221 = vmax.f32 %v2149, 0.0
    %v2222 = vmax.f32 %v2154, 0.0
    %v2223 = vmax.f32 %v2157, 0.0
    %v2224 = vlaneseq
    %v2225 = vshrl.u32 %v2224, 7
    %v2226 = vsub.s32 0, %v2225
    %v2227 = vrot.slane %v81, %v2226
    %v2228 = vmul.f32 %v2160, %v2227
    %v2229 = vmul.f32 %v2161, %v2227
    %v2230 = vmul.f32 %v2162, %v2227
    %v2231 = vmul.f32 %v2163, %v2227
    %v2232 = vmul.f32 %v2164, %v2227
    %v2233 = vmul.f32 %v2165, %v2227
    %v2234 = vmul.f32 %v2166, %v2227
    %v2235 = vmul.f32 %v2167, %v2227
    %v2236 = vmul.f32 %v2168, %v2227
    %v2237 = vmul.f32 %v2169, %v2227
    %v2238 = vmul.f32 %v2170, %v2227
    %v2239 = vmul.f32 %v2171, %v2227
    %v2240 = vmul.f32 %v2172, %v2227
    %v2241 = vmul.f32 %v2173, %v2227
    %v2242 = vmul.f32 %v2174, %v2227
    %v2243 = vmul.f32 %v2175, %v2227
    %v2244 = vmul.f32 %v2176, %v2227
    %v2245 = vmul.f32 %v2177, %v2227
    %v2246 = vmul.f32 %v2178, %v2227
    %v2247 = vmul.f32 %v2179, %v2227
    %v2248 = vmul.f32 %v2180, %v2227
    %v2249 = vmul.f32 %v2181, %v2227
    %v2250 = vmul.f32 %v2182, %v2227
    %v2251 = vmul.f32 %v2183, %v2227
    %v2252 = vmul.f32 %v2184, %v2227
    %v2253 = vmul.f32 %v2185, %v2227
    %v2254 = vmul.f32 %v2186, %v2227
    %v2255 = vmul.f32 %v2187, %v2227
    %v2256 = vmul.f32 %v2188, %v2227
    %v2257 = vmul.f32 %v2189, %v2227
    %v2258 = vmul.f32 %v2190, %v2227
    %v2259 = vmul.f32 %v2191, %v2227
    %v2260 = vmul.f32 %v2192, %v2227
    %v2261 = vmul.f32 %v2193, %v2227
    %v2262 = vmul.f32 %v2194, %v2227
    %v2263 = vmul.f32 %v2195, %v2227
    %v2264 = vmul.f32 %v2196, %v2227
    %v2265 = vmul.f32 %v2197, %v2227
    %v2266 = vmul.f32 %v2198, %v2227
    %v2267 = vmul.f32 %v2199, %v2227
    %v2268 = vmul.f32 %v2200, %v2227
    %v2269 = vmul.f32 %v2201, %v2227
    %v2270 = vmul.f32 %v2202, %v2227
    %v2271 = vmul.f32 %v2203, %v2227
    %v2272 = vmul.f32 %v2204, %v2227
    %v2273 = vmul.f32 %v2205, %v2227
    %v2274 = vmul.f32 %v2206, %v2227
    %v2275 = vmul.f32 %v2207, %v2227
    %v2276 = vmul.f32 %v2208, %v2227
    %v2277 = vmul.f32 %v2209, %v2227
    %v2278 = vmul.f32 %v2210, %v2227
    %v2279 = vmul.f32 %v2211, %v2227
    %v2280 = vmul.f32 %v2212, %v2227
    %v2281 = vmul.f32 %v2213, %v2227
    %v2282 = vmul.f32 %v2214, %v2227
    %v2283 = vmul.f32 %v2215, %v2227
    %v2284 = vmul.f32 %v2216, %v2227
    %v2285 = vmul.f32 %v2217, %v2227
    %v2286 = vmul.f32 %v2218, %v2227
    %v2287 = vmul.f32 %v2219, %v2227
    %v2288 = vmul.f32 %v2220, %v2227
    %v2289 = vmul.f32 %v2221, %v2227
    %v2290 = vmul.f32 %v2222, %v2227
    %v2291 = vmul.f32 %v2223, %v2227
    %2292 = vadd.xlane.f32.xlu0 %v2228
    %v2293 = vpop.xlane.xlu0 %2292
    %2294 = vadd.xlane.f32.xlu0 %v2229
    %v2295 = vpop.xlane.xlu0 %2294
    %2296 = vadd.xlane.f32.xlu0 %v2230
    %v2297 = vpop.xlane.xlu0 %2296
    %2298 = vadd.xlane.f32.xlu0 %v2231
    %v2299 = vpop.xlane.xlu0 %2298
    %2300 = vadd.xlane.f32.xlu0 %v2232
    %v2301 = vpop.xlane.xlu0 %2300
    %2302 = vadd.xlane.f32.xlu0 %v2233
    %v2303 = vpop.xlane.xlu0 %2302
    %2304 = vadd.xlane.f32.xlu0 %v2234
    %v2305 = vpop.xlane.xlu0 %2304
    %2306 = vadd.xlane.f32.xlu0 %v2235
    %v2307 = vpop.xlane.xlu0 %2306
    %2308 = vadd.xlane.f32.xlu0 %v2236
    %v2309 = vpop.xlane.xlu0 %2308
    %2310 = vadd.xlane.f32.xlu0 %v2237
    %v2311 = vpop.xlane.xlu0 %2310
    %2312 = vadd.xlane.f32.xlu0 %v2238
    %v2313 = vpop.xlane.xlu0 %2312
    %2314 = vadd.xlane.f32.xlu0 %v2239
    %v2315 = vpop.xlane.xlu0 %2314
    %2316 = vadd.xlane.f32.xlu0 %v2240
    %v2317 = vpop.xlane.xlu0 %2316
    %2318 = vadd.xlane.f32.xlu0 %v2241
    %v2319 = vpop.xlane.xlu0 %2318
    %2320 = vadd.xlane.f32.xlu0 %v2242
    %v2321 = vpop.xlane.xlu0 %2320
    %2322 = vadd.xlane.f32.xlu0 %v2243
    %v2323 = vpop.xlane.xlu0 %2322
    %2324 = vadd.xlane.f32.xlu0 %v2244
    %v2325 = vpop.xlane.xlu0 %2324
    %2326 = vadd.xlane.f32.xlu0 %v2245
    %v2327 = vpop.xlane.xlu0 %2326
    %2328 = vadd.xlane.f32.xlu0 %v2246
    %v2329 = vpop.xlane.xlu0 %2328
    %2330 = vadd.xlane.f32.xlu0 %v2247
    %v2331 = vpop.xlane.xlu0 %2330
    %2332 = vadd.xlane.f32.xlu0 %v2248
    %v2333 = vpop.xlane.xlu0 %2332
    %2334 = vadd.xlane.f32.xlu0 %v2249
    %v2335 = vpop.xlane.xlu0 %2334
    %2336 = vadd.xlane.f32.xlu0 %v2250
    %v2337 = vpop.xlane.xlu0 %2336
    %2338 = vadd.xlane.f32.xlu0 %v2251
    %v2339 = vpop.xlane.xlu0 %2338
    %2340 = vadd.xlane.f32.xlu0 %v2252
    %v2341 = vpop.xlane.xlu0 %2340
    %2342 = vadd.xlane.f32.xlu0 %v2253
    %v2343 = vpop.xlane.xlu0 %2342
    %2344 = vadd.xlane.f32.xlu0 %v2254
    %v2345 = vpop.xlane.xlu0 %2344
    %2346 = vadd.xlane.f32.xlu0 %v2255
    %v2347 = vpop.xlane.xlu0 %2346
    %2348 = vadd.xlane.f32.xlu0 %v2256
    %v2349 = vpop.xlane.xlu0 %2348
    %2350 = vadd.xlane.f32.xlu0 %v2257
    %v2351 = vpop.xlane.xlu0 %2350
    %2352 = vadd.xlane.f32.xlu0 %v2258
    %v2353 = vpop.xlane.xlu0 %2352
    %2354 = vadd.xlane.f32.xlu0 %v2259
    %v2355 = vpop.xlane.xlu0 %2354
    %2356 = vadd.xlane.f32.xlu0 %v2260
    %v2357 = vpop.xlane.xlu0 %2356
    %2358 = vadd.xlane.f32.xlu0 %v2261
    %v2359 = vpop.xlane.xlu0 %2358
    %2360 = vadd.xlane.f32.xlu0 %v2262
    %v2361 = vpop.xlane.xlu0 %2360
    %2362 = vadd.xlane.f32.xlu0 %v2263
    %v2363 = vpop.xlane.xlu0 %2362
    %2364 = vadd.xlane.f32.xlu0 %v2264
    %v2365 = vpop.xlane.xlu0 %2364
    %2366 = vadd.xlane.f32.xlu0 %v2265
    %v2367 = vpop.xlane.xlu0 %2366
    %2368 = vadd.xlane.f32.xlu0 %v2266
    %v2369 = vpop.xlane.xlu0 %2368
    %2370 = vadd.xlane.f32.xlu0 %v2267
    %v2371 = vpop.xlane.xlu0 %2370
    %2372 = vadd.xlane.f32.xlu0 %v2268
    %v2373 = vpop.xlane.xlu0 %2372
    %2374 = vadd.xlane.f32.xlu0 %v2269
    %v2375 = vpop.xlane.xlu0 %2374
    %2376 = vadd.xlane.f32.xlu0 %v2270
    %v2377 = vpop.xlane.xlu0 %2376
    %2378 = vadd.xlane.f32.xlu0 %v2271
    %v2379 = vpop.xlane.xlu0 %2378
    %2380 = vadd.xlane.f32.xlu0 %v2272
    %v2381 = vpop.xlane.xlu0 %2380
    %2382 = vadd.xlane.f32.xlu0 %v2273
    %v2383 = vpop.xlane.xlu0 %2382
    %2384 = vadd.xlane.f32.xlu0 %v2274
    %v2385 = vpop.xlane.xlu0 %2384
    %2386 = vadd.xlane.f32.xlu0 %v2275
    %v2387 = vpop.xlane.xlu0 %2386
    %2388 = vadd.xlane.f32.xlu0 %v2276
    %v2389 = vpop.xlane.xlu0 %2388
    %2390 = vadd.xlane.f32.xlu0 %v2277
    %v2391 = vpop.xlane.xlu0 %2390
    %2392 = vadd.xlane.f32.xlu0 %v2278
    %v2393 = vpop.xlane.xlu0 %2392
    %2394 = vadd.xlane.f32.xlu0 %v2279
    %v2395 = vpop.xlane.xlu0 %2394
    %2396 = vadd.xlane.f32.xlu0 %v2280
    %v2397 = vpop.xlane.xlu0 %2396
    %2398 = vadd.xlane.f32.xlu0 %v2281
    %v2399 = vpop.xlane.xlu0 %2398
    %2400 = vadd.xlane.f32.xlu0 %v2282
    %v2401 = vpop.xlane.xlu0 %2400
    %2402 = vadd.xlane.f32.xlu0 %v2283
    %v2403 = vpop.xlane.xlu0 %2402
    %2404 = vadd.xlane.f32.xlu0 %v2284
    %v2405 = vpop.xlane.xlu0 %2404
    %2406 = vadd.xlane.f32.xlu0 %v2285
    %v2407 = vpop.xlane.xlu0 %2406
    %2408 = vadd.xlane.f32.xlu0 %v2286
    %v2409 = vpop.xlane.xlu0 %2408
    %2410 = vadd.xlane.f32.xlu0 %v2287
    %v2411 = vpop.xlane.xlu0 %2410
    %2412 = vadd.xlane.f32.xlu0 %v2288
    %v2413 = vpop.xlane.xlu0 %2412
    %2414 = vadd.xlane.f32.xlu0 %v2289
    %v2415 = vpop.xlane.xlu0 %2414
    %2416 = vadd.xlane.f32.xlu0 %v2290
    %v2417 = vpop.xlane.xlu0 %2416
    %2418 = vadd.xlane.f32.xlu0 %v2291
    %v2419 = vpop.xlane.xlu0 %2418
    %2421 = vset.pattern.permute.xlu0 0
    %2422 = vperm.xlu0 %2421, %v82
    %v2423 = vpop.permute.xlu0 %2422
    %v2426 = vunpack.c.l.s4 839922192
    %v2427 = vunpack.c.0.s8 %v2426
    %v2428 = vlaneseq
    %v2429 = vshrl.u32 %v2428, 7
    %v2430 = vsub.s32 %v2427, %v2429
    %v2431 = vrot.slane %v2423, %v2430
    %v2433 = vlaneseq
    %v2434 = vshrl.u32 %v2433, 7
    %v2435 = vsub.s32 0, %v2434
    %v2436 = vrot.slane %v2431, %v2435
    %v2438 = vadd.f32 %v2293, %v2436
    %v2439 = vadd.f32 %v2295, %v2436
    %v2440 = vadd.f32 %v2297, %v2436
    %v2441 = vadd.f32 %v2299, %v2436
    %v2442 = vadd.f32 %v2301, %v2436
    %v2443 = vadd.f32 %v2303, %v2436
    %v2444 = vadd.f32 %v2305, %v2436
    %v2445 = vadd.f32 %v2307, %v2436
    %v2446 = vadd.f32 %v2309, %v2436
    %v2447 = vadd.f32 %v2311, %v2436
    %v2448 = vadd.f32 %v2313, %v2436
    %v2449 = vadd.f32 %v2315, %v2436
    %v2450 = vadd.f32 %v2317, %v2436
    %v2451 = vadd.f32 %v2319, %v2436
    %v2452 = vadd.f32 %v2321, %v2436
    %v2453 = vadd.f32 %v2323, %v2436
    %v2454 = vadd.f32 %v2325, %v2436
    %v2455 = vadd.f32 %v2327, %v2436
    %v2456 = vadd.f32 %v2329, %v2436
    %v2457 = vadd.f32 %v2331, %v2436
    %v2458 = vadd.f32 %v2333, %v2436
    %v2459 = vadd.f32 %v2335, %v2436
    %v2460 = vadd.f32 %v2337, %v2436
    %v2461 = vadd.f32 %v2339, %v2436
    %v2462 = vadd.f32 %v2341, %v2436
    %v2463 = vadd.f32 %v2343, %v2436
    %v2464 = vadd.f32 %v2345, %v2436
    %v2465 = vadd.f32 %v2347, %v2436
    %v2466 = vadd.f32 %v2349, %v2436
    %v2467 = vadd.f32 %v2351, %v2436
    %v2468 = vadd.f32 %v2353, %v2436
    %v2469 = vadd.f32 %v2355, %v2436
    %v2470 = vadd.f32 %v2357, %v2436
    %v2471 = vadd.f32 %v2359, %v2436
    %v2472 = vadd.f32 %v2361, %v2436
    %v2473 = vadd.f32 %v2363, %v2436
    %v2474 = vadd.f32 %v2365, %v2436
    %v2475 = vadd.f32 %v2367, %v2436
    %v2476 = vadd.f32 %v2369, %v2436
    %v2477 = vadd.f32 %v2371, %v2436
    %v2478 = vadd.f32 %v2373, %v2436
    %v2479 = vadd.f32 %v2375, %v2436
    %v2480 = vadd.f32 %v2377, %v2436
    %v2481 = vadd.f32 %v2379, %v2436
    %v2482 = vadd.f32 %v2381, %v2436
    %v2483 = vadd.f32 %v2383, %v2436
    %v2484 = vadd.f32 %v2385, %v2436
    %v2485 = vadd.f32 %v2387, %v2436
    %v2486 = vadd.f32 %v2389, %v2436
    %v2487 = vadd.f32 %v2391, %v2436
    %v2488 = vadd.f32 %v2393, %v2436
    %v2489 = vadd.f32 %v2395, %v2436
    %v2490 = vadd.f32 %v2397, %v2436
    %v2491 = vadd.f32 %v2399, %v2436
    %v2492 = vadd.f32 %v2401, %v2436
    %v2493 = vadd.f32 %v2403, %v2436
    %v2494 = vadd.f32 %v2405, %v2436
    %v2495 = vadd.f32 %v2407, %v2436
    %v2496 = vadd.f32 %v2409, %v2436
    %v2497 = vadd.f32 %v2411, %v2436
    %v2498 = vadd.f32 %v2413, %v2436
    %v2499 = vadd.f32 %v2415, %v2436
    %v2500 = vadd.f32 %v2417, %v2436
    %v2501 = vadd.f32 %v2419, %v2436
    %v2502 = vxor.u32 %v2438, 2147483648
    %v2503 = vxor.u32 %v2439, 2147483648
    %v2504 = vxor.u32 %v2440, 2147483648
    %v2505 = vxor.u32 %v2441, 2147483648
    %v2506 = vxor.u32 %v2442, 2147483648
    %v2507 = vxor.u32 %v2443, 2147483648
    %v2508 = vxor.u32 %v2444, 2147483648
    %v2509 = vxor.u32 %v2445, 2147483648
    %v2510 = vxor.u32 %v2446, 2147483648
    %v2511 = vxor.u32 %v2447, 2147483648
    %v2512 = vxor.u32 %v2448, 2147483648
    %v2513 = vxor.u32 %v2449, 2147483648
    %v2514 = vxor.u32 %v2450, 2147483648
    %v2515 = vxor.u32 %v2451, 2147483648
    %v2516 = vxor.u32 %v2452, 2147483648
    %v2517 = vxor.u32 %v2453, 2147483648
    %v2518 = vxor.u32 %v2454, 2147483648
    %v2519 = vxor.u32 %v2455, 2147483648
    %v2520 = vxor.u32 %v2456, 2147483648
    %v2521 = vxor.u32 %v2457, 2147483648
    %v2522 = vxor.u32 %v2458, 2147483648
    %v2523 = vxor.u32 %v2459, 2147483648
    %v2524 = vxor.u32 %v2460, 2147483648
    %v2525 = vxor.u32 %v2461, 2147483648
    %v2526 = vxor.u32 %v2462, 2147483648
    %v2527 = vxor.u32 %v2463, 2147483648
    %v2528 = vxor.u32 %v2464, 2147483648
    %v2529 = vxor.u32 %v2465, 2147483648
    %v2530 = vxor.u32 %v2466, 2147483648
    %v2531 = vxor.u32 %v2467, 2147483648
    %v2532 = vxor.u32 %v2468, 2147483648
    %v2533 = vxor.u32 %v2469, 2147483648
    %v2534 = vxor.u32 %v2470, 2147483648
    %v2535 = vxor.u32 %v2471, 2147483648
    %v2536 = vxor.u32 %v2472, 2147483648
    %v2537 = vxor.u32 %v2473, 2147483648
    %v2538 = vxor.u32 %v2474, 2147483648
    %v2539 = vxor.u32 %v2475, 2147483648
    %v2540 = vxor.u32 %v2476, 2147483648
    %v2541 = vxor.u32 %v2477, 2147483648
    %v2542 = vxor.u32 %v2478, 2147483648
    %v2543 = vxor.u32 %v2479, 2147483648
    %v2544 = vxor.u32 %v2480, 2147483648
    %v2545 = vxor.u32 %v2481, 2147483648
    %v2546 = vxor.u32 %v2482, 2147483648
    %v2547 = vxor.u32 %v2483, 2147483648
    %v2548 = vxor.u32 %v2484, 2147483648
    %v2549 = vxor.u32 %v2485, 2147483648
    %v2550 = vxor.u32 %v2486, 2147483648
    %v2551 = vxor.u32 %v2487, 2147483648
    %v2552 = vxor.u32 %v2488, 2147483648
    %v2553 = vxor.u32 %v2489, 2147483648
    %v2554 = vxor.u32 %v2490, 2147483648
    %v2555 = vxor.u32 %v2491, 2147483648
    %v2556 = vxor.u32 %v2492, 2147483648
    %v2557 = vxor.u32 %v2493, 2147483648
    %v2558 = vxor.u32 %v2494, 2147483648
    %v2559 = vxor.u32 %v2495, 2147483648
    %v2560 = vxor.u32 %v2496, 2147483648
    %v2561 = vxor.u32 %v2497, 2147483648
    %v2562 = vxor.u32 %v2498, 2147483648
    %v2563 = vxor.u32 %v2499, 2147483648
    %v2564 = vxor.u32 %v2500, 2147483648
    %v2565 = vxor.u32 %v2501, 2147483648
    %v2566 = vmul.f32 %v2502, 1.442695
    %v2567 = vpow.pop %v2566
    %v2568 = vmul.f32 %v2503, 1.442695
    %v2569 = vpow.pop %v2568
    %v2570 = vmul.f32 %v2504, 1.442695
    %v2571 = vpow.pop %v2570
    %v2572 = vmul.f32 %v2505, 1.442695
    %v2573 = vpow.pop %v2572
    %v2574 = vmul.f32 %v2506, 1.442695
    %v2575 = vpow.pop %v2574
    %v2576 = vmul.f32 %v2507, 1.442695
    %v2577 = vpow.pop %v2576
    %v2578 = vmul.f32 %v2508, 1.442695
    %v2579 = vpow.pop %v2578
    %v2580 = vmul.f32 %v2509, 1.442695
    %v2581 = vpow.pop %v2580
    %v2582 = vmul.f32 %v2510, 1.442695
    %v2583 = vpow.pop %v2582
    %v2584 = vmul.f32 %v2511, 1.442695
    %v2585 = vpow.pop %v2584
    %v2586 = vmul.f32 %v2512, 1.442695
    %v2587 = vpow.pop %v2586
    %v2588 = vmul.f32 %v2513, 1.442695
    %v2589 = vpow.pop %v2588
    %v2590 = vmul.f32 %v2514, 1.442695
    %v2591 = vpow.pop %v2590
    %v2592 = vmul.f32 %v2515, 1.442695
    %v2593 = vpow.pop %v2592
    %v2594 = vmul.f32 %v2516, 1.442695
    %v2595 = vpow.pop %v2594
    %v2596 = vmul.f32 %v2517, 1.442695
    %v2597 = vpow.pop %v2596
    %v2598 = vmul.f32 %v2518, 1.442695
    %v2599 = vpow.pop %v2598
    %v2600 = vmul.f32 %v2519, 1.442695
    %v2601 = vpow.pop %v2600
    %v2602 = vmul.f32 %v2520, 1.442695
    %v2603 = vpow.pop %v2602
    %v2604 = vmul.f32 %v2521, 1.442695
    %v2605 = vpow.pop %v2604
    %v2606 = vmul.f32 %v2522, 1.442695
    %v2607 = vpow.pop %v2606
    %v2608 = vmul.f32 %v2523, 1.442695
    %v2609 = vpow.pop %v2608
    %v2610 = vmul.f32 %v2524, 1.442695
    %v2611 = vpow.pop %v2610
    %v2612 = vmul.f32 %v2525, 1.442695
    %v2613 = vpow.pop %v2612
    %v2614 = vmul.f32 %v2526, 1.442695
    %v2615 = vpow.pop %v2614
    %v2616 = vmul.f32 %v2527, 1.442695
    %v2617 = vpow.pop %v2616
    %v2618 = vmul.f32 %v2528, 1.442695
    %v2619 = vpow.pop %v2618
    %v2620 = vmul.f32 %v2529, 1.442695
    %v2621 = vpow.pop %v2620
    %v2622 = vmul.f32 %v2530, 1.442695
    %v2623 = vpow.pop %v2622
    %v2624 = vmul.f32 %v2531, 1.442695
    %v2625 = vpow.pop %v2624
    %v2626 = vmul.f32 %v2532, 1.442695
    %v2627 = vpow.pop %v2626
    %v2628 = vmul.f32 %v2533, 1.442695
    %v2629 = vpow.pop %v2628
    %v2630 = vmul.f32 %v2534, 1.442695
    %v2631 = vpow.pop %v2630
    %v2632 = vmul.f32 %v2535, 1.442695
    %v2633 = vpow.pop %v2632
    %v2634 = vmul.f32 %v2536, 1.442695
    %v2635 = vpow.pop %v2634
    %v2636 = vmul.f32 %v2537, 1.442695
    %v2637 = vpow.pop %v2636
    %v2638 = vmul.f32 %v2538, 1.442695
    %v2639 = vpow.pop %v2638
    %v2640 = vmul.f32 %v2539, 1.442695
    %v2641 = vpow.pop %v2640
    %v2642 = vmul.f32 %v2540, 1.442695
    %v2643 = vpow.pop %v2642
    %v2644 = vmul.f32 %v2541, 1.442695
    %v2645 = vpow.pop %v2644
    %v2646 = vmul.f32 %v2542, 1.442695
    %v2647 = vpow.pop %v2646
    %v2648 = vmul.f32 %v2543, 1.442695
    %v2649 = vpow.pop %v2648
    %v2650 = vmul.f32 %v2544, 1.442695
    %v2651 = vpow.pop %v2650
    %v2652 = vmul.f32 %v2545, 1.442695
    %v2653 = vpow.pop %v2652
    %v2654 = vmul.f32 %v2546, 1.442695
    %v2655 = vpow.pop %v2654
    %v2656 = vmul.f32 %v2547, 1.442695
    %v2657 = vpow.pop %v2656
    %v2658 = vmul.f32 %v2548, 1.442695
    %v2659 = vpow.pop %v2658
    %v2660 = vmul.f32 %v2549, 1.442695
    %v2661 = vpow.pop %v2660
    %v2662 = vmul.f32 %v2550, 1.442695
    %v2663 = vpow.pop %v2662
    %v2664 = vmul.f32 %v2551, 1.442695
    %v2665 = vpow.pop %v2664
    %v2666 = vmul.f32 %v2552, 1.442695
    %v2667 = vpow.pop %v2666
    %v2668 = vmul.f32 %v2553, 1.442695
    %v2669 = vpow.pop %v2668
    %v2670 = vmul.f32 %v2554, 1.442695
    %v2671 = vpow.pop %v2670
    %v2672 = vmul.f32 %v2555, 1.442695
    %v2673 = vpow.pop %v2672
    %v2674 = vmul.f32 %v2556, 1.442695
    %v2675 = vpow.pop %v2674
    %v2676 = vmul.f32 %v2557, 1.442695
    %v2677 = vpow.pop %v2676
    %v2678 = vmul.f32 %v2558, 1.442695
    %v2679 = vpow.pop %v2678
    %v2680 = vmul.f32 %v2559, 1.442695
    %v2681 = vpow.pop %v2680
    %v2682 = vmul.f32 %v2560, 1.442695
    %v2683 = vpow.pop %v2682
    %v2684 = vmul.f32 %v2561, 1.442695
    %v2685 = vpow.pop %v2684
    %v2686 = vmul.f32 %v2562, 1.442695
    %v2687 = vpow.pop %v2686
    %v2688 = vmul.f32 %v2563, 1.442695
    %v2689 = vpow.pop %v2688
    %v2690 = vmul.f32 %v2564, 1.442695
    %v2691 = vpow.pop %v2690
    %v2692 = vmul.f32 %v2565, 1.442695
    %v2693 = vpow.pop %v2692
    %v2694 = vadd.f32 %v2567, 1.0
    %v2695 = vadd.f32 %v2569, 1.0
    %v2696 = vadd.f32 %v2571, 1.0
    %v2697 = vadd.f32 %v2573, 1.0
    %v2698 = vadd.f32 %v2575, 1.0
    %v2699 = vadd.f32 %v2577, 1.0
    %v2700 = vadd.f32 %v2579, 1.0
    %v2701 = vadd.f32 %v2581, 1.0
    %v2702 = vadd.f32 %v2583, 1.0
    %v2703 = vadd.f32 %v2585, 1.0
    %v2704 = vadd.f32 %v2587, 1.0
    %v2705 = vadd.f32 %v2589, 1.0
    %v2706 = vadd.f32 %v2591, 1.0
    %v2707 = vadd.f32 %v2593, 1.0
    %v2708 = vadd.f32 %v2595, 1.0
    %v2709 = vadd.f32 %v2597, 1.0
    %v2710 = vadd.f32 %v2599, 1.0
    %v2711 = vadd.f32 %v2601, 1.0
    %v2712 = vadd.f32 %v2603, 1.0
    %v2713 = vadd.f32 %v2605, 1.0
    %v2714 = vadd.f32 %v2607, 1.0
    %v2715 = vadd.f32 %v2609, 1.0
    %v2716 = vadd.f32 %v2611, 1.0
    %v2717 = vadd.f32 %v2613, 1.0
    %v2718 = vadd.f32 %v2615, 1.0
    %v2719 = vadd.f32 %v2617, 1.0
    %v2720 = vadd.f32 %v2619, 1.0
    %v2721 = vadd.f32 %v2621, 1.0
    %v2722 = vadd.f32 %v2623, 1.0
    %v2723 = vadd.f32 %v2625, 1.0
    %v2724 = vadd.f32 %v2627, 1.0
    %v2725 = vadd.f32 %v2629, 1.0
    %v2726 = vadd.f32 %v2631, 1.0
    %v2727 = vadd.f32 %v2633, 1.0
    %v2728 = vadd.f32 %v2635, 1.0
    %v2729 = vadd.f32 %v2637, 1.0
    %v2730 = vadd.f32 %v2639, 1.0
    %v2731 = vadd.f32 %v2641, 1.0
    %v2732 = vadd.f32 %v2643, 1.0
    %v2733 = vadd.f32 %v2645, 1.0
    %v2734 = vadd.f32 %v2647, 1.0
    %v2735 = vadd.f32 %v2649, 1.0
    %v2736 = vadd.f32 %v2651, 1.0
    %v2737 = vadd.f32 %v2653, 1.0
    %v2738 = vadd.f32 %v2655, 1.0
    %v2739 = vadd.f32 %v2657, 1.0
    %v2740 = vadd.f32 %v2659, 1.0
    %v2741 = vadd.f32 %v2661, 1.0
    %v2742 = vadd.f32 %v2663, 1.0
    %v2743 = vadd.f32 %v2665, 1.0
    %v2744 = vadd.f32 %v2667, 1.0
    %v2745 = vadd.f32 %v2669, 1.0
    %v2746 = vadd.f32 %v2671, 1.0
    %v2747 = vadd.f32 %v2673, 1.0
    %v2748 = vadd.f32 %v2675, 1.0
    %v2749 = vadd.f32 %v2677, 1.0
    %v2750 = vadd.f32 %v2679, 1.0
    %v2751 = vadd.f32 %v2681, 1.0
    %v2752 = vadd.f32 %v2683, 1.0
    %v2753 = vadd.f32 %v2685, 1.0
    %v2754 = vadd.f32 %v2687, 1.0
    %v2755 = vadd.f32 %v2689, 1.0
    %v2756 = vadd.f32 %v2691, 1.0
    %v2757 = vadd.f32 %v2693, 1.0
    %v2758 = vrcp.pop %v2694
    %v2759 = vmul.f32 1.0, %v2758
    %v2760 = vrcp.pop %v2695
    %v2761 = vmul.f32 1.0, %v2760
    %v2762 = vrcp.pop %v2696
    %v2763 = vmul.f32 1.0, %v2762
    %v2764 = vrcp.pop %v2697
    %v2765 = vmul.f32 1.0, %v2764
    %v2766 = vrcp.pop %v2698
    %v2767 = vmul.f32 1.0, %v2766
    %v2768 = vrcp.pop %v2699
    %v2769 = vmul.f32 1.0, %v2768
    %v2770 = vrcp.pop %v2700
    %v2771 = vmul.f32 1.0, %v2770
    %v2772 = vrcp.pop %v2701
    %v2773 = vmul.f32 1.0, %v2772
    %v2774 = vrcp.pop %v2702
    %v2775 = vmul.f32 1.0, %v2774
    %v2776 = vrcp.pop %v2703
    %v2777 = vmul.f32 1.0, %v2776
    %v2778 = vrcp.pop %v2704
    %v2779 = vmul.f32 1.0, %v2778
    %v2780 = vrcp.pop %v2705
    %v2781 = vmul.f32 1.0, %v2780
    %v2782 = vrcp.pop %v2706
    %v2783 = vmul.f32 1.0, %v2782
    %v2784 = vrcp.pop %v2707
    %v2785 = vmul.f32 1.0, %v2784
    %v2786 = vrcp.pop %v2708
    %v2787 = vmul.f32 1.0, %v2786
    %v2788 = vrcp.pop %v2709
    %v2789 = vmul.f32 1.0, %v2788
    %v2790 = vrcp.pop %v2710
    %v2791 = vmul.f32 1.0, %v2790
    %v2792 = vrcp.pop %v2711
    %v2793 = vmul.f32 1.0, %v2792
    %v2794 = vrcp.pop %v2712
    %v2795 = vmul.f32 1.0, %v2794
    %v2796 = vrcp.pop %v2713
    %v2797 = vmul.f32 1.0, %v2796
    %v2798 = vrcp.pop %v2714
    %v2799 = vmul.f32 1.0, %v2798
    %v2800 = vrcp.pop %v2715
    %v2801 = vmul.f32 1.0, %v2800
    %v2802 = vrcp.pop %v2716
    %v2803 = vmul.f32 1.0, %v2802
    %v2804 = vrcp.pop %v2717
    %v2805 = vmul.f32 1.0, %v2804
    %v2806 = vrcp.pop %v2718
    %v2807 = vmul.f32 1.0, %v2806
    %v2808 = vrcp.pop %v2719
    %v2809 = vmul.f32 1.0, %v2808
    %v2810 = vrcp.pop %v2720
    %v2811 = vmul.f32 1.0, %v2810
    %v2812 = vrcp.pop %v2721
    %v2813 = vmul.f32 1.0, %v2812
    %v2814 = vrcp.pop %v2722
    %v2815 = vmul.f32 1.0, %v2814
    %v2816 = vrcp.pop %v2723
    %v2817 = vmul.f32 1.0, %v2816
    %v2818 = vrcp.pop %v2724
    %v2819 = vmul.f32 1.0, %v2818
    %v2820 = vrcp.pop %v2725
    %v2821 = vmul.f32 1.0, %v2820
    %v2822 = vrcp.pop %v2726
    %v2823 = vmul.f32 1.0, %v2822
    %v2824 = vrcp.pop %v2727
    %v2825 = vmul.f32 1.0, %v2824
    %v2826 = vrcp.pop %v2728
    %v2827 = vmul.f32 1.0, %v2826
    %v2828 = vrcp.pop %v2729
    %v2829 = vmul.f32 1.0, %v2828
    %v2830 = vrcp.pop %v2730
    %v2831 = vmul.f32 1.0, %v2830
    %v2832 = vrcp.pop %v2731
    %v2833 = vmul.f32 1.0, %v2832
    %v2834 = vrcp.pop %v2732
    %v2835 = vmul.f32 1.0, %v2834
    %v2836 = vrcp.pop %v2733
    %v2837 = vmul.f32 1.0, %v2836
    %v2838 = vrcp.pop %v2734
    %v2839 = vmul.f32 1.0, %v2838
    %v2840 = vrcp.pop %v2735
    %v2841 = vmul.f32 1.0, %v2840
    %v2842 = vrcp.pop %v2736
    %v2843 = vmul.f32 1.0, %v2842
    %v2844 = vrcp.pop %v2737
    %v2845 = vmul.f32 1.0, %v2844
    %v2846 = vrcp.pop %v2738
    %v2847 = vmul.f32 1.0, %v2846
    %v2848 = vrcp.pop %v2739
    %v2849 = vmul.f32 1.0, %v2848
    %v2850 = vrcp.pop %v2740
    %v2851 = vmul.f32 1.0, %v2850
    %v2852 = vrcp.pop %v2741
    %v2853 = vmul.f32 1.0, %v2852
    %v2854 = vrcp.pop %v2742
    %v2855 = vmul.f32 1.0, %v2854
    %v2856 = vrcp.pop %v2743
    %v2857 = vmul.f32 1.0, %v2856
    %v2858 = vrcp.pop %v2744
    %v2859 = vmul.f32 1.0, %v2858
    %v2860 = vrcp.pop %v2745
    %v2861 = vmul.f32 1.0, %v2860
    %v2862 = vrcp.pop %v2746
    %v2863 = vmul.f32 1.0, %v2862
    %v2864 = vrcp.pop %v2747
    %v2865 = vmul.f32 1.0, %v2864
    %v2866 = vrcp.pop %v2748
    %v2867 = vmul.f32 1.0, %v2866
    %v2868 = vrcp.pop %v2749
    %v2869 = vmul.f32 1.0, %v2868
    %v2870 = vrcp.pop %v2750
    %v2871 = vmul.f32 1.0, %v2870
    %v2872 = vrcp.pop %v2751
    %v2873 = vmul.f32 1.0, %v2872
    %v2874 = vrcp.pop %v2752
    %v2875 = vmul.f32 1.0, %v2874
    %v2876 = vrcp.pop %v2753
    %v2877 = vmul.f32 1.0, %v2876
    %v2878 = vrcp.pop %v2754
    %v2879 = vmul.f32 1.0, %v2878
    %v2880 = vrcp.pop %v2755
    %v2881 = vmul.f32 1.0, %v2880
    %v2882 = vrcp.pop %v2756
    %v2883 = vmul.f32 1.0, %v2882
    %v2884 = vrcp.pop %v2757
    %v2885 = vmul.f32 1.0, %v2884
    %v2950 = vcombine.high %v2759, %v2759
    %v2952 = vunpack.c.l.s4 1966171168
    %v2953 = vunpack.c.0.s8 %v2952
    %v2954 = vlaneseq
    %v2955 = vshrl.u32 %v2954, 7
    %v2956 = vsub.s32 %v2953, %v2955
    %v2957 = vrot.slane %v2759, %v2956
    %v2959 = vunpack.c.l.s4 1966171168
    %v2960 = vunpack.c.0.s8 %v2959
    %v2961 = vlaneseq
    %v2962 = vshrl.u32 %v2961, 7
    %v2963 = vsub.s32 %v2960, %v2962
    %v2964 = vrot.slane %v2950, %v2963
    %v2965 = vcombine.high %v2957, %v2957
    %v2966 = vcombine.high %v2964, %v2964
    %v2968 = vunpack.c.l.s4 1966171168
    %v2969 = vunpack.c.0.s8 %v2968
    %v2970 = vlaneseq
    %v2971 = vshrl.u32 %v2970, 7
    %v2972 = vsub.s32 %v2969, %v2971
    %v2973 = vrot.slane %v2957, %v2972
    %v2975 = vunpack.c.l.s4 1966171168
    %v2976 = vunpack.c.0.s8 %v2975
    %v2977 = vlaneseq
    %v2978 = vshrl.u32 %v2977, 7
    %v2979 = vsub.s32 %v2976, %v2978
    %v2980 = vrot.slane %v2964, %v2979
    %v2982 = vunpack.c.l.s4 1966171168
    %v2983 = vunpack.c.0.s8 %v2982
    %v2984 = vlaneseq
    %v2985 = vshrl.u32 %v2984, 7
    %v2986 = vsub.s32 %v2983, %v2985
    %v2987 = vrot.slane %v2965, %v2986
    %v2989 = vunpack.c.l.s4 1966171168
    %v2990 = vunpack.c.0.s8 %v2989
    %v2991 = vlaneseq
    %v2992 = vshrl.u32 %v2991, 7
    %v2993 = vsub.s32 %v2990, %v2992
    %v2994 = vrot.slane %v2966, %v2993
    %v2995 = vcombine.high %v2973, %v2973
    %v2996 = vcombine.high %v2980, %v2980
    %v2997 = vcombine.high %v2987, %v2987
    %v2998 = vcombine.high %v2994, %v2994
    %v2999 = vcombine.high %v2761, %v2761
    %v3001 = vunpack.c.l.s4 1966171168
    %v3002 = vunpack.c.0.s8 %v3001
    %v3003 = vlaneseq
    %v3004 = vshrl.u32 %v3003, 7
    %v3005 = vsub.s32 %v3002, %v3004
    %v3006 = vrot.slane %v2761, %v3005
    %v3008 = vunpack.c.l.s4 1966171168
    %v3009 = vunpack.c.0.s8 %v3008
    %v3010 = vlaneseq
    %v3011 = vshrl.u32 %v3010, 7
    %v3012 = vsub.s32 %v3009, %v3011
    %v3013 = vrot.slane %v2999, %v3012
    %v3014 = vcombine.high %v3006, %v3006
    %v3015 = vcombine.high %v3013, %v3013
    %v3017 = vunpack.c.l.s4 1966171168
    %v3018 = vunpack.c.0.s8 %v3017
    %v3019 = vlaneseq
    %v3020 = vshrl.u32 %v3019, 7
    %v3021 = vsub.s32 %v3018, %v3020
    %v3022 = vrot.slane %v3006, %v3021
    %v3024 = vunpack.c.l.s4 1966171168
    %v3025 = vunpack.c.0.s8 %v3024
    %v3026 = vlaneseq
    %v3027 = vshrl.u32 %v3026, 7
    %v3028 = vsub.s32 %v3025, %v3027
    %v3029 = vrot.slane %v3013, %v3028
    %v3031 = vunpack.c.l.s4 1966171168
    %v3032 = vunpack.c.0.s8 %v3031
    %v3033 = vlaneseq
    %v3034 = vshrl.u32 %v3033, 7
    %v3035 = vsub.s32 %v3032, %v3034
    %v3036 = vrot.slane %v3014, %v3035
    %v3038 = vunpack.c.l.s4 1966171168
    %v3039 = vunpack.c.0.s8 %v3038
    %v3040 = vlaneseq
    %v3041 = vshrl.u32 %v3040, 7
    %v3042 = vsub.s32 %v3039, %v3041
    %v3043 = vrot.slane %v3015, %v3042
    %v3044 = vcombine.high %v3022, %v3022
    %v3045 = vcombine.high %v3029, %v3029
    %v3046 = vcombine.high %v3036, %v3036
    %v3047 = vcombine.high %v3043, %v3043
    %v3048 = vcombine.high %v2763, %v2763
    %v3050 = vunpack.c.l.s4 1966171168
    %v3051 = vunpack.c.0.s8 %v3050
    %v3052 = vlaneseq
    %v3053 = vshrl.u32 %v3052, 7
    %v3054 = vsub.s32 %v3051, %v3053
    %v3055 = vrot.slane %v2763, %v3054
    %v3057 = vunpack.c.l.s4 1966171168
    %v3058 = vunpack.c.0.s8 %v3057
    %v3059 = vlaneseq
    %v3060 = vshrl.u32 %v3059, 7
    %v3061 = vsub.s32 %v3058, %v3060
    %v3062 = vrot.slane %v3048, %v3061
    %v3063 = vcombine.high %v3055, %v3055
    %v3064 = vcombine.high %v3062, %v3062
    %v3066 = vunpack.c.l.s4 1966171168
    %v3067 = vunpack.c.0.s8 %v3066
    %v3068 = vlaneseq
    %v3069 = vshrl.u32 %v3068, 7
    %v3070 = vsub.s32 %v3067, %v3069
    %v3071 = vrot.slane %v3055, %v3070
    %v3073 = vunpack.c.l.s4 1966171168
    %v3074 = vunpack.c.0.s8 %v3073
    %v3075 = vlaneseq
    %v3076 = vshrl.u32 %v3075, 7
    %v3077 = vsub.s32 %v3074, %v3076
    %v3078 = vrot.slane %v3062, %v3077
    %v3080 = vunpack.c.l.s4 1966171168
    %v3081 = vunpack.c.0.s8 %v3080
    %v3082 = vlaneseq
    %v3083 = vshrl.u32 %v3082, 7
    %v3084 = vsub.s32 %v3081, %v3083
    %v3085 = vrot.slane %v3063, %v3084
    %v3087 = vunpack.c.l.s4 1966171168
    %v3088 = vunpack.c.0.s8 %v3087
    %v3089 = vlaneseq
    %v3090 = vshrl.u32 %v3089, 7
    %v3091 = vsub.s32 %v3088, %v3090
    %v3092 = vrot.slane %v3064, %v3091
    %v3093 = vcombine.high %v3071, %v3071
    %v3094 = vcombine.high %v3078, %v3078
    %v3095 = vcombine.high %v3085, %v3085
    %v3096 = vcombine.high %v3092, %v3092
    %v3097 = vcombine.high %v2765, %v2765
    %v3099 = vunpack.c.l.s4 1966171168
    %v3100 = vunpack.c.0.s8 %v3099
    %v3101 = vlaneseq
    %v3102 = vshrl.u32 %v3101, 7
    %v3103 = vsub.s32 %v3100, %v3102
    %v3104 = vrot.slane %v2765, %v3103
    %v3106 = vunpack.c.l.s4 1966171168
    %v3107 = vunpack.c.0.s8 %v3106
    %v3108 = vlaneseq
    %v3109 = vshrl.u32 %v3108, 7
    %v3110 = vsub.s32 %v3107, %v3109
    %v3111 = vrot.slane %v3097, %v3110
    %v3112 = vcombine.high %v3104, %v3104
    %v3113 = vcombine.high %v3111, %v3111
    %v3115 = vunpack.c.l.s4 1966171168
    %v3116 = vunpack.c.0.s8 %v3115
    %v3117 = vlaneseq
    %v3118 = vshrl.u32 %v3117, 7
    %v3119 = vsub.s32 %v3116, %v3118
    %v3120 = vrot.slane %v3104, %v3119
    %v3122 = vunpack.c.l.s4 1966171168
    %v3123 = vunpack.c.0.s8 %v3122
    %v3124 = vlaneseq
    %v3125 = vshrl.u32 %v3124, 7
    %v3126 = vsub.s32 %v3123, %v3125
    %v3127 = vrot.slane %v3111, %v3126
    %v3129 = vunpack.c.l.s4 1966171168
    %v3130 = vunpack.c.0.s8 %v3129
    %v3131 = vlaneseq
    %v3132 = vshrl.u32 %v3131, 7
    %v3133 = vsub.s32 %v3130, %v3132
    %v3134 = vrot.slane %v3112, %v3133
    %v3136 = vunpack.c.l.s4 1966171168
    %v3137 = vunpack.c.0.s8 %v3136
    %v3138 = vlaneseq
    %v3139 = vshrl.u32 %v3138, 7
    %v3140 = vsub.s32 %v3137, %v3139
    %v3141 = vrot.slane %v3113, %v3140
    %v3142 = vcombine.high %v3120, %v3120
    %v3143 = vcombine.high %v3127, %v3127
    %v3144 = vcombine.high %v3134, %v3134
    %v3145 = vcombine.high %v3141, %v3141
    %v3146 = vcombine.high %v2767, %v2767
    %v3148 = vunpack.c.l.s4 1966171168
    %v3149 = vunpack.c.0.s8 %v3148
    %v3150 = vlaneseq
    %v3151 = vshrl.u32 %v3150, 7
    %v3152 = vsub.s32 %v3149, %v3151
    %v3153 = vrot.slane %v2767, %v3152
    %v3155 = vunpack.c.l.s4 1966171168
    %v3156 = vunpack.c.0.s8 %v3155
    %v3157 = vlaneseq
    %v3158 = vshrl.u32 %v3157, 7
    %v3159 = vsub.s32 %v3156, %v3158
    %v3160 = vrot.slane %v3146, %v3159
    %v3161 = vcombine.high %v3153, %v3153
    %v3162 = vcombine.high %v3160, %v3160
    %v3164 = vunpack.c.l.s4 1966171168
    %v3165 = vunpack.c.0.s8 %v3164
    %v3166 = vlaneseq
    %v3167 = vshrl.u32 %v3166, 7
    %v3168 = vsub.s32 %v3165, %v3167
    %v3169 = vrot.slane %v3153, %v3168
    %v3171 = vunpack.c.l.s4 1966171168
    %v3172 = vunpack.c.0.s8 %v3171
    %v3173 = vlaneseq
    %v3174 = vshrl.u32 %v3173, 7
    %v3175 = vsub.s32 %v3172, %v3174
    %v3176 = vrot.slane %v3160, %v3175
    %v3178 = vunpack.c.l.s4 1966171168
    %v3179 = vunpack.c.0.s8 %v3178
    %v3180 = vlaneseq
    %v3181 = vshrl.u32 %v3180, 7
    %v3182 = vsub.s32 %v3179, %v3181
    %v3183 = vrot.slane %v3161, %v3182
    %v3185 = vunpack.c.l.s4 1966171168
    %v3186 = vunpack.c.0.s8 %v3185
    %v3187 = vlaneseq
    %v3188 = vshrl.u32 %v3187, 7
    %v3189 = vsub.s32 %v3186, %v3188
    %v3190 = vrot.slane %v3162, %v3189
    %v3191 = vcombine.high %v3169, %v3169
    %v3192 = vcombine.high %v3176, %v3176
    %v3193 = vcombine.high %v3183, %v3183
    %v3194 = vcombine.high %v3190, %v3190
    %v3195 = vcombine.high %v2769, %v2769
    %v3197 = vunpack.c.l.s4 1966171168
    %v3198 = vunpack.c.0.s8 %v3197
    %v3199 = vlaneseq
    %v3200 = vshrl.u32 %v3199, 7
    %v3201 = vsub.s32 %v3198, %v3200
    %v3202 = vrot.slane %v2769, %v3201
    %v3204 = vunpack.c.l.s4 1966171168
    %v3205 = vunpack.c.0.s8 %v3204
    %v3206 = vlaneseq
    %v3207 = vshrl.u32 %v3206, 7
    %v3208 = vsub.s32 %v3205, %v3207
    %v3209 = vrot.slane %v3195, %v3208
    %v3210 = vcombine.high %v3202, %v3202
    %v3211 = vcombine.high %v3209, %v3209
    %v3213 = vunpack.c.l.s4 1966171168
    %v3214 = vunpack.c.0.s8 %v3213
    %v3215 = vlaneseq
    %v3216 = vshrl.u32 %v3215, 7
    %v3217 = vsub.s32 %v3214, %v3216
    %v3218 = vrot.slane %v3202, %v3217
    %v3220 = vunpack.c.l.s4 1966171168
    %v3221 = vunpack.c.0.s8 %v3220
    %v3222 = vlaneseq
    %v3223 = vshrl.u32 %v3222, 7
    %v3224 = vsub.s32 %v3221, %v3223
    %v3225 = vrot.slane %v3209, %v3224
    %v3227 = vunpack.c.l.s4 1966171168
    %v3228 = vunpack.c.0.s8 %v3227
    %v3229 = vlaneseq
    %v3230 = vshrl.u32 %v3229, 7
    %v3231 = vsub.s32 %v3228, %v3230
    %v3232 = vrot.slane %v3210, %v3231
    %v3234 = vunpack.c.l.s4 1966171168
    %v3235 = vunpack.c.0.s8 %v3234
    %v3236 = vlaneseq
    %v3237 = vshrl.u32 %v3236, 7
    %v3238 = vsub.s32 %v3235, %v3237
    %v3239 = vrot.slane %v3211, %v3238
    %v3240 = vcombine.high %v3218, %v3218
    %v3241 = vcombine.high %v3225, %v3225
    %v3242 = vcombine.high %v3232, %v3232
    %v3243 = vcombine.high %v3239, %v3239
    %v3244 = vcombine.high %v2771, %v2771
    %v3246 = vunpack.c.l.s4 1966171168
    %v3247 = vunpack.c.0.s8 %v3246
    %v3248 = vlaneseq
    %v3249 = vshrl.u32 %v3248, 7
    %v3250 = vsub.s32 %v3247, %v3249
    %v3251 = vrot.slane %v2771, %v3250
    %v3253 = vunpack.c.l.s4 1966171168
    %v3254 = vunpack.c.0.s8 %v3253
    %v3255 = vlaneseq
    %v3256 = vshrl.u32 %v3255, 7
    %v3257 = vsub.s32 %v3254, %v3256
    %v3258 = vrot.slane %v3244, %v3257
    %v3259 = vcombine.high %v3251, %v3251
    %v3260 = vcombine.high %v3258, %v3258
    %v3262 = vunpack.c.l.s4 1966171168
    %v3263 = vunpack.c.0.s8 %v3262
    %v3264 = vlaneseq
    %v3265 = vshrl.u32 %v3264, 7
    %v3266 = vsub.s32 %v3263, %v3265
    %v3267 = vrot.slane %v3251, %v3266
    %v3269 = vunpack.c.l.s4 1966171168
    %v3270 = vunpack.c.0.s8 %v3269
    %v3271 = vlaneseq
    %v3272 = vshrl.u32 %v3271, 7
    %v3273 = vsub.s32 %v3270, %v3272
    %v3274 = vrot.slane %v3258, %v3273
    %v3276 = vunpack.c.l.s4 1966171168
    %v3277 = vunpack.c.0.s8 %v3276
    %v3278 = vlaneseq
    %v3279 = vshrl.u32 %v3278, 7
    %v3280 = vsub.s32 %v3277, %v3279
    %v3281 = vrot.slane %v3259, %v3280
    %v3283 = vunpack.c.l.s4 1966171168
    %v3284 = vunpack.c.0.s8 %v3283
    %v3285 = vlaneseq
    %v3286 = vshrl.u32 %v3285, 7
    %v3287 = vsub.s32 %v3284, %v3286
    %v3288 = vrot.slane %v3260, %v3287
    %v3289 = vcombine.high %v3267, %v3267
    %v3290 = vcombine.high %v3274, %v3274
    %v3291 = vcombine.high %v3281, %v3281
    %v3292 = vcombine.high %v3288, %v3288
    %v3293 = vcombine.high %v2773, %v2773
    %v3295 = vunpack.c.l.s4 1966171168
    %v3296 = vunpack.c.0.s8 %v3295
    %v3297 = vlaneseq
    %v3298 = vshrl.u32 %v3297, 7
    %v3299 = vsub.s32 %v3296, %v3298
    %v3300 = vrot.slane %v2773, %v3299
    %v3302 = vunpack.c.l.s4 1966171168
    %v3303 = vunpack.c.0.s8 %v3302
    %v3304 = vlaneseq
    %v3305 = vshrl.u32 %v3304, 7
    %v3306 = vsub.s32 %v3303, %v3305
    %v3307 = vrot.slane %v3293, %v3306
    %v3308 = vcombine.high %v3300, %v3300
    %v3309 = vcombine.high %v3307, %v3307
    %v3311 = vunpack.c.l.s4 1966171168
    %v3312 = vunpack.c.0.s8 %v3311
    %v3313 = vlaneseq
    %v3314 = vshrl.u32 %v3313, 7
    %v3315 = vsub.s32 %v3312, %v3314
    %v3316 = vrot.slane %v3300, %v3315
    %v3318 = vunpack.c.l.s4 1966171168
    %v3319 = vunpack.c.0.s8 %v3318
    %v3320 = vlaneseq
    %v3321 = vshrl.u32 %v3320, 7
    %v3322 = vsub.s32 %v3319, %v3321
    %v3323 = vrot.slane %v3307, %v3322
    %v3325 = vunpack.c.l.s4 1966171168
    %v3326 = vunpack.c.0.s8 %v3325
    %v3327 = vlaneseq
    %v3328 = vshrl.u32 %v3327, 7
    %v3329 = vsub.s32 %v3326, %v3328
    %v3330 = vrot.slane %v3308, %v3329
    %v3332 = vunpack.c.l.s4 1966171168
    %v3333 = vunpack.c.0.s8 %v3332
    %v3334 = vlaneseq
    %v3335 = vshrl.u32 %v3334, 7
    %v3336 = vsub.s32 %v3333, %v3335
    %v3337 = vrot.slane %v3309, %v3336
    %v3338 = vcombine.high %v3316, %v3316
    %v3339 = vcombine.high %v3323, %v3323
    %v3340 = vcombine.high %v3330, %v3330
    %v3341 = vcombine.high %v3337, %v3337
    %v3342 = vcombine.high %v2775, %v2775
    %v3344 = vunpack.c.l.s4 1966171168
    %v3345 = vunpack.c.0.s8 %v3344
    %v3346 = vlaneseq
    %v3347 = vshrl.u32 %v3346, 7
    %v3348 = vsub.s32 %v3345, %v3347
    %v3349 = vrot.slane %v2775, %v3348
    %v3351 = vunpack.c.l.s4 1966171168
    %v3352 = vunpack.c.0.s8 %v3351
    %v3353 = vlaneseq
    %v3354 = vshrl.u32 %v3353, 7
    %v3355 = vsub.s32 %v3352, %v3354
    %v3356 = vrot.slane %v3342, %v3355
    %v3357 = vcombine.high %v3349, %v3349
    %v3358 = vcombine.high %v3356, %v3356
    %v3360 = vunpack.c.l.s4 1966171168
    %v3361 = vunpack.c.0.s8 %v3360
    %v3362 = vlaneseq
    %v3363 = vshrl.u32 %v3362, 7
    %v3364 = vsub.s32 %v3361, %v3363
    %v3365 = vrot.slane %v3349, %v3364
    %v3367 = vunpack.c.l.s4 1966171168
    %v3368 = vunpack.c.0.s8 %v3367
    %v3369 = vlaneseq
    %v3370 = vshrl.u32 %v3369, 7
    %v3371 = vsub.s32 %v3368, %v3370
    %v3372 = vrot.slane %v3356, %v3371
    %v3374 = vunpack.c.l.s4 1966171168
    %v3375 = vunpack.c.0.s8 %v3374
    %v3376 = vlaneseq
    %v3377 = vshrl.u32 %v3376, 7
    %v3378 = vsub.s32 %v3375, %v3377
    %v3379 = vrot.slane %v3357, %v3378
    %v3381 = vunpack.c.l.s4 1966171168
    %v3382 = vunpack.c.0.s8 %v3381
    %v3383 = vlaneseq
    %v3384 = vshrl.u32 %v3383, 7
    %v3385 = vsub.s32 %v3382, %v3384
    %v3386 = vrot.slane %v3358, %v3385
    %v3387 = vcombine.high %v3365, %v3365
    %v3388 = vcombine.high %v3372, %v3372
    %v3389 = vcombine.high %v3379, %v3379
    %v3390 = vcombine.high %v3386, %v3386
    %v3391 = vcombine.high %v2777, %v2777
    %v3393 = vunpack.c.l.s4 1966171168
    %v3394 = vunpack.c.0.s8 %v3393
    %v3395 = vlaneseq
    %v3396 = vshrl.u32 %v3395, 7
    %v3397 = vsub.s32 %v3394, %v3396
    %v3398 = vrot.slane %v2777, %v3397
    %v3400 = vunpack.c.l.s4 1966171168
    %v3401 = vunpack.c.0.s8 %v3400
    %v3402 = vlaneseq
    %v3403 = vshrl.u32 %v3402, 7
    %v3404 = vsub.s32 %v3401, %v3403
    %v3405 = vrot.slane %v3391, %v3404
    %v3406 = vcombine.high %v3398, %v3398
    %v3407 = vcombine.high %v3405, %v3405
    %v3409 = vunpack.c.l.s4 1966171168
    %v3410 = vunpack.c.0.s8 %v3409
    %v3411 = vlaneseq
    %v3412 = vshrl.u32 %v3411, 7
    %v3413 = vsub.s32 %v3410, %v3412
    %v3414 = vrot.slane %v3398, %v3413
    %v3416 = vunpack.c.l.s4 1966171168
    %v3417 = vunpack.c.0.s8 %v3416
    %v3418 = vlaneseq
    %v3419 = vshrl.u32 %v3418, 7
    %v3420 = vsub.s32 %v3417, %v3419
    %v3421 = vrot.slane %v3405, %v3420
    %v3423 = vunpack.c.l.s4 1966171168
    %v3424 = vunpack.c.0.s8 %v3423
    %v3425 = vlaneseq
    %v3426 = vshrl.u32 %v3425, 7
    %v3427 = vsub.s32 %v3424, %v3426
    %v3428 = vrot.slane %v3406, %v3427
    %v3430 = vunpack.c.l.s4 1966171168
    %v3431 = vunpack.c.0.s8 %v3430
    %v3432 = vlaneseq
    %v3433 = vshrl.u32 %v3432, 7
    %v3434 = vsub.s32 %v3431, %v3433
    %v3435 = vrot.slane %v3407, %v3434
    %v3436 = vcombine.high %v3414, %v3414
    %v3437 = vcombine.high %v3421, %v3421
    %v3438 = vcombine.high %v3428, %v3428
    %v3439 = vcombine.high %v3435, %v3435
    %v3440 = vcombine.high %v2779, %v2779
    %v3442 = vunpack.c.l.s4 1966171168
    %v3443 = vunpack.c.0.s8 %v3442
    %v3444 = vlaneseq
    %v3445 = vshrl.u32 %v3444, 7
    %v3446 = vsub.s32 %v3443, %v3445
    %v3447 = vrot.slane %v2779, %v3446
    %v3449 = vunpack.c.l.s4 1966171168
    %v3450 = vunpack.c.0.s8 %v3449
    %v3451 = vlaneseq
    %v3452 = vshrl.u32 %v3451, 7
    %v3453 = vsub.s32 %v3450, %v3452
    %v3454 = vrot.slane %v3440, %v3453
    %v3455 = vcombine.high %v3447, %v3447
    %v3456 = vcombine.high %v3454, %v3454
    %v3458 = vunpack.c.l.s4 1966171168
    %v3459 = vunpack.c.0.s8 %v3458
    %v3460 = vlaneseq
    %v3461 = vshrl.u32 %v3460, 7
    %v3462 = vsub.s32 %v3459, %v3461
    %v3463 = vrot.slane %v3447, %v3462
    %v3465 = vunpack.c.l.s4 1966171168
    %v3466 = vunpack.c.0.s8 %v3465
    %v3467 = vlaneseq
    %v3468 = vshrl.u32 %v3467, 7
    %v3469 = vsub.s32 %v3466, %v3468
    %v3470 = vrot.slane %v3454, %v3469
    %v3472 = vunpack.c.l.s4 1966171168
    %v3473 = vunpack.c.0.s8 %v3472
    %v3474 = vlaneseq
    %v3475 = vshrl.u32 %v3474, 7
    %v3476 = vsub.s32 %v3473, %v3475
    %v3477 = vrot.slane %v3455, %v3476
    %v3479 = vunpack.c.l.s4 1966171168
    %v3480 = vunpack.c.0.s8 %v3479
    %v3481 = vlaneseq
    %v3482 = vshrl.u32 %v3481, 7
    %v3483 = vsub.s32 %v3480, %v3482
    %v3484 = vrot.slane %v3456, %v3483
    %v3485 = vcombine.high %v3463, %v3463
    %v3486 = vcombine.high %v3470, %v3470
    %v3487 = vcombine.high %v3477, %v3477
    %v3488 = vcombine.high %v3484, %v3484
    %v3489 = vcombine.high %v2781, %v2781
    %v3491 = vunpack.c.l.s4 1966171168
    %v3492 = vunpack.c.0.s8 %v3491
    %v3493 = vlaneseq
    %v3494 = vshrl.u32 %v3493, 7
    %v3495 = vsub.s32 %v3492, %v3494
    %v3496 = vrot.slane %v2781, %v3495
    %v3498 = vunpack.c.l.s4 1966171168
    %v3499 = vunpack.c.0.s8 %v3498
    %v3500 = vlaneseq
    %v3501 = vshrl.u32 %v3500, 7
    %v3502 = vsub.s32 %v3499, %v3501
    %v3503 = vrot.slane %v3489, %v3502
    %v3504 = vcombine.high %v3496, %v3496
    %v3505 = vcombine.high %v3503, %v3503
    %v3507 = vunpack.c.l.s4 1966171168
    %v3508 = vunpack.c.0.s8 %v3507
    %v3509 = vlaneseq
    %v3510 = vshrl.u32 %v3509, 7
    %v3511 = vsub.s32 %v3508, %v3510
    %v3512 = vrot.slane %v3496, %v3511
    %v3514 = vunpack.c.l.s4 1966171168
    %v3515 = vunpack.c.0.s8 %v3514
    %v3516 = vlaneseq
    %v3517 = vshrl.u32 %v3516, 7
    %v3518 = vsub.s32 %v3515, %v3517
    %v3519 = vrot.slane %v3503, %v3518
    %v3521 = vunpack.c.l.s4 1966171168
    %v3522 = vunpack.c.0.s8 %v3521
    %v3523 = vlaneseq
    %v3524 = vshrl.u32 %v3523, 7
    %v3525 = vsub.s32 %v3522, %v3524
    %v3526 = vrot.slane %v3504, %v3525
    %v3528 = vunpack.c.l.s4 1966171168
    %v3529 = vunpack.c.0.s8 %v3528
    %v3530 = vlaneseq
    %v3531 = vshrl.u32 %v3530, 7
    %v3532 = vsub.s32 %v3529, %v3531
    %v3533 = vrot.slane %v3505, %v3532
    %v3534 = vcombine.high %v3512, %v3512
    %v3535 = vcombine.high %v3519, %v3519
    %v3536 = vcombine.high %v3526, %v3526
    %v3537 = vcombine.high %v3533, %v3533
    %v3538 = vcombine.high %v2783, %v2783
    %v3540 = vunpack.c.l.s4 1966171168
    %v3541 = vunpack.c.0.s8 %v3540
    %v3542 = vlaneseq
    %v3543 = vshrl.u32 %v3542, 7
    %v3544 = vsub.s32 %v3541, %v3543
    %v3545 = vrot.slane %v2783, %v3544
    %v3547 = vunpack.c.l.s4 1966171168
    %v3548 = vunpack.c.0.s8 %v3547
    %v3549 = vlaneseq
    %v3550 = vshrl.u32 %v3549, 7
    %v3551 = vsub.s32 %v3548, %v3550
    %v3552 = vrot.slane %v3538, %v3551
    %v3553 = vcombine.high %v3545, %v3545
    %v3554 = vcombine.high %v3552, %v3552
    %v3556 = vunpack.c.l.s4 1966171168
    %v3557 = vunpack.c.0.s8 %v3556
    %v3558 = vlaneseq
    %v3559 = vshrl.u32 %v3558, 7
    %v3560 = vsub.s32 %v3557, %v3559
    %v3561 = vrot.slane %v3545, %v3560
    %v3563 = vunpack.c.l.s4 1966171168
    %v3564 = vunpack.c.0.s8 %v3563
    %v3565 = vlaneseq
    %v3566 = vshrl.u32 %v3565, 7
    %v3567 = vsub.s32 %v3564, %v3566
    %v3568 = vrot.slane %v3552, %v3567
    %v3570 = vunpack.c.l.s4 1966171168
    %v3571 = vunpack.c.0.s8 %v3570
    %v3572 = vlaneseq
    %v3573 = vshrl.u32 %v3572, 7
    %v3574 = vsub.s32 %v3571, %v3573
    %v3575 = vrot.slane %v3553, %v3574
    %v3577 = vunpack.c.l.s4 1966171168
    %v3578 = vunpack.c.0.s8 %v3577
    %v3579 = vlaneseq
    %v3580 = vshrl.u32 %v3579, 7
    %v3581 = vsub.s32 %v3578, %v3580
    %v3582 = vrot.slane %v3554, %v3581
    %v3583 = vcombine.high %v3561, %v3561
    %v3584 = vcombine.high %v3568, %v3568
    %v3585 = vcombine.high %v3575, %v3575
    %v3586 = vcombine.high %v3582, %v3582
    %v3587 = vcombine.high %v2785, %v2785
    %v3589 = vunpack.c.l.s4 1966171168
    %v3590 = vunpack.c.0.s8 %v3589
    %v3591 = vlaneseq
    %v3592 = vshrl.u32 %v3591, 7
    %v3593 = vsub.s32 %v3590, %v3592
    %v3594 = vrot.slane %v2785, %v3593
    %v3596 = vunpack.c.l.s4 1966171168
    %v3597 = vunpack.c.0.s8 %v3596
    %v3598 = vlaneseq
    %v3599 = vshrl.u32 %v3598, 7
    %v3600 = vsub.s32 %v3597, %v3599
    %v3601 = vrot.slane %v3587, %v3600
    %v3602 = vcombine.high %v3594, %v3594
    %v3603 = vcombine.high %v3601, %v3601
    %v3605 = vunpack.c.l.s4 1966171168
    %v3606 = vunpack.c.0.s8 %v3605
    %v3607 = vlaneseq
    %v3608 = vshrl.u32 %v3607, 7
    %v3609 = vsub.s32 %v3606, %v3608
    %v3610 = vrot.slane %v3594, %v3609
    %v3612 = vunpack.c.l.s4 1966171168
    %v3613 = vunpack.c.0.s8 %v3612
    %v3614 = vlaneseq
    %v3615 = vshrl.u32 %v3614, 7
    %v3616 = vsub.s32 %v3613, %v3615
    %v3617 = vrot.slane %v3601, %v3616
    %v3619 = vunpack.c.l.s4 1966171168
    %v3620 = vunpack.c.0.s8 %v3619
    %v3621 = vlaneseq
    %v3622 = vshrl.u32 %v3621, 7
    %v3623 = vsub.s32 %v3620, %v3622
    %v3624 = vrot.slane %v3602, %v3623
    %v3626 = vunpack.c.l.s4 1966171168
    %v3627 = vunpack.c.0.s8 %v3626
    %v3628 = vlaneseq
    %v3629 = vshrl.u32 %v3628, 7
    %v3630 = vsub.s32 %v3627, %v3629
    %v3631 = vrot.slane %v3603, %v3630
    %v3632 = vcombine.high %v3610, %v3610
    %v3633 = vcombine.high %v3617, %v3617
    %v3634 = vcombine.high %v3624, %v3624
    %v3635 = vcombine.high %v3631, %v3631
    %v3636 = vcombine.high %v2787, %v2787
    %v3638 = vunpack.c.l.s4 1966171168
    %v3639 = vunpack.c.0.s8 %v3638
    %v3640 = vlaneseq
    %v3641 = vshrl.u32 %v3640, 7
    %v3642 = vsub.s32 %v3639, %v3641
    %v3643 = vrot.slane %v2787, %v3642
    %v3645 = vunpack.c.l.s4 1966171168
    %v3646 = vunpack.c.0.s8 %v3645
    %v3647 = vlaneseq
    %v3648 = vshrl.u32 %v3647, 7
    %v3649 = vsub.s32 %v3646, %v3648
    %v3650 = vrot.slane %v3636, %v3649
    %v3651 = vcombine.high %v3643, %v3643
    %v3652 = vcombine.high %v3650, %v3650
    %v3654 = vunpack.c.l.s4 1966171168
    %v3655 = vunpack.c.0.s8 %v3654
    %v3656 = vlaneseq
    %v3657 = vshrl.u32 %v3656, 7
    %v3658 = vsub.s32 %v3655, %v3657
    %v3659 = vrot.slane %v3643, %v3658
    %v3661 = vunpack.c.l.s4 1966171168
    %v3662 = vunpack.c.0.s8 %v3661
    %v3663 = vlaneseq
    %v3664 = vshrl.u32 %v3663, 7
    %v3665 = vsub.s32 %v3662, %v3664
    %v3666 = vrot.slane %v3650, %v3665
    %v3668 = vunpack.c.l.s4 1966171168
    %v3669 = vunpack.c.0.s8 %v3668
    %v3670 = vlaneseq
    %v3671 = vshrl.u32 %v3670, 7
    %v3672 = vsub.s32 %v3669, %v3671
    %v3673 = vrot.slane %v3651, %v3672
    %v3675 = vunpack.c.l.s4 1966171168
    %v3676 = vunpack.c.0.s8 %v3675
    %v3677 = vlaneseq
    %v3678 = vshrl.u32 %v3677, 7
    %v3679 = vsub.s32 %v3676, %v3678
    %v3680 = vrot.slane %v3652, %v3679
    %v3681 = vcombine.high %v3659, %v3659
    %v3682 = vcombine.high %v3666, %v3666
    %v3683 = vcombine.high %v3673, %v3673
    %v3684 = vcombine.high %v3680, %v3680
    %v3685 = vcombine.high %v2789, %v2789
    %v3687 = vunpack.c.l.s4 1966171168
    %v3688 = vunpack.c.0.s8 %v3687
    %v3689 = vlaneseq
    %v3690 = vshrl.u32 %v3689, 7
    %v3691 = vsub.s32 %v3688, %v3690
    %v3692 = vrot.slane %v2789, %v3691
    %v3694 = vunpack.c.l.s4 1966171168
    %v3695 = vunpack.c.0.s8 %v3694
    %v3696 = vlaneseq
    %v3697 = vshrl.u32 %v3696, 7
    %v3698 = vsub.s32 %v3695, %v3697
    %v3699 = vrot.slane %v3685, %v3698
    %v3700 = vcombine.high %v3692, %v3692
    %v3701 = vcombine.high %v3699, %v3699
    %v3703 = vunpack.c.l.s4 1966171168
    %v3704 = vunpack.c.0.s8 %v3703
    %v3705 = vlaneseq
    %v3706 = vshrl.u32 %v3705, 7
    %v3707 = vsub.s32 %v3704, %v3706
    %v3708 = vrot.slane %v3692, %v3707
    %v3710 = vunpack.c.l.s4 1966171168
    %v3711 = vunpack.c.0.s8 %v3710
    %v3712 = vlaneseq
    %v3713 = vshrl.u32 %v3712, 7
    %v3714 = vsub.s32 %v3711, %v3713
    %v3715 = vrot.slane %v3699, %v3714
    %v3717 = vunpack.c.l.s4 1966171168
    %v3718 = vunpack.c.0.s8 %v3717
    %v3719 = vlaneseq
    %v3720 = vshrl.u32 %v3719, 7
    %v3721 = vsub.s32 %v3718, %v3720
    %v3722 = vrot.slane %v3700, %v3721
    %v3724 = vunpack.c.l.s4 1966171168
    %v3725 = vunpack.c.0.s8 %v3724
    %v3726 = vlaneseq
    %v3727 = vshrl.u32 %v3726, 7
    %v3728 = vsub.s32 %v3725, %v3727
    %v3729 = vrot.slane %v3701, %v3728
    %v3730 = vcombine.high %v3708, %v3708
    %v3731 = vcombine.high %v3715, %v3715
    %v3732 = vcombine.high %v3722, %v3722
    %v3733 = vcombine.high %v3729, %v3729
    %v3734 = vcombine.high %v2791, %v2791
    %v3736 = vunpack.c.l.s4 1966171168
    %v3737 = vunpack.c.0.s8 %v3736
    %v3738 = vlaneseq
    %v3739 = vshrl.u32 %v3738, 7
    %v3740 = vsub.s32 %v3737, %v3739
    %v3741 = vrot.slane %v2791, %v3740
    %v3743 = vunpack.c.l.s4 1966171168
    %v3744 = vunpack.c.0.s8 %v3743
    %v3745 = vlaneseq
    %v3746 = vshrl.u32 %v3745, 7
    %v3747 = vsub.s32 %v3744, %v3746
    %v3748 = vrot.slane %v3734, %v3747
    %v3749 = vcombine.high %v3741, %v3741
    %v3750 = vcombine.high %v3748, %v3748
    %v3752 = vunpack.c.l.s4 1966171168
    %v3753 = vunpack.c.0.s8 %v3752
    %v3754 = vlaneseq
    %v3755 = vshrl.u32 %v3754, 7
    %v3756 = vsub.s32 %v3753, %v3755
    %v3757 = vrot.slane %v3741, %v3756
    %v3759 = vunpack.c.l.s4 1966171168
    %v3760 = vunpack.c.0.s8 %v3759
    %v3761 = vlaneseq
    %v3762 = vshrl.u32 %v3761, 7
    %v3763 = vsub.s32 %v3760, %v3762
    %v3764 = vrot.slane %v3748, %v3763
    %v3766 = vunpack.c.l.s4 1966171168
    %v3767 = vunpack.c.0.s8 %v3766
    %v3768 = vlaneseq
    %v3769 = vshrl.u32 %v3768, 7
    %v3770 = vsub.s32 %v3767, %v3769
    %v3771 = vrot.slane %v3749, %v3770
    %v3773 = vunpack.c.l.s4 1966171168
    %v3774 = vunpack.c.0.s8 %v3773
    %v3775 = vlaneseq
    %v3776 = vshrl.u32 %v3775, 7
    %v3777 = vsub.s32 %v3774, %v3776
    %v3778 = vrot.slane %v3750, %v3777
    %v3779 = vcombine.high %v3757, %v3757
    %v3780 = vcombine.high %v3764, %v3764
    %v3781 = vcombine.high %v3771, %v3771
    %v3782 = vcombine.high %v3778, %v3778
    %v3783 = vcombine.high %v2793, %v2793
    %v3785 = vunpack.c.l.s4 1966171168
    %v3786 = vunpack.c.0.s8 %v3785
    %v3787 = vlaneseq
    %v3788 = vshrl.u32 %v3787, 7
    %v3789 = vsub.s32 %v3786, %v3788
    %v3790 = vrot.slane %v2793, %v3789
    %v3792 = vunpack.c.l.s4 1966171168
    %v3793 = vunpack.c.0.s8 %v3792
    %v3794 = vlaneseq
    %v3795 = vshrl.u32 %v3794, 7
    %v3796 = vsub.s32 %v3793, %v3795
    %v3797 = vrot.slane %v3783, %v3796
    %v3798 = vcombine.high %v3790, %v3790
    %v3799 = vcombine.high %v3797, %v3797
    %v3801 = vunpack.c.l.s4 1966171168
    %v3802 = vunpack.c.0.s8 %v3801
    %v3803 = vlaneseq
    %v3804 = vshrl.u32 %v3803, 7
    %v3805 = vsub.s32 %v3802, %v3804
    %v3806 = vrot.slane %v3790, %v3805
    %v3808 = vunpack.c.l.s4 1966171168
    %v3809 = vunpack.c.0.s8 %v3808
    %v3810 = vlaneseq
    %v3811 = vshrl.u32 %v3810, 7
    %v3812 = vsub.s32 %v3809, %v3811
    %v3813 = vrot.slane %v3797, %v3812
    %v3815 = vunpack.c.l.s4 1966171168
    %v3816 = vunpack.c.0.s8 %v3815
    %v3817 = vlaneseq
    %v3818 = vshrl.u32 %v3817, 7
    %v3819 = vsub.s32 %v3816, %v3818
    %v3820 = vrot.slane %v3798, %v3819
    %v3822 = vunpack.c.l.s4 1966171168
    %v3823 = vunpack.c.0.s8 %v3822
    %v3824 = vlaneseq
    %v3825 = vshrl.u32 %v3824, 7
    %v3826 = vsub.s32 %v3823, %v3825
    %v3827 = vrot.slane %v3799, %v3826
    %v3828 = vcombine.high %v3806, %v3806
    %v3829 = vcombine.high %v3813, %v3813
    %v3830 = vcombine.high %v3820, %v3820
    %v3831 = vcombine.high %v3827, %v3827
    %v3832 = vcombine.high %v2795, %v2795
    %v3834 = vunpack.c.l.s4 1966171168
    %v3835 = vunpack.c.0.s8 %v3834
    %v3836 = vlaneseq
    %v3837 = vshrl.u32 %v3836, 7
    %v3838 = vsub.s32 %v3835, %v3837
    %v3839 = vrot.slane %v2795, %v3838
    %v3841 = vunpack.c.l.s4 1966171168
    %v3842 = vunpack.c.0.s8 %v3841
    %v3843 = vlaneseq
    %v3844 = vshrl.u32 %v3843, 7
    %v3845 = vsub.s32 %v3842, %v3844
    %v3846 = vrot.slane %v3832, %v3845
    %v3847 = vcombine.high %v3839, %v3839
    %v3848 = vcombine.high %v3846, %v3846
    %v3850 = vunpack.c.l.s4 1966171168
    %v3851 = vunpack.c.0.s8 %v3850
    %v3852 = vlaneseq
    %v3853 = vshrl.u32 %v3852, 7
    %v3854 = vsub.s32 %v3851, %v3853
    %v3855 = vrot.slane %v3839, %v3854
    %v3857 = vunpack.c.l.s4 1966171168
    %v3858 = vunpack.c.0.s8 %v3857
    %v3859 = vlaneseq
    %v3860 = vshrl.u32 %v3859, 7
    %v3861 = vsub.s32 %v3858, %v3860
    %v3862 = vrot.slane %v3846, %v3861
    %v3864 = vunpack.c.l.s4 1966171168
    %v3865 = vunpack.c.0.s8 %v3864
    %v3866 = vlaneseq
    %v3867 = vshrl.u32 %v3866, 7
    %v3868 = vsub.s32 %v3865, %v3867
    %v3869 = vrot.slane %v3847, %v3868
    %v3871 = vunpack.c.l.s4 1966171168
    %v3872 = vunpack.c.0.s8 %v3871
    %v3873 = vlaneseq
    %v3874 = vshrl.u32 %v3873, 7
    %v3875 = vsub.s32 %v3872, %v3874
    %v3876 = vrot.slane %v3848, %v3875
    %v3877 = vcombine.high %v3855, %v3855
    %v3878 = vcombine.high %v3862, %v3862
    %v3879 = vcombine.high %v3869, %v3869
    %v3880 = vcombine.high %v3876, %v3876
    %v3881 = vcombine.high %v2797, %v2797
    %v3883 = vunpack.c.l.s4 1966171168
    %v3884 = vunpack.c.0.s8 %v3883
    %v3885 = vlaneseq
    %v3886 = vshrl.u32 %v3885, 7
    %v3887 = vsub.s32 %v3884, %v3886
    %v3888 = vrot.slane %v2797, %v3887
    %v3890 = vunpack.c.l.s4 1966171168
    %v3891 = vunpack.c.0.s8 %v3890
    %v3892 = vlaneseq
    %v3893 = vshrl.u32 %v3892, 7
    %v3894 = vsub.s32 %v3891, %v3893
    %v3895 = vrot.slane %v3881, %v3894
    %v3896 = vcombine.high %v3888, %v3888
    %v3897 = vcombine.high %v3895, %v3895
    %v3899 = vunpack.c.l.s4 1966171168
    %v3900 = vunpack.c.0.s8 %v3899
    %v3901 = vlaneseq
    %v3902 = vshrl.u32 %v3901, 7
    %v3903 = vsub.s32 %v3900, %v3902
    %v3904 = vrot.slane %v3888, %v3903
    %v3906 = vunpack.c.l.s4 1966171168
    %v3907 = vunpack.c.0.s8 %v3906
    %v3908 = vlaneseq
    %v3909 = vshrl.u32 %v3908, 7
    %v3910 = vsub.s32 %v3907, %v3909
    %v3911 = vrot.slane %v3895, %v3910
    %v3913 = vunpack.c.l.s4 1966171168
    %v3914 = vunpack.c.0.s8 %v3913
    %v3915 = vlaneseq
    %v3916 = vshrl.u32 %v3915, 7
    %v3917 = vsub.s32 %v3914, %v3916
    %v3918 = vrot.slane %v3896, %v3917
    %v3920 = vunpack.c.l.s4 1966171168
    %v3921 = vunpack.c.0.s8 %v3920
    %v3922 = vlaneseq
    %v3923 = vshrl.u32 %v3922, 7
    %v3924 = vsub.s32 %v3921, %v3923
    %v3925 = vrot.slane %v3897, %v3924
    %v3926 = vcombine.high %v3904, %v3904
    %v3927 = vcombine.high %v3911, %v3911
    %v3928 = vcombine.high %v3918, %v3918
    %v3929 = vcombine.high %v3925, %v3925
    %v3930 = vcombine.high %v2799, %v2799
    %v3932 = vunpack.c.l.s4 1966171168
    %v3933 = vunpack.c.0.s8 %v3932
    %v3934 = vlaneseq
    %v3935 = vshrl.u32 %v3934, 7
    %v3936 = vsub.s32 %v3933, %v3935
    %v3937 = vrot.slane %v2799, %v3936
    %v3939 = vunpack.c.l.s4 1966171168
    %v3940 = vunpack.c.0.s8 %v3939
    %v3941 = vlaneseq
    %v3942 = vshrl.u32 %v3941, 7
    %v3943 = vsub.s32 %v3940, %v3942
    %v3944 = vrot.slane %v3930, %v3943
    %v3945 = vcombine.high %v3937, %v3937
    %v3946 = vcombine.high %v3944, %v3944
    %v3948 = vunpack.c.l.s4 1966171168
    %v3949 = vunpack.c.0.s8 %v3948
    %v3950 = vlaneseq
    %v3951 = vshrl.u32 %v3950, 7
    %v3952 = vsub.s32 %v3949, %v3951
    %v3953 = vrot.slane %v3937, %v3952
    %v3955 = vunpack.c.l.s4 1966171168
    %v3956 = vunpack.c.0.s8 %v3955
    %v3957 = vlaneseq
    %v3958 = vshrl.u32 %v3957, 7
    %v3959 = vsub.s32 %v3956, %v3958
    %v3960 = vrot.slane %v3944, %v3959
    %v3962 = vunpack.c.l.s4 1966171168
    %v3963 = vunpack.c.0.s8 %v3962
    %v3964 = vlaneseq
    %v3965 = vshrl.u32 %v3964, 7
    %v3966 = vsub.s32 %v3963, %v3965
    %v3967 = vrot.slane %v3945, %v3966
    %v3969 = vunpack.c.l.s4 1966171168
    %v3970 = vunpack.c.0.s8 %v3969
    %v3971 = vlaneseq
    %v3972 = vshrl.u32 %v3971, 7
    %v3973 = vsub.s32 %v3970, %v3972
    %v3974 = vrot.slane %v3946, %v3973
    %v3975 = vcombine.high %v3953, %v3953
    %v3976 = vcombine.high %v3960, %v3960
    %v3977 = vcombine.high %v3967, %v3967
    %v3978 = vcombine.high %v3974, %v3974
    %v3979 = vcombine.high %v2801, %v2801
    %v3981 = vunpack.c.l.s4 1966171168
    %v3982 = vunpack.c.0.s8 %v3981
    %v3983 = vlaneseq
    %v3984 = vshrl.u32 %v3983, 7
    %v3985 = vsub.s32 %v3982, %v3984
    %v3986 = vrot.slane %v2801, %v3985
    %v3988 = vunpack.c.l.s4 1966171168
    %v3989 = vunpack.c.0.s8 %v3988
    %v3990 = vlaneseq
    %v3991 = vshrl.u32 %v3990, 7
    %v3992 = vsub.s32 %v3989, %v3991
    %v3993 = vrot.slane %v3979, %v3992
    %v3994 = vcombine.high %v3986, %v3986
    %v3995 = vcombine.high %v3993, %v3993
    %v3997 = vunpack.c.l.s4 1966171168
    %v3998 = vunpack.c.0.s8 %v3997
    %v3999 = vlaneseq
    %v4000 = vshrl.u32 %v3999, 7
    %v4001 = vsub.s32 %v3998, %v4000
    %v4002 = vrot.slane %v3986, %v4001
    %v4004 = vunpack.c.l.s4 1966171168
    %v4005 = vunpack.c.0.s8 %v4004
    %v4006 = vlaneseq
    %v4007 = vshrl.u32 %v4006, 7
    %v4008 = vsub.s32 %v4005, %v4007
    %v4009 = vrot.slane %v3993, %v4008
    %v4011 = vunpack.c.l.s4 1966171168
    %v4012 = vunpack.c.0.s8 %v4011
    %v4013 = vlaneseq
    %v4014 = vshrl.u32 %v4013, 7
    %v4015 = vsub.s32 %v4012, %v4014
    %v4016 = vrot.slane %v3994, %v4015
    %v4018 = vunpack.c.l.s4 1966171168
    %v4019 = vunpack.c.0.s8 %v4018
    %v4020 = vlaneseq
    %v4021 = vshrl.u32 %v4020, 7
    %v4022 = vsub.s32 %v4019, %v4021
    %v4023 = vrot.slane %v3995, %v4022
    %v4024 = vcombine.high %v4002, %v4002
    %v4025 = vcombine.high %v4009, %v4009
    %v4026 = vcombine.high %v4016, %v4016
    %v4027 = vcombine.high %v4023, %v4023
    %v4028 = vcombine.high %v2803, %v2803
    %v4030 = vunpack.c.l.s4 1966171168
    %v4031 = vunpack.c.0.s8 %v4030
    %v4032 = vlaneseq
    %v4033 = vshrl.u32 %v4032, 7
    %v4034 = vsub.s32 %v4031, %v4033
    %v4035 = vrot.slane %v2803, %v4034
    %v4037 = vunpack.c.l.s4 1966171168
    %v4038 = vunpack.c.0.s8 %v4037
    %v4039 = vlaneseq
    %v4040 = vshrl.u32 %v4039, 7
    %v4041 = vsub.s32 %v4038, %v4040
    %v4042 = vrot.slane %v4028, %v4041
    %v4043 = vcombine.high %v4035, %v4035
    %v4044 = vcombine.high %v4042, %v4042
    %v4046 = vunpack.c.l.s4 1966171168
    %v4047 = vunpack.c.0.s8 %v4046
    %v4048 = vlaneseq
    %v4049 = vshrl.u32 %v4048, 7
    %v4050 = vsub.s32 %v4047, %v4049
    %v4051 = vrot.slane %v4035, %v4050
    %v4053 = vunpack.c.l.s4 1966171168
    %v4054 = vunpack.c.0.s8 %v4053
    %v4055 = vlaneseq
    %v4056 = vshrl.u32 %v4055, 7
    %v4057 = vsub.s32 %v4054, %v4056
    %v4058 = vrot.slane %v4042, %v4057
    %v4060 = vunpack.c.l.s4 1966171168
    %v4061 = vunpack.c.0.s8 %v4060
    %v4062 = vlaneseq
    %v4063 = vshrl.u32 %v4062, 7
    %v4064 = vsub.s32 %v4061, %v4063
    %v4065 = vrot.slane %v4043, %v4064
    %v4067 = vunpack.c.l.s4 1966171168
    %v4068 = vunpack.c.0.s8 %v4067
    %v4069 = vlaneseq
    %v4070 = vshrl.u32 %v4069, 7
    %v4071 = vsub.s32 %v4068, %v4070
    %v4072 = vrot.slane %v4044, %v4071
    %v4073 = vcombine.high %v4051, %v4051
    %v4074 = vcombine.high %v4058, %v4058
    %v4075 = vcombine.high %v4065, %v4065
    %v4076 = vcombine.high %v4072, %v4072
    %v4077 = vcombine.high %v2805, %v2805
    %v4079 = vunpack.c.l.s4 1966171168
    %v4080 = vunpack.c.0.s8 %v4079
    %v4081 = vlaneseq
    %v4082 = vshrl.u32 %v4081, 7
    %v4083 = vsub.s32 %v4080, %v4082
    %v4084 = vrot.slane %v2805, %v4083
    %v4086 = vunpack.c.l.s4 1966171168
    %v4087 = vunpack.c.0.s8 %v4086
    %v4088 = vlaneseq
    %v4089 = vshrl.u32 %v4088, 7
    %v4090 = vsub.s32 %v4087, %v4089
    %v4091 = vrot.slane %v4077, %v4090
    %v4092 = vcombine.high %v4084, %v4084
    %v4093 = vcombine.high %v4091, %v4091
    %v4095 = vunpack.c.l.s4 1966171168
    %v4096 = vunpack.c.0.s8 %v4095
    %v4097 = vlaneseq
    %v4098 = vshrl.u32 %v4097, 7
    %v4099 = vsub.s32 %v4096, %v4098
    %v4100 = vrot.slane %v4084, %v4099
    %v4102 = vunpack.c.l.s4 1966171168
    %v4103 = vunpack.c.0.s8 %v4102
    %v4104 = vlaneseq
    %v4105 = vshrl.u32 %v4104, 7
    %v4106 = vsub.s32 %v4103, %v4105
    %v4107 = vrot.slane %v4091, %v4106
    %v4109 = vunpack.c.l.s4 1966171168
    %v4110 = vunpack.c.0.s8 %v4109
    %v4111 = vlaneseq
    %v4112 = vshrl.u32 %v4111, 7
    %v4113 = vsub.s32 %v4110, %v4112
    %v4114 = vrot.slane %v4092, %v4113
    %v4116 = vunpack.c.l.s4 1966171168
    %v4117 = vunpack.c.0.s8 %v4116
    %v4118 = vlaneseq
    %v4119 = vshrl.u32 %v4118, 7
    %v4120 = vsub.s32 %v4117, %v4119
    %v4121 = vrot.slane %v4093, %v4120
    %v4122 = vcombine.high %v4100, %v4100
    %v4123 = vcombine.high %v4107, %v4107
    %v4124 = vcombine.high %v4114, %v4114
    %v4125 = vcombine.high %v4121, %v4121
    %v4126 = vcombine.high %v2807, %v2807
    %v4128 = vunpack.c.l.s4 1966171168
    %v4129 = vunpack.c.0.s8 %v4128
    %v4130 = vlaneseq
    %v4131 = vshrl.u32 %v4130, 7
    %v4132 = vsub.s32 %v4129, %v4131
    %v4133 = vrot.slane %v2807, %v4132
    %v4135 = vunpack.c.l.s4 1966171168
    %v4136 = vunpack.c.0.s8 %v4135
    %v4137 = vlaneseq
    %v4138 = vshrl.u32 %v4137, 7
    %v4139 = vsub.s32 %v4136, %v4138
    %v4140 = vrot.slane %v4126, %v4139
    %v4141 = vcombine.high %v4133, %v4133
    %v4142 = vcombine.high %v4140, %v4140
    %v4144 = vunpack.c.l.s4 1966171168
    %v4145 = vunpack.c.0.s8 %v4144
    %v4146 = vlaneseq
    %v4147 = vshrl.u32 %v4146, 7
    %v4148 = vsub.s32 %v4145, %v4147
    %v4149 = vrot.slane %v4133, %v4148
    %v4151 = vunpack.c.l.s4 1966171168
    %v4152 = vunpack.c.0.s8 %v4151
    %v4153 = vlaneseq
    %v4154 = vshrl.u32 %v4153, 7
    %v4155 = vsub.s32 %v4152, %v4154
    %v4156 = vrot.slane %v4140, %v4155
    %v4158 = vunpack.c.l.s4 1966171168
    %v4159 = vunpack.c.0.s8 %v4158
    %v4160 = vlaneseq
    %v4161 = vshrl.u32 %v4160, 7
    %v4162 = vsub.s32 %v4159, %v4161
    %v4163 = vrot.slane %v4141, %v4162
    %v4165 = vunpack.c.l.s4 1966171168
    %v4166 = vunpack.c.0.s8 %v4165
    %v4167 = vlaneseq
    %v4168 = vshrl.u32 %v4167, 7
    %v4169 = vsub.s32 %v4166, %v4168
    %v4170 = vrot.slane %v4142, %v4169
    %v4171 = vcombine.high %v4149, %v4149
    %v4172 = vcombine.high %v4156, %v4156
    %v4173 = vcombine.high %v4163, %v4163
    %v4174 = vcombine.high %v4170, %v4170
    %v4175 = vcombine.high %v2809, %v2809
    %v4177 = vunpack.c.l.s4 1966171168
    %v4178 = vunpack.c.0.s8 %v4177
    %v4179 = vlaneseq
    %v4180 = vshrl.u32 %v4179, 7
    %v4181 = vsub.s32 %v4178, %v4180
    %v4182 = vrot.slane %v2809, %v4181
    %v4184 = vunpack.c.l.s4 1966171168
    %v4185 = vunpack.c.0.s8 %v4184
    %v4186 = vlaneseq
    %v4187 = vshrl.u32 %v4186, 7
    %v4188 = vsub.s32 %v4185, %v4187
    %v4189 = vrot.slane %v4175, %v4188
    %v4190 = vcombine.high %v4182, %v4182
    %v4191 = vcombine.high %v4189, %v4189
    %v4193 = vunpack.c.l.s4 1966171168
    %v4194 = vunpack.c.0.s8 %v4193
    %v4195 = vlaneseq
    %v4196 = vshrl.u32 %v4195, 7
    %v4197 = vsub.s32 %v4194, %v4196
    %v4198 = vrot.slane %v4182, %v4197
    %v4200 = vunpack.c.l.s4 1966171168
    %v4201 = vunpack.c.0.s8 %v4200
    %v4202 = vlaneseq
    %v4203 = vshrl.u32 %v4202, 7
    %v4204 = vsub.s32 %v4201, %v4203
    %v4205 = vrot.slane %v4189, %v4204
    %v4207 = vunpack.c.l.s4 1966171168
    %v4208 = vunpack.c.0.s8 %v4207
    %v4209 = vlaneseq
    %v4210 = vshrl.u32 %v4209, 7
    %v4211 = vsub.s32 %v4208, %v4210
    %v4212 = vrot.slane %v4190, %v4211
    %v4214 = vunpack.c.l.s4 1966171168
    %v4215 = vunpack.c.0.s8 %v4214
    %v4216 = vlaneseq
    %v4217 = vshrl.u32 %v4216, 7
    %v4218 = vsub.s32 %v4215, %v4217
    %v4219 = vrot.slane %v4191, %v4218
    %v4220 = vcombine.high %v4198, %v4198
    %v4221 = vcombine.high %v4205, %v4205
    %v4222 = vcombine.high %v4212, %v4212
    %v4223 = vcombine.high %v4219, %v4219
    %v4224 = vcombine.high %v2811, %v2811
    %v4226 = vunpack.c.l.s4 1966171168
    %v4227 = vunpack.c.0.s8 %v4226
    %v4228 = vlaneseq
    %v4229 = vshrl.u32 %v4228, 7
    %v4230 = vsub.s32 %v4227, %v4229
    %v4231 = vrot.slane %v2811, %v4230
    %v4233 = vunpack.c.l.s4 1966171168
    %v4234 = vunpack.c.0.s8 %v4233
    %v4235 = vlaneseq
    %v4236 = vshrl.u32 %v4235, 7
    %v4237 = vsub.s32 %v4234, %v4236
    %v4238 = vrot.slane %v4224, %v4237
    %v4239 = vcombine.high %v4231, %v4231
    %v4240 = vcombine.high %v4238, %v4238
    %v4242 = vunpack.c.l.s4 1966171168
    %v4243 = vunpack.c.0.s8 %v4242
    %v4244 = vlaneseq
    %v4245 = vshrl.u32 %v4244, 7
    %v4246 = vsub.s32 %v4243, %v4245
    %v4247 = vrot.slane %v4231, %v4246
    %v4249 = vunpack.c.l.s4 1966171168
    %v4250 = vunpack.c.0.s8 %v4249
    %v4251 = vlaneseq
    %v4252 = vshrl.u32 %v4251, 7
    %v4253 = vsub.s32 %v4250, %v4252
    %v4254 = vrot.slane %v4238, %v4253
    %v4256 = vunpack.c.l.s4 1966171168
    %v4257 = vunpack.c.0.s8 %v4256
    %v4258 = vlaneseq
    %v4259 = vshrl.u32 %v4258, 7
    %v4260 = vsub.s32 %v4257, %v4259
    %v4261 = vrot.slane %v4239, %v4260
    %v4263 = vunpack.c.l.s4 1966171168
    %v4264 = vunpack.c.0.s8 %v4263
    %v4265 = vlaneseq
    %v4266 = vshrl.u32 %v4265, 7
    %v4267 = vsub.s32 %v4264, %v4266
    %v4268 = vrot.slane %v4240, %v4267
    %v4269 = vcombine.high %v4247, %v4247
    %v4270 = vcombine.high %v4254, %v4254
    %v4271 = vcombine.high %v4261, %v4261
    %v4272 = vcombine.high %v4268, %v4268
    %v4273 = vcombine.high %v2813, %v2813
    %v4275 = vunpack.c.l.s4 1966171168
    %v4276 = vunpack.c.0.s8 %v4275
    %v4277 = vlaneseq
    %v4278 = vshrl.u32 %v4277, 7
    %v4279 = vsub.s32 %v4276, %v4278
    %v4280 = vrot.slane %v2813, %v4279
    %v4282 = vunpack.c.l.s4 1966171168
    %v4283 = vunpack.c.0.s8 %v4282
    %v4284 = vlaneseq
    %v4285 = vshrl.u32 %v4284, 7
    %v4286 = vsub.s32 %v4283, %v4285
    %v4287 = vrot.slane %v4273, %v4286
    %v4288 = vcombine.high %v4280, %v4280
    %v4289 = vcombine.high %v4287, %v4287
    %v4291 = vunpack.c.l.s4 1966171168
    %v4292 = vunpack.c.0.s8 %v4291
    %v4293 = vlaneseq
    %v4294 = vshrl.u32 %v4293, 7
    %v4295 = vsub.s32 %v4292, %v4294
    %v4296 = vrot.slane %v4280, %v4295
    %v4298 = vunpack.c.l.s4 1966171168
    %v4299 = vunpack.c.0.s8 %v4298
    %v4300 = vlaneseq
    %v4301 = vshrl.u32 %v4300, 7
    %v4302 = vsub.s32 %v4299, %v4301
    %v4303 = vrot.slane %v4287, %v4302
    %v4305 = vunpack.c.l.s4 1966171168
    %v4306 = vunpack.c.0.s8 %v4305
    %v4307 = vlaneseq
    %v4308 = vshrl.u32 %v4307, 7
    %v4309 = vsub.s32 %v4306, %v4308
    %v4310 = vrot.slane %v4288, %v4309
    %v4312 = vunpack.c.l.s4 1966171168
    %v4313 = vunpack.c.0.s8 %v4312
    %v4314 = vlaneseq
    %v4315 = vshrl.u32 %v4314, 7
    %v4316 = vsub.s32 %v4313, %v4315
    %v4317 = vrot.slane %v4289, %v4316
    %v4318 = vcombine.high %v4296, %v4296
    %v4319 = vcombine.high %v4303, %v4303
    %v4320 = vcombine.high %v4310, %v4310
    %v4321 = vcombine.high %v4317, %v4317
    %v4322 = vcombine.high %v2815, %v2815
    %v4324 = vunpack.c.l.s4 1966171168
    %v4325 = vunpack.c.0.s8 %v4324
    %v4326 = vlaneseq
    %v4327 = vshrl.u32 %v4326, 7
    %v4328 = vsub.s32 %v4325, %v4327
    %v4329 = vrot.slane %v2815, %v4328
    %v4331 = vunpack.c.l.s4 1966171168
    %v4332 = vunpack.c.0.s8 %v4331
    %v4333 = vlaneseq
    %v4334 = vshrl.u32 %v4333, 7
    %v4335 = vsub.s32 %v4332, %v4334
    %v4336 = vrot.slane %v4322, %v4335
    %v4337 = vcombine.high %v4329, %v4329
    %v4338 = vcombine.high %v4336, %v4336
    %v4340 = vunpack.c.l.s4 1966171168
    %v4341 = vunpack.c.0.s8 %v4340
    %v4342 = vlaneseq
    %v4343 = vshrl.u32 %v4342, 7
    %v4344 = vsub.s32 %v4341, %v4343
    %v4345 = vrot.slane %v4329, %v4344
    %v4347 = vunpack.c.l.s4 1966171168
    %v4348 = vunpack.c.0.s8 %v4347
    %v4349 = vlaneseq
    %v4350 = vshrl.u32 %v4349, 7
    %v4351 = vsub.s32 %v4348, %v4350
    %v4352 = vrot.slane %v4336, %v4351
    %v4354 = vunpack.c.l.s4 1966171168
    %v4355 = vunpack.c.0.s8 %v4354
    %v4356 = vlaneseq
    %v4357 = vshrl.u32 %v4356, 7
    %v4358 = vsub.s32 %v4355, %v4357
    %v4359 = vrot.slane %v4337, %v4358
    %v4361 = vunpack.c.l.s4 1966171168
    %v4362 = vunpack.c.0.s8 %v4361
    %v4363 = vlaneseq
    %v4364 = vshrl.u32 %v4363, 7
    %v4365 = vsub.s32 %v4362, %v4364
    %v4366 = vrot.slane %v4338, %v4365
    %v4367 = vcombine.high %v4345, %v4345
    %v4368 = vcombine.high %v4352, %v4352
    %v4369 = vcombine.high %v4359, %v4359
    %v4370 = vcombine.high %v4366, %v4366
    %v4371 = vcombine.high %v2817, %v2817
    %v4373 = vunpack.c.l.s4 1966171168
    %v4374 = vunpack.c.0.s8 %v4373
    %v4375 = vlaneseq
    %v4376 = vshrl.u32 %v4375, 7
    %v4377 = vsub.s32 %v4374, %v4376
    %v4378 = vrot.slane %v2817, %v4377
    %v4380 = vunpack.c.l.s4 1966171168
    %v4381 = vunpack.c.0.s8 %v4380
    %v4382 = vlaneseq
    %v4383 = vshrl.u32 %v4382, 7
    %v4384 = vsub.s32 %v4381, %v4383
    %v4385 = vrot.slane %v4371, %v4384
    %v4386 = vcombine.high %v4378, %v4378
    %v4387 = vcombine.high %v4385, %v4385
    %v4389 = vunpack.c.l.s4 1966171168
    %v4390 = vunpack.c.0.s8 %v4389
    %v4391 = vlaneseq
    %v4392 = vshrl.u32 %v4391, 7
    %v4393 = vsub.s32 %v4390, %v4392
    %v4394 = vrot.slane %v4378, %v4393
    %v4396 = vunpack.c.l.s4 1966171168
    %v4397 = vunpack.c.0.s8 %v4396
    %v4398 = vlaneseq
    %v4399 = vshrl.u32 %v4398, 7
    %v4400 = vsub.s32 %v4397, %v4399
    %v4401 = vrot.slane %v4385, %v4400
    %v4403 = vunpack.c.l.s4 1966171168
    %v4404 = vunpack.c.0.s8 %v4403
    %v4405 = vlaneseq
    %v4406 = vshrl.u32 %v4405, 7
    %v4407 = vsub.s32 %v4404, %v4406
    %v4408 = vrot.slane %v4386, %v4407
    %v4410 = vunpack.c.l.s4 1966171168
    %v4411 = vunpack.c.0.s8 %v4410
    %v4412 = vlaneseq
    %v4413 = vshrl.u32 %v4412, 7
    %v4414 = vsub.s32 %v4411, %v4413
    %v4415 = vrot.slane %v4387, %v4414
    %v4416 = vcombine.high %v4394, %v4394
    %v4417 = vcombine.high %v4401, %v4401
    %v4418 = vcombine.high %v4408, %v4408
    %v4419 = vcombine.high %v4415, %v4415
    %v4420 = vcombine.high %v2819, %v2819
    %v4422 = vunpack.c.l.s4 1966171168
    %v4423 = vunpack.c.0.s8 %v4422
    %v4424 = vlaneseq
    %v4425 = vshrl.u32 %v4424, 7
    %v4426 = vsub.s32 %v4423, %v4425
    %v4427 = vrot.slane %v2819, %v4426
    %v4429 = vunpack.c.l.s4 1966171168
    %v4430 = vunpack.c.0.s8 %v4429
    %v4431 = vlaneseq
    %v4432 = vshrl.u32 %v4431, 7
    %v4433 = vsub.s32 %v4430, %v4432
    %v4434 = vrot.slane %v4420, %v4433
    %v4435 = vcombine.high %v4427, %v4427
    %v4436 = vcombine.high %v4434, %v4434
    %v4438 = vunpack.c.l.s4 1966171168
    %v4439 = vunpack.c.0.s8 %v4438
    %v4440 = vlaneseq
    %v4441 = vshrl.u32 %v4440, 7
    %v4442 = vsub.s32 %v4439, %v4441
    %v4443 = vrot.slane %v4427, %v4442
    %v4445 = vunpack.c.l.s4 1966171168
    %v4446 = vunpack.c.0.s8 %v4445
    %v4447 = vlaneseq
    %v4448 = vshrl.u32 %v4447, 7
    %v4449 = vsub.s32 %v4446, %v4448
    %v4450 = vrot.slane %v4434, %v4449
    %v4452 = vunpack.c.l.s4 1966171168
    %v4453 = vunpack.c.0.s8 %v4452
    %v4454 = vlaneseq
    %v4455 = vshrl.u32 %v4454, 7
    %v4456 = vsub.s32 %v4453, %v4455
    %v4457 = vrot.slane %v4435, %v4456
    %v4459 = vunpack.c.l.s4 1966171168
    %v4460 = vunpack.c.0.s8 %v4459
    %v4461 = vlaneseq
    %v4462 = vshrl.u32 %v4461, 7
    %v4463 = vsub.s32 %v4460, %v4462
    %v4464 = vrot.slane %v4436, %v4463
    %v4465 = vcombine.high %v4443, %v4443
    %v4466 = vcombine.high %v4450, %v4450
    %v4467 = vcombine.high %v4457, %v4457
    %v4468 = vcombine.high %v4464, %v4464
    %v4469 = vcombine.high %v2821, %v2821
    %v4471 = vunpack.c.l.s4 1966171168
    %v4472 = vunpack.c.0.s8 %v4471
    %v4473 = vlaneseq
    %v4474 = vshrl.u32 %v4473, 7
    %v4475 = vsub.s32 %v4472, %v4474
    %v4476 = vrot.slane %v2821, %v4475
    %v4478 = vunpack.c.l.s4 1966171168
    %v4479 = vunpack.c.0.s8 %v4478
    %v4480 = vlaneseq
    %v4481 = vshrl.u32 %v4480, 7
    %v4482 = vsub.s32 %v4479, %v4481
    %v4483 = vrot.slane %v4469, %v4482
    %v4484 = vcombine.high %v4476, %v4476
    %v4485 = vcombine.high %v4483, %v4483
    %v4487 = vunpack.c.l.s4 1966171168
    %v4488 = vunpack.c.0.s8 %v4487
    %v4489 = vlaneseq
    %v4490 = vshrl.u32 %v4489, 7
    %v4491 = vsub.s32 %v4488, %v4490
    %v4492 = vrot.slane %v4476, %v4491
    %v4494 = vunpack.c.l.s4 1966171168
    %v4495 = vunpack.c.0.s8 %v4494
    %v4496 = vlaneseq
    %v4497 = vshrl.u32 %v4496, 7
    %v4498 = vsub.s32 %v4495, %v4497
    %v4499 = vrot.slane %v4483, %v4498
    %v4501 = vunpack.c.l.s4 1966171168
    %v4502 = vunpack.c.0.s8 %v4501
    %v4503 = vlaneseq
    %v4504 = vshrl.u32 %v4503, 7
    %v4505 = vsub.s32 %v4502, %v4504
    %v4506 = vrot.slane %v4484, %v4505
    %v4508 = vunpack.c.l.s4 1966171168
    %v4509 = vunpack.c.0.s8 %v4508
    %v4510 = vlaneseq
    %v4511 = vshrl.u32 %v4510, 7
    %v4512 = vsub.s32 %v4509, %v4511
    %v4513 = vrot.slane %v4485, %v4512
    %v4514 = vcombine.high %v4492, %v4492
    %v4515 = vcombine.high %v4499, %v4499
    %v4516 = vcombine.high %v4506, %v4506
    %v4517 = vcombine.high %v4513, %v4513
    %v4518 = vcombine.high %v2823, %v2823
    %v4520 = vunpack.c.l.s4 1966171168
    %v4521 = vunpack.c.0.s8 %v4520
    %v4522 = vlaneseq
    %v4523 = vshrl.u32 %v4522, 7
    %v4524 = vsub.s32 %v4521, %v4523
    %v4525 = vrot.slane %v2823, %v4524
    %v4527 = vunpack.c.l.s4 1966171168
    %v4528 = vunpack.c.0.s8 %v4527
    %v4529 = vlaneseq
    %v4530 = vshrl.u32 %v4529, 7
    %v4531 = vsub.s32 %v4528, %v4530
    %v4532 = vrot.slane %v4518, %v4531
    %v4533 = vcombine.high %v4525, %v4525
    %v4534 = vcombine.high %v4532, %v4532
    %v4536 = vunpack.c.l.s4 1966171168
    %v4537 = vunpack.c.0.s8 %v4536
    %v4538 = vlaneseq
    %v4539 = vshrl.u32 %v4538, 7
    %v4540 = vsub.s32 %v4537, %v4539
    %v4541 = vrot.slane %v4525, %v4540
    %v4543 = vunpack.c.l.s4 1966171168
    %v4544 = vunpack.c.0.s8 %v4543
    %v4545 = vlaneseq
    %v4546 = vshrl.u32 %v4545, 7
    %v4547 = vsub.s32 %v4544, %v4546
    %v4548 = vrot.slane %v4532, %v4547
    %v4550 = vunpack.c.l.s4 1966171168
    %v4551 = vunpack.c.0.s8 %v4550
    %v4552 = vlaneseq
    %v4553 = vshrl.u32 %v4552, 7
    %v4554 = vsub.s32 %v4551, %v4553
    %v4555 = vrot.slane %v4533, %v4554
    %v4557 = vunpack.c.l.s4 1966171168
    %v4558 = vunpack.c.0.s8 %v4557
    %v4559 = vlaneseq
    %v4560 = vshrl.u32 %v4559, 7
    %v4561 = vsub.s32 %v4558, %v4560
    %v4562 = vrot.slane %v4534, %v4561
    %v4563 = vcombine.high %v4541, %v4541
    %v4564 = vcombine.high %v4548, %v4548
    %v4565 = vcombine.high %v4555, %v4555
    %v4566 = vcombine.high %v4562, %v4562
    %v4567 = vcombine.high %v2825, %v2825
    %v4569 = vunpack.c.l.s4 1966171168
    %v4570 = vunpack.c.0.s8 %v4569
    %v4571 = vlaneseq
    %v4572 = vshrl.u32 %v4571, 7
    %v4573 = vsub.s32 %v4570, %v4572
    %v4574 = vrot.slane %v2825, %v4573
    %v4576 = vunpack.c.l.s4 1966171168
    %v4577 = vunpack.c.0.s8 %v4576
    %v4578 = vlaneseq
    %v4579 = vshrl.u32 %v4578, 7
    %v4580 = vsub.s32 %v4577, %v4579
    %v4581 = vrot.slane %v4567, %v4580
    %v4582 = vcombine.high %v4574, %v4574
    %v4583 = vcombine.high %v4581, %v4581
    %v4585 = vunpack.c.l.s4 1966171168
    %v4586 = vunpack.c.0.s8 %v4585
    %v4587 = vlaneseq
    %v4588 = vshrl.u32 %v4587, 7
    %v4589 = vsub.s32 %v4586, %v4588
    %v4590 = vrot.slane %v4574, %v4589
    %v4592 = vunpack.c.l.s4 1966171168
    %v4593 = vunpack.c.0.s8 %v4592
    %v4594 = vlaneseq
    %v4595 = vshrl.u32 %v4594, 7
    %v4596 = vsub.s32 %v4593, %v4595
    %v4597 = vrot.slane %v4581, %v4596
    %v4599 = vunpack.c.l.s4 1966171168
    %v4600 = vunpack.c.0.s8 %v4599
    %v4601 = vlaneseq
    %v4602 = vshrl.u32 %v4601, 7
    %v4603 = vsub.s32 %v4600, %v4602
    %v4604 = vrot.slane %v4582, %v4603
    %v4606 = vunpack.c.l.s4 1966171168
    %v4607 = vunpack.c.0.s8 %v4606
    %v4608 = vlaneseq
    %v4609 = vshrl.u32 %v4608, 7
    %v4610 = vsub.s32 %v4607, %v4609
    %v4611 = vrot.slane %v4583, %v4610
    %v4612 = vcombine.high %v4590, %v4590
    %v4613 = vcombine.high %v4597, %v4597
    %v4614 = vcombine.high %v4604, %v4604
    %v4615 = vcombine.high %v4611, %v4611
    %v4616 = vcombine.high %v2827, %v2827
    %v4618 = vunpack.c.l.s4 1966171168
    %v4619 = vunpack.c.0.s8 %v4618
    %v4620 = vlaneseq
    %v4621 = vshrl.u32 %v4620, 7
    %v4622 = vsub.s32 %v4619, %v4621
    %v4623 = vrot.slane %v2827, %v4622
    %v4625 = vunpack.c.l.s4 1966171168
    %v4626 = vunpack.c.0.s8 %v4625
    %v4627 = vlaneseq
    %v4628 = vshrl.u32 %v4627, 7
    %v4629 = vsub.s32 %v4626, %v4628
    %v4630 = vrot.slane %v4616, %v4629
    %v4631 = vcombine.high %v4623, %v4623
    %v4632 = vcombine.high %v4630, %v4630
    %v4634 = vunpack.c.l.s4 1966171168
    %v4635 = vunpack.c.0.s8 %v4634
    %v4636 = vlaneseq
    %v4637 = vshrl.u32 %v4636, 7
    %v4638 = vsub.s32 %v4635, %v4637
    %v4639 = vrot.slane %v4623, %v4638
    %v4641 = vunpack.c.l.s4 1966171168
    %v4642 = vunpack.c.0.s8 %v4641
    %v4643 = vlaneseq
    %v4644 = vshrl.u32 %v4643, 7
    %v4645 = vsub.s32 %v4642, %v4644
    %v4646 = vrot.slane %v4630, %v4645
    %v4648 = vunpack.c.l.s4 1966171168
    %v4649 = vunpack.c.0.s8 %v4648
    %v4650 = vlaneseq
    %v4651 = vshrl.u32 %v4650, 7
    %v4652 = vsub.s32 %v4649, %v4651
    %v4653 = vrot.slane %v4631, %v4652
    %v4655 = vunpack.c.l.s4 1966171168
    %v4656 = vunpack.c.0.s8 %v4655
    %v4657 = vlaneseq
    %v4658 = vshrl.u32 %v4657, 7
    %v4659 = vsub.s32 %v4656, %v4658
    %v4660 = vrot.slane %v4632, %v4659
    %v4661 = vcombine.high %v4639, %v4639
    %v4662 = vcombine.high %v4646, %v4646
    %v4663 = vcombine.high %v4653, %v4653
    %v4664 = vcombine.high %v4660, %v4660
    %v4665 = vcombine.high %v2829, %v2829
    %v4667 = vunpack.c.l.s4 1966171168
    %v4668 = vunpack.c.0.s8 %v4667
    %v4669 = vlaneseq
    %v4670 = vshrl.u32 %v4669, 7
    %v4671 = vsub.s32 %v4668, %v4670
    %v4672 = vrot.slane %v2829, %v4671
    %v4674 = vunpack.c.l.s4 1966171168
    %v4675 = vunpack.c.0.s8 %v4674
    %v4676 = vlaneseq
    %v4677 = vshrl.u32 %v4676, 7
    %v4678 = vsub.s32 %v4675, %v4677
    %v4679 = vrot.slane %v4665, %v4678
    %v4680 = vcombine.high %v4672, %v4672
    %v4681 = vcombine.high %v4679, %v4679
    %v4683 = vunpack.c.l.s4 1966171168
    %v4684 = vunpack.c.0.s8 %v4683
    %v4685 = vlaneseq
    %v4686 = vshrl.u32 %v4685, 7
    %v4687 = vsub.s32 %v4684, %v4686
    %v4688 = vrot.slane %v4672, %v4687
    %v4690 = vunpack.c.l.s4 1966171168
    %v4691 = vunpack.c.0.s8 %v4690
    %v4692 = vlaneseq
    %v4693 = vshrl.u32 %v4692, 7
    %v4694 = vsub.s32 %v4691, %v4693
    %v4695 = vrot.slane %v4679, %v4694
    %v4697 = vunpack.c.l.s4 1966171168
    %v4698 = vunpack.c.0.s8 %v4697
    %v4699 = vlaneseq
    %v4700 = vshrl.u32 %v4699, 7
    %v4701 = vsub.s32 %v4698, %v4700
    %v4702 = vrot.slane %v4680, %v4701
    %v4704 = vunpack.c.l.s4 1966171168
    %v4705 = vunpack.c.0.s8 %v4704
    %v4706 = vlaneseq
    %v4707 = vshrl.u32 %v4706, 7
    %v4708 = vsub.s32 %v4705, %v4707
    %v4709 = vrot.slane %v4681, %v4708
    %v4710 = vcombine.high %v4688, %v4688
    %v4711 = vcombine.high %v4695, %v4695
    %v4712 = vcombine.high %v4702, %v4702
    %v4713 = vcombine.high %v4709, %v4709
    %v4714 = vcombine.high %v2831, %v2831
    %v4716 = vunpack.c.l.s4 1966171168
    %v4717 = vunpack.c.0.s8 %v4716
    %v4718 = vlaneseq
    %v4719 = vshrl.u32 %v4718, 7
    %v4720 = vsub.s32 %v4717, %v4719
    %v4721 = vrot.slane %v2831, %v4720
    %v4723 = vunpack.c.l.s4 1966171168
    %v4724 = vunpack.c.0.s8 %v4723
    %v4725 = vlaneseq
    %v4726 = vshrl.u32 %v4725, 7
    %v4727 = vsub.s32 %v4724, %v4726
    %v4728 = vrot.slane %v4714, %v4727
    %v4729 = vcombine.high %v4721, %v4721
    %v4730 = vcombine.high %v4728, %v4728
    %v4732 = vunpack.c.l.s4 1966171168
    %v4733 = vunpack.c.0.s8 %v4732
    %v4734 = vlaneseq
    %v4735 = vshrl.u32 %v4734, 7
    %v4736 = vsub.s32 %v4733, %v4735
    %v4737 = vrot.slane %v4721, %v4736
    %v4739 = vunpack.c.l.s4 1966171168
    %v4740 = vunpack.c.0.s8 %v4739
    %v4741 = vlaneseq
    %v4742 = vshrl.u32 %v4741, 7
    %v4743 = vsub.s32 %v4740, %v4742
    %v4744 = vrot.slane %v4728, %v4743
    %v4746 = vunpack.c.l.s4 1966171168
    %v4747 = vunpack.c.0.s8 %v4746
    %v4748 = vlaneseq
    %v4749 = vshrl.u32 %v4748, 7
    %v4750 = vsub.s32 %v4747, %v4749
    %v4751 = vrot.slane %v4729, %v4750
    %v4753 = vunpack.c.l.s4 1966171168
    %v4754 = vunpack.c.0.s8 %v4753
    %v4755 = vlaneseq
    %v4756 = vshrl.u32 %v4755, 7
    %v4757 = vsub.s32 %v4754, %v4756
    %v4758 = vrot.slane %v4730, %v4757
    %v4759 = vcombine.high %v4737, %v4737
    %v4760 = vcombine.high %v4744, %v4744
    %v4761 = vcombine.high %v4751, %v4751
    %v4762 = vcombine.high %v4758, %v4758
    %v4763 = vcombine.high %v2833, %v2833
    %v4765 = vunpack.c.l.s4 1966171168
    %v4766 = vunpack.c.0.s8 %v4765
    %v4767 = vlaneseq
    %v4768 = vshrl.u32 %v4767, 7
    %v4769 = vsub.s32 %v4766, %v4768
    %v4770 = vrot.slane %v2833, %v4769
    %v4772 = vunpack.c.l.s4 1966171168
    %v4773 = vunpack.c.0.s8 %v4772
    %v4774 = vlaneseq
    %v4775 = vshrl.u32 %v4774, 7
    %v4776 = vsub.s32 %v4773, %v4775
    %v4777 = vrot.slane %v4763, %v4776
    %v4778 = vcombine.high %v4770, %v4770
    %v4779 = vcombine.high %v4777, %v4777
    %v4781 = vunpack.c.l.s4 1966171168
    %v4782 = vunpack.c.0.s8 %v4781
    %v4783 = vlaneseq
    %v4784 = vshrl.u32 %v4783, 7
    %v4785 = vsub.s32 %v4782, %v4784
    %v4786 = vrot.slane %v4770, %v4785
    %v4788 = vunpack.c.l.s4 1966171168
    %v4789 = vunpack.c.0.s8 %v4788
    %v4790 = vlaneseq
    %v4791 = vshrl.u32 %v4790, 7
    %v4792 = vsub.s32 %v4789, %v4791
    %v4793 = vrot.slane %v4777, %v4792
    %v4795 = vunpack.c.l.s4 1966171168
    %v4796 = vunpack.c.0.s8 %v4795
    %v4797 = vlaneseq
    %v4798 = vshrl.u32 %v4797, 7
    %v4799 = vsub.s32 %v4796, %v4798
    %v4800 = vrot.slane %v4778, %v4799
    %v4802 = vunpack.c.l.s4 1966171168
    %v4803 = vunpack.c.0.s8 %v4802
    %v4804 = vlaneseq
    %v4805 = vshrl.u32 %v4804, 7
    %v4806 = vsub.s32 %v4803, %v4805
    %v4807 = vrot.slane %v4779, %v4806
    %v4808 = vcombine.high %v4786, %v4786
    %v4809 = vcombine.high %v4793, %v4793
    %v4810 = vcombine.high %v4800, %v4800
    %v4811 = vcombine.high %v4807, %v4807
    %v4812 = vcombine.high %v2835, %v2835
    %v4814 = vunpack.c.l.s4 1966171168
    %v4815 = vunpack.c.0.s8 %v4814
    %v4816 = vlaneseq
    %v4817 = vshrl.u32 %v4816, 7
    %v4818 = vsub.s32 %v4815, %v4817
    %v4819 = vrot.slane %v2835, %v4818
    %v4821 = vunpack.c.l.s4 1966171168
    %v4822 = vunpack.c.0.s8 %v4821
    %v4823 = vlaneseq
    %v4824 = vshrl.u32 %v4823, 7
    %v4825 = vsub.s32 %v4822, %v4824
    %v4826 = vrot.slane %v4812, %v4825
    %v4827 = vcombine.high %v4819, %v4819
    %v4828 = vcombine.high %v4826, %v4826
    %v4830 = vunpack.c.l.s4 1966171168
    %v4831 = vunpack.c.0.s8 %v4830
    %v4832 = vlaneseq
    %v4833 = vshrl.u32 %v4832, 7
    %v4834 = vsub.s32 %v4831, %v4833
    %v4835 = vrot.slane %v4819, %v4834
    %v4837 = vunpack.c.l.s4 1966171168
    %v4838 = vunpack.c.0.s8 %v4837
    %v4839 = vlaneseq
    %v4840 = vshrl.u32 %v4839, 7
    %v4841 = vsub.s32 %v4838, %v4840
    %v4842 = vrot.slane %v4826, %v4841
    %v4844 = vunpack.c.l.s4 1966171168
    %v4845 = vunpack.c.0.s8 %v4844
    %v4846 = vlaneseq
    %v4847 = vshrl.u32 %v4846, 7
    %v4848 = vsub.s32 %v4845, %v4847
    %v4849 = vrot.slane %v4827, %v4848
    %v4851 = vunpack.c.l.s4 1966171168
    %v4852 = vunpack.c.0.s8 %v4851
    %v4853 = vlaneseq
    %v4854 = vshrl.u32 %v4853, 7
    %v4855 = vsub.s32 %v4852, %v4854
    %v4856 = vrot.slane %v4828, %v4855
    %v4857 = vcombine.high %v4835, %v4835
    %v4858 = vcombine.high %v4842, %v4842
    %v4859 = vcombine.high %v4849, %v4849
    %v4860 = vcombine.high %v4856, %v4856
    %v4861 = vcombine.high %v2837, %v2837
    %v4863 = vunpack.c.l.s4 1966171168
    %v4864 = vunpack.c.0.s8 %v4863
    %v4865 = vlaneseq
    %v4866 = vshrl.u32 %v4865, 7
    %v4867 = vsub.s32 %v4864, %v4866
    %v4868 = vrot.slane %v2837, %v4867
    %v4870 = vunpack.c.l.s4 1966171168
    %v4871 = vunpack.c.0.s8 %v4870
    %v4872 = vlaneseq
    %v4873 = vshrl.u32 %v4872, 7
    %v4874 = vsub.s32 %v4871, %v4873
    %v4875 = vrot.slane %v4861, %v4874
    %v4876 = vcombine.high %v4868, %v4868
    %v4877 = vcombine.high %v4875, %v4875
    %v4879 = vunpack.c.l.s4 1966171168
    %v4880 = vunpack.c.0.s8 %v4879
    %v4881 = vlaneseq
    %v4882 = vshrl.u32 %v4881, 7
    %v4883 = vsub.s32 %v4880, %v4882
    %v4884 = vrot.slane %v4868, %v4883
    %v4886 = vunpack.c.l.s4 1966171168
    %v4887 = vunpack.c.0.s8 %v4886
    %v4888 = vlaneseq
    %v4889 = vshrl.u32 %v4888, 7
    %v4890 = vsub.s32 %v4887, %v4889
    %v4891 = vrot.slane %v4875, %v4890
    %v4893 = vunpack.c.l.s4 1966171168
    %v4894 = vunpack.c.0.s8 %v4893
    %v4895 = vlaneseq
    %v4896 = vshrl.u32 %v4895, 7
    %v4897 = vsub.s32 %v4894, %v4896
    %v4898 = vrot.slane %v4876, %v4897
    %v4900 = vunpack.c.l.s4 1966171168
    %v4901 = vunpack.c.0.s8 %v4900
    %v4902 = vlaneseq
    %v4903 = vshrl.u32 %v4902, 7
    %v4904 = vsub.s32 %v4901, %v4903
    %v4905 = vrot.slane %v4877, %v4904
    %v4906 = vcombine.high %v4884, %v4884
    %v4907 = vcombine.high %v4891, %v4891
    %v4908 = vcombine.high %v4898, %v4898
    %v4909 = vcombine.high %v4905, %v4905
    %v4910 = vcombine.high %v2839, %v2839
    %v4912 = vunpack.c.l.s4 1966171168
    %v4913 = vunpack.c.0.s8 %v4912
    %v4914 = vlaneseq
    %v4915 = vshrl.u32 %v4914, 7
    %v4916 = vsub.s32 %v4913, %v4915
    %v4917 = vrot.slane %v2839, %v4916
    %v4919 = vunpack.c.l.s4 1966171168
    %v4920 = vunpack.c.0.s8 %v4919
    %v4921 = vlaneseq
    %v4922 = vshrl.u32 %v4921, 7
    %v4923 = vsub.s32 %v4920, %v4922
    %v4924 = vrot.slane %v4910, %v4923
    %v4925 = vcombine.high %v4917, %v4917
    %v4926 = vcombine.high %v4924, %v4924
    %v4928 = vunpack.c.l.s4 1966171168
    %v4929 = vunpack.c.0.s8 %v4928
    %v4930 = vlaneseq
    %v4931 = vshrl.u32 %v4930, 7
    %v4932 = vsub.s32 %v4929, %v4931
    %v4933 = vrot.slane %v4917, %v4932
    %v4935 = vunpack.c.l.s4 1966171168
    %v4936 = vunpack.c.0.s8 %v4935
    %v4937 = vlaneseq
    %v4938 = vshrl.u32 %v4937, 7
    %v4939 = vsub.s32 %v4936, %v4938
    %v4940 = vrot.slane %v4924, %v4939
    %v4942 = vunpack.c.l.s4 1966171168
    %v4943 = vunpack.c.0.s8 %v4942
    %v4944 = vlaneseq
    %v4945 = vshrl.u32 %v4944, 7
    %v4946 = vsub.s32 %v4943, %v4945
    %v4947 = vrot.slane %v4925, %v4946
    %v4949 = vunpack.c.l.s4 1966171168
    %v4950 = vunpack.c.0.s8 %v4949
    %v4951 = vlaneseq
    %v4952 = vshrl.u32 %v4951, 7
    %v4953 = vsub.s32 %v4950, %v4952
    %v4954 = vrot.slane %v4926, %v4953
    %v4955 = vcombine.high %v4933, %v4933
    %v4956 = vcombine.high %v4940, %v4940
    %v4957 = vcombine.high %v4947, %v4947
    %v4958 = vcombine.high %v4954, %v4954
    %v4959 = vcombine.high %v2841, %v2841
    %v4961 = vunpack.c.l.s4 1966171168
    %v4962 = vunpack.c.0.s8 %v4961
    %v4963 = vlaneseq
    %v4964 = vshrl.u32 %v4963, 7
    %v4965 = vsub.s32 %v4962, %v4964
    %v4966 = vrot.slane %v2841, %v4965
    %v4968 = vunpack.c.l.s4 1966171168
    %v4969 = vunpack.c.0.s8 %v4968
    %v4970 = vlaneseq
    %v4971 = vshrl.u32 %v4970, 7
    %v4972 = vsub.s32 %v4969, %v4971
    %v4973 = vrot.slane %v4959, %v4972
    %v4974 = vcombine.high %v4966, %v4966
    %v4975 = vcombine.high %v4973, %v4973
    %v4977 = vunpack.c.l.s4 1966171168
    %v4978 = vunpack.c.0.s8 %v4977
    %v4979 = vlaneseq
    %v4980 = vshrl.u32 %v4979, 7
    %v4981 = vsub.s32 %v4978, %v4980
    %v4982 = vrot.slane %v4966, %v4981
    %v4984 = vunpack.c.l.s4 1966171168
    %v4985 = vunpack.c.0.s8 %v4984
    %v4986 = vlaneseq
    %v4987 = vshrl.u32 %v4986, 7
    %v4988 = vsub.s32 %v4985, %v4987
    %v4989 = vrot.slane %v4973, %v4988
    %v4991 = vunpack.c.l.s4 1966171168
    %v4992 = vunpack.c.0.s8 %v4991
    %v4993 = vlaneseq
    %v4994 = vshrl.u32 %v4993, 7
    %v4995 = vsub.s32 %v4992, %v4994
    %v4996 = vrot.slane %v4974, %v4995
    %v4998 = vunpack.c.l.s4 1966171168
    %v4999 = vunpack.c.0.s8 %v4998
    %v5000 = vlaneseq
    %v5001 = vshrl.u32 %v5000, 7
    %v5002 = vsub.s32 %v4999, %v5001
    %v5003 = vrot.slane %v4975, %v5002
    %v5004 = vcombine.high %v4982, %v4982
    %v5005 = vcombine.high %v4989, %v4989
    %v5006 = vcombine.high %v4996, %v4996
    %v5007 = vcombine.high %v5003, %v5003
    %v5008 = vcombine.high %v2843, %v2843
    %v5010 = vunpack.c.l.s4 1966171168
    %v5011 = vunpack.c.0.s8 %v5010
    %v5012 = vlaneseq
    %v5013 = vshrl.u32 %v5012, 7
    %v5014 = vsub.s32 %v5011, %v5013
    %v5015 = vrot.slane %v2843, %v5014
    %v5017 = vunpack.c.l.s4 1966171168
    %v5018 = vunpack.c.0.s8 %v5017
    %v5019 = vlaneseq
    %v5020 = vshrl.u32 %v5019, 7
    %v5021 = vsub.s32 %v5018, %v5020
    %v5022 = vrot.slane %v5008, %v5021
    %v5023 = vcombine.high %v5015, %v5015
    %v5024 = vcombine.high %v5022, %v5022
    %v5026 = vunpack.c.l.s4 1966171168
    %v5027 = vunpack.c.0.s8 %v5026
    %v5028 = vlaneseq
    %v5029 = vshrl.u32 %v5028, 7
    %v5030 = vsub.s32 %v5027, %v5029
    %v5031 = vrot.slane %v5015, %v5030
    %v5033 = vunpack.c.l.s4 1966171168
    %v5034 = vunpack.c.0.s8 %v5033
    %v5035 = vlaneseq
    %v5036 = vshrl.u32 %v5035, 7
    %v5037 = vsub.s32 %v5034, %v5036
    %v5038 = vrot.slane %v5022, %v5037
    %v5040 = vunpack.c.l.s4 1966171168
    %v5041 = vunpack.c.0.s8 %v5040
    %v5042 = vlaneseq
    %v5043 = vshrl.u32 %v5042, 7
    %v5044 = vsub.s32 %v5041, %v5043
    %v5045 = vrot.slane %v5023, %v5044
    %v5047 = vunpack.c.l.s4 1966171168
    %v5048 = vunpack.c.0.s8 %v5047
    %v5049 = vlaneseq
    %v5050 = vshrl.u32 %v5049, 7
    %v5051 = vsub.s32 %v5048, %v5050
    %v5052 = vrot.slane %v5024, %v5051
    %v5053 = vcombine.high %v5031, %v5031
    %v5054 = vcombine.high %v5038, %v5038
    %v5055 = vcombine.high %v5045, %v5045
    %v5056 = vcombine.high %v5052, %v5052
    %v5057 = vcombine.high %v2845, %v2845
    %v5059 = vunpack.c.l.s4 1966171168
    %v5060 = vunpack.c.0.s8 %v5059
    %v5061 = vlaneseq
    %v5062 = vshrl.u32 %v5061, 7
    %v5063 = vsub.s32 %v5060, %v5062
    %v5064 = vrot.slane %v2845, %v5063
    %v5066 = vunpack.c.l.s4 1966171168
    %v5067 = vunpack.c.0.s8 %v5066
    %v5068 = vlaneseq
    %v5069 = vshrl.u32 %v5068, 7
    %v5070 = vsub.s32 %v5067, %v5069
    %v5071 = vrot.slane %v5057, %v5070
    %v5072 = vcombine.high %v5064, %v5064
    %v5073 = vcombine.high %v5071, %v5071
    %v5075 = vunpack.c.l.s4 1966171168
    %v5076 = vunpack.c.0.s8 %v5075
    %v5077 = vlaneseq
    %v5078 = vshrl.u32 %v5077, 7
    %v5079 = vsub.s32 %v5076, %v5078
    %v5080 = vrot.slane %v5064, %v5079
    %v5082 = vunpack.c.l.s4 1966171168
    %v5083 = vunpack.c.0.s8 %v5082
    %v5084 = vlaneseq
    %v5085 = vshrl.u32 %v5084, 7
    %v5086 = vsub.s32 %v5083, %v5085
    %v5087 = vrot.slane %v5071, %v5086
    %v5089 = vunpack.c.l.s4 1966171168
    %v5090 = vunpack.c.0.s8 %v5089
    %v5091 = vlaneseq
    %v5092 = vshrl.u32 %v5091, 7
    %v5093 = vsub.s32 %v5090, %v5092
    %v5094 = vrot.slane %v5072, %v5093
    %v5096 = vunpack.c.l.s4 1966171168
    %v5097 = vunpack.c.0.s8 %v5096
    %v5098 = vlaneseq
    %v5099 = vshrl.u32 %v5098, 7
    %v5100 = vsub.s32 %v5097, %v5099
    %v5101 = vrot.slane %v5073, %v5100
    %v5102 = vcombine.high %v5080, %v5080
    %v5103 = vcombine.high %v5087, %v5087
    %v5104 = vcombine.high %v5094, %v5094
    %v5105 = vcombine.high %v5101, %v5101
    %v5106 = vcombine.high %v2847, %v2847
    %v5108 = vunpack.c.l.s4 1966171168
    %v5109 = vunpack.c.0.s8 %v5108
    %v5110 = vlaneseq
    %v5111 = vshrl.u32 %v5110, 7
    %v5112 = vsub.s32 %v5109, %v5111
    %v5113 = vrot.slane %v2847, %v5112
    %v5115 = vunpack.c.l.s4 1966171168
    %v5116 = vunpack.c.0.s8 %v5115
    %v5117 = vlaneseq
    %v5118 = vshrl.u32 %v5117, 7
    %v5119 = vsub.s32 %v5116, %v5118
    %v5120 = vrot.slane %v5106, %v5119
    %v5121 = vcombine.high %v5113, %v5113
    %v5122 = vcombine.high %v5120, %v5120
    %v5124 = vunpack.c.l.s4 1966171168
    %v5125 = vunpack.c.0.s8 %v5124
    %v5126 = vlaneseq
    %v5127 = vshrl.u32 %v5126, 7
    %v5128 = vsub.s32 %v5125, %v5127
    %v5129 = vrot.slane %v5113, %v5128
    %v5131 = vunpack.c.l.s4 1966171168
    %v5132 = vunpack.c.0.s8 %v5131
    %v5133 = vlaneseq
    %v5134 = vshrl.u32 %v5133, 7
    %v5135 = vsub.s32 %v5132, %v5134
    %v5136 = vrot.slane %v5120, %v5135
    %v5138 = vunpack.c.l.s4 1966171168
    %v5139 = vunpack.c.0.s8 %v5138
    %v5140 = vlaneseq
    %v5141 = vshrl.u32 %v5140, 7
    %v5142 = vsub.s32 %v5139, %v5141
    %v5143 = vrot.slane %v5121, %v5142
    %v5145 = vunpack.c.l.s4 1966171168
    %v5146 = vunpack.c.0.s8 %v5145
    %v5147 = vlaneseq
    %v5148 = vshrl.u32 %v5147, 7
    %v5149 = vsub.s32 %v5146, %v5148
    %v5150 = vrot.slane %v5122, %v5149
    %v5151 = vcombine.high %v5129, %v5129
    %v5152 = vcombine.high %v5136, %v5136
    %v5153 = vcombine.high %v5143, %v5143
    %v5154 = vcombine.high %v5150, %v5150
    %v5155 = vcombine.high %v2849, %v2849
    %v5157 = vunpack.c.l.s4 1966171168
    %v5158 = vunpack.c.0.s8 %v5157
    %v5159 = vlaneseq
    %v5160 = vshrl.u32 %v5159, 7
    %v5161 = vsub.s32 %v5158, %v5160
    %v5162 = vrot.slane %v2849, %v5161
    %v5164 = vunpack.c.l.s4 1966171168
    %v5165 = vunpack.c.0.s8 %v5164
    %v5166 = vlaneseq
    %v5167 = vshrl.u32 %v5166, 7
    %v5168 = vsub.s32 %v5165, %v5167
    %v5169 = vrot.slane %v5155, %v5168
    %v5170 = vcombine.high %v5162, %v5162
    %v5171 = vcombine.high %v5169, %v5169
    %v5173 = vunpack.c.l.s4 1966171168
    %v5174 = vunpack.c.0.s8 %v5173
    %v5175 = vlaneseq
    %v5176 = vshrl.u32 %v5175, 7
    %v5177 = vsub.s32 %v5174, %v5176
    %v5178 = vrot.slane %v5162, %v5177
    %v5180 = vunpack.c.l.s4 1966171168
    %v5181 = vunpack.c.0.s8 %v5180
    %v5182 = vlaneseq
    %v5183 = vshrl.u32 %v5182, 7
    %v5184 = vsub.s32 %v5181, %v5183
    %v5185 = vrot.slane %v5169, %v5184
    %v5187 = vunpack.c.l.s4 1966171168
    %v5188 = vunpack.c.0.s8 %v5187
    %v5189 = vlaneseq
    %v5190 = vshrl.u32 %v5189, 7
    %v5191 = vsub.s32 %v5188, %v5190
    %v5192 = vrot.slane %v5170, %v5191
    %v5194 = vunpack.c.l.s4 1966171168
    %v5195 = vunpack.c.0.s8 %v5194
    %v5196 = vlaneseq
    %v5197 = vshrl.u32 %v5196, 7
    %v5198 = vsub.s32 %v5195, %v5197
    %v5199 = vrot.slane %v5171, %v5198
    %v5200 = vcombine.high %v5178, %v5178
    %v5201 = vcombine.high %v5185, %v5185
    %v5202 = vcombine.high %v5192, %v5192
    %v5203 = vcombine.high %v5199, %v5199
    %v5204 = vcombine.high %v2851, %v2851
    %v5206 = vunpack.c.l.s4 1966171168
    %v5207 = vunpack.c.0.s8 %v5206
    %v5208 = vlaneseq
    %v5209 = vshrl.u32 %v5208, 7
    %v5210 = vsub.s32 %v5207, %v5209
    %v5211 = vrot.slane %v2851, %v5210
    %v5213 = vunpack.c.l.s4 1966171168
    %v5214 = vunpack.c.0.s8 %v5213
    %v5215 = vlaneseq
    %v5216 = vshrl.u32 %v5215, 7
    %v5217 = vsub.s32 %v5214, %v5216
    %v5218 = vrot.slane %v5204, %v5217
    %v5219 = vcombine.high %v5211, %v5211
    %v5220 = vcombine.high %v5218, %v5218
    %v5222 = vunpack.c.l.s4 1966171168
    %v5223 = vunpack.c.0.s8 %v5222
    %v5224 = vlaneseq
    %v5225 = vshrl.u32 %v5224, 7
    %v5226 = vsub.s32 %v5223, %v5225
    %v5227 = vrot.slane %v5211, %v5226
    %v5229 = vunpack.c.l.s4 1966171168
    %v5230 = vunpack.c.0.s8 %v5229
    %v5231 = vlaneseq
    %v5232 = vshrl.u32 %v5231, 7
    %v5233 = vsub.s32 %v5230, %v5232
    %v5234 = vrot.slane %v5218, %v5233
    %v5236 = vunpack.c.l.s4 1966171168
    %v5237 = vunpack.c.0.s8 %v5236
    %v5238 = vlaneseq
    %v5239 = vshrl.u32 %v5238, 7
    %v5240 = vsub.s32 %v5237, %v5239
    %v5241 = vrot.slane %v5219, %v5240
    %v5243 = vunpack.c.l.s4 1966171168
    %v5244 = vunpack.c.0.s8 %v5243
    %v5245 = vlaneseq
    %v5246 = vshrl.u32 %v5245, 7
    %v5247 = vsub.s32 %v5244, %v5246
    %v5248 = vrot.slane %v5220, %v5247
    %v5249 = vcombine.high %v5227, %v5227
    %v5250 = vcombine.high %v5234, %v5234
    %v5251 = vcombine.high %v5241, %v5241
    %v5252 = vcombine.high %v5248, %v5248
    %v5253 = vcombine.high %v2853, %v2853
    %v5255 = vunpack.c.l.s4 1966171168
    %v5256 = vunpack.c.0.s8 %v5255
    %v5257 = vlaneseq
    %v5258 = vshrl.u32 %v5257, 7
    %v5259 = vsub.s32 %v5256, %v5258
    %v5260 = vrot.slane %v2853, %v5259
    %v5262 = vunpack.c.l.s4 1966171168
    %v5263 = vunpack.c.0.s8 %v5262
    %v5264 = vlaneseq
    %v5265 = vshrl.u32 %v5264, 7
    %v5266 = vsub.s32 %v5263, %v5265
    %v5267 = vrot.slane %v5253, %v5266
    %v5268 = vcombine.high %v5260, %v5260
    %v5269 = vcombine.high %v5267, %v5267
    %v5271 = vunpack.c.l.s4 1966171168
    %v5272 = vunpack.c.0.s8 %v5271
    %v5273 = vlaneseq
    %v5274 = vshrl.u32 %v5273, 7
    %v5275 = vsub.s32 %v5272, %v5274
    %v5276 = vrot.slane %v5260, %v5275
    %v5278 = vunpack.c.l.s4 1966171168
    %v5279 = vunpack.c.0.s8 %v5278
    %v5280 = vlaneseq
    %v5281 = vshrl.u32 %v5280, 7
    %v5282 = vsub.s32 %v5279, %v5281
    %v5283 = vrot.slane %v5267, %v5282
    %v5285 = vunpack.c.l.s4 1966171168
    %v5286 = vunpack.c.0.s8 %v5285
    %v5287 = vlaneseq
    %v5288 = vshrl.u32 %v5287, 7
    %v5289 = vsub.s32 %v5286, %v5288
    %v5290 = vrot.slane %v5268, %v5289
    %v5292 = vunpack.c.l.s4 1966171168
    %v5293 = vunpack.c.0.s8 %v5292
    %v5294 = vlaneseq
    %v5295 = vshrl.u32 %v5294, 7
    %v5296 = vsub.s32 %v5293, %v5295
    %v5297 = vrot.slane %v5269, %v5296
    %v5298 = vcombine.high %v5276, %v5276
    %v5299 = vcombine.high %v5283, %v5283
    %v5300 = vcombine.high %v5290, %v5290
    %v5301 = vcombine.high %v5297, %v5297
    %v5302 = vcombine.high %v2855, %v2855
    %v5304 = vunpack.c.l.s4 1966171168
    %v5305 = vunpack.c.0.s8 %v5304
    %v5306 = vlaneseq
    %v5307 = vshrl.u32 %v5306, 7
    %v5308 = vsub.s32 %v5305, %v5307
    %v5309 = vrot.slane %v2855, %v5308
    %v5311 = vunpack.c.l.s4 1966171168
    %v5312 = vunpack.c.0.s8 %v5311
    %v5313 = vlaneseq
    %v5314 = vshrl.u32 %v5313, 7
    %v5315 = vsub.s32 %v5312, %v5314
    %v5316 = vrot.slane %v5302, %v5315
    %v5317 = vcombine.high %v5309, %v5309
    %v5318 = vcombine.high %v5316, %v5316
    %v5320 = vunpack.c.l.s4 1966171168
    %v5321 = vunpack.c.0.s8 %v5320
    %v5322 = vlaneseq
    %v5323 = vshrl.u32 %v5322, 7
    %v5324 = vsub.s32 %v5321, %v5323
    %v5325 = vrot.slane %v5309, %v5324
    %v5327 = vunpack.c.l.s4 1966171168
    %v5328 = vunpack.c.0.s8 %v5327
    %v5329 = vlaneseq
    %v5330 = vshrl.u32 %v5329, 7
    %v5331 = vsub.s32 %v5328, %v5330
    %v5332 = vrot.slane %v5316, %v5331
    %v5334 = vunpack.c.l.s4 1966171168
    %v5335 = vunpack.c.0.s8 %v5334
    %v5336 = vlaneseq
    %v5337 = vshrl.u32 %v5336, 7
    %v5338 = vsub.s32 %v5335, %v5337
    %v5339 = vrot.slane %v5317, %v5338
    %v5341 = vunpack.c.l.s4 1966171168
    %v5342 = vunpack.c.0.s8 %v5341
    %v5343 = vlaneseq
    %v5344 = vshrl.u32 %v5343, 7
    %v5345 = vsub.s32 %v5342, %v5344
    %v5346 = vrot.slane %v5318, %v5345
    %v5347 = vcombine.high %v5325, %v5325
    %v5348 = vcombine.high %v5332, %v5332
    %v5349 = vcombine.high %v5339, %v5339
    %v5350 = vcombine.high %v5346, %v5346
    %v5351 = vcombine.high %v2857, %v2857
    %v5353 = vunpack.c.l.s4 1966171168
    %v5354 = vunpack.c.0.s8 %v5353
    %v5355 = vlaneseq
    %v5356 = vshrl.u32 %v5355, 7
    %v5357 = vsub.s32 %v5354, %v5356
    %v5358 = vrot.slane %v2857, %v5357
    %v5360 = vunpack.c.l.s4 1966171168
    %v5361 = vunpack.c.0.s8 %v5360
    %v5362 = vlaneseq
    %v5363 = vshrl.u32 %v5362, 7
    %v5364 = vsub.s32 %v5361, %v5363
    %v5365 = vrot.slane %v5351, %v5364
    %v5366 = vcombine.high %v5358, %v5358
    %v5367 = vcombine.high %v5365, %v5365
    %v5369 = vunpack.c.l.s4 1966171168
    %v5370 = vunpack.c.0.s8 %v5369
    %v5371 = vlaneseq
    %v5372 = vshrl.u32 %v5371, 7
    %v5373 = vsub.s32 %v5370, %v5372
    %v5374 = vrot.slane %v5358, %v5373
    %v5376 = vunpack.c.l.s4 1966171168
    %v5377 = vunpack.c.0.s8 %v5376
    %v5378 = vlaneseq
    %v5379 = vshrl.u32 %v5378, 7
    %v5380 = vsub.s32 %v5377, %v5379
    %v5381 = vrot.slane %v5365, %v5380
    %v5383 = vunpack.c.l.s4 1966171168
    %v5384 = vunpack.c.0.s8 %v5383
    %v5385 = vlaneseq
    %v5386 = vshrl.u32 %v5385, 7
    %v5387 = vsub.s32 %v5384, %v5386
    %v5388 = vrot.slane %v5366, %v5387
    %v5390 = vunpack.c.l.s4 1966171168
    %v5391 = vunpack.c.0.s8 %v5390
    %v5392 = vlaneseq
    %v5393 = vshrl.u32 %v5392, 7
    %v5394 = vsub.s32 %v5391, %v5393
    %v5395 = vrot.slane %v5367, %v5394
    %v5396 = vcombine.high %v5374, %v5374
    %v5397 = vcombine.high %v5381, %v5381
    %v5398 = vcombine.high %v5388, %v5388
    %v5399 = vcombine.high %v5395, %v5395
    %v5400 = vcombine.high %v2859, %v2859
    %v5402 = vunpack.c.l.s4 1966171168
    %v5403 = vunpack.c.0.s8 %v5402
    %v5404 = vlaneseq
    %v5405 = vshrl.u32 %v5404, 7
    %v5406 = vsub.s32 %v5403, %v5405
    %v5407 = vrot.slane %v2859, %v5406
    %v5409 = vunpack.c.l.s4 1966171168
    %v5410 = vunpack.c.0.s8 %v5409
    %v5411 = vlaneseq
    %v5412 = vshrl.u32 %v5411, 7
    %v5413 = vsub.s32 %v5410, %v5412
    %v5414 = vrot.slane %v5400, %v5413
    %v5415 = vcombine.high %v5407, %v5407
    %v5416 = vcombine.high %v5414, %v5414
    %v5418 = vunpack.c.l.s4 1966171168
    %v5419 = vunpack.c.0.s8 %v5418
    %v5420 = vlaneseq
    %v5421 = vshrl.u32 %v5420, 7
    %v5422 = vsub.s32 %v5419, %v5421
    %v5423 = vrot.slane %v5407, %v5422
    %v5425 = vunpack.c.l.s4 1966171168
    %v5426 = vunpack.c.0.s8 %v5425
    %v5427 = vlaneseq
    %v5428 = vshrl.u32 %v5427, 7
    %v5429 = vsub.s32 %v5426, %v5428
    %v5430 = vrot.slane %v5414, %v5429
    %v5432 = vunpack.c.l.s4 1966171168
    %v5433 = vunpack.c.0.s8 %v5432
    %v5434 = vlaneseq
    %v5435 = vshrl.u32 %v5434, 7
    %v5436 = vsub.s32 %v5433, %v5435
    %v5437 = vrot.slane %v5415, %v5436
    %v5439 = vunpack.c.l.s4 1966171168
    %v5440 = vunpack.c.0.s8 %v5439
    %v5441 = vlaneseq
    %v5442 = vshrl.u32 %v5441, 7
    %v5443 = vsub.s32 %v5440, %v5442
    %v5444 = vrot.slane %v5416, %v5443
    %v5445 = vcombine.high %v5423, %v5423
    %v5446 = vcombine.high %v5430, %v5430
    %v5447 = vcombine.high %v5437, %v5437
    %v5448 = vcombine.high %v5444, %v5444
    %v5449 = vcombine.high %v2861, %v2861
    %v5451 = vunpack.c.l.s4 1966171168
    %v5452 = vunpack.c.0.s8 %v5451
    %v5453 = vlaneseq
    %v5454 = vshrl.u32 %v5453, 7
    %v5455 = vsub.s32 %v5452, %v5454
    %v5456 = vrot.slane %v2861, %v5455
    %v5458 = vunpack.c.l.s4 1966171168
    %v5459 = vunpack.c.0.s8 %v5458
    %v5460 = vlaneseq
    %v5461 = vshrl.u32 %v5460, 7
    %v5462 = vsub.s32 %v5459, %v5461
    %v5463 = vrot.slane %v5449, %v5462
    %v5464 = vcombine.high %v5456, %v5456
    %v5465 = vcombine.high %v5463, %v5463
    %v5467 = vunpack.c.l.s4 1966171168
    %v5468 = vunpack.c.0.s8 %v5467
    %v5469 = vlaneseq
    %v5470 = vshrl.u32 %v5469, 7
    %v5471 = vsub.s32 %v5468, %v5470
    %v5472 = vrot.slane %v5456, %v5471
    %v5474 = vunpack.c.l.s4 1966171168
    %v5475 = vunpack.c.0.s8 %v5474
    %v5476 = vlaneseq
    %v5477 = vshrl.u32 %v5476, 7
    %v5478 = vsub.s32 %v5475, %v5477
    %v5479 = vrot.slane %v5463, %v5478
    %v5481 = vunpack.c.l.s4 1966171168
    %v5482 = vunpack.c.0.s8 %v5481
    %v5483 = vlaneseq
    %v5484 = vshrl.u32 %v5483, 7
    %v5485 = vsub.s32 %v5482, %v5484
    %v5486 = vrot.slane %v5464, %v5485
    %v5488 = vunpack.c.l.s4 1966171168
    %v5489 = vunpack.c.0.s8 %v5488
    %v5490 = vlaneseq
    %v5491 = vshrl.u32 %v5490, 7
    %v5492 = vsub.s32 %v5489, %v5491
    %v5493 = vrot.slane %v5465, %v5492
    %v5494 = vcombine.high %v5472, %v5472
    %v5495 = vcombine.high %v5479, %v5479
    %v5496 = vcombine.high %v5486, %v5486
    %v5497 = vcombine.high %v5493, %v5493
    %v5498 = vcombine.high %v2863, %v2863
    %v5500 = vunpack.c.l.s4 1966171168
    %v5501 = vunpack.c.0.s8 %v5500
    %v5502 = vlaneseq
    %v5503 = vshrl.u32 %v5502, 7
    %v5504 = vsub.s32 %v5501, %v5503
    %v5505 = vrot.slane %v2863, %v5504
    %v5507 = vunpack.c.l.s4 1966171168
    %v5508 = vunpack.c.0.s8 %v5507
    %v5509 = vlaneseq
    %v5510 = vshrl.u32 %v5509, 7
    %v5511 = vsub.s32 %v5508, %v5510
    %v5512 = vrot.slane %v5498, %v5511
    %v5513 = vcombine.high %v5505, %v5505
    %v5514 = vcombine.high %v5512, %v5512
    %v5516 = vunpack.c.l.s4 1966171168
    %v5517 = vunpack.c.0.s8 %v5516
    %v5518 = vlaneseq
    %v5519 = vshrl.u32 %v5518, 7
    %v5520 = vsub.s32 %v5517, %v5519
    %v5521 = vrot.slane %v5505, %v5520
    %v5523 = vunpack.c.l.s4 1966171168
    %v5524 = vunpack.c.0.s8 %v5523
    %v5525 = vlaneseq
    %v5526 = vshrl.u32 %v5525, 7
    %v5527 = vsub.s32 %v5524, %v5526
    %v5528 = vrot.slane %v5512, %v5527
    %v5530 = vunpack.c.l.s4 1966171168
    %v5531 = vunpack.c.0.s8 %v5530
    %v5532 = vlaneseq
    %v5533 = vshrl.u32 %v5532, 7
    %v5534 = vsub.s32 %v5531, %v5533
    %v5535 = vrot.slane %v5513, %v5534
    %v5537 = vunpack.c.l.s4 1966171168
    %v5538 = vunpack.c.0.s8 %v5537
    %v5539 = vlaneseq
    %v5540 = vshrl.u32 %v5539, 7
    %v5541 = vsub.s32 %v5538, %v5540
    %v5542 = vrot.slane %v5514, %v5541
    %v5543 = vcombine.high %v5521, %v5521
    %v5544 = vcombine.high %v5528, %v5528
    %v5545 = vcombine.high %v5535, %v5535
    %v5546 = vcombine.high %v5542, %v5542
    %v5547 = vcombine.high %v2865, %v2865
    %v5549 = vunpack.c.l.s4 1966171168
    %v5550 = vunpack.c.0.s8 %v5549
    %v5551 = vlaneseq
    %v5552 = vshrl.u32 %v5551, 7
    %v5553 = vsub.s32 %v5550, %v5552
    %v5554 = vrot.slane %v2865, %v5553
    %v5556 = vunpack.c.l.s4 1966171168
    %v5557 = vunpack.c.0.s8 %v5556
    %v5558 = vlaneseq
    %v5559 = vshrl.u32 %v5558, 7
    %v5560 = vsub.s32 %v5557, %v5559
    %v5561 = vrot.slane %v5547, %v5560
    %v5562 = vcombine.high %v5554, %v5554
    %v5563 = vcombine.high %v5561, %v5561
    %v5565 = vunpack.c.l.s4 1966171168
    %v5566 = vunpack.c.0.s8 %v5565
    %v5567 = vlaneseq
    %v5568 = vshrl.u32 %v5567, 7
    %v5569 = vsub.s32 %v5566, %v5568
    %v5570 = vrot.slane %v5554, %v5569
    %v5572 = vunpack.c.l.s4 1966171168
    %v5573 = vunpack.c.0.s8 %v5572
    %v5574 = vlaneseq
    %v5575 = vshrl.u32 %v5574, 7
    %v5576 = vsub.s32 %v5573, %v5575
    %v5577 = vrot.slane %v5561, %v5576
    %v5579 = vunpack.c.l.s4 1966171168
    %v5580 = vunpack.c.0.s8 %v5579
    %v5581 = vlaneseq
    %v5582 = vshrl.u32 %v5581, 7
    %v5583 = vsub.s32 %v5580, %v5582
    %v5584 = vrot.slane %v5562, %v5583
    %v5586 = vunpack.c.l.s4 1966171168
    %v5587 = vunpack.c.0.s8 %v5586
    %v5588 = vlaneseq
    %v5589 = vshrl.u32 %v5588, 7
    %v5590 = vsub.s32 %v5587, %v5589
    %v5591 = vrot.slane %v5563, %v5590
    %v5592 = vcombine.high %v5570, %v5570
    %v5593 = vcombine.high %v5577, %v5577
    %v5594 = vcombine.high %v5584, %v5584
    %v5595 = vcombine.high %v5591, %v5591
    %v5596 = vcombine.high %v2867, %v2867
    %v5598 = vunpack.c.l.s4 1966171168
    %v5599 = vunpack.c.0.s8 %v5598
    %v5600 = vlaneseq
    %v5601 = vshrl.u32 %v5600, 7
    %v5602 = vsub.s32 %v5599, %v5601
    %v5603 = vrot.slane %v2867, %v5602
    %v5605 = vunpack.c.l.s4 1966171168
    %v5606 = vunpack.c.0.s8 %v5605
    %v5607 = vlaneseq
    %v5608 = vshrl.u32 %v5607, 7
    %v5609 = vsub.s32 %v5606, %v5608
    %v5610 = vrot.slane %v5596, %v5609
    %v5611 = vcombine.high %v5603, %v5603
    %v5612 = vcombine.high %v5610, %v5610
    %v5614 = vunpack.c.l.s4 1966171168
    %v5615 = vunpack.c.0.s8 %v5614
    %v5616 = vlaneseq
    %v5617 = vshrl.u32 %v5616, 7
    %v5618 = vsub.s32 %v5615, %v5617
    %v5619 = vrot.slane %v5603, %v5618
    %v5621 = vunpack.c.l.s4 1966171168
    %v5622 = vunpack.c.0.s8 %v5621
    %v5623 = vlaneseq
    %v5624 = vshrl.u32 %v5623, 7
    %v5625 = vsub.s32 %v5622, %v5624
    %v5626 = vrot.slane %v5610, %v5625
    %v5628 = vunpack.c.l.s4 1966171168
    %v5629 = vunpack.c.0.s8 %v5628
    %v5630 = vlaneseq
    %v5631 = vshrl.u32 %v5630, 7
    %v5632 = vsub.s32 %v5629, %v5631
    %v5633 = vrot.slane %v5611, %v5632
    %v5635 = vunpack.c.l.s4 1966171168
    %v5636 = vunpack.c.0.s8 %v5635
    %v5637 = vlaneseq
    %v5638 = vshrl.u32 %v5637, 7
    %v5639 = vsub.s32 %v5636, %v5638
    %v5640 = vrot.slane %v5612, %v5639
    %v5641 = vcombine.high %v5619, %v5619
    %v5642 = vcombine.high %v5626, %v5626
    %v5643 = vcombine.high %v5633, %v5633
    %v5644 = vcombine.high %v5640, %v5640
    %v5645 = vcombine.high %v2869, %v2869
    %v5647 = vunpack.c.l.s4 1966171168
    %v5648 = vunpack.c.0.s8 %v5647
    %v5649 = vlaneseq
    %v5650 = vshrl.u32 %v5649, 7
    %v5651 = vsub.s32 %v5648, %v5650
    %v5652 = vrot.slane %v2869, %v5651
    %v5654 = vunpack.c.l.s4 1966171168
    %v5655 = vunpack.c.0.s8 %v5654
    %v5656 = vlaneseq
    %v5657 = vshrl.u32 %v5656, 7
    %v5658 = vsub.s32 %v5655, %v5657
    %v5659 = vrot.slane %v5645, %v5658
    %v5660 = vcombine.high %v5652, %v5652
    %v5661 = vcombine.high %v5659, %v5659
    %v5663 = vunpack.c.l.s4 1966171168
    %v5664 = vunpack.c.0.s8 %v5663
    %v5665 = vlaneseq
    %v5666 = vshrl.u32 %v5665, 7
    %v5667 = vsub.s32 %v5664, %v5666
    %v5668 = vrot.slane %v5652, %v5667
    %v5670 = vunpack.c.l.s4 1966171168
    %v5671 = vunpack.c.0.s8 %v5670
    %v5672 = vlaneseq
    %v5673 = vshrl.u32 %v5672, 7
    %v5674 = vsub.s32 %v5671, %v5673
    %v5675 = vrot.slane %v5659, %v5674
    %v5677 = vunpack.c.l.s4 1966171168
    %v5678 = vunpack.c.0.s8 %v5677
    %v5679 = vlaneseq
    %v5680 = vshrl.u32 %v5679, 7
    %v5681 = vsub.s32 %v5678, %v5680
    %v5682 = vrot.slane %v5660, %v5681
    %v5684 = vunpack.c.l.s4 1966171168
    %v5685 = vunpack.c.0.s8 %v5684
    %v5686 = vlaneseq
    %v5687 = vshrl.u32 %v5686, 7
    %v5688 = vsub.s32 %v5685, %v5687
    %v5689 = vrot.slane %v5661, %v5688
    %v5690 = vcombine.high %v5668, %v5668
    %v5691 = vcombine.high %v5675, %v5675
    %v5692 = vcombine.high %v5682, %v5682
    %v5693 = vcombine.high %v5689, %v5689
    %v5694 = vcombine.high %v2871, %v2871
    %v5696 = vunpack.c.l.s4 1966171168
    %v5697 = vunpack.c.0.s8 %v5696
    %v5698 = vlaneseq
    %v5699 = vshrl.u32 %v5698, 7
    %v5700 = vsub.s32 %v5697, %v5699
    %v5701 = vrot.slane %v2871, %v5700
    %v5703 = vunpack.c.l.s4 1966171168
    %v5704 = vunpack.c.0.s8 %v5703
    %v5705 = vlaneseq
    %v5706 = vshrl.u32 %v5705, 7
    %v5707 = vsub.s32 %v5704, %v5706
    %v5708 = vrot.slane %v5694, %v5707
    %v5709 = vcombine.high %v5701, %v5701
    %v5710 = vcombine.high %v5708, %v5708
    %v5712 = vunpack.c.l.s4 1966171168
    %v5713 = vunpack.c.0.s8 %v5712
    %v5714 = vlaneseq
    %v5715 = vshrl.u32 %v5714, 7
    %v5716 = vsub.s32 %v5713, %v5715
    %v5717 = vrot.slane %v5701, %v5716
    %v5719 = vunpack.c.l.s4 1966171168
    %v5720 = vunpack.c.0.s8 %v5719
    %v5721 = vlaneseq
    %v5722 = vshrl.u32 %v5721, 7
    %v5723 = vsub.s32 %v5720, %v5722
    %v5724 = vrot.slane %v5708, %v5723
    %v5726 = vunpack.c.l.s4 1966171168
    %v5727 = vunpack.c.0.s8 %v5726
    %v5728 = vlaneseq
    %v5729 = vshrl.u32 %v5728, 7
    %v5730 = vsub.s32 %v5727, %v5729
    %v5731 = vrot.slane %v5709, %v5730
    %v5733 = vunpack.c.l.s4 1966171168
    %v5734 = vunpack.c.0.s8 %v5733
    %v5735 = vlaneseq
    %v5736 = vshrl.u32 %v5735, 7
    %v5737 = vsub.s32 %v5734, %v5736
    %v5738 = vrot.slane %v5710, %v5737
    %v5739 = vcombine.high %v5717, %v5717
    %v5740 = vcombine.high %v5724, %v5724
    %v5741 = vcombine.high %v5731, %v5731
    %v5742 = vcombine.high %v5738, %v5738
    %v5743 = vcombine.high %v2873, %v2873
    %v5745 = vunpack.c.l.s4 1966171168
    %v5746 = vunpack.c.0.s8 %v5745
    %v5747 = vlaneseq
    %v5748 = vshrl.u32 %v5747, 7
    %v5749 = vsub.s32 %v5746, %v5748
    %v5750 = vrot.slane %v2873, %v5749
    %v5752 = vunpack.c.l.s4 1966171168
    %v5753 = vunpack.c.0.s8 %v5752
    %v5754 = vlaneseq
    %v5755 = vshrl.u32 %v5754, 7
    %v5756 = vsub.s32 %v5753, %v5755
    %v5757 = vrot.slane %v5743, %v5756
    %v5758 = vcombine.high %v5750, %v5750
    %v5759 = vcombine.high %v5757, %v5757
    %v5761 = vunpack.c.l.s4 1966171168
    %v5762 = vunpack.c.0.s8 %v5761
    %v5763 = vlaneseq
    %v5764 = vshrl.u32 %v5763, 7
    %v5765 = vsub.s32 %v5762, %v5764
    %v5766 = vrot.slane %v5750, %v5765
    %v5768 = vunpack.c.l.s4 1966171168
    %v5769 = vunpack.c.0.s8 %v5768
    %v5770 = vlaneseq
    %v5771 = vshrl.u32 %v5770, 7
    %v5772 = vsub.s32 %v5769, %v5771
    %v5773 = vrot.slane %v5757, %v5772
    %v5775 = vunpack.c.l.s4 1966171168
    %v5776 = vunpack.c.0.s8 %v5775
    %v5777 = vlaneseq
    %v5778 = vshrl.u32 %v5777, 7
    %v5779 = vsub.s32 %v5776, %v5778
    %v5780 = vrot.slane %v5758, %v5779
    %v5782 = vunpack.c.l.s4 1966171168
    %v5783 = vunpack.c.0.s8 %v5782
    %v5784 = vlaneseq
    %v5785 = vshrl.u32 %v5784, 7
    %v5786 = vsub.s32 %v5783, %v5785
    %v5787 = vrot.slane %v5759, %v5786
    %v5788 = vcombine.high %v5766, %v5766
    %v5789 = vcombine.high %v5773, %v5773
    %v5790 = vcombine.high %v5780, %v5780
    %v5791 = vcombine.high %v5787, %v5787
    %v5792 = vcombine.high %v2875, %v2875
    %v5794 = vunpack.c.l.s4 1966171168
    %v5795 = vunpack.c.0.s8 %v5794
    %v5796 = vlaneseq
    %v5797 = vshrl.u32 %v5796, 7
    %v5798 = vsub.s32 %v5795, %v5797
    %v5799 = vrot.slane %v2875, %v5798
    %v5801 = vunpack.c.l.s4 1966171168
    %v5802 = vunpack.c.0.s8 %v5801
    %v5803 = vlaneseq
    %v5804 = vshrl.u32 %v5803, 7
    %v5805 = vsub.s32 %v5802, %v5804
    %v5806 = vrot.slane %v5792, %v5805
    %v5807 = vcombine.high %v5799, %v5799
    %v5808 = vcombine.high %v5806, %v5806
    %v5810 = vunpack.c.l.s4 1966171168
    %v5811 = vunpack.c.0.s8 %v5810
    %v5812 = vlaneseq
    %v5813 = vshrl.u32 %v5812, 7
    %v5814 = vsub.s32 %v5811, %v5813
    %v5815 = vrot.slane %v5799, %v5814
    %v5817 = vunpack.c.l.s4 1966171168
    %v5818 = vunpack.c.0.s8 %v5817
    %v5819 = vlaneseq
    %v5820 = vshrl.u32 %v5819, 7
    %v5821 = vsub.s32 %v5818, %v5820
    %v5822 = vrot.slane %v5806, %v5821
    %v5824 = vunpack.c.l.s4 1966171168
    %v5825 = vunpack.c.0.s8 %v5824
    %v5826 = vlaneseq
    %v5827 = vshrl.u32 %v5826, 7
    %v5828 = vsub.s32 %v5825, %v5827
    %v5829 = vrot.slane %v5807, %v5828
    %v5831 = vunpack.c.l.s4 1966171168
    %v5832 = vunpack.c.0.s8 %v5831
    %v5833 = vlaneseq
    %v5834 = vshrl.u32 %v5833, 7
    %v5835 = vsub.s32 %v5832, %v5834
    %v5836 = vrot.slane %v5808, %v5835
    %v5837 = vcombine.high %v5815, %v5815
    %v5838 = vcombine.high %v5822, %v5822
    %v5839 = vcombine.high %v5829, %v5829
    %v5840 = vcombine.high %v5836, %v5836
    %v5841 = vcombine.high %v2877, %v2877
    %v5843 = vunpack.c.l.s4 1966171168
    %v5844 = vunpack.c.0.s8 %v5843
    %v5845 = vlaneseq
    %v5846 = vshrl.u32 %v5845, 7
    %v5847 = vsub.s32 %v5844, %v5846
    %v5848 = vrot.slane %v2877, %v5847
    %v5850 = vunpack.c.l.s4 1966171168
    %v5851 = vunpack.c.0.s8 %v5850
    %v5852 = vlaneseq
    %v5853 = vshrl.u32 %v5852, 7
    %v5854 = vsub.s32 %v5851, %v5853
    %v5855 = vrot.slane %v5841, %v5854
    %v5856 = vcombine.high %v5848, %v5848
    %v5857 = vcombine.high %v5855, %v5855
    %v5859 = vunpack.c.l.s4 1966171168
    %v5860 = vunpack.c.0.s8 %v5859
    %v5861 = vlaneseq
    %v5862 = vshrl.u32 %v5861, 7
    %v5863 = vsub.s32 %v5860, %v5862
    %v5864 = vrot.slane %v5848, %v5863
    %v5866 = vunpack.c.l.s4 1966171168
    %v5867 = vunpack.c.0.s8 %v5866
    %v5868 = vlaneseq
    %v5869 = vshrl.u32 %v5868, 7
    %v5870 = vsub.s32 %v5867, %v5869
    %v5871 = vrot.slane %v5855, %v5870
    %v5873 = vunpack.c.l.s4 1966171168
    %v5874 = vunpack.c.0.s8 %v5873
    %v5875 = vlaneseq
    %v5876 = vshrl.u32 %v5875, 7
    %v5877 = vsub.s32 %v5874, %v5876
    %v5878 = vrot.slane %v5856, %v5877
    %v5880 = vunpack.c.l.s4 1966171168
    %v5881 = vunpack.c.0.s8 %v5880
    %v5882 = vlaneseq
    %v5883 = vshrl.u32 %v5882, 7
    %v5884 = vsub.s32 %v5881, %v5883
    %v5885 = vrot.slane %v5857, %v5884
    %v5886 = vcombine.high %v5864, %v5864
    %v5887 = vcombine.high %v5871, %v5871
    %v5888 = vcombine.high %v5878, %v5878
    %v5889 = vcombine.high %v5885, %v5885
    %v5890 = vcombine.high %v2879, %v2879
    %v5892 = vunpack.c.l.s4 1966171168
    %v5893 = vunpack.c.0.s8 %v5892
    %v5894 = vlaneseq
    %v5895 = vshrl.u32 %v5894, 7
    %v5896 = vsub.s32 %v5893, %v5895
    %v5897 = vrot.slane %v2879, %v5896
    %v5899 = vunpack.c.l.s4 1966171168
    %v5900 = vunpack.c.0.s8 %v5899
    %v5901 = vlaneseq
    %v5902 = vshrl.u32 %v5901, 7
    %v5903 = vsub.s32 %v5900, %v5902
    %v5904 = vrot.slane %v5890, %v5903
    %v5905 = vcombine.high %v5897, %v5897
    %v5906 = vcombine.high %v5904, %v5904
    %v5908 = vunpack.c.l.s4 1966171168
    %v5909 = vunpack.c.0.s8 %v5908
    %v5910 = vlaneseq
    %v5911 = vshrl.u32 %v5910, 7
    %v5912 = vsub.s32 %v5909, %v5911
    %v5913 = vrot.slane %v5897, %v5912
    %v5915 = vunpack.c.l.s4 1966171168
    %v5916 = vunpack.c.0.s8 %v5915
    %v5917 = vlaneseq
    %v5918 = vshrl.u32 %v5917, 7
    %v5919 = vsub.s32 %v5916, %v5918
    %v5920 = vrot.slane %v5904, %v5919
    %v5922 = vunpack.c.l.s4 1966171168
    %v5923 = vunpack.c.0.s8 %v5922
    %v5924 = vlaneseq
    %v5925 = vshrl.u32 %v5924, 7
    %v5926 = vsub.s32 %v5923, %v5925
    %v5927 = vrot.slane %v5905, %v5926
    %v5929 = vunpack.c.l.s4 1966171168
    %v5930 = vunpack.c.0.s8 %v5929
    %v5931 = vlaneseq
    %v5932 = vshrl.u32 %v5931, 7
    %v5933 = vsub.s32 %v5930, %v5932
    %v5934 = vrot.slane %v5906, %v5933
    %v5935 = vcombine.high %v5913, %v5913
    %v5936 = vcombine.high %v5920, %v5920
    %v5937 = vcombine.high %v5927, %v5927
    %v5938 = vcombine.high %v5934, %v5934
    %v5939 = vcombine.high %v2881, %v2881
    %v5941 = vunpack.c.l.s4 1966171168
    %v5942 = vunpack.c.0.s8 %v5941
    %v5943 = vlaneseq
    %v5944 = vshrl.u32 %v5943, 7
    %v5945 = vsub.s32 %v5942, %v5944
    %v5946 = vrot.slane %v2881, %v5945
    %v5948 = vunpack.c.l.s4 1966171168
    %v5949 = vunpack.c.0.s8 %v5948
    %v5950 = vlaneseq
    %v5951 = vshrl.u32 %v5950, 7
    %v5952 = vsub.s32 %v5949, %v5951
    %v5953 = vrot.slane %v5939, %v5952
    %v5954 = vcombine.high %v5946, %v5946
    %v5955 = vcombine.high %v5953, %v5953
    %v5957 = vunpack.c.l.s4 1966171168
    %v5958 = vunpack.c.0.s8 %v5957
    %v5959 = vlaneseq
    %v5960 = vshrl.u32 %v5959, 7
    %v5961 = vsub.s32 %v5958, %v5960
    %v5962 = vrot.slane %v5946, %v5961
    %v5964 = vunpack.c.l.s4 1966171168
    %v5965 = vunpack.c.0.s8 %v5964
    %v5966 = vlaneseq
    %v5967 = vshrl.u32 %v5966, 7
    %v5968 = vsub.s32 %v5965, %v5967
    %v5969 = vrot.slane %v5953, %v5968
    %v5971 = vunpack.c.l.s4 1966171168
    %v5972 = vunpack.c.0.s8 %v5971
    %v5973 = vlaneseq
    %v5974 = vshrl.u32 %v5973, 7
    %v5975 = vsub.s32 %v5972, %v5974
    %v5976 = vrot.slane %v5954, %v5975
    %v5978 = vunpack.c.l.s4 1966171168
    %v5979 = vunpack.c.0.s8 %v5978
    %v5980 = vlaneseq
    %v5981 = vshrl.u32 %v5980, 7
    %v5982 = vsub.s32 %v5979, %v5981
    %v5983 = vrot.slane %v5955, %v5982
    %v5984 = vcombine.high %v5962, %v5962
    %v5985 = vcombine.high %v5969, %v5969
    %v5986 = vcombine.high %v5976, %v5976
    %v5987 = vcombine.high %v5983, %v5983
    %v5988 = vcombine.high %v2883, %v2883
    %v5990 = vunpack.c.l.s4 1966171168
    %v5991 = vunpack.c.0.s8 %v5990
    %v5992 = vlaneseq
    %v5993 = vshrl.u32 %v5992, 7
    %v5994 = vsub.s32 %v5991, %v5993
    %v5995 = vrot.slane %v2883, %v5994
    %v5997 = vunpack.c.l.s4 1966171168
    %v5998 = vunpack.c.0.s8 %v5997
    %v5999 = vlaneseq
    %v6000 = vshrl.u32 %v5999, 7
    %v6001 = vsub.s32 %v5998, %v6000
    %v6002 = vrot.slane %v5988, %v6001
    %v6003 = vcombine.high %v5995, %v5995
    %v6004 = vcombine.high %v6002, %v6002
    %v6006 = vunpack.c.l.s4 1966171168
    %v6007 = vunpack.c.0.s8 %v6006
    %v6008 = vlaneseq
    %v6009 = vshrl.u32 %v6008, 7
    %v6010 = vsub.s32 %v6007, %v6009
    %v6011 = vrot.slane %v5995, %v6010
    %v6013 = vunpack.c.l.s4 1966171168
    %v6014 = vunpack.c.0.s8 %v6013
    %v6015 = vlaneseq
    %v6016 = vshrl.u32 %v6015, 7
    %v6017 = vsub.s32 %v6014, %v6016
    %v6018 = vrot.slane %v6002, %v6017
    %v6020 = vunpack.c.l.s4 1966171168
    %v6021 = vunpack.c.0.s8 %v6020
    %v6022 = vlaneseq
    %v6023 = vshrl.u32 %v6022, 7
    %v6024 = vsub.s32 %v6021, %v6023
    %v6025 = vrot.slane %v6003, %v6024
    %v6027 = vunpack.c.l.s4 1966171168
    %v6028 = vunpack.c.0.s8 %v6027
    %v6029 = vlaneseq
    %v6030 = vshrl.u32 %v6029, 7
    %v6031 = vsub.s32 %v6028, %v6030
    %v6032 = vrot.slane %v6004, %v6031
    %v6033 = vcombine.high %v6011, %v6011
    %v6034 = vcombine.high %v6018, %v6018
    %v6035 = vcombine.high %v6025, %v6025
    %v6036 = vcombine.high %v6032, %v6032
    %v6037 = vcombine.high %v2885, %v2885
    %v6039 = vunpack.c.l.s4 1966171168
    %v6040 = vunpack.c.0.s8 %v6039
    %v6041 = vlaneseq
    %v6042 = vshrl.u32 %v6041, 7
    %v6043 = vsub.s32 %v6040, %v6042
    %v6044 = vrot.slane %v2885, %v6043
    %v6046 = vunpack.c.l.s4 1966171168
    %v6047 = vunpack.c.0.s8 %v6046
    %v6048 = vlaneseq
    %v6049 = vshrl.u32 %v6048, 7
    %v6050 = vsub.s32 %v6047, %v6049
    %v6051 = vrot.slane %v6037, %v6050
    %v6052 = vcombine.high %v6044, %v6044
    %v6053 = vcombine.high %v6051, %v6051
    %v6055 = vunpack.c.l.s4 1966171168
    %v6056 = vunpack.c.0.s8 %v6055
    %v6057 = vlaneseq
    %v6058 = vshrl.u32 %v6057, 7
    %v6059 = vsub.s32 %v6056, %v6058
    %v6060 = vrot.slane %v6044, %v6059
    %v6062 = vunpack.c.l.s4 1966171168
    %v6063 = vunpack.c.0.s8 %v6062
    %v6064 = vlaneseq
    %v6065 = vshrl.u32 %v6064, 7
    %v6066 = vsub.s32 %v6063, %v6065
    %v6067 = vrot.slane %v6051, %v6066
    %v6069 = vunpack.c.l.s4 1966171168
    %v6070 = vunpack.c.0.s8 %v6069
    %v6071 = vlaneseq
    %v6072 = vshrl.u32 %v6071, 7
    %v6073 = vsub.s32 %v6070, %v6072
    %v6074 = vrot.slane %v6052, %v6073
    %v6076 = vunpack.c.l.s4 1966171168
    %v6077 = vunpack.c.0.s8 %v6076
    %v6078 = vlaneseq
    %v6079 = vshrl.u32 %v6078, 7
    %v6080 = vsub.s32 %v6077, %v6079
    %v6081 = vrot.slane %v6053, %v6080
    %v6082 = vcombine.high %v6060, %v6060
    %v6083 = vcombine.high %v6067, %v6067
    %v6084 = vcombine.high %v6074, %v6074
    %v6085 = vcombine.high %v6081, %v6081
    %v6086 = vcombine.low %v2973, %v2987
    %v6087 = vcombine.low %v2995, %v2997
    %v6088 = vcombine.low %v2980, %v2994
    %v6089 = vcombine.low %v2996, %v2998
    %v6091 = vunpack.c.l.s4 1966171168
    %v6092 = vunpack.c.0.s8 %v6091
    %v6093 = vlaneseq
    %v6094 = vshrl.u32 %v6093, 7
    %v6095 = vsub.s32 %v6092, %v6094
    %v6096 = vrot.slane %v6086, %v6095
    %v6098 = vunpack.c.l.s4 1966171168
    %v6099 = vunpack.c.0.s8 %v6098
    %v6100 = vlaneseq
    %v6101 = vshrl.u32 %v6100, 7
    %v6102 = vsub.s32 %v6099, %v6101
    %v6103 = vrot.slane %v6087, %v6102
    %v6105 = vunpack.c.l.s4 1966171168
    %v6106 = vunpack.c.0.s8 %v6105
    %v6107 = vlaneseq
    %v6108 = vshrl.u32 %v6107, 7
    %v6109 = vsub.s32 %v6106, %v6108
    %v6110 = vrot.slane %v6088, %v6109
    %v6112 = vunpack.c.l.s4 1966171168
    %v6113 = vunpack.c.0.s8 %v6112
    %v6114 = vlaneseq
    %v6115 = vshrl.u32 %v6114, 7
    %v6116 = vsub.s32 %v6113, %v6115
    %v6117 = vrot.slane %v6089, %v6116
    %v6118 = vcombine.low %v6096, %v6103
    %v6119 = vcombine.low %v6110, %v6117
    %v6121 = vunpack.c.l.s4 1966171168
    %v6122 = vunpack.c.0.s8 %v6121
    %v6123 = vlaneseq
    %v6124 = vshrl.u32 %v6123, 7
    %v6125 = vsub.s32 %v6122, %v6124
    %v6126 = vrot.slane %v6118, %v6125
    %v6128 = vunpack.c.l.s4 1966171168
    %v6129 = vunpack.c.0.s8 %v6128
    %v6130 = vlaneseq
    %v6131 = vshrl.u32 %v6130, 7
    %v6132 = vsub.s32 %v6129, %v6131
    %v6133 = vrot.slane %v6119, %v6132
    %v6134 = vcombine.low %v6126, %v6133
    %v6135 = vcombine.low %v3022, %v3036
    %v6136 = vcombine.low %v3044, %v3046
    %v6137 = vcombine.low %v3029, %v3043
    %v6138 = vcombine.low %v3045, %v3047
    %v6140 = vunpack.c.l.s4 1966171168
    %v6141 = vunpack.c.0.s8 %v6140
    %v6142 = vlaneseq
    %v6143 = vshrl.u32 %v6142, 7
    %v6144 = vsub.s32 %v6141, %v6143
    %v6145 = vrot.slane %v6135, %v6144
    %v6147 = vunpack.c.l.s4 1966171168
    %v6148 = vunpack.c.0.s8 %v6147
    %v6149 = vlaneseq
    %v6150 = vshrl.u32 %v6149, 7
    %v6151 = vsub.s32 %v6148, %v6150
    %v6152 = vrot.slane %v6136, %v6151
    %v6154 = vunpack.c.l.s4 1966171168
    %v6155 = vunpack.c.0.s8 %v6154
    %v6156 = vlaneseq
    %v6157 = vshrl.u32 %v6156, 7
    %v6158 = vsub.s32 %v6155, %v6157
    %v6159 = vrot.slane %v6137, %v6158
    %v6161 = vunpack.c.l.s4 1966171168
    %v6162 = vunpack.c.0.s8 %v6161
    %v6163 = vlaneseq
    %v6164 = vshrl.u32 %v6163, 7
    %v6165 = vsub.s32 %v6162, %v6164
    %v6166 = vrot.slane %v6138, %v6165
    %v6167 = vcombine.low %v6145, %v6152
    %v6168 = vcombine.low %v6159, %v6166
    %v6170 = vunpack.c.l.s4 1966171168
    %v6171 = vunpack.c.0.s8 %v6170
    %v6172 = vlaneseq
    %v6173 = vshrl.u32 %v6172, 7
    %v6174 = vsub.s32 %v6171, %v6173
    %v6175 = vrot.slane %v6167, %v6174
    %v6177 = vunpack.c.l.s4 1966171168
    %v6178 = vunpack.c.0.s8 %v6177
    %v6179 = vlaneseq
    %v6180 = vshrl.u32 %v6179, 7
    %v6181 = vsub.s32 %v6178, %v6180
    %v6182 = vrot.slane %v6168, %v6181
    %v6183 = vcombine.low %v6175, %v6182
    %v6184 = vcombine.low %v3071, %v3085
    %v6185 = vcombine.low %v3093, %v3095
    %v6186 = vcombine.low %v3078, %v3092
    %v6187 = vcombine.low %v3094, %v3096
    %v6189 = vunpack.c.l.s4 1966171168
    %v6190 = vunpack.c.0.s8 %v6189
    %v6191 = vlaneseq
    %v6192 = vshrl.u32 %v6191, 7
    %v6193 = vsub.s32 %v6190, %v6192
    %v6194 = vrot.slane %v6184, %v6193
    %v6196 = vunpack.c.l.s4 1966171168
    %v6197 = vunpack.c.0.s8 %v6196
    %v6198 = vlaneseq
    %v6199 = vshrl.u32 %v6198, 7
    %v6200 = vsub.s32 %v6197, %v6199
    %v6201 = vrot.slane %v6185, %v6200
    %v6203 = vunpack.c.l.s4 1966171168
    %v6204 = vunpack.c.0.s8 %v6203
    %v6205 = vlaneseq
    %v6206 = vshrl.u32 %v6205, 7
    %v6207 = vsub.s32 %v6204, %v6206
    %v6208 = vrot.slane %v6186, %v6207
    %v6210 = vunpack.c.l.s4 1966171168
    %v6211 = vunpack.c.0.s8 %v6210
    %v6212 = vlaneseq
    %v6213 = vshrl.u32 %v6212, 7
    %v6214 = vsub.s32 %v6211, %v6213
    %v6215 = vrot.slane %v6187, %v6214
    %v6216 = vcombine.low %v6194, %v6201
    %v6217 = vcombine.low %v6208, %v6215
    %v6219 = vunpack.c.l.s4 1966171168
    %v6220 = vunpack.c.0.s8 %v6219
    %v6221 = vlaneseq
    %v6222 = vshrl.u32 %v6221, 7
    %v6223 = vsub.s32 %v6220, %v6222
    %v6224 = vrot.slane %v6216, %v6223
    %v6226 = vunpack.c.l.s4 1966171168
    %v6227 = vunpack.c.0.s8 %v6226
    %v6228 = vlaneseq
    %v6229 = vshrl.u32 %v6228, 7
    %v6230 = vsub.s32 %v6227, %v6229
    %v6231 = vrot.slane %v6217, %v6230
    %v6232 = vcombine.low %v6224, %v6231
    %v6233 = vcombine.low %v3120, %v3134
    %v6234 = vcombine.low %v3142, %v3144
    %v6235 = vcombine.low %v3127, %v3141
    %v6236 = vcombine.low %v3143, %v3145
    %v6238 = vunpack.c.l.s4 1966171168
    %v6239 = vunpack.c.0.s8 %v6238
    %v6240 = vlaneseq
    %v6241 = vshrl.u32 %v6240, 7
    %v6242 = vsub.s32 %v6239, %v6241
    %v6243 = vrot.slane %v6233, %v6242
    %v6245 = vunpack.c.l.s4 1966171168
    %v6246 = vunpack.c.0.s8 %v6245
    %v6247 = vlaneseq
    %v6248 = vshrl.u32 %v6247, 7
    %v6249 = vsub.s32 %v6246, %v6248
    %v6250 = vrot.slane %v6234, %v6249
    %v6252 = vunpack.c.l.s4 1966171168
    %v6253 = vunpack.c.0.s8 %v6252
    %v6254 = vlaneseq
    %v6255 = vshrl.u32 %v6254, 7
    %v6256 = vsub.s32 %v6253, %v6255
    %v6257 = vrot.slane %v6235, %v6256
    %v6259 = vunpack.c.l.s4 1966171168
    %v6260 = vunpack.c.0.s8 %v6259
    %v6261 = vlaneseq
    %v6262 = vshrl.u32 %v6261, 7
    %v6263 = vsub.s32 %v6260, %v6262
    %v6264 = vrot.slane %v6236, %v6263
    %v6265 = vcombine.low %v6243, %v6250
    %v6266 = vcombine.low %v6257, %v6264
    %v6268 = vunpack.c.l.s4 1966171168
    %v6269 = vunpack.c.0.s8 %v6268
    %v6270 = vlaneseq
    %v6271 = vshrl.u32 %v6270, 7
    %v6272 = vsub.s32 %v6269, %v6271
    %v6273 = vrot.slane %v6265, %v6272
    %v6275 = vunpack.c.l.s4 1966171168
    %v6276 = vunpack.c.0.s8 %v6275
    %v6277 = vlaneseq
    %v6278 = vshrl.u32 %v6277, 7
    %v6279 = vsub.s32 %v6276, %v6278
    %v6280 = vrot.slane %v6266, %v6279
    %v6281 = vcombine.low %v6273, %v6280
    %v6282 = vcombine.low %v3169, %v3183
    %v6283 = vcombine.low %v3191, %v3193
    %v6284 = vcombine.low %v3176, %v3190
    %v6285 = vcombine.low %v3192, %v3194
    %v6287 = vunpack.c.l.s4 1966171168
    %v6288 = vunpack.c.0.s8 %v6287
    %v6289 = vlaneseq
    %v6290 = vshrl.u32 %v6289, 7
    %v6291 = vsub.s32 %v6288, %v6290
    %v6292 = vrot.slane %v6282, %v6291
    %v6294 = vunpack.c.l.s4 1966171168
    %v6295 = vunpack.c.0.s8 %v6294
    %v6296 = vlaneseq
    %v6297 = vshrl.u32 %v6296, 7
    %v6298 = vsub.s32 %v6295, %v6297
    %v6299 = vrot.slane %v6283, %v6298
    %v6301 = vunpack.c.l.s4 1966171168
    %v6302 = vunpack.c.0.s8 %v6301
    %v6303 = vlaneseq
    %v6304 = vshrl.u32 %v6303, 7
    %v6305 = vsub.s32 %v6302, %v6304
    %v6306 = vrot.slane %v6284, %v6305
    %v6308 = vunpack.c.l.s4 1966171168
    %v6309 = vunpack.c.0.s8 %v6308
    %v6310 = vlaneseq
    %v6311 = vshrl.u32 %v6310, 7
    %v6312 = vsub.s32 %v6309, %v6311
    %v6313 = vrot.slane %v6285, %v6312
    %v6314 = vcombine.low %v6292, %v6299
    %v6315 = vcombine.low %v6306, %v6313
    %v6317 = vunpack.c.l.s4 1966171168
    %v6318 = vunpack.c.0.s8 %v6317
    %v6319 = vlaneseq
    %v6320 = vshrl.u32 %v6319, 7
    %v6321 = vsub.s32 %v6318, %v6320
    %v6322 = vrot.slane %v6314, %v6321
    %v6324 = vunpack.c.l.s4 1966171168
    %v6325 = vunpack.c.0.s8 %v6324
    %v6326 = vlaneseq
    %v6327 = vshrl.u32 %v6326, 7
    %v6328 = vsub.s32 %v6325, %v6327
    %v6329 = vrot.slane %v6315, %v6328
    %v6330 = vcombine.low %v6322, %v6329
    %v6331 = vcombine.low %v3218, %v3232
    %v6332 = vcombine.low %v3240, %v3242
    %v6333 = vcombine.low %v3225, %v3239
    %v6334 = vcombine.low %v3241, %v3243
    %v6336 = vunpack.c.l.s4 1966171168
    %v6337 = vunpack.c.0.s8 %v6336
    %v6338 = vlaneseq
    %v6339 = vshrl.u32 %v6338, 7
    %v6340 = vsub.s32 %v6337, %v6339
    %v6341 = vrot.slane %v6331, %v6340
    %v6343 = vunpack.c.l.s4 1966171168
    %v6344 = vunpack.c.0.s8 %v6343
    %v6345 = vlaneseq
    %v6346 = vshrl.u32 %v6345, 7
    %v6347 = vsub.s32 %v6344, %v6346
    %v6348 = vrot.slane %v6332, %v6347
    %v6350 = vunpack.c.l.s4 1966171168
    %v6351 = vunpack.c.0.s8 %v6350
    %v6352 = vlaneseq
    %v6353 = vshrl.u32 %v6352, 7
    %v6354 = vsub.s32 %v6351, %v6353
    %v6355 = vrot.slane %v6333, %v6354
    %v6357 = vunpack.c.l.s4 1966171168
    %v6358 = vunpack.c.0.s8 %v6357
    %v6359 = vlaneseq
    %v6360 = vshrl.u32 %v6359, 7
    %v6361 = vsub.s32 %v6358, %v6360
    %v6362 = vrot.slane %v6334, %v6361
    %v6363 = vcombine.low %v6341, %v6348
    %v6364 = vcombine.low %v6355, %v6362
    %v6366 = vunpack.c.l.s4 1966171168
    %v6367 = vunpack.c.0.s8 %v6366
    %v6368 = vlaneseq
    %v6369 = vshrl.u32 %v6368, 7
    %v6370 = vsub.s32 %v6367, %v6369
    %v6371 = vrot.slane %v6363, %v6370
    %v6373 = vunpack.c.l.s4 1966171168
    %v6374 = vunpack.c.0.s8 %v6373
    %v6375 = vlaneseq
    %v6376 = vshrl.u32 %v6375, 7
    %v6377 = vsub.s32 %v6374, %v6376
    %v6378 = vrot.slane %v6364, %v6377
    %v6379 = vcombine.low %v6371, %v6378
    %v6380 = vcombine.low %v3267, %v3281
    %v6381 = vcombine.low %v3289, %v3291
    %v6382 = vcombine.low %v3274, %v3288
    %v6383 = vcombine.low %v3290, %v3292
    %v6385 = vunpack.c.l.s4 1966171168
    %v6386 = vunpack.c.0.s8 %v6385
    %v6387 = vlaneseq
    %v6388 = vshrl.u32 %v6387, 7
    %v6389 = vsub.s32 %v6386, %v6388
    %v6390 = vrot.slane %v6380, %v6389
    %v6392 = vunpack.c.l.s4 1966171168
    %v6393 = vunpack.c.0.s8 %v6392
    %v6394 = vlaneseq
    %v6395 = vshrl.u32 %v6394, 7
    %v6396 = vsub.s32 %v6393, %v6395
    %v6397 = vrot.slane %v6381, %v6396
    %v6399 = vunpack.c.l.s4 1966171168
    %v6400 = vunpack.c.0.s8 %v6399
    %v6401 = vlaneseq
    %v6402 = vshrl.u32 %v6401, 7
    %v6403 = vsub.s32 %v6400, %v6402
    %v6404 = vrot.slane %v6382, %v6403
    %v6406 = vunpack.c.l.s4 1966171168
    %v6407 = vunpack.c.0.s8 %v6406
    %v6408 = vlaneseq
    %v6409 = vshrl.u32 %v6408, 7
    %v6410 = vsub.s32 %v6407, %v6409
    %v6411 = vrot.slane %v6383, %v6410
    %v6412 = vcombine.low %v6390, %v6397
    %v6413 = vcombine.low %v6404, %v6411
    %v6415 = vunpack.c.l.s4 1966171168
    %v6416 = vunpack.c.0.s8 %v6415
    %v6417 = vlaneseq
    %v6418 = vshrl.u32 %v6417, 7
    %v6419 = vsub.s32 %v6416, %v6418
    %v6420 = vrot.slane %v6412, %v6419
    %v6422 = vunpack.c.l.s4 1966171168
    %v6423 = vunpack.c.0.s8 %v6422
    %v6424 = vlaneseq
    %v6425 = vshrl.u32 %v6424, 7
    %v6426 = vsub.s32 %v6423, %v6425
    %v6427 = vrot.slane %v6413, %v6426
    %v6428 = vcombine.low %v6420, %v6427
    %v6429 = vcombine.low %v3316, %v3330
    %v6430 = vcombine.low %v3338, %v3340
    %v6431 = vcombine.low %v3323, %v3337
    %v6432 = vcombine.low %v3339, %v3341
    %v6434 = vunpack.c.l.s4 1966171168
    %v6435 = vunpack.c.0.s8 %v6434
    %v6436 = vlaneseq
    %v6437 = vshrl.u32 %v6436, 7
    %v6438 = vsub.s32 %v6435, %v6437
    %v6439 = vrot.slane %v6429, %v6438
    %v6441 = vunpack.c.l.s4 1966171168
    %v6442 = vunpack.c.0.s8 %v6441
    %v6443 = vlaneseq
    %v6444 = vshrl.u32 %v6443, 7
    %v6445 = vsub.s32 %v6442, %v6444
    %v6446 = vrot.slane %v6430, %v6445
    %v6448 = vunpack.c.l.s4 1966171168
    %v6449 = vunpack.c.0.s8 %v6448
    %v6450 = vlaneseq
    %v6451 = vshrl.u32 %v6450, 7
    %v6452 = vsub.s32 %v6449, %v6451
    %v6453 = vrot.slane %v6431, %v6452
    %v6455 = vunpack.c.l.s4 1966171168
    %v6456 = vunpack.c.0.s8 %v6455
    %v6457 = vlaneseq
    %v6458 = vshrl.u32 %v6457, 7
    %v6459 = vsub.s32 %v6456, %v6458
    %v6460 = vrot.slane %v6432, %v6459
    %v6461 = vcombine.low %v6439, %v6446
    %v6462 = vcombine.low %v6453, %v6460
    %v6464 = vunpack.c.l.s4 1966171168
    %v6465 = vunpack.c.0.s8 %v6464
    %v6466 = vlaneseq
    %v6467 = vshrl.u32 %v6466, 7
    %v6468 = vsub.s32 %v6465, %v6467
    %v6469 = vrot.slane %v6461, %v6468
    %v6471 = vunpack.c.l.s4 1966171168
    %v6472 = vunpack.c.0.s8 %v6471
    %v6473 = vlaneseq
    %v6474 = vshrl.u32 %v6473, 7
    %v6475 = vsub.s32 %v6472, %v6474
    %v6476 = vrot.slane %v6462, %v6475
    %v6477 = vcombine.low %v6469, %v6476
    %v6478 = vcombine.low %v3365, %v3379
    %v6479 = vcombine.low %v3387, %v3389
    %v6480 = vcombine.low %v3372, %v3386
    %v6481 = vcombine.low %v3388, %v3390
    %v6483 = vunpack.c.l.s4 1966171168
    %v6484 = vunpack.c.0.s8 %v6483
    %v6485 = vlaneseq
    %v6486 = vshrl.u32 %v6485, 7
    %v6487 = vsub.s32 %v6484, %v6486
    %v6488 = vrot.slane %v6478, %v6487
    %v6490 = vunpack.c.l.s4 1966171168
    %v6491 = vunpack.c.0.s8 %v6490
    %v6492 = vlaneseq
    %v6493 = vshrl.u32 %v6492, 7
    %v6494 = vsub.s32 %v6491, %v6493
    %v6495 = vrot.slane %v6479, %v6494
    %v6497 = vunpack.c.l.s4 1966171168
    %v6498 = vunpack.c.0.s8 %v6497
    %v6499 = vlaneseq
    %v6500 = vshrl.u32 %v6499, 7
    %v6501 = vsub.s32 %v6498, %v6500
    %v6502 = vrot.slane %v6480, %v6501
    %v6504 = vunpack.c.l.s4 1966171168
    %v6505 = vunpack.c.0.s8 %v6504
    %v6506 = vlaneseq
    %v6507 = vshrl.u32 %v6506, 7
    %v6508 = vsub.s32 %v6505, %v6507
    %v6509 = vrot.slane %v6481, %v6508
    %v6510 = vcombine.low %v6488, %v6495
    %v6511 = vcombine.low %v6502, %v6509
    %v6513 = vunpack.c.l.s4 1966171168
    %v6514 = vunpack.c.0.s8 %v6513
    %v6515 = vlaneseq
    %v6516 = vshrl.u32 %v6515, 7
    %v6517 = vsub.s32 %v6514, %v6516
    %v6518 = vrot.slane %v6510, %v6517
    %v6520 = vunpack.c.l.s4 1966171168
    %v6521 = vunpack.c.0.s8 %v6520
    %v6522 = vlaneseq
    %v6523 = vshrl.u32 %v6522, 7
    %v6524 = vsub.s32 %v6521, %v6523
    %v6525 = vrot.slane %v6511, %v6524
    %v6526 = vcombine.low %v6518, %v6525
    %v6527 = vcombine.low %v3414, %v3428
    %v6528 = vcombine.low %v3436, %v3438
    %v6529 = vcombine.low %v3421, %v3435
    %v6530 = vcombine.low %v3437, %v3439
    %v6532 = vunpack.c.l.s4 1966171168
    %v6533 = vunpack.c.0.s8 %v6532
    %v6534 = vlaneseq
    %v6535 = vshrl.u32 %v6534, 7
    %v6536 = vsub.s32 %v6533, %v6535
    %v6537 = vrot.slane %v6527, %v6536
    %v6539 = vunpack.c.l.s4 1966171168
    %v6540 = vunpack.c.0.s8 %v6539
    %v6541 = vlaneseq
    %v6542 = vshrl.u32 %v6541, 7
    %v6543 = vsub.s32 %v6540, %v6542
    %v6544 = vrot.slane %v6528, %v6543
    %v6546 = vunpack.c.l.s4 1966171168
    %v6547 = vunpack.c.0.s8 %v6546
    %v6548 = vlaneseq
    %v6549 = vshrl.u32 %v6548, 7
    %v6550 = vsub.s32 %v6547, %v6549
    %v6551 = vrot.slane %v6529, %v6550
    %v6553 = vunpack.c.l.s4 1966171168
    %v6554 = vunpack.c.0.s8 %v6553
    %v6555 = vlaneseq
    %v6556 = vshrl.u32 %v6555, 7
    %v6557 = vsub.s32 %v6554, %v6556
    %v6558 = vrot.slane %v6530, %v6557
    %v6559 = vcombine.low %v6537, %v6544
    %v6560 = vcombine.low %v6551, %v6558
    %v6562 = vunpack.c.l.s4 1966171168
    %v6563 = vunpack.c.0.s8 %v6562
    %v6564 = vlaneseq
    %v6565 = vshrl.u32 %v6564, 7
    %v6566 = vsub.s32 %v6563, %v6565
    %v6567 = vrot.slane %v6559, %v6566
    %v6569 = vunpack.c.l.s4 1966171168
    %v6570 = vunpack.c.0.s8 %v6569
    %v6571 = vlaneseq
    %v6572 = vshrl.u32 %v6571, 7
    %v6573 = vsub.s32 %v6570, %v6572
    %v6574 = vrot.slane %v6560, %v6573
    %v6575 = vcombine.low %v6567, %v6574
    %v6576 = vcombine.low %v3463, %v3477
    %v6577 = vcombine.low %v3485, %v3487
    %v6578 = vcombine.low %v3470, %v3484
    %v6579 = vcombine.low %v3486, %v3488
    %v6581 = vunpack.c.l.s4 1966171168
    %v6582 = vunpack.c.0.s8 %v6581
    %v6583 = vlaneseq
    %v6584 = vshrl.u32 %v6583, 7
    %v6585 = vsub.s32 %v6582, %v6584
    %v6586 = vrot.slane %v6576, %v6585
    %v6588 = vunpack.c.l.s4 1966171168
    %v6589 = vunpack.c.0.s8 %v6588
    %v6590 = vlaneseq
    %v6591 = vshrl.u32 %v6590, 7
    %v6592 = vsub.s32 %v6589, %v6591
    %v6593 = vrot.slane %v6577, %v6592
    %v6595 = vunpack.c.l.s4 1966171168
    %v6596 = vunpack.c.0.s8 %v6595
    %v6597 = vlaneseq
    %v6598 = vshrl.u32 %v6597, 7
    %v6599 = vsub.s32 %v6596, %v6598
    %v6600 = vrot.slane %v6578, %v6599
    %v6602 = vunpack.c.l.s4 1966171168
    %v6603 = vunpack.c.0.s8 %v6602
    %v6604 = vlaneseq
    %v6605 = vshrl.u32 %v6604, 7
    %v6606 = vsub.s32 %v6603, %v6605
    %v6607 = vrot.slane %v6579, %v6606
    %v6608 = vcombine.low %v6586, %v6593
    %v6609 = vcombine.low %v6600, %v6607
    %v6611 = vunpack.c.l.s4 1966171168
    %v6612 = vunpack.c.0.s8 %v6611
    %v6613 = vlaneseq
    %v6614 = vshrl.u32 %v6613, 7
    %v6615 = vsub.s32 %v6612, %v6614
    %v6616 = vrot.slane %v6608, %v6615
    %v6618 = vunpack.c.l.s4 1966171168
    %v6619 = vunpack.c.0.s8 %v6618
    %v6620 = vlaneseq
    %v6621 = vshrl.u32 %v6620, 7
    %v6622 = vsub.s32 %v6619, %v6621
    %v6623 = vrot.slane %v6609, %v6622
    %v6624 = vcombine.low %v6616, %v6623
    %v6625 = vcombine.low %v3512, %v3526
    %v6626 = vcombine.low %v3534, %v3536
    %v6627 = vcombine.low %v3519, %v3533
    %v6628 = vcombine.low %v3535, %v3537
    %v6630 = vunpack.c.l.s4 1966171168
    %v6631 = vunpack.c.0.s8 %v6630
    %v6632 = vlaneseq
    %v6633 = vshrl.u32 %v6632, 7
    %v6634 = vsub.s32 %v6631, %v6633
    %v6635 = vrot.slane %v6625, %v6634
    %v6637 = vunpack.c.l.s4 1966171168
    %v6638 = vunpack.c.0.s8 %v6637
    %v6639 = vlaneseq
    %v6640 = vshrl.u32 %v6639, 7
    %v6641 = vsub.s32 %v6638, %v6640
    %v6642 = vrot.slane %v6626, %v6641
    %v6644 = vunpack.c.l.s4 1966171168
    %v6645 = vunpack.c.0.s8 %v6644
    %v6646 = vlaneseq
    %v6647 = vshrl.u32 %v6646, 7
    %v6648 = vsub.s32 %v6645, %v6647
    %v6649 = vrot.slane %v6627, %v6648
    %v6651 = vunpack.c.l.s4 1966171168
    %v6652 = vunpack.c.0.s8 %v6651
    %v6653 = vlaneseq
    %v6654 = vshrl.u32 %v6653, 7
    %v6655 = vsub.s32 %v6652, %v6654
    %v6656 = vrot.slane %v6628, %v6655
    %v6657 = vcombine.low %v6635, %v6642
    %v6658 = vcombine.low %v6649, %v6656
    %v6660 = vunpack.c.l.s4 1966171168
    %v6661 = vunpack.c.0.s8 %v6660
    %v6662 = vlaneseq
    %v6663 = vshrl.u32 %v6662, 7
    %v6664 = vsub.s32 %v6661, %v6663
    %v6665 = vrot.slane %v6657, %v6664
    %v6667 = vunpack.c.l.s4 1966171168
    %v6668 = vunpack.c.0.s8 %v6667
    %v6669 = vlaneseq
    %v6670 = vshrl.u32 %v6669, 7
    %v6671 = vsub.s32 %v6668, %v6670
    %v6672 = vrot.slane %v6658, %v6671
    %v6673 = vcombine.low %v6665, %v6672
    %v6674 = vcombine.low %v3561, %v3575
    %v6675 = vcombine.low %v3583, %v3585
    %v6676 = vcombine.low %v3568, %v3582
    %v6677 = vcombine.low %v3584, %v3586
    %v6679 = vunpack.c.l.s4 1966171168
    %v6680 = vunpack.c.0.s8 %v6679
    %v6681 = vlaneseq
    %v6682 = vshrl.u32 %v6681, 7
    %v6683 = vsub.s32 %v6680, %v6682
    %v6684 = vrot.slane %v6674, %v6683
    %v6686 = vunpack.c.l.s4 1966171168
    %v6687 = vunpack.c.0.s8 %v6686
    %v6688 = vlaneseq
    %v6689 = vshrl.u32 %v6688, 7
    %v6690 = vsub.s32 %v6687, %v6689
    %v6691 = vrot.slane %v6675, %v6690
    %v6693 = vunpack.c.l.s4 1966171168
    %v6694 = vunpack.c.0.s8 %v6693
    %v6695 = vlaneseq
    %v6696 = vshrl.u32 %v6695, 7
    %v6697 = vsub.s32 %v6694, %v6696
    %v6698 = vrot.slane %v6676, %v6697
    %v6700 = vunpack.c.l.s4 1966171168
    %v6701 = vunpack.c.0.s8 %v6700
    %v6702 = vlaneseq
    %v6703 = vshrl.u32 %v6702, 7
    %v6704 = vsub.s32 %v6701, %v6703
    %v6705 = vrot.slane %v6677, %v6704
    %v6706 = vcombine.low %v6684, %v6691
    %v6707 = vcombine.low %v6698, %v6705
    %v6709 = vunpack.c.l.s4 1966171168
    %v6710 = vunpack.c.0.s8 %v6709
    %v6711 = vlaneseq
    %v6712 = vshrl.u32 %v6711, 7
    %v6713 = vsub.s32 %v6710, %v6712
    %v6714 = vrot.slane %v6706, %v6713
    %v6716 = vunpack.c.l.s4 1966171168
    %v6717 = vunpack.c.0.s8 %v6716
    %v6718 = vlaneseq
    %v6719 = vshrl.u32 %v6718, 7
    %v6720 = vsub.s32 %v6717, %v6719
    %v6721 = vrot.slane %v6707, %v6720
    %v6722 = vcombine.low %v6714, %v6721
    %v6723 = vcombine.low %v3610, %v3624
    %v6724 = vcombine.low %v3632, %v3634
    %v6725 = vcombine.low %v3617, %v3631
    %v6726 = vcombine.low %v3633, %v3635
    %v6728 = vunpack.c.l.s4 1966171168
    %v6729 = vunpack.c.0.s8 %v6728
    %v6730 = vlaneseq
    %v6731 = vshrl.u32 %v6730, 7
    %v6732 = vsub.s32 %v6729, %v6731
    %v6733 = vrot.slane %v6723, %v6732
    %v6735 = vunpack.c.l.s4 1966171168
    %v6736 = vunpack.c.0.s8 %v6735
    %v6737 = vlaneseq
    %v6738 = vshrl.u32 %v6737, 7
    %v6739 = vsub.s32 %v6736, %v6738
    %v6740 = vrot.slane %v6724, %v6739
    %v6742 = vunpack.c.l.s4 1966171168
    %v6743 = vunpack.c.0.s8 %v6742
    %v6744 = vlaneseq
    %v6745 = vshrl.u32 %v6744, 7
    %v6746 = vsub.s32 %v6743, %v6745
    %v6747 = vrot.slane %v6725, %v6746
    %v6749 = vunpack.c.l.s4 1966171168
    %v6750 = vunpack.c.0.s8 %v6749
    %v6751 = vlaneseq
    %v6752 = vshrl.u32 %v6751, 7
    %v6753 = vsub.s32 %v6750, %v6752
    %v6754 = vrot.slane %v6726, %v6753
    %v6755 = vcombine.low %v6733, %v6740
    %v6756 = vcombine.low %v6747, %v6754
    %v6758 = vunpack.c.l.s4 1966171168
    %v6759 = vunpack.c.0.s8 %v6758
    %v6760 = vlaneseq
    %v6761 = vshrl.u32 %v6760, 7
    %v6762 = vsub.s32 %v6759, %v6761
    %v6763 = vrot.slane %v6755, %v6762
    %v6765 = vunpack.c.l.s4 1966171168
    %v6766 = vunpack.c.0.s8 %v6765
    %v6767 = vlaneseq
    %v6768 = vshrl.u32 %v6767, 7
    %v6769 = vsub.s32 %v6766, %v6768
    %v6770 = vrot.slane %v6756, %v6769
    %v6771 = vcombine.low %v6763, %v6770
    %v6772 = vcombine.low %v3659, %v3673
    %v6773 = vcombine.low %v3681, %v3683
    %v6774 = vcombine.low %v3666, %v3680
    %v6775 = vcombine.low %v3682, %v3684
    %v6777 = vunpack.c.l.s4 1966171168
    %v6778 = vunpack.c.0.s8 %v6777
    %v6779 = vlaneseq
    %v6780 = vshrl.u32 %v6779, 7
    %v6781 = vsub.s32 %v6778, %v6780
    %v6782 = vrot.slane %v6772, %v6781
    %v6784 = vunpack.c.l.s4 1966171168
    %v6785 = vunpack.c.0.s8 %v6784
    %v6786 = vlaneseq
    %v6787 = vshrl.u32 %v6786, 7
    %v6788 = vsub.s32 %v6785, %v6787
    %v6789 = vrot.slane %v6773, %v6788
    %v6791 = vunpack.c.l.s4 1966171168
    %v6792 = vunpack.c.0.s8 %v6791
    %v6793 = vlaneseq
    %v6794 = vshrl.u32 %v6793, 7
    %v6795 = vsub.s32 %v6792, %v6794
    %v6796 = vrot.slane %v6774, %v6795
    %v6798 = vunpack.c.l.s4 1966171168
    %v6799 = vunpack.c.0.s8 %v6798
    %v6800 = vlaneseq
    %v6801 = vshrl.u32 %v6800, 7
    %v6802 = vsub.s32 %v6799, %v6801
    %v6803 = vrot.slane %v6775, %v6802
    %v6804 = vcombine.low %v6782, %v6789
    %v6805 = vcombine.low %v6796, %v6803
    %v6807 = vunpack.c.l.s4 1966171168
    %v6808 = vunpack.c.0.s8 %v6807
    %v6809 = vlaneseq
    %v6810 = vshrl.u32 %v6809, 7
    %v6811 = vsub.s32 %v6808, %v6810
    %v6812 = vrot.slane %v6804, %v6811
    %v6814 = vunpack.c.l.s4 1966171168
    %v6815 = vunpack.c.0.s8 %v6814
    %v6816 = vlaneseq
    %v6817 = vshrl.u32 %v6816, 7
    %v6818 = vsub.s32 %v6815, %v6817
    %v6819 = vrot.slane %v6805, %v6818
    %v6820 = vcombine.low %v6812, %v6819
    %v6821 = vcombine.low %v3708, %v3722
    %v6822 = vcombine.low %v3730, %v3732
    %v6823 = vcombine.low %v3715, %v3729
    %v6824 = vcombine.low %v3731, %v3733
    %v6826 = vunpack.c.l.s4 1966171168
    %v6827 = vunpack.c.0.s8 %v6826
    %v6828 = vlaneseq
    %v6829 = vshrl.u32 %v6828, 7
    %v6830 = vsub.s32 %v6827, %v6829
    %v6831 = vrot.slane %v6821, %v6830
    %v6833 = vunpack.c.l.s4 1966171168
    %v6834 = vunpack.c.0.s8 %v6833
    %v6835 = vlaneseq
    %v6836 = vshrl.u32 %v6835, 7
    %v6837 = vsub.s32 %v6834, %v6836
    %v6838 = vrot.slane %v6822, %v6837
    %v6840 = vunpack.c.l.s4 1966171168
    %v6841 = vunpack.c.0.s8 %v6840
    %v6842 = vlaneseq
    %v6843 = vshrl.u32 %v6842, 7
    %v6844 = vsub.s32 %v6841, %v6843
    %v6845 = vrot.slane %v6823, %v6844
    %v6847 = vunpack.c.l.s4 1966171168
    %v6848 = vunpack.c.0.s8 %v6847
    %v6849 = vlaneseq
    %v6850 = vshrl.u32 %v6849, 7
    %v6851 = vsub.s32 %v6848, %v6850
    %v6852 = vrot.slane %v6824, %v6851
    %v6853 = vcombine.low %v6831, %v6838
    %v6854 = vcombine.low %v6845, %v6852
    %v6856 = vunpack.c.l.s4 1966171168
    %v6857 = vunpack.c.0.s8 %v6856
    %v6858 = vlaneseq
    %v6859 = vshrl.u32 %v6858, 7
    %v6860 = vsub.s32 %v6857, %v6859
    %v6861 = vrot.slane %v6853, %v6860
    %v6863 = vunpack.c.l.s4 1966171168
    %v6864 = vunpack.c.0.s8 %v6863
    %v6865 = vlaneseq
    %v6866 = vshrl.u32 %v6865, 7
    %v6867 = vsub.s32 %v6864, %v6866
    %v6868 = vrot.slane %v6854, %v6867
    %v6869 = vcombine.low %v6861, %v6868
    %v6870 = vcombine.low %v3757, %v3771
    %v6871 = vcombine.low %v3779, %v3781
    %v6872 = vcombine.low %v3764, %v3778
    %v6873 = vcombine.low %v3780, %v3782
    %v6875 = vunpack.c.l.s4 1966171168
    %v6876 = vunpack.c.0.s8 %v6875
    %v6877 = vlaneseq
    %v6878 = vshrl.u32 %v6877, 7
    %v6879 = vsub.s32 %v6876, %v6878
    %v6880 = vrot.slane %v6870, %v6879
    %v6882 = vunpack.c.l.s4 1966171168
    %v6883 = vunpack.c.0.s8 %v6882
    %v6884 = vlaneseq
    %v6885 = vshrl.u32 %v6884, 7
    %v6886 = vsub.s32 %v6883, %v6885
    %v6887 = vrot.slane %v6871, %v6886
    %v6889 = vunpack.c.l.s4 1966171168
    %v6890 = vunpack.c.0.s8 %v6889
    %v6891 = vlaneseq
    %v6892 = vshrl.u32 %v6891, 7
    %v6893 = vsub.s32 %v6890, %v6892
    %v6894 = vrot.slane %v6872, %v6893
    %v6896 = vunpack.c.l.s4 1966171168
    %v6897 = vunpack.c.0.s8 %v6896
    %v6898 = vlaneseq
    %v6899 = vshrl.u32 %v6898, 7
    %v6900 = vsub.s32 %v6897, %v6899
    %v6901 = vrot.slane %v6873, %v6900
    %v6902 = vcombine.low %v6880, %v6887
    %v6903 = vcombine.low %v6894, %v6901
    %v6905 = vunpack.c.l.s4 1966171168
    %v6906 = vunpack.c.0.s8 %v6905
    %v6907 = vlaneseq
    %v6908 = vshrl.u32 %v6907, 7
    %v6909 = vsub.s32 %v6906, %v6908
    %v6910 = vrot.slane %v6902, %v6909
    %v6912 = vunpack.c.l.s4 1966171168
    %v6913 = vunpack.c.0.s8 %v6912
    %v6914 = vlaneseq
    %v6915 = vshrl.u32 %v6914, 7
    %v6916 = vsub.s32 %v6913, %v6915
    %v6917 = vrot.slane %v6903, %v6916
    %v6918 = vcombine.low %v6910, %v6917
    %v6919 = vcombine.low %v3806, %v3820
    %v6920 = vcombine.low %v3828, %v3830
    %v6921 = vcombine.low %v3813, %v3827
    %v6922 = vcombine.low %v3829, %v3831
    %v6924 = vunpack.c.l.s4 1966171168
    %v6925 = vunpack.c.0.s8 %v6924
    %v6926 = vlaneseq
    %v6927 = vshrl.u32 %v6926, 7
    %v6928 = vsub.s32 %v6925, %v6927
    %v6929 = vrot.slane %v6919, %v6928
    %v6931 = vunpack.c.l.s4 1966171168
    %v6932 = vunpack.c.0.s8 %v6931
    %v6933 = vlaneseq
    %v6934 = vshrl.u32 %v6933, 7
    %v6935 = vsub.s32 %v6932, %v6934
    %v6936 = vrot.slane %v6920, %v6935
    %v6938 = vunpack.c.l.s4 1966171168
    %v6939 = vunpack.c.0.s8 %v6938
    %v6940 = vlaneseq
    %v6941 = vshrl.u32 %v6940, 7
    %v6942 = vsub.s32 %v6939, %v6941
    %v6943 = vrot.slane %v6921, %v6942
    %v6945 = vunpack.c.l.s4 1966171168
    %v6946 = vunpack.c.0.s8 %v6945
    %v6947 = vlaneseq
    %v6948 = vshrl.u32 %v6947, 7
    %v6949 = vsub.s32 %v6946, %v6948
    %v6950 = vrot.slane %v6922, %v6949
    %v6951 = vcombine.low %v6929, %v6936
    %v6952 = vcombine.low %v6943, %v6950
    %v6954 = vunpack.c.l.s4 1966171168
    %v6955 = vunpack.c.0.s8 %v6954
    %v6956 = vlaneseq
    %v6957 = vshrl.u32 %v6956, 7
    %v6958 = vsub.s32 %v6955, %v6957
    %v6959 = vrot.slane %v6951, %v6958
    %v6961 = vunpack.c.l.s4 1966171168
    %v6962 = vunpack.c.0.s8 %v6961
    %v6963 = vlaneseq
    %v6964 = vshrl.u32 %v6963, 7
    %v6965 = vsub.s32 %v6962, %v6964
    %v6966 = vrot.slane %v6952, %v6965
    %v6967 = vcombine.low %v6959, %v6966
    %v6968 = vcombine.low %v3855, %v3869
    %v6969 = vcombine.low %v3877, %v3879
    %v6970 = vcombine.low %v3862, %v3876
    %v6971 = vcombine.low %v3878, %v3880
    %v6973 = vunpack.c.l.s4 1966171168
    %v6974 = vunpack.c.0.s8 %v6973
    %v6975 = vlaneseq
    %v6976 = vshrl.u32 %v6975, 7
    %v6977 = vsub.s32 %v6974, %v6976
    %v6978 = vrot.slane %v6968, %v6977
    %v6980 = vunpack.c.l.s4 1966171168
    %v6981 = vunpack.c.0.s8 %v6980
    %v6982 = vlaneseq
    %v6983 = vshrl.u32 %v6982, 7
    %v6984 = vsub.s32 %v6981, %v6983
    %v6985 = vrot.slane %v6969, %v6984
    %v6987 = vunpack.c.l.s4 1966171168
    %v6988 = vunpack.c.0.s8 %v6987
    %v6989 = vlaneseq
    %v6990 = vshrl.u32 %v6989, 7
    %v6991 = vsub.s32 %v6988, %v6990
    %v6992 = vrot.slane %v6970, %v6991
    %v6994 = vunpack.c.l.s4 1966171168
    %v6995 = vunpack.c.0.s8 %v6994
    %v6996 = vlaneseq
    %v6997 = vshrl.u32 %v6996, 7
    %v6998 = vsub.s32 %v6995, %v6997
    %v6999 = vrot.slane %v6971, %v6998
    %v7000 = vcombine.low %v6978, %v6985
    %v7001 = vcombine.low %v6992, %v6999
    %v7003 = vunpack.c.l.s4 1966171168
    %v7004 = vunpack.c.0.s8 %v7003
    %v7005 = vlaneseq
    %v7006 = vshrl.u32 %v7005, 7
    %v7007 = vsub.s32 %v7004, %v7006
    %v7008 = vrot.slane %v7000, %v7007
    %v7010 = vunpack.c.l.s4 1966171168
    %v7011 = vunpack.c.0.s8 %v7010
    %v7012 = vlaneseq
    %v7013 = vshrl.u32 %v7012, 7
    %v7014 = vsub.s32 %v7011, %v7013
    %v7015 = vrot.slane %v7001, %v7014
    %v7016 = vcombine.low %v7008, %v7015
    %v7017 = vcombine.low %v3904, %v3918
    %v7018 = vcombine.low %v3926, %v3928
    %v7019 = vcombine.low %v3911, %v3925
    %v7020 = vcombine.low %v3927, %v3929
    %v7022 = vunpack.c.l.s4 1966171168
    %v7023 = vunpack.c.0.s8 %v7022
    %v7024 = vlaneseq
    %v7025 = vshrl.u32 %v7024, 7
    %v7026 = vsub.s32 %v7023, %v7025
    %v7027 = vrot.slane %v7017, %v7026
    %v7029 = vunpack.c.l.s4 1966171168
    %v7030 = vunpack.c.0.s8 %v7029
    %v7031 = vlaneseq
    %v7032 = vshrl.u32 %v7031, 7
    %v7033 = vsub.s32 %v7030, %v7032
    %v7034 = vrot.slane %v7018, %v7033
    %v7036 = vunpack.c.l.s4 1966171168
    %v7037 = vunpack.c.0.s8 %v7036
    %v7038 = vlaneseq
    %v7039 = vshrl.u32 %v7038, 7
    %v7040 = vsub.s32 %v7037, %v7039
    %v7041 = vrot.slane %v7019, %v7040
    %v7043 = vunpack.c.l.s4 1966171168
    %v7044 = vunpack.c.0.s8 %v7043
    %v7045 = vlaneseq
    %v7046 = vshrl.u32 %v7045, 7
    %v7047 = vsub.s32 %v7044, %v7046
    %v7048 = vrot.slane %v7020, %v7047
    %v7049 = vcombine.low %v7027, %v7034
    %v7050 = vcombine.low %v7041, %v7048
    %v7052 = vunpack.c.l.s4 1966171168
    %v7053 = vunpack.c.0.s8 %v7052
    %v7054 = vlaneseq
    %v7055 = vshrl.u32 %v7054, 7
    %v7056 = vsub.s32 %v7053, %v7055
    %v7057 = vrot.slane %v7049, %v7056
    %v7059 = vunpack.c.l.s4 1966171168
    %v7060 = vunpack.c.0.s8 %v7059
    %v7061 = vlaneseq
    %v7062 = vshrl.u32 %v7061, 7
    %v7063 = vsub.s32 %v7060, %v7062
    %v7064 = vrot.slane %v7050, %v7063
    %v7065 = vcombine.low %v7057, %v7064
    %v7066 = vcombine.low %v3953, %v3967
    %v7067 = vcombine.low %v3975, %v3977
    %v7068 = vcombine.low %v3960, %v3974
    %v7069 = vcombine.low %v3976, %v3978
    %v7071 = vunpack.c.l.s4 1966171168
    %v7072 = vunpack.c.0.s8 %v7071
    %v7073 = vlaneseq
    %v7074 = vshrl.u32 %v7073, 7
    %v7075 = vsub.s32 %v7072, %v7074
    %v7076 = vrot.slane %v7066, %v7075
    %v7078 = vunpack.c.l.s4 1966171168
    %v7079 = vunpack.c.0.s8 %v7078
    %v7080 = vlaneseq
    %v7081 = vshrl.u32 %v7080, 7
    %v7082 = vsub.s32 %v7079, %v7081
    %v7083 = vrot.slane %v7067, %v7082
    %v7085 = vunpack.c.l.s4 1966171168
    %v7086 = vunpack.c.0.s8 %v7085
    %v7087 = vlaneseq
    %v7088 = vshrl.u32 %v7087, 7
    %v7089 = vsub.s32 %v7086, %v7088
    %v7090 = vrot.slane %v7068, %v7089
    %v7092 = vunpack.c.l.s4 1966171168
    %v7093 = vunpack.c.0.s8 %v7092
    %v7094 = vlaneseq
    %v7095 = vshrl.u32 %v7094, 7
    %v7096 = vsub.s32 %v7093, %v7095
    %v7097 = vrot.slane %v7069, %v7096
    %v7098 = vcombine.low %v7076, %v7083
    %v7099 = vcombine.low %v7090, %v7097
    %v7101 = vunpack.c.l.s4 1966171168
    %v7102 = vunpack.c.0.s8 %v7101
    %v7103 = vlaneseq
    %v7104 = vshrl.u32 %v7103, 7
    %v7105 = vsub.s32 %v7102, %v7104
    %v7106 = vrot.slane %v7098, %v7105
    %v7108 = vunpack.c.l.s4 1966171168
    %v7109 = vunpack.c.0.s8 %v7108
    %v7110 = vlaneseq
    %v7111 = vshrl.u32 %v7110, 7
    %v7112 = vsub.s32 %v7109, %v7111
    %v7113 = vrot.slane %v7099, %v7112
    %v7114 = vcombine.low %v7106, %v7113
    %v7115 = vcombine.low %v4002, %v4016
    %v7116 = vcombine.low %v4024, %v4026
    %v7117 = vcombine.low %v4009, %v4023
    %v7118 = vcombine.low %v4025, %v4027
    %v7120 = vunpack.c.l.s4 1966171168
    %v7121 = vunpack.c.0.s8 %v7120
    %v7122 = vlaneseq
    %v7123 = vshrl.u32 %v7122, 7
    %v7124 = vsub.s32 %v7121, %v7123
    %v7125 = vrot.slane %v7115, %v7124
    %v7127 = vunpack.c.l.s4 1966171168
    %v7128 = vunpack.c.0.s8 %v7127
    %v7129 = vlaneseq
    %v7130 = vshrl.u32 %v7129, 7
    %v7131 = vsub.s32 %v7128, %v7130
    %v7132 = vrot.slane %v7116, %v7131
    %v7134 = vunpack.c.l.s4 1966171168
    %v7135 = vunpack.c.0.s8 %v7134
    %v7136 = vlaneseq
    %v7137 = vshrl.u32 %v7136, 7
    %v7138 = vsub.s32 %v7135, %v7137
    %v7139 = vrot.slane %v7117, %v7138
    %v7141 = vunpack.c.l.s4 1966171168
    %v7142 = vunpack.c.0.s8 %v7141
    %v7143 = vlaneseq
    %v7144 = vshrl.u32 %v7143, 7
    %v7145 = vsub.s32 %v7142, %v7144
    %v7146 = vrot.slane %v7118, %v7145
    %v7147 = vcombine.low %v7125, %v7132
    %v7148 = vcombine.low %v7139, %v7146
    %v7150 = vunpack.c.l.s4 1966171168
    %v7151 = vunpack.c.0.s8 %v7150
    %v7152 = vlaneseq
    %v7153 = vshrl.u32 %v7152, 7
    %v7154 = vsub.s32 %v7151, %v7153
    %v7155 = vrot.slane %v7147, %v7154
    %v7157 = vunpack.c.l.s4 1966171168
    %v7158 = vunpack.c.0.s8 %v7157
    %v7159 = vlaneseq
    %v7160 = vshrl.u32 %v7159, 7
    %v7161 = vsub.s32 %v7158, %v7160
    %v7162 = vrot.slane %v7148, %v7161
    %v7163 = vcombine.low %v7155, %v7162
    %v7164 = vcombine.low %v4051, %v4065
    %v7165 = vcombine.low %v4073, %v4075
    %v7166 = vcombine.low %v4058, %v4072
    %v7167 = vcombine.low %v4074, %v4076
    %v7169 = vunpack.c.l.s4 1966171168
    %v7170 = vunpack.c.0.s8 %v7169
    %v7171 = vlaneseq
    %v7172 = vshrl.u32 %v7171, 7
    %v7173 = vsub.s32 %v7170, %v7172
    %v7174 = vrot.slane %v7164, %v7173
    %v7176 = vunpack.c.l.s4 1966171168
    %v7177 = vunpack.c.0.s8 %v7176
    %v7178 = vlaneseq
    %v7179 = vshrl.u32 %v7178, 7
    %v7180 = vsub.s32 %v7177, %v7179
    %v7181 = vrot.slane %v7165, %v7180
    %v7183 = vunpack.c.l.s4 1966171168
    %v7184 = vunpack.c.0.s8 %v7183
    %v7185 = vlaneseq
    %v7186 = vshrl.u32 %v7185, 7
    %v7187 = vsub.s32 %v7184, %v7186
    %v7188 = vrot.slane %v7166, %v7187
    %v7190 = vunpack.c.l.s4 1966171168
    %v7191 = vunpack.c.0.s8 %v7190
    %v7192 = vlaneseq
    %v7193 = vshrl.u32 %v7192, 7
    %v7194 = vsub.s32 %v7191, %v7193
    %v7195 = vrot.slane %v7167, %v7194
    %v7196 = vcombine.low %v7174, %v7181
    %v7197 = vcombine.low %v7188, %v7195
    %v7199 = vunpack.c.l.s4 1966171168
    %v7200 = vunpack.c.0.s8 %v7199
    %v7201 = vlaneseq
    %v7202 = vshrl.u32 %v7201, 7
    %v7203 = vsub.s32 %v7200, %v7202
    %v7204 = vrot.slane %v7196, %v7203
    %v7206 = vunpack.c.l.s4 1966171168
    %v7207 = vunpack.c.0.s8 %v7206
    %v7208 = vlaneseq
    %v7209 = vshrl.u32 %v7208, 7
    %v7210 = vsub.s32 %v7207, %v7209
    %v7211 = vrot.slane %v7197, %v7210
    %v7212 = vcombine.low %v7204, %v7211
    %v7213 = vcombine.low %v4100, %v4114
    %v7214 = vcombine.low %v4122, %v4124
    %v7215 = vcombine.low %v4107, %v4121
    %v7216 = vcombine.low %v4123, %v4125
    %v7218 = vunpack.c.l.s4 1966171168
    %v7219 = vunpack.c.0.s8 %v7218
    %v7220 = vlaneseq
    %v7221 = vshrl.u32 %v7220, 7
    %v7222 = vsub.s32 %v7219, %v7221
    %v7223 = vrot.slane %v7213, %v7222
    %v7225 = vunpack.c.l.s4 1966171168
    %v7226 = vunpack.c.0.s8 %v7225
    %v7227 = vlaneseq
    %v7228 = vshrl.u32 %v7227, 7
    %v7229 = vsub.s32 %v7226, %v7228
    %v7230 = vrot.slane %v7214, %v7229
    %v7232 = vunpack.c.l.s4 1966171168
    %v7233 = vunpack.c.0.s8 %v7232
    %v7234 = vlaneseq
    %v7235 = vshrl.u32 %v7234, 7
    %v7236 = vsub.s32 %v7233, %v7235
    %v7237 = vrot.slane %v7215, %v7236
    %v7239 = vunpack.c.l.s4 1966171168
    %v7240 = vunpack.c.0.s8 %v7239
    %v7241 = vlaneseq
    %v7242 = vshrl.u32 %v7241, 7
    %v7243 = vsub.s32 %v7240, %v7242
    %v7244 = vrot.slane %v7216, %v7243
    %v7245 = vcombine.low %v7223, %v7230
    %v7246 = vcombine.low %v7237, %v7244
    %v7248 = vunpack.c.l.s4 1966171168
    %v7249 = vunpack.c.0.s8 %v7248
    %v7250 = vlaneseq
    %v7251 = vshrl.u32 %v7250, 7
    %v7252 = vsub.s32 %v7249, %v7251
    %v7253 = vrot.slane %v7245, %v7252
    %v7255 = vunpack.c.l.s4 1966171168
    %v7256 = vunpack.c.0.s8 %v7255
    %v7257 = vlaneseq
    %v7258 = vshrl.u32 %v7257, 7
    %v7259 = vsub.s32 %v7256, %v7258
    %v7260 = vrot.slane %v7246, %v7259
    %v7261 = vcombine.low %v7253, %v7260
    %v7262 = vcombine.low %v4149, %v4163
    %v7263 = vcombine.low %v4171, %v4173
    %v7264 = vcombine.low %v4156, %v4170
    %v7265 = vcombine.low %v4172, %v4174
    %v7267 = vunpack.c.l.s4 1966171168
    %v7268 = vunpack.c.0.s8 %v7267
    %v7269 = vlaneseq
    %v7270 = vshrl.u32 %v7269, 7
    %v7271 = vsub.s32 %v7268, %v7270
    %v7272 = vrot.slane %v7262, %v7271
    %v7274 = vunpack.c.l.s4 1966171168
    %v7275 = vunpack.c.0.s8 %v7274
    %v7276 = vlaneseq
    %v7277 = vshrl.u32 %v7276, 7
    %v7278 = vsub.s32 %v7275, %v7277
    %v7279 = vrot.slane %v7263, %v7278
    %v7281 = vunpack.c.l.s4 1966171168
    %v7282 = vunpack.c.0.s8 %v7281
    %v7283 = vlaneseq
    %v7284 = vshrl.u32 %v7283, 7
    %v7285 = vsub.s32 %v7282, %v7284
    %v7286 = vrot.slane %v7264, %v7285
    %v7288 = vunpack.c.l.s4 1966171168
    %v7289 = vunpack.c.0.s8 %v7288
    %v7290 = vlaneseq
    %v7291 = vshrl.u32 %v7290, 7
    %v7292 = vsub.s32 %v7289, %v7291
    %v7293 = vrot.slane %v7265, %v7292
    %v7294 = vcombine.low %v7272, %v7279
    %v7295 = vcombine.low %v7286, %v7293
    %v7297 = vunpack.c.l.s4 1966171168
    %v7298 = vunpack.c.0.s8 %v7297
    %v7299 = vlaneseq
    %v7300 = vshrl.u32 %v7299, 7
    %v7301 = vsub.s32 %v7298, %v7300
    %v7302 = vrot.slane %v7294, %v7301
    %v7304 = vunpack.c.l.s4 1966171168
    %v7305 = vunpack.c.0.s8 %v7304
    %v7306 = vlaneseq
    %v7307 = vshrl.u32 %v7306, 7
    %v7308 = vsub.s32 %v7305, %v7307
    %v7309 = vrot.slane %v7295, %v7308
    %v7310 = vcombine.low %v7302, %v7309
    %v7311 = vcombine.low %v4198, %v4212
    %v7312 = vcombine.low %v4220, %v4222
    %v7313 = vcombine.low %v4205, %v4219
    %v7314 = vcombine.low %v4221, %v4223
    %v7316 = vunpack.c.l.s4 1966171168
    %v7317 = vunpack.c.0.s8 %v7316
    %v7318 = vlaneseq
    %v7319 = vshrl.u32 %v7318, 7
    %v7320 = vsub.s32 %v7317, %v7319
    %v7321 = vrot.slane %v7311, %v7320
    %v7323 = vunpack.c.l.s4 1966171168
    %v7324 = vunpack.c.0.s8 %v7323
    %v7325 = vlaneseq
    %v7326 = vshrl.u32 %v7325, 7
    %v7327 = vsub.s32 %v7324, %v7326
    %v7328 = vrot.slane %v7312, %v7327
    %v7330 = vunpack.c.l.s4 1966171168
    %v7331 = vunpack.c.0.s8 %v7330
    %v7332 = vlaneseq
    %v7333 = vshrl.u32 %v7332, 7
    %v7334 = vsub.s32 %v7331, %v7333
    %v7335 = vrot.slane %v7313, %v7334
    %v7337 = vunpack.c.l.s4 1966171168
    %v7338 = vunpack.c.0.s8 %v7337
    %v7339 = vlaneseq
    %v7340 = vshrl.u32 %v7339, 7
    %v7341 = vsub.s32 %v7338, %v7340
    %v7342 = vrot.slane %v7314, %v7341
    %v7343 = vcombine.low %v7321, %v7328
    %v7344 = vcombine.low %v7335, %v7342
    %v7346 = vunpack.c.l.s4 1966171168
    %v7347 = vunpack.c.0.s8 %v7346
    %v7348 = vlaneseq
    %v7349 = vshrl.u32 %v7348, 7
    %v7350 = vsub.s32 %v7347, %v7349
    %v7351 = vrot.slane %v7343, %v7350
    %v7353 = vunpack.c.l.s4 1966171168
    %v7354 = vunpack.c.0.s8 %v7353
    %v7355 = vlaneseq
    %v7356 = vshrl.u32 %v7355, 7
    %v7357 = vsub.s32 %v7354, %v7356
    %v7358 = vrot.slane %v7344, %v7357
    %v7359 = vcombine.low %v7351, %v7358
    %v7360 = vcombine.low %v4247, %v4261
    %v7361 = vcombine.low %v4269, %v4271
    %v7362 = vcombine.low %v4254, %v4268
    %v7363 = vcombine.low %v4270, %v4272
    %v7365 = vunpack.c.l.s4 1966171168
    %v7366 = vunpack.c.0.s8 %v7365
    %v7367 = vlaneseq
    %v7368 = vshrl.u32 %v7367, 7
    %v7369 = vsub.s32 %v7366, %v7368
    %v7370 = vrot.slane %v7360, %v7369
    %v7372 = vunpack.c.l.s4 1966171168
    %v7373 = vunpack.c.0.s8 %v7372
    %v7374 = vlaneseq
    %v7375 = vshrl.u32 %v7374, 7
    %v7376 = vsub.s32 %v7373, %v7375
    %v7377 = vrot.slane %v7361, %v7376
    %v7379 = vunpack.c.l.s4 1966171168
    %v7380 = vunpack.c.0.s8 %v7379
    %v7381 = vlaneseq
    %v7382 = vshrl.u32 %v7381, 7
    %v7383 = vsub.s32 %v7380, %v7382
    %v7384 = vrot.slane %v7362, %v7383
    %v7386 = vunpack.c.l.s4 1966171168
    %v7387 = vunpack.c.0.s8 %v7386
    %v7388 = vlaneseq
    %v7389 = vshrl.u32 %v7388, 7
    %v7390 = vsub.s32 %v7387, %v7389
    %v7391 = vrot.slane %v7363, %v7390
    %v7392 = vcombine.low %v7370, %v7377
    %v7393 = vcombine.low %v7384, %v7391
    %v7395 = vunpack.c.l.s4 1966171168
    %v7396 = vunpack.c.0.s8 %v7395
    %v7397 = vlaneseq
    %v7398 = vshrl.u32 %v7397, 7
    %v7399 = vsub.s32 %v7396, %v7398
    %v7400 = vrot.slane %v7392, %v7399
    %v7402 = vunpack.c.l.s4 1966171168
    %v7403 = vunpack.c.0.s8 %v7402
    %v7404 = vlaneseq
    %v7405 = vshrl.u32 %v7404, 7
    %v7406 = vsub.s32 %v7403, %v7405
    %v7407 = vrot.slane %v7393, %v7406
    %v7408 = vcombine.low %v7400, %v7407
    %v7409 = vcombine.low %v4296, %v4310
    %v7410 = vcombine.low %v4318, %v4320
    %v7411 = vcombine.low %v4303, %v4317
    %v7412 = vcombine.low %v4319, %v4321
    %v7414 = vunpack.c.l.s4 1966171168
    %v7415 = vunpack.c.0.s8 %v7414
    %v7416 = vlaneseq
    %v7417 = vshrl.u32 %v7416, 7
    %v7418 = vsub.s32 %v7415, %v7417
    %v7419 = vrot.slane %v7409, %v7418
    %v7421 = vunpack.c.l.s4 1966171168
    %v7422 = vunpack.c.0.s8 %v7421
    %v7423 = vlaneseq
    %v7424 = vshrl.u32 %v7423, 7
    %v7425 = vsub.s32 %v7422, %v7424
    %v7426 = vrot.slane %v7410, %v7425
    %v7428 = vunpack.c.l.s4 1966171168
    %v7429 = vunpack.c.0.s8 %v7428
    %v7430 = vlaneseq
    %v7431 = vshrl.u32 %v7430, 7
    %v7432 = vsub.s32 %v7429, %v7431
    %v7433 = vrot.slane %v7411, %v7432
    %v7435 = vunpack.c.l.s4 1966171168
    %v7436 = vunpack.c.0.s8 %v7435
    %v7437 = vlaneseq
    %v7438 = vshrl.u32 %v7437, 7
    %v7439 = vsub.s32 %v7436, %v7438
    %v7440 = vrot.slane %v7412, %v7439
    %v7441 = vcombine.low %v7419, %v7426
    %v7442 = vcombine.low %v7433, %v7440
    %v7444 = vunpack.c.l.s4 1966171168
    %v7445 = vunpack.c.0.s8 %v7444
    %v7446 = vlaneseq
    %v7447 = vshrl.u32 %v7446, 7
    %v7448 = vsub.s32 %v7445, %v7447
    %v7449 = vrot.slane %v7441, %v7448
    %v7451 = vunpack.c.l.s4 1966171168
    %v7452 = vunpack.c.0.s8 %v7451
    %v7453 = vlaneseq
    %v7454 = vshrl.u32 %v7453, 7
    %v7455 = vsub.s32 %v7452, %v7454
    %v7456 = vrot.slane %v7442, %v7455
    %v7457 = vcombine.low %v7449, %v7456
    %v7458 = vcombine.low %v4345, %v4359
    %v7459 = vcombine.low %v4367, %v4369
    %v7460 = vcombine.low %v4352, %v4366
    %v7461 = vcombine.low %v4368, %v4370
    %v7463 = vunpack.c.l.s4 1966171168
    %v7464 = vunpack.c.0.s8 %v7463
    %v7465 = vlaneseq
    %v7466 = vshrl.u32 %v7465, 7
    %v7467 = vsub.s32 %v7464, %v7466
    %v7468 = vrot.slane %v7458, %v7467
    %v7470 = vunpack.c.l.s4 1966171168
    %v7471 = vunpack.c.0.s8 %v7470
    %v7472 = vlaneseq
    %v7473 = vshrl.u32 %v7472, 7
    %v7474 = vsub.s32 %v7471, %v7473
    %v7475 = vrot.slane %v7459, %v7474
    %v7477 = vunpack.c.l.s4 1966171168
    %v7478 = vunpack.c.0.s8 %v7477
    %v7479 = vlaneseq
    %v7480 = vshrl.u32 %v7479, 7
    %v7481 = vsub.s32 %v7478, %v7480
    %v7482 = vrot.slane %v7460, %v7481
    %v7484 = vunpack.c.l.s4 1966171168
    %v7485 = vunpack.c.0.s8 %v7484
    %v7486 = vlaneseq
    %v7487 = vshrl.u32 %v7486, 7
    %v7488 = vsub.s32 %v7485, %v7487
    %v7489 = vrot.slane %v7461, %v7488
    %v7490 = vcombine.low %v7468, %v7475
    %v7491 = vcombine.low %v7482, %v7489
    %v7493 = vunpack.c.l.s4 1966171168
    %v7494 = vunpack.c.0.s8 %v7493
    %v7495 = vlaneseq
    %v7496 = vshrl.u32 %v7495, 7
    %v7497 = vsub.s32 %v7494, %v7496
    %v7498 = vrot.slane %v7490, %v7497
    %v7500 = vunpack.c.l.s4 1966171168
    %v7501 = vunpack.c.0.s8 %v7500
    %v7502 = vlaneseq
    %v7503 = vshrl.u32 %v7502, 7
    %v7504 = vsub.s32 %v7501, %v7503
    %v7505 = vrot.slane %v7491, %v7504
    %v7506 = vcombine.low %v7498, %v7505
    %v7507 = vcombine.low %v4394, %v4408
    %v7508 = vcombine.low %v4416, %v4418
    %v7509 = vcombine.low %v4401, %v4415
    %v7510 = vcombine.low %v4417, %v4419
    %v7512 = vunpack.c.l.s4 1966171168
    %v7513 = vunpack.c.0.s8 %v7512
    %v7514 = vlaneseq
    %v7515 = vshrl.u32 %v7514, 7
    %v7516 = vsub.s32 %v7513, %v7515
    %v7517 = vrot.slane %v7507, %v7516
    %v7519 = vunpack.c.l.s4 1966171168
    %v7520 = vunpack.c.0.s8 %v7519
    %v7521 = vlaneseq
    %v7522 = vshrl.u32 %v7521, 7
    %v7523 = vsub.s32 %v7520, %v7522
    %v7524 = vrot.slane %v7508, %v7523
    %v7526 = vunpack.c.l.s4 1966171168
    %v7527 = vunpack.c.0.s8 %v7526
    %v7528 = vlaneseq
    %v7529 = vshrl.u32 %v7528, 7
    %v7530 = vsub.s32 %v7527, %v7529
    %v7531 = vrot.slane %v7509, %v7530
    %v7533 = vunpack.c.l.s4 1966171168
    %v7534 = vunpack.c.0.s8 %v7533
    %v7535 = vlaneseq
    %v7536 = vshrl.u32 %v7535, 7
    %v7537 = vsub.s32 %v7534, %v7536
    %v7538 = vrot.slane %v7510, %v7537
    %v7539 = vcombine.low %v7517, %v7524
    %v7540 = vcombine.low %v7531, %v7538
    %v7542 = vunpack.c.l.s4 1966171168
    %v7543 = vunpack.c.0.s8 %v7542
    %v7544 = vlaneseq
    %v7545 = vshrl.u32 %v7544, 7
    %v7546 = vsub.s32 %v7543, %v7545
    %v7547 = vrot.slane %v7539, %v7546
    %v7549 = vunpack.c.l.s4 1966171168
    %v7550 = vunpack.c.0.s8 %v7549
    %v7551 = vlaneseq
    %v7552 = vshrl.u32 %v7551, 7
    %v7553 = vsub.s32 %v7550, %v7552
    %v7554 = vrot.slane %v7540, %v7553
    %v7555 = vcombine.low %v7547, %v7554
    %v7556 = vcombine.low %v4443, %v4457
    %v7557 = vcombine.low %v4465, %v4467
    %v7558 = vcombine.low %v4450, %v4464
    %v7559 = vcombine.low %v4466, %v4468
    %v7561 = vunpack.c.l.s4 1966171168
    %v7562 = vunpack.c.0.s8 %v7561
    %v7563 = vlaneseq
    %v7564 = vshrl.u32 %v7563, 7
    %v7565 = vsub.s32 %v7562, %v7564
    %v7566 = vrot.slane %v7556, %v7565
    %v7568 = vunpack.c.l.s4 1966171168
    %v7569 = vunpack.c.0.s8 %v7568
    %v7570 = vlaneseq
    %v7571 = vshrl.u32 %v7570, 7
    %v7572 = vsub.s32 %v7569, %v7571
    %v7573 = vrot.slane %v7557, %v7572
    %v7575 = vunpack.c.l.s4 1966171168
    %v7576 = vunpack.c.0.s8 %v7575
    %v7577 = vlaneseq
    %v7578 = vshrl.u32 %v7577, 7
    %v7579 = vsub.s32 %v7576, %v7578
    %v7580 = vrot.slane %v7558, %v7579
    %v7582 = vunpack.c.l.s4 1966171168
    %v7583 = vunpack.c.0.s8 %v7582
    %v7584 = vlaneseq
    %v7585 = vshrl.u32 %v7584, 7
    %v7586 = vsub.s32 %v7583, %v7585
    %v7587 = vrot.slane %v7559, %v7586
    %v7588 = vcombine.low %v7566, %v7573
    %v7589 = vcombine.low %v7580, %v7587
    %v7591 = vunpack.c.l.s4 1966171168
    %v7592 = vunpack.c.0.s8 %v7591
    %v7593 = vlaneseq
    %v7594 = vshrl.u32 %v7593, 7
    %v7595 = vsub.s32 %v7592, %v7594
    %v7596 = vrot.slane %v7588, %v7595
    %v7598 = vunpack.c.l.s4 1966171168
    %v7599 = vunpack.c.0.s8 %v7598
    %v7600 = vlaneseq
    %v7601 = vshrl.u32 %v7600, 7
    %v7602 = vsub.s32 %v7599, %v7601
    %v7603 = vrot.slane %v7589, %v7602
    %v7604 = vcombine.low %v7596, %v7603
    %v7605 = vcombine.low %v4492, %v4506
    %v7606 = vcombine.low %v4514, %v4516
    %v7607 = vcombine.low %v4499, %v4513
    %v7608 = vcombine.low %v4515, %v4517
    %v7610 = vunpack.c.l.s4 1966171168
    %v7611 = vunpack.c.0.s8 %v7610
    %v7612 = vlaneseq
    %v7613 = vshrl.u32 %v7612, 7
    %v7614 = vsub.s32 %v7611, %v7613
    %v7615 = vrot.slane %v7605, %v7614
    %v7617 = vunpack.c.l.s4 1966171168
    %v7618 = vunpack.c.0.s8 %v7617
    %v7619 = vlaneseq
    %v7620 = vshrl.u32 %v7619, 7
    %v7621 = vsub.s32 %v7618, %v7620
    %v7622 = vrot.slane %v7606, %v7621
    %v7624 = vunpack.c.l.s4 1966171168
    %v7625 = vunpack.c.0.s8 %v7624
    %v7626 = vlaneseq
    %v7627 = vshrl.u32 %v7626, 7
    %v7628 = vsub.s32 %v7625, %v7627
    %v7629 = vrot.slane %v7607, %v7628
    %v7631 = vunpack.c.l.s4 1966171168
    %v7632 = vunpack.c.0.s8 %v7631
    %v7633 = vlaneseq
    %v7634 = vshrl.u32 %v7633, 7
    %v7635 = vsub.s32 %v7632, %v7634
    %v7636 = vrot.slane %v7608, %v7635
    %v7637 = vcombine.low %v7615, %v7622
    %v7638 = vcombine.low %v7629, %v7636
    %v7640 = vunpack.c.l.s4 1966171168
    %v7641 = vunpack.c.0.s8 %v7640
    %v7642 = vlaneseq
    %v7643 = vshrl.u32 %v7642, 7
    %v7644 = vsub.s32 %v7641, %v7643
    %v7645 = vrot.slane %v7637, %v7644
    %v7647 = vunpack.c.l.s4 1966171168
    %v7648 = vunpack.c.0.s8 %v7647
    %v7649 = vlaneseq
    %v7650 = vshrl.u32 %v7649, 7
    %v7651 = vsub.s32 %v7648, %v7650
    %v7652 = vrot.slane %v7638, %v7651
    %v7653 = vcombine.low %v7645, %v7652
    %v7654 = vcombine.low %v4541, %v4555
    %v7655 = vcombine.low %v4563, %v4565
    %v7656 = vcombine.low %v4548, %v4562
    %v7657 = vcombine.low %v4564, %v4566
    %v7659 = vunpack.c.l.s4 1966171168
    %v7660 = vunpack.c.0.s8 %v7659
    %v7661 = vlaneseq
    %v7662 = vshrl.u32 %v7661, 7
    %v7663 = vsub.s32 %v7660, %v7662
    %v7664 = vrot.slane %v7654, %v7663
    %v7666 = vunpack.c.l.s4 1966171168
    %v7667 = vunpack.c.0.s8 %v7666
    %v7668 = vlaneseq
    %v7669 = vshrl.u32 %v7668, 7
    %v7670 = vsub.s32 %v7667, %v7669
    %v7671 = vrot.slane %v7655, %v7670
    %v7673 = vunpack.c.l.s4 1966171168
    %v7674 = vunpack.c.0.s8 %v7673
    %v7675 = vlaneseq
    %v7676 = vshrl.u32 %v7675, 7
    %v7677 = vsub.s32 %v7674, %v7676
    %v7678 = vrot.slane %v7656, %v7677
    %v7680 = vunpack.c.l.s4 1966171168
    %v7681 = vunpack.c.0.s8 %v7680
    %v7682 = vlaneseq
    %v7683 = vshrl.u32 %v7682, 7
    %v7684 = vsub.s32 %v7681, %v7683
    %v7685 = vrot.slane %v7657, %v7684
    %v7686 = vcombine.low %v7664, %v7671
    %v7687 = vcombine.low %v7678, %v7685
    %v7689 = vunpack.c.l.s4 1966171168
    %v7690 = vunpack.c.0.s8 %v7689
    %v7691 = vlaneseq
    %v7692 = vshrl.u32 %v7691, 7
    %v7693 = vsub.s32 %v7690, %v7692
    %v7694 = vrot.slane %v7686, %v7693
    %v7696 = vunpack.c.l.s4 1966171168
    %v7697 = vunpack.c.0.s8 %v7696
    %v7698 = vlaneseq
    %v7699 = vshrl.u32 %v7698, 7
    %v7700 = vsub.s32 %v7697, %v7699
    %v7701 = vrot.slane %v7687, %v7700
    %v7702 = vcombine.low %v7694, %v7701
    %v7703 = vcombine.low %v4590, %v4604
    %v7704 = vcombine.low %v4612, %v4614
    %v7705 = vcombine.low %v4597, %v4611
    %v7706 = vcombine.low %v4613, %v4615
    %v7708 = vunpack.c.l.s4 1966171168
    %v7709 = vunpack.c.0.s8 %v7708
    %v7710 = vlaneseq
    %v7711 = vshrl.u32 %v7710, 7
    %v7712 = vsub.s32 %v7709, %v7711
    %v7713 = vrot.slane %v7703, %v7712
    %v7715 = vunpack.c.l.s4 1966171168
    %v7716 = vunpack.c.0.s8 %v7715
    %v7717 = vlaneseq
    %v7718 = vshrl.u32 %v7717, 7
    %v7719 = vsub.s32 %v7716, %v7718
    %v7720 = vrot.slane %v7704, %v7719
    %v7722 = vunpack.c.l.s4 1966171168
    %v7723 = vunpack.c.0.s8 %v7722
    %v7724 = vlaneseq
    %v7725 = vshrl.u32 %v7724, 7
    %v7726 = vsub.s32 %v7723, %v7725
    %v7727 = vrot.slane %v7705, %v7726
    %v7729 = vunpack.c.l.s4 1966171168
    %v7730 = vunpack.c.0.s8 %v7729
    %v7731 = vlaneseq
    %v7732 = vshrl.u32 %v7731, 7
    %v7733 = vsub.s32 %v7730, %v7732
    %v7734 = vrot.slane %v7706, %v7733
    %v7735 = vcombine.low %v7713, %v7720
    %v7736 = vcombine.low %v7727, %v7734
    %v7738 = vunpack.c.l.s4 1966171168
    %v7739 = vunpack.c.0.s8 %v7738
    %v7740 = vlaneseq
    %v7741 = vshrl.u32 %v7740, 7
    %v7742 = vsub.s32 %v7739, %v7741
    %v7743 = vrot.slane %v7735, %v7742
    %v7745 = vunpack.c.l.s4 1966171168
    %v7746 = vunpack.c.0.s8 %v7745
    %v7747 = vlaneseq
    %v7748 = vshrl.u32 %v7747, 7
    %v7749 = vsub.s32 %v7746, %v7748
    %v7750 = vrot.slane %v7736, %v7749
    %v7751 = vcombine.low %v7743, %v7750
    %v7752 = vcombine.low %v4639, %v4653
    %v7753 = vcombine.low %v4661, %v4663
    %v7754 = vcombine.low %v4646, %v4660
    %v7755 = vcombine.low %v4662, %v4664
    %v7757 = vunpack.c.l.s4 1966171168
    %v7758 = vunpack.c.0.s8 %v7757
    %v7759 = vlaneseq
    %v7760 = vshrl.u32 %v7759, 7
    %v7761 = vsub.s32 %v7758, %v7760
    %v7762 = vrot.slane %v7752, %v7761
    %v7764 = vunpack.c.l.s4 1966171168
    %v7765 = vunpack.c.0.s8 %v7764
    %v7766 = vlaneseq
    %v7767 = vshrl.u32 %v7766, 7
    %v7768 = vsub.s32 %v7765, %v7767
    %v7769 = vrot.slane %v7753, %v7768
    %v7771 = vunpack.c.l.s4 1966171168
    %v7772 = vunpack.c.0.s8 %v7771
    %v7773 = vlaneseq
    %v7774 = vshrl.u32 %v7773, 7
    %v7775 = vsub.s32 %v7772, %v7774
    %v7776 = vrot.slane %v7754, %v7775
    %v7778 = vunpack.c.l.s4 1966171168
    %v7779 = vunpack.c.0.s8 %v7778
    %v7780 = vlaneseq
    %v7781 = vshrl.u32 %v7780, 7
    %v7782 = vsub.s32 %v7779, %v7781
    %v7783 = vrot.slane %v7755, %v7782
    %v7784 = vcombine.low %v7762, %v7769
    %v7785 = vcombine.low %v7776, %v7783
    %v7787 = vunpack.c.l.s4 1966171168
    %v7788 = vunpack.c.0.s8 %v7787
    %v7789 = vlaneseq
    %v7790 = vshrl.u32 %v7789, 7
    %v7791 = vsub.s32 %v7788, %v7790
    %v7792 = vrot.slane %v7784, %v7791
    %v7794 = vunpack.c.l.s4 1966171168
    %v7795 = vunpack.c.0.s8 %v7794
    %v7796 = vlaneseq
    %v7797 = vshrl.u32 %v7796, 7
    %v7798 = vsub.s32 %v7795, %v7797
    %v7799 = vrot.slane %v7785, %v7798
    %v7800 = vcombine.low %v7792, %v7799
    %v7801 = vcombine.low %v4688, %v4702
    %v7802 = vcombine.low %v4710, %v4712
    %v7803 = vcombine.low %v4695, %v4709
    %v7804 = vcombine.low %v4711, %v4713
    %v7806 = vunpack.c.l.s4 1966171168
    %v7807 = vunpack.c.0.s8 %v7806
    %v7808 = vlaneseq
    %v7809 = vshrl.u32 %v7808, 7
    %v7810 = vsub.s32 %v7807, %v7809
    %v7811 = vrot.slane %v7801, %v7810
    %v7813 = vunpack.c.l.s4 1966171168
    %v7814 = vunpack.c.0.s8 %v7813
    %v7815 = vlaneseq
    %v7816 = vshrl.u32 %v7815, 7
    %v7817 = vsub.s32 %v7814, %v7816
    %v7818 = vrot.slane %v7802, %v7817
    %v7820 = vunpack.c.l.s4 1966171168
    %v7821 = vunpack.c.0.s8 %v7820
    %v7822 = vlaneseq
    %v7823 = vshrl.u32 %v7822, 7
    %v7824 = vsub.s32 %v7821, %v7823
    %v7825 = vrot.slane %v7803, %v7824
    %v7827 = vunpack.c.l.s4 1966171168
    %v7828 = vunpack.c.0.s8 %v7827
    %v7829 = vlaneseq
    %v7830 = vshrl.u32 %v7829, 7
    %v7831 = vsub.s32 %v7828, %v7830
    %v7832 = vrot.slane %v7804, %v7831
    %v7833 = vcombine.low %v7811, %v7818
    %v7834 = vcombine.low %v7825, %v7832
    %v7836 = vunpack.c.l.s4 1966171168
    %v7837 = vunpack.c.0.s8 %v7836
    %v7838 = vlaneseq
    %v7839 = vshrl.u32 %v7838, 7
    %v7840 = vsub.s32 %v7837, %v7839
    %v7841 = vrot.slane %v7833, %v7840
    %v7843 = vunpack.c.l.s4 1966171168
    %v7844 = vunpack.c.0.s8 %v7843
    %v7845 = vlaneseq
    %v7846 = vshrl.u32 %v7845, 7
    %v7847 = vsub.s32 %v7844, %v7846
    %v7848 = vrot.slane %v7834, %v7847
    %v7849 = vcombine.low %v7841, %v7848
    %v7850 = vcombine.low %v4737, %v4751
    %v7851 = vcombine.low %v4759, %v4761
    %v7852 = vcombine.low %v4744, %v4758
    %v7853 = vcombine.low %v4760, %v4762
    %v7855 = vunpack.c.l.s4 1966171168
    %v7856 = vunpack.c.0.s8 %v7855
    %v7857 = vlaneseq
    %v7858 = vshrl.u32 %v7857, 7
    %v7859 = vsub.s32 %v7856, %v7858
    %v7860 = vrot.slane %v7850, %v7859
    %v7862 = vunpack.c.l.s4 1966171168
    %v7863 = vunpack.c.0.s8 %v7862
    %v7864 = vlaneseq
    %v7865 = vshrl.u32 %v7864, 7
    %v7866 = vsub.s32 %v7863, %v7865
    %v7867 = vrot.slane %v7851, %v7866
    %v7869 = vunpack.c.l.s4 1966171168
    %v7870 = vunpack.c.0.s8 %v7869
    %v7871 = vlaneseq
    %v7872 = vshrl.u32 %v7871, 7
    %v7873 = vsub.s32 %v7870, %v7872
    %v7874 = vrot.slane %v7852, %v7873
    %v7876 = vunpack.c.l.s4 1966171168
    %v7877 = vunpack.c.0.s8 %v7876
    %v7878 = vlaneseq
    %v7879 = vshrl.u32 %v7878, 7
    %v7880 = vsub.s32 %v7877, %v7879
    %v7881 = vrot.slane %v7853, %v7880
    %v7882 = vcombine.low %v7860, %v7867
    %v7883 = vcombine.low %v7874, %v7881
    %v7885 = vunpack.c.l.s4 1966171168
    %v7886 = vunpack.c.0.s8 %v7885
    %v7887 = vlaneseq
    %v7888 = vshrl.u32 %v7887, 7
    %v7889 = vsub.s32 %v7886, %v7888
    %v7890 = vrot.slane %v7882, %v7889
    %v7892 = vunpack.c.l.s4 1966171168
    %v7893 = vunpack.c.0.s8 %v7892
    %v7894 = vlaneseq
    %v7895 = vshrl.u32 %v7894, 7
    %v7896 = vsub.s32 %v7893, %v7895
    %v7897 = vrot.slane %v7883, %v7896
    %v7898 = vcombine.low %v7890, %v7897
    %v7899 = vcombine.low %v4786, %v4800
    %v7900 = vcombine.low %v4808, %v4810
    %v7901 = vcombine.low %v4793, %v4807
    %v7902 = vcombine.low %v4809, %v4811
    %v7904 = vunpack.c.l.s4 1966171168
    %v7905 = vunpack.c.0.s8 %v7904
    %v7906 = vlaneseq
    %v7907 = vshrl.u32 %v7906, 7
    %v7908 = vsub.s32 %v7905, %v7907
    %v7909 = vrot.slane %v7899, %v7908
    %v7911 = vunpack.c.l.s4 1966171168
    %v7912 = vunpack.c.0.s8 %v7911
    %v7913 = vlaneseq
    %v7914 = vshrl.u32 %v7913, 7
    %v7915 = vsub.s32 %v7912, %v7914
    %v7916 = vrot.slane %v7900, %v7915
    %v7918 = vunpack.c.l.s4 1966171168
    %v7919 = vunpack.c.0.s8 %v7918
    %v7920 = vlaneseq
    %v7921 = vshrl.u32 %v7920, 7
    %v7922 = vsub.s32 %v7919, %v7921
    %v7923 = vrot.slane %v7901, %v7922
    %v7925 = vunpack.c.l.s4 1966171168
    %v7926 = vunpack.c.0.s8 %v7925
    %v7927 = vlaneseq
    %v7928 = vshrl.u32 %v7927, 7
    %v7929 = vsub.s32 %v7926, %v7928
    %v7930 = vrot.slane %v7902, %v7929
    %v7931 = vcombine.low %v7909, %v7916
    %v7932 = vcombine.low %v7923, %v7930
    %v7934 = vunpack.c.l.s4 1966171168
    %v7935 = vunpack.c.0.s8 %v7934
    %v7936 = vlaneseq
    %v7937 = vshrl.u32 %v7936, 7
    %v7938 = vsub.s32 %v7935, %v7937
    %v7939 = vrot.slane %v7931, %v7938
    %v7941 = vunpack.c.l.s4 1966171168
    %v7942 = vunpack.c.0.s8 %v7941
    %v7943 = vlaneseq
    %v7944 = vshrl.u32 %v7943, 7
    %v7945 = vsub.s32 %v7942, %v7944
    %v7946 = vrot.slane %v7932, %v7945
    %v7947 = vcombine.low %v7939, %v7946
    %v7948 = vcombine.low %v4835, %v4849
    %v7949 = vcombine.low %v4857, %v4859
    %v7950 = vcombine.low %v4842, %v4856
    %v7951 = vcombine.low %v4858, %v4860
    %v7953 = vunpack.c.l.s4 1966171168
    %v7954 = vunpack.c.0.s8 %v7953
    %v7955 = vlaneseq
    %v7956 = vshrl.u32 %v7955, 7
    %v7957 = vsub.s32 %v7954, %v7956
    %v7958 = vrot.slane %v7948, %v7957
    %v7960 = vunpack.c.l.s4 1966171168
    %v7961 = vunpack.c.0.s8 %v7960
    %v7962 = vlaneseq
    %v7963 = vshrl.u32 %v7962, 7
    %v7964 = vsub.s32 %v7961, %v7963
    %v7965 = vrot.slane %v7949, %v7964
    %v7967 = vunpack.c.l.s4 1966171168
    %v7968 = vunpack.c.0.s8 %v7967
    %v7969 = vlaneseq
    %v7970 = vshrl.u32 %v7969, 7
    %v7971 = vsub.s32 %v7968, %v7970
    %v7972 = vrot.slane %v7950, %v7971
    %v7974 = vunpack.c.l.s4 1966171168
    %v7975 = vunpack.c.0.s8 %v7974
    %v7976 = vlaneseq
    %v7977 = vshrl.u32 %v7976, 7
    %v7978 = vsub.s32 %v7975, %v7977
    %v7979 = vrot.slane %v7951, %v7978
    %v7980 = vcombine.low %v7958, %v7965
    %v7981 = vcombine.low %v7972, %v7979
    %v7983 = vunpack.c.l.s4 1966171168
    %v7984 = vunpack.c.0.s8 %v7983
    %v7985 = vlaneseq
    %v7986 = vshrl.u32 %v7985, 7
    %v7987 = vsub.s32 %v7984, %v7986
    %v7988 = vrot.slane %v7980, %v7987
    %v7990 = vunpack.c.l.s4 1966171168
    %v7991 = vunpack.c.0.s8 %v7990
    %v7992 = vlaneseq
    %v7993 = vshrl.u32 %v7992, 7
    %v7994 = vsub.s32 %v7991, %v7993
    %v7995 = vrot.slane %v7981, %v7994
    %v7996 = vcombine.low %v7988, %v7995
    %v7997 = vcombine.low %v4884, %v4898
    %v7998 = vcombine.low %v4906, %v4908
    %v7999 = vcombine.low %v4891, %v4905
    %v8000 = vcombine.low %v4907, %v4909
    %v8002 = vunpack.c.l.s4 1966171168
    %v8003 = vunpack.c.0.s8 %v8002
    %v8004 = vlaneseq
    %v8005 = vshrl.u32 %v8004, 7
    %v8006 = vsub.s32 %v8003, %v8005
    %v8007 = vrot.slane %v7997, %v8006
    %v8009 = vunpack.c.l.s4 1966171168
    %v8010 = vunpack.c.0.s8 %v8009
    %v8011 = vlaneseq
    %v8012 = vshrl.u32 %v8011, 7
    %v8013 = vsub.s32 %v8010, %v8012
    %v8014 = vrot.slane %v7998, %v8013
    %v8016 = vunpack.c.l.s4 1966171168
    %v8017 = vunpack.c.0.s8 %v8016
    %v8018 = vlaneseq
    %v8019 = vshrl.u32 %v8018, 7
    %v8020 = vsub.s32 %v8017, %v8019
    %v8021 = vrot.slane %v7999, %v8020
    %v8023 = vunpack.c.l.s4 1966171168
    %v8024 = vunpack.c.0.s8 %v8023
    %v8025 = vlaneseq
    %v8026 = vshrl.u32 %v8025, 7
    %v8027 = vsub.s32 %v8024, %v8026
    %v8028 = vrot.slane %v8000, %v8027
    %v8029 = vcombine.low %v8007, %v8014
    %v8030 = vcombine.low %v8021, %v8028
    %v8032 = vunpack.c.l.s4 1966171168
    %v8033 = vunpack.c.0.s8 %v8032
    %v8034 = vlaneseq
    %v8035 = vshrl.u32 %v8034, 7
    %v8036 = vsub.s32 %v8033, %v8035
    %v8037 = vrot.slane %v8029, %v8036
    %v8039 = vunpack.c.l.s4 1966171168
    %v8040 = vunpack.c.0.s8 %v8039
    %v8041 = vlaneseq
    %v8042 = vshrl.u32 %v8041, 7
    %v8043 = vsub.s32 %v8040, %v8042
    %v8044 = vrot.slane %v8030, %v8043
    %v8045 = vcombine.low %v8037, %v8044
    %v8046 = vcombine.low %v4933, %v4947
    %v8047 = vcombine.low %v4955, %v4957
    %v8048 = vcombine.low %v4940, %v4954
    %v8049 = vcombine.low %v4956, %v4958
    %v8051 = vunpack.c.l.s4 1966171168
    %v8052 = vunpack.c.0.s8 %v8051
    %v8053 = vlaneseq
    %v8054 = vshrl.u32 %v8053, 7
    %v8055 = vsub.s32 %v8052, %v8054
    %v8056 = vrot.slane %v8046, %v8055
    %v8058 = vunpack.c.l.s4 1966171168
    %v8059 = vunpack.c.0.s8 %v8058
    %v8060 = vlaneseq
    %v8061 = vshrl.u32 %v8060, 7
    %v8062 = vsub.s32 %v8059, %v8061
    %v8063 = vrot.slane %v8047, %v8062
    %v8065 = vunpack.c.l.s4 1966171168
    %v8066 = vunpack.c.0.s8 %v8065
    %v8067 = vlaneseq
    %v8068 = vshrl.u32 %v8067, 7
    %v8069 = vsub.s32 %v8066, %v8068
    %v8070 = vrot.slane %v8048, %v8069
    %v8072 = vunpack.c.l.s4 1966171168
    %v8073 = vunpack.c.0.s8 %v8072
    %v8074 = vlaneseq
    %v8075 = vshrl.u32 %v8074, 7
    %v8076 = vsub.s32 %v8073, %v8075
    %v8077 = vrot.slane %v8049, %v8076
    %v8078 = vcombine.low %v8056, %v8063
    %v8079 = vcombine.low %v8070, %v8077
    %v8081 = vunpack.c.l.s4 1966171168
    %v8082 = vunpack.c.0.s8 %v8081
    %v8083 = vlaneseq
    %v8084 = vshrl.u32 %v8083, 7
    %v8085 = vsub.s32 %v8082, %v8084
    %v8086 = vrot.slane %v8078, %v8085
    %v8088 = vunpack.c.l.s4 1966171168
    %v8089 = vunpack.c.0.s8 %v8088
    %v8090 = vlaneseq
    %v8091 = vshrl.u32 %v8090, 7
    %v8092 = vsub.s32 %v8089, %v8091
    %v8093 = vrot.slane %v8079, %v8092
    %v8094 = vcombine.low %v8086, %v8093
    %v8095 = vcombine.low %v4982, %v4996
    %v8096 = vcombine.low %v5004, %v5006
    %v8097 = vcombine.low %v4989, %v5003
    %v8098 = vcombine.low %v5005, %v5007
    %v8100 = vunpack.c.l.s4 1966171168
    %v8101 = vunpack.c.0.s8 %v8100
    %v8102 = vlaneseq
    %v8103 = vshrl.u32 %v8102, 7
    %v8104 = vsub.s32 %v8101, %v8103
    %v8105 = vrot.slane %v8095, %v8104
    %v8107 = vunpack.c.l.s4 1966171168
    %v8108 = vunpack.c.0.s8 %v8107
    %v8109 = vlaneseq
    %v8110 = vshrl.u32 %v8109, 7
    %v8111 = vsub.s32 %v8108, %v8110
    %v8112 = vrot.slane %v8096, %v8111
    %v8114 = vunpack.c.l.s4 1966171168
    %v8115 = vunpack.c.0.s8 %v8114
    %v8116 = vlaneseq
    %v8117 = vshrl.u32 %v8116, 7
    %v8118 = vsub.s32 %v8115, %v8117
    %v8119 = vrot.slane %v8097, %v8118
    %v8121 = vunpack.c.l.s4 1966171168
    %v8122 = vunpack.c.0.s8 %v8121
    %v8123 = vlaneseq
    %v8124 = vshrl.u32 %v8123, 7
    %v8125 = vsub.s32 %v8122, %v8124
    %v8126 = vrot.slane %v8098, %v8125
    %v8127 = vcombine.low %v8105, %v8112
    %v8128 = vcombine.low %v8119, %v8126
    %v8130 = vunpack.c.l.s4 1966171168
    %v8131 = vunpack.c.0.s8 %v8130
    %v8132 = vlaneseq
    %v8133 = vshrl.u32 %v8132, 7
    %v8134 = vsub.s32 %v8131, %v8133
    %v8135 = vrot.slane %v8127, %v8134
    %v8137 = vunpack.c.l.s4 1966171168
    %v8138 = vunpack.c.0.s8 %v8137
    %v8139 = vlaneseq
    %v8140 = vshrl.u32 %v8139, 7
    %v8141 = vsub.s32 %v8138, %v8140
    %v8142 = vrot.slane %v8128, %v8141
    %v8143 = vcombine.low %v8135, %v8142
    %v8144 = vcombine.low %v5031, %v5045
    %v8145 = vcombine.low %v5053, %v5055
    %v8146 = vcombine.low %v5038, %v5052
    %v8147 = vcombine.low %v5054, %v5056
    %v8149 = vunpack.c.l.s4 1966171168
    %v8150 = vunpack.c.0.s8 %v8149
    %v8151 = vlaneseq
    %v8152 = vshrl.u32 %v8151, 7
    %v8153 = vsub.s32 %v8150, %v8152
    %v8154 = vrot.slane %v8144, %v8153
    %v8156 = vunpack.c.l.s4 1966171168
    %v8157 = vunpack.c.0.s8 %v8156
    %v8158 = vlaneseq
    %v8159 = vshrl.u32 %v8158, 7
    %v8160 = vsub.s32 %v8157, %v8159
    %v8161 = vrot.slane %v8145, %v8160
    %v8163 = vunpack.c.l.s4 1966171168
    %v8164 = vunpack.c.0.s8 %v8163
    %v8165 = vlaneseq
    %v8166 = vshrl.u32 %v8165, 7
    %v8167 = vsub.s32 %v8164, %v8166
    %v8168 = vrot.slane %v8146, %v8167
    %v8170 = vunpack.c.l.s4 1966171168
    %v8171 = vunpack.c.0.s8 %v8170
    %v8172 = vlaneseq
    %v8173 = vshrl.u32 %v8172, 7
    %v8174 = vsub.s32 %v8171, %v8173
    %v8175 = vrot.slane %v8147, %v8174
    %v8176 = vcombine.low %v8154, %v8161
    %v8177 = vcombine.low %v8168, %v8175
    %v8179 = vunpack.c.l.s4 1966171168
    %v8180 = vunpack.c.0.s8 %v8179
    %v8181 = vlaneseq
    %v8182 = vshrl.u32 %v8181, 7
    %v8183 = vsub.s32 %v8180, %v8182
    %v8184 = vrot.slane %v8176, %v8183
    %v8186 = vunpack.c.l.s4 1966171168
    %v8187 = vunpack.c.0.s8 %v8186
    %v8188 = vlaneseq
    %v8189 = vshrl.u32 %v8188, 7
    %v8190 = vsub.s32 %v8187, %v8189
    %v8191 = vrot.slane %v8177, %v8190
    %v8192 = vcombine.low %v8184, %v8191
    %v8193 = vcombine.low %v5080, %v5094
    %v8194 = vcombine.low %v5102, %v5104
    %v8195 = vcombine.low %v5087, %v5101
    %v8196 = vcombine.low %v5103, %v5105
    %v8198 = vunpack.c.l.s4 1966171168
    %v8199 = vunpack.c.0.s8 %v8198
    %v8200 = vlaneseq
    %v8201 = vshrl.u32 %v8200, 7
    %v8202 = vsub.s32 %v8199, %v8201
    %v8203 = vrot.slane %v8193, %v8202
    %v8205 = vunpack.c.l.s4 1966171168
    %v8206 = vunpack.c.0.s8 %v8205
    %v8207 = vlaneseq
    %v8208 = vshrl.u32 %v8207, 7
    %v8209 = vsub.s32 %v8206, %v8208
    %v8210 = vrot.slane %v8194, %v8209
    %v8212 = vunpack.c.l.s4 1966171168
    %v8213 = vunpack.c.0.s8 %v8212
    %v8214 = vlaneseq
    %v8215 = vshrl.u32 %v8214, 7
    %v8216 = vsub.s32 %v8213, %v8215
    %v8217 = vrot.slane %v8195, %v8216
    %v8219 = vunpack.c.l.s4 1966171168
    %v8220 = vunpack.c.0.s8 %v8219
    %v8221 = vlaneseq
    %v8222 = vshrl.u32 %v8221, 7
    %v8223 = vsub.s32 %v8220, %v8222
    %v8224 = vrot.slane %v8196, %v8223
    %v8225 = vcombine.low %v8203, %v8210
    %v8226 = vcombine.low %v8217, %v8224
    %v8228 = vunpack.c.l.s4 1966171168
    %v8229 = vunpack.c.0.s8 %v8228
    %v8230 = vlaneseq
    %v8231 = vshrl.u32 %v8230, 7
    %v8232 = vsub.s32 %v8229, %v8231
    %v8233 = vrot.slane %v8225, %v8232
    %v8235 = vunpack.c.l.s4 1966171168
    %v8236 = vunpack.c.0.s8 %v8235
    %v8237 = vlaneseq
    %v8238 = vshrl.u32 %v8237, 7
    %v8239 = vsub.s32 %v8236, %v8238
    %v8240 = vrot.slane %v8226, %v8239
    %v8241 = vcombine.low %v8233, %v8240
    %v8242 = vcombine.low %v5129, %v5143
    %v8243 = vcombine.low %v5151, %v5153
    %v8244 = vcombine.low %v5136, %v5150
    %v8245 = vcombine.low %v5152, %v5154
    %v8247 = vunpack.c.l.s4 1966171168
    %v8248 = vunpack.c.0.s8 %v8247
    %v8249 = vlaneseq
    %v8250 = vshrl.u32 %v8249, 7
    %v8251 = vsub.s32 %v8248, %v8250
    %v8252 = vrot.slane %v8242, %v8251
    %v8254 = vunpack.c.l.s4 1966171168
    %v8255 = vunpack.c.0.s8 %v8254
    %v8256 = vlaneseq
    %v8257 = vshrl.u32 %v8256, 7
    %v8258 = vsub.s32 %v8255, %v8257
    %v8259 = vrot.slane %v8243, %v8258
    %v8261 = vunpack.c.l.s4 1966171168
    %v8262 = vunpack.c.0.s8 %v8261
    %v8263 = vlaneseq
    %v8264 = vshrl.u32 %v8263, 7
    %v8265 = vsub.s32 %v8262, %v8264
    %v8266 = vrot.slane %v8244, %v8265
    %v8268 = vunpack.c.l.s4 1966171168
    %v8269 = vunpack.c.0.s8 %v8268
    %v8270 = vlaneseq
    %v8271 = vshrl.u32 %v8270, 7
    %v8272 = vsub.s32 %v8269, %v8271
    %v8273 = vrot.slane %v8245, %v8272
    %v8274 = vcombine.low %v8252, %v8259
    %v8275 = vcombine.low %v8266, %v8273
    %v8277 = vunpack.c.l.s4 1966171168
    %v8278 = vunpack.c.0.s8 %v8277
    %v8279 = vlaneseq
    %v8280 = vshrl.u32 %v8279, 7
    %v8281 = vsub.s32 %v8278, %v8280
    %v8282 = vrot.slane %v8274, %v8281
    %v8284 = vunpack.c.l.s4 1966171168
    %v8285 = vunpack.c.0.s8 %v8284
    %v8286 = vlaneseq
    %v8287 = vshrl.u32 %v8286, 7
    %v8288 = vsub.s32 %v8285, %v8287
    %v8289 = vrot.slane %v8275, %v8288
    %v8290 = vcombine.low %v8282, %v8289
    %v8291 = vcombine.low %v5178, %v5192
    %v8292 = vcombine.low %v5200, %v5202
    %v8293 = vcombine.low %v5185, %v5199
    %v8294 = vcombine.low %v5201, %v5203
    %v8296 = vunpack.c.l.s4 1966171168
    %v8297 = vunpack.c.0.s8 %v8296
    %v8298 = vlaneseq
    %v8299 = vshrl.u32 %v8298, 7
    %v8300 = vsub.s32 %v8297, %v8299
    %v8301 = vrot.slane %v8291, %v8300
    %v8303 = vunpack.c.l.s4 1966171168
    %v8304 = vunpack.c.0.s8 %v8303
    %v8305 = vlaneseq
    %v8306 = vshrl.u32 %v8305, 7
    %v8307 = vsub.s32 %v8304, %v8306
    %v8308 = vrot.slane %v8292, %v8307
    %v8310 = vunpack.c.l.s4 1966171168
    %v8311 = vunpack.c.0.s8 %v8310
    %v8312 = vlaneseq
    %v8313 = vshrl.u32 %v8312, 7
    %v8314 = vsub.s32 %v8311, %v8313
    %v8315 = vrot.slane %v8293, %v8314
    %v8317 = vunpack.c.l.s4 1966171168
    %v8318 = vunpack.c.0.s8 %v8317
    %v8319 = vlaneseq
    %v8320 = vshrl.u32 %v8319, 7
    %v8321 = vsub.s32 %v8318, %v8320
    %v8322 = vrot.slane %v8294, %v8321
    %v8323 = vcombine.low %v8301, %v8308
    %v8324 = vcombine.low %v8315, %v8322
    %v8326 = vunpack.c.l.s4 1966171168
    %v8327 = vunpack.c.0.s8 %v8326
    %v8328 = vlaneseq
    %v8329 = vshrl.u32 %v8328, 7
    %v8330 = vsub.s32 %v8327, %v8329
    %v8331 = vrot.slane %v8323, %v8330
    %v8333 = vunpack.c.l.s4 1966171168
    %v8334 = vunpack.c.0.s8 %v8333
    %v8335 = vlaneseq
    %v8336 = vshrl.u32 %v8335, 7
    %v8337 = vsub.s32 %v8334, %v8336
    %v8338 = vrot.slane %v8324, %v8337
    %v8339 = vcombine.low %v8331, %v8338
    %v8340 = vcombine.low %v5227, %v5241
    %v8341 = vcombine.low %v5249, %v5251
    %v8342 = vcombine.low %v5234, %v5248
    %v8343 = vcombine.low %v5250, %v5252
    %v8345 = vunpack.c.l.s4 1966171168
    %v8346 = vunpack.c.0.s8 %v8345
    %v8347 = vlaneseq
    %v8348 = vshrl.u32 %v8347, 7
    %v8349 = vsub.s32 %v8346, %v8348
    %v8350 = vrot.slane %v8340, %v8349
    %v8352 = vunpack.c.l.s4 1966171168
    %v8353 = vunpack.c.0.s8 %v8352
    %v8354 = vlaneseq
    %v8355 = vshrl.u32 %v8354, 7
    %v8356 = vsub.s32 %v8353, %v8355
    %v8357 = vrot.slane %v8341, %v8356
    %v8359 = vunpack.c.l.s4 1966171168
    %v8360 = vunpack.c.0.s8 %v8359
    %v8361 = vlaneseq
    %v8362 = vshrl.u32 %v8361, 7
    %v8363 = vsub.s32 %v8360, %v8362
    %v8364 = vrot.slane %v8342, %v8363
    %v8366 = vunpack.c.l.s4 1966171168
    %v8367 = vunpack.c.0.s8 %v8366
    %v8368 = vlaneseq
    %v8369 = vshrl.u32 %v8368, 7
    %v8370 = vsub.s32 %v8367, %v8369
    %v8371 = vrot.slane %v8343, %v8370
    %v8372 = vcombine.low %v8350, %v8357
    %v8373 = vcombine.low %v8364, %v8371
    %v8375 = vunpack.c.l.s4 1966171168
    %v8376 = vunpack.c.0.s8 %v8375
    %v8377 = vlaneseq
    %v8378 = vshrl.u32 %v8377, 7
    %v8379 = vsub.s32 %v8376, %v8378
    %v8380 = vrot.slane %v8372, %v8379
    %v8382 = vunpack.c.l.s4 1966171168
    %v8383 = vunpack.c.0.s8 %v8382
    %v8384 = vlaneseq
    %v8385 = vshrl.u32 %v8384, 7
    %v8386 = vsub.s32 %v8383, %v8385
    %v8387 = vrot.slane %v8373, %v8386
    %v8388 = vcombine.low %v8380, %v8387
    %v8389 = vcombine.low %v5276, %v5290
    %v8390 = vcombine.low %v5298, %v5300
    %v8391 = vcombine.low %v5283, %v5297
    %v8392 = vcombine.low %v5299, %v5301
    %v8394 = vunpack.c.l.s4 1966171168
    %v8395 = vunpack.c.0.s8 %v8394
    %v8396 = vlaneseq
    %v8397 = vshrl.u32 %v8396, 7
    %v8398 = vsub.s32 %v8395, %v8397
    %v8399 = vrot.slane %v8389, %v8398
    %v8401 = vunpack.c.l.s4 1966171168
    %v8402 = vunpack.c.0.s8 %v8401
    %v8403 = vlaneseq
    %v8404 = vshrl.u32 %v8403, 7
    %v8405 = vsub.s32 %v8402, %v8404
    %v8406 = vrot.slane %v8390, %v8405
    %v8408 = vunpack.c.l.s4 1966171168
    %v8409 = vunpack.c.0.s8 %v8408
    %v8410 = vlaneseq
    %v8411 = vshrl.u32 %v8410, 7
    %v8412 = vsub.s32 %v8409, %v8411
    %v8413 = vrot.slane %v8391, %v8412
    %v8415 = vunpack.c.l.s4 1966171168
    %v8416 = vunpack.c.0.s8 %v8415
    %v8417 = vlaneseq
    %v8418 = vshrl.u32 %v8417, 7
    %v8419 = vsub.s32 %v8416, %v8418
    %v8420 = vrot.slane %v8392, %v8419
    %v8421 = vcombine.low %v8399, %v8406
    %v8422 = vcombine.low %v8413, %v8420
    %v8424 = vunpack.c.l.s4 1966171168
    %v8425 = vunpack.c.0.s8 %v8424
    %v8426 = vlaneseq
    %v8427 = vshrl.u32 %v8426, 7
    %v8428 = vsub.s32 %v8425, %v8427
    %v8429 = vrot.slane %v8421, %v8428
    %v8431 = vunpack.c.l.s4 1966171168
    %v8432 = vunpack.c.0.s8 %v8431
    %v8433 = vlaneseq
    %v8434 = vshrl.u32 %v8433, 7
    %v8435 = vsub.s32 %v8432, %v8434
    %v8436 = vrot.slane %v8422, %v8435
    %v8437 = vcombine.low %v8429, %v8436
    %v8438 = vcombine.low %v5325, %v5339
    %v8439 = vcombine.low %v5347, %v5349
    %v8440 = vcombine.low %v5332, %v5346
    %v8441 = vcombine.low %v5348, %v5350
    %v8443 = vunpack.c.l.s4 1966171168
    %v8444 = vunpack.c.0.s8 %v8443
    %v8445 = vlaneseq
    %v8446 = vshrl.u32 %v8445, 7
    %v8447 = vsub.s32 %v8444, %v8446
    %v8448 = vrot.slane %v8438, %v8447
    %v8450 = vunpack.c.l.s4 1966171168
    %v8451 = vunpack.c.0.s8 %v8450
    %v8452 = vlaneseq
    %v8453 = vshrl.u32 %v8452, 7
    %v8454 = vsub.s32 %v8451, %v8453
    %v8455 = vrot.slane %v8439, %v8454
    %v8457 = vunpack.c.l.s4 1966171168
    %v8458 = vunpack.c.0.s8 %v8457
    %v8459 = vlaneseq
    %v8460 = vshrl.u32 %v8459, 7
    %v8461 = vsub.s32 %v8458, %v8460
    %v8462 = vrot.slane %v8440, %v8461
    %v8464 = vunpack.c.l.s4 1966171168
    %v8465 = vunpack.c.0.s8 %v8464
    %v8466 = vlaneseq
    %v8467 = vshrl.u32 %v8466, 7
    %v8468 = vsub.s32 %v8465, %v8467
    %v8469 = vrot.slane %v8441, %v8468
    %v8470 = vcombine.low %v8448, %v8455
    %v8471 = vcombine.low %v8462, %v8469
    %v8473 = vunpack.c.l.s4 1966171168
    %v8474 = vunpack.c.0.s8 %v8473
    %v8475 = vlaneseq
    %v8476 = vshrl.u32 %v8475, 7
    %v8477 = vsub.s32 %v8474, %v8476
    %v8478 = vrot.slane %v8470, %v8477
    %v8480 = vunpack.c.l.s4 1966171168
    %v8481 = vunpack.c.0.s8 %v8480
    %v8482 = vlaneseq
    %v8483 = vshrl.u32 %v8482, 7
    %v8484 = vsub.s32 %v8481, %v8483
    %v8485 = vrot.slane %v8471, %v8484
    %v8486 = vcombine.low %v8478, %v8485
    %v8487 = vcombine.low %v5374, %v5388
    %v8488 = vcombine.low %v5396, %v5398
    %v8489 = vcombine.low %v5381, %v5395
    %v8490 = vcombine.low %v5397, %v5399
    %v8492 = vunpack.c.l.s4 1966171168
    %v8493 = vunpack.c.0.s8 %v8492
    %v8494 = vlaneseq
    %v8495 = vshrl.u32 %v8494, 7
    %v8496 = vsub.s32 %v8493, %v8495
    %v8497 = vrot.slane %v8487, %v8496
    %v8499 = vunpack.c.l.s4 1966171168
    %v8500 = vunpack.c.0.s8 %v8499
    %v8501 = vlaneseq
    %v8502 = vshrl.u32 %v8501, 7
    %v8503 = vsub.s32 %v8500, %v8502
    %v8504 = vrot.slane %v8488, %v8503
    %v8506 = vunpack.c.l.s4 1966171168
    %v8507 = vunpack.c.0.s8 %v8506
    %v8508 = vlaneseq
    %v8509 = vshrl.u32 %v8508, 7
    %v8510 = vsub.s32 %v8507, %v8509
    %v8511 = vrot.slane %v8489, %v8510
    %v8513 = vunpack.c.l.s4 1966171168
    %v8514 = vunpack.c.0.s8 %v8513
    %v8515 = vlaneseq
    %v8516 = vshrl.u32 %v8515, 7
    %v8517 = vsub.s32 %v8514, %v8516
    %v8518 = vrot.slane %v8490, %v8517
    %v8519 = vcombine.low %v8497, %v8504
    %v8520 = vcombine.low %v8511, %v8518
    %v8522 = vunpack.c.l.s4 1966171168
    %v8523 = vunpack.c.0.s8 %v8522
    %v8524 = vlaneseq
    %v8525 = vshrl.u32 %v8524, 7
    %v8526 = vsub.s32 %v8523, %v8525
    %v8527 = vrot.slane %v8519, %v8526
    %v8529 = vunpack.c.l.s4 1966171168
    %v8530 = vunpack.c.0.s8 %v8529
    %v8531 = vlaneseq
    %v8532 = vshrl.u32 %v8531, 7
    %v8533 = vsub.s32 %v8530, %v8532
    %v8534 = vrot.slane %v8520, %v8533
    %v8535 = vcombine.low %v8527, %v8534
    %v8536 = vcombine.low %v5423, %v5437
    %v8537 = vcombine.low %v5445, %v5447
    %v8538 = vcombine.low %v5430, %v5444
    %v8539 = vcombine.low %v5446, %v5448
    %v8541 = vunpack.c.l.s4 1966171168
    %v8542 = vunpack.c.0.s8 %v8541
    %v8543 = vlaneseq
    %v8544 = vshrl.u32 %v8543, 7
    %v8545 = vsub.s32 %v8542, %v8544
    %v8546 = vrot.slane %v8536, %v8545
    %v8548 = vunpack.c.l.s4 1966171168
    %v8549 = vunpack.c.0.s8 %v8548
    %v8550 = vlaneseq
    %v8551 = vshrl.u32 %v8550, 7
    %v8552 = vsub.s32 %v8549, %v8551
    %v8553 = vrot.slane %v8537, %v8552
    %v8555 = vunpack.c.l.s4 1966171168
    %v8556 = vunpack.c.0.s8 %v8555
    %v8557 = vlaneseq
    %v8558 = vshrl.u32 %v8557, 7
    %v8559 = vsub.s32 %v8556, %v8558
    %v8560 = vrot.slane %v8538, %v8559
    %v8562 = vunpack.c.l.s4 1966171168
    %v8563 = vunpack.c.0.s8 %v8562
    %v8564 = vlaneseq
    %v8565 = vshrl.u32 %v8564, 7
    %v8566 = vsub.s32 %v8563, %v8565
    %v8567 = vrot.slane %v8539, %v8566
    %v8568 = vcombine.low %v8546, %v8553
    %v8569 = vcombine.low %v8560, %v8567
    %v8571 = vunpack.c.l.s4 1966171168
    %v8572 = vunpack.c.0.s8 %v8571
    %v8573 = vlaneseq
    %v8574 = vshrl.u32 %v8573, 7
    %v8575 = vsub.s32 %v8572, %v8574
    %v8576 = vrot.slane %v8568, %v8575
    %v8578 = vunpack.c.l.s4 1966171168
    %v8579 = vunpack.c.0.s8 %v8578
    %v8580 = vlaneseq
    %v8581 = vshrl.u32 %v8580, 7
    %v8582 = vsub.s32 %v8579, %v8581
    %v8583 = vrot.slane %v8569, %v8582
    %v8584 = vcombine.low %v8576, %v8583
    %v8585 = vcombine.low %v5472, %v5486
    %v8586 = vcombine.low %v5494, %v5496
    %v8587 = vcombine.low %v5479, %v5493
    %v8588 = vcombine.low %v5495, %v5497
    %v8590 = vunpack.c.l.s4 1966171168
    %v8591 = vunpack.c.0.s8 %v8590
    %v8592 = vlaneseq
    %v8593 = vshrl.u32 %v8592, 7
    %v8594 = vsub.s32 %v8591, %v8593
    %v8595 = vrot.slane %v8585, %v8594
    %v8597 = vunpack.c.l.s4 1966171168
    %v8598 = vunpack.c.0.s8 %v8597
    %v8599 = vlaneseq
    %v8600 = vshrl.u32 %v8599, 7
    %v8601 = vsub.s32 %v8598, %v8600
    %v8602 = vrot.slane %v8586, %v8601
    %v8604 = vunpack.c.l.s4 1966171168
    %v8605 = vunpack.c.0.s8 %v8604
    %v8606 = vlaneseq
    %v8607 = vshrl.u32 %v8606, 7
    %v8608 = vsub.s32 %v8605, %v8607
    %v8609 = vrot.slane %v8587, %v8608
    %v8611 = vunpack.c.l.s4 1966171168
    %v8612 = vunpack.c.0.s8 %v8611
    %v8613 = vlaneseq
    %v8614 = vshrl.u32 %v8613, 7
    %v8615 = vsub.s32 %v8612, %v8614
    %v8616 = vrot.slane %v8588, %v8615
    %v8617 = vcombine.low %v8595, %v8602
    %v8618 = vcombine.low %v8609, %v8616
    %v8620 = vunpack.c.l.s4 1966171168
    %v8621 = vunpack.c.0.s8 %v8620
    %v8622 = vlaneseq
    %v8623 = vshrl.u32 %v8622, 7
    %v8624 = vsub.s32 %v8621, %v8623
    %v8625 = vrot.slane %v8617, %v8624
    %v8627 = vunpack.c.l.s4 1966171168
    %v8628 = vunpack.c.0.s8 %v8627
    %v8629 = vlaneseq
    %v8630 = vshrl.u32 %v8629, 7
    %v8631 = vsub.s32 %v8628, %v8630
    %v8632 = vrot.slane %v8618, %v8631
    %v8633 = vcombine.low %v8625, %v8632
    %v8634 = vcombine.low %v5521, %v5535
    %v8635 = vcombine.low %v5543, %v5545
    %v8636 = vcombine.low %v5528, %v5542
    %v8637 = vcombine.low %v5544, %v5546
    %v8639 = vunpack.c.l.s4 1966171168
    %v8640 = vunpack.c.0.s8 %v8639
    %v8641 = vlaneseq
    %v8642 = vshrl.u32 %v8641, 7
    %v8643 = vsub.s32 %v8640, %v8642
    %v8644 = vrot.slane %v8634, %v8643
    %v8646 = vunpack.c.l.s4 1966171168
    %v8647 = vunpack.c.0.s8 %v8646
    %v8648 = vlaneseq
    %v8649 = vshrl.u32 %v8648, 7
    %v8650 = vsub.s32 %v8647, %v8649
    %v8651 = vrot.slane %v8635, %v8650
    %v8653 = vunpack.c.l.s4 1966171168
    %v8654 = vunpack.c.0.s8 %v8653
    %v8655 = vlaneseq
    %v8656 = vshrl.u32 %v8655, 7
    %v8657 = vsub.s32 %v8654, %v8656
    %v8658 = vrot.slane %v8636, %v8657
    %v8660 = vunpack.c.l.s4 1966171168
    %v8661 = vunpack.c.0.s8 %v8660
    %v8662 = vlaneseq
    %v8663 = vshrl.u32 %v8662, 7
    %v8664 = vsub.s32 %v8661, %v8663
    %v8665 = vrot.slane %v8637, %v8664
    %v8666 = vcombine.low %v8644, %v8651
    %v8667 = vcombine.low %v8658, %v8665
    %v8669 = vunpack.c.l.s4 1966171168
    %v8670 = vunpack.c.0.s8 %v8669
    %v8671 = vlaneseq
    %v8672 = vshrl.u32 %v8671, 7
    %v8673 = vsub.s32 %v8670, %v8672
    %v8674 = vrot.slane %v8666, %v8673
    %v8676 = vunpack.c.l.s4 1966171168
    %v8677 = vunpack.c.0.s8 %v8676
    %v8678 = vlaneseq
    %v8679 = vshrl.u32 %v8678, 7
    %v8680 = vsub.s32 %v8677, %v8679
    %v8681 = vrot.slane %v8667, %v8680
    %v8682 = vcombine.low %v8674, %v8681
    %v8683 = vcombine.low %v5570, %v5584
    %v8684 = vcombine.low %v5592, %v5594
    %v8685 = vcombine.low %v5577, %v5591
    %v8686 = vcombine.low %v5593, %v5595
    %v8688 = vunpack.c.l.s4 1966171168
    %v8689 = vunpack.c.0.s8 %v8688
    %v8690 = vlaneseq
    %v8691 = vshrl.u32 %v8690, 7
    %v8692 = vsub.s32 %v8689, %v8691
    %v8693 = vrot.slane %v8683, %v8692
    %v8695 = vunpack.c.l.s4 1966171168
    %v8696 = vunpack.c.0.s8 %v8695
    %v8697 = vlaneseq
    %v8698 = vshrl.u32 %v8697, 7
    %v8699 = vsub.s32 %v8696, %v8698
    %v8700 = vrot.slane %v8684, %v8699
    %v8702 = vunpack.c.l.s4 1966171168
    %v8703 = vunpack.c.0.s8 %v8702
    %v8704 = vlaneseq
    %v8705 = vshrl.u32 %v8704, 7
    %v8706 = vsub.s32 %v8703, %v8705
    %v8707 = vrot.slane %v8685, %v8706
    %v8709 = vunpack.c.l.s4 1966171168
    %v8710 = vunpack.c.0.s8 %v8709
    %v8711 = vlaneseq
    %v8712 = vshrl.u32 %v8711, 7
    %v8713 = vsub.s32 %v8710, %v8712
    %v8714 = vrot.slane %v8686, %v8713
    %v8715 = vcombine.low %v8693, %v8700
    %v8716 = vcombine.low %v8707, %v8714
    %v8718 = vunpack.c.l.s4 1966171168
    %v8719 = vunpack.c.0.s8 %v8718
    %v8720 = vlaneseq
    %v8721 = vshrl.u32 %v8720, 7
    %v8722 = vsub.s32 %v8719, %v8721
    %v8723 = vrot.slane %v8715, %v8722
    %v8725 = vunpack.c.l.s4 1966171168
    %v8726 = vunpack.c.0.s8 %v8725
    %v8727 = vlaneseq
    %v8728 = vshrl.u32 %v8727, 7
    %v8729 = vsub.s32 %v8726, %v8728
    %v8730 = vrot.slane %v8716, %v8729
    %v8731 = vcombine.low %v8723, %v8730
    %v8732 = vcombine.low %v5619, %v5633
    %v8733 = vcombine.low %v5641, %v5643
    %v8734 = vcombine.low %v5626, %v5640
    %v8735 = vcombine.low %v5642, %v5644
    %v8737 = vunpack.c.l.s4 1966171168
    %v8738 = vunpack.c.0.s8 %v8737
    %v8739 = vlaneseq
    %v8740 = vshrl.u32 %v8739, 7
    %v8741 = vsub.s32 %v8738, %v8740
    %v8742 = vrot.slane %v8732, %v8741
    %v8744 = vunpack.c.l.s4 1966171168
    %v8745 = vunpack.c.0.s8 %v8744
    %v8746 = vlaneseq
    %v8747 = vshrl.u32 %v8746, 7
    %v8748 = vsub.s32 %v8745, %v8747
    %v8749 = vrot.slane %v8733, %v8748
    %v8751 = vunpack.c.l.s4 1966171168
    %v8752 = vunpack.c.0.s8 %v8751
    %v8753 = vlaneseq
    %v8754 = vshrl.u32 %v8753, 7
    %v8755 = vsub.s32 %v8752, %v8754
    %v8756 = vrot.slane %v8734, %v8755
    %v8758 = vunpack.c.l.s4 1966171168
    %v8759 = vunpack.c.0.s8 %v8758
    %v8760 = vlaneseq
    %v8761 = vshrl.u32 %v8760, 7
    %v8762 = vsub.s32 %v8759, %v8761
    %v8763 = vrot.slane %v8735, %v8762
    %v8764 = vcombine.low %v8742, %v8749
    %v8765 = vcombine.low %v8756, %v8763
    %v8767 = vunpack.c.l.s4 1966171168
    %v8768 = vunpack.c.0.s8 %v8767
    %v8769 = vlaneseq
    %v8770 = vshrl.u32 %v8769, 7
    %v8771 = vsub.s32 %v8768, %v8770
    %v8772 = vrot.slane %v8764, %v8771
    %v8774 = vunpack.c.l.s4 1966171168
    %v8775 = vunpack.c.0.s8 %v8774
    %v8776 = vlaneseq
    %v8777 = vshrl.u32 %v8776, 7
    %v8778 = vsub.s32 %v8775, %v8777
    %v8779 = vrot.slane %v8765, %v8778
    %v8780 = vcombine.low %v8772, %v8779
    %v8781 = vcombine.low %v5668, %v5682
    %v8782 = vcombine.low %v5690, %v5692
    %v8783 = vcombine.low %v5675, %v5689
    %v8784 = vcombine.low %v5691, %v5693
    %v8786 = vunpack.c.l.s4 1966171168
    %v8787 = vunpack.c.0.s8 %v8786
    %v8788 = vlaneseq
    %v8789 = vshrl.u32 %v8788, 7
    %v8790 = vsub.s32 %v8787, %v8789
    %v8791 = vrot.slane %v8781, %v8790
    %v8793 = vunpack.c.l.s4 1966171168
    %v8794 = vunpack.c.0.s8 %v8793
    %v8795 = vlaneseq
    %v8796 = vshrl.u32 %v8795, 7
    %v8797 = vsub.s32 %v8794, %v8796
    %v8798 = vrot.slane %v8782, %v8797
    %v8800 = vunpack.c.l.s4 1966171168
    %v8801 = vunpack.c.0.s8 %v8800
    %v8802 = vlaneseq
    %v8803 = vshrl.u32 %v8802, 7
    %v8804 = vsub.s32 %v8801, %v8803
    %v8805 = vrot.slane %v8783, %v8804
    %v8807 = vunpack.c.l.s4 1966171168
    %v8808 = vunpack.c.0.s8 %v8807
    %v8809 = vlaneseq
    %v8810 = vshrl.u32 %v8809, 7
    %v8811 = vsub.s32 %v8808, %v8810
    %v8812 = vrot.slane %v8784, %v8811
    %v8813 = vcombine.low %v8791, %v8798
    %v8814 = vcombine.low %v8805, %v8812
    %v8816 = vunpack.c.l.s4 1966171168
    %v8817 = vunpack.c.0.s8 %v8816
    %v8818 = vlaneseq
    %v8819 = vshrl.u32 %v8818, 7
    %v8820 = vsub.s32 %v8817, %v8819
    %v8821 = vrot.slane %v8813, %v8820
    %v8823 = vunpack.c.l.s4 1966171168
    %v8824 = vunpack.c.0.s8 %v8823
    %v8825 = vlaneseq
    %v8826 = vshrl.u32 %v8825, 7
    %v8827 = vsub.s32 %v8824, %v8826
    %v8828 = vrot.slane %v8814, %v8827
    %v8829 = vcombine.low %v8821, %v8828
    %v8830 = vcombine.low %v5717, %v5731
    %v8831 = vcombine.low %v5739, %v5741
    %v8832 = vcombine.low %v5724, %v5738
    %v8833 = vcombine.low %v5740, %v5742
    %v8835 = vunpack.c.l.s4 1966171168
    %v8836 = vunpack.c.0.s8 %v8835
    %v8837 = vlaneseq
    %v8838 = vshrl.u32 %v8837, 7
    %v8839 = vsub.s32 %v8836, %v8838
    %v8840 = vrot.slane %v8830, %v8839
    %v8842 = vunpack.c.l.s4 1966171168
    %v8843 = vunpack.c.0.s8 %v8842
    %v8844 = vlaneseq
    %v8845 = vshrl.u32 %v8844, 7
    %v8846 = vsub.s32 %v8843, %v8845
    %v8847 = vrot.slane %v8831, %v8846
    %v8849 = vunpack.c.l.s4 1966171168
    %v8850 = vunpack.c.0.s8 %v8849
    %v8851 = vlaneseq
    %v8852 = vshrl.u32 %v8851, 7
    %v8853 = vsub.s32 %v8850, %v8852
    %v8854 = vrot.slane %v8832, %v8853
    %v8856 = vunpack.c.l.s4 1966171168
    %v8857 = vunpack.c.0.s8 %v8856
    %v8858 = vlaneseq
    %v8859 = vshrl.u32 %v8858, 7
    %v8860 = vsub.s32 %v8857, %v8859
    %v8861 = vrot.slane %v8833, %v8860
    %v8862 = vcombine.low %v8840, %v8847
    %v8863 = vcombine.low %v8854, %v8861
    %v8865 = vunpack.c.l.s4 1966171168
    %v8866 = vunpack.c.0.s8 %v8865
    %v8867 = vlaneseq
    %v8868 = vshrl.u32 %v8867, 7
    %v8869 = vsub.s32 %v8866, %v8868
    %v8870 = vrot.slane %v8862, %v8869
    %v8872 = vunpack.c.l.s4 1966171168
    %v8873 = vunpack.c.0.s8 %v8872
    %v8874 = vlaneseq
    %v8875 = vshrl.u32 %v8874, 7
    %v8876 = vsub.s32 %v8873, %v8875
    %v8877 = vrot.slane %v8863, %v8876
    %v8878 = vcombine.low %v8870, %v8877
    %v8879 = vcombine.low %v5766, %v5780
    %v8880 = vcombine.low %v5788, %v5790
    %v8881 = vcombine.low %v5773, %v5787
    %v8882 = vcombine.low %v5789, %v5791
    %v8884 = vunpack.c.l.s4 1966171168
    %v8885 = vunpack.c.0.s8 %v8884
    %v8886 = vlaneseq
    %v8887 = vshrl.u32 %v8886, 7
    %v8888 = vsub.s32 %v8885, %v8887
    %v8889 = vrot.slane %v8879, %v8888
    %v8891 = vunpack.c.l.s4 1966171168
    %v8892 = vunpack.c.0.s8 %v8891
    %v8893 = vlaneseq
    %v8894 = vshrl.u32 %v8893, 7
    %v8895 = vsub.s32 %v8892, %v8894
    %v8896 = vrot.slane %v8880, %v8895
    %v8898 = vunpack.c.l.s4 1966171168
    %v8899 = vunpack.c.0.s8 %v8898
    %v8900 = vlaneseq
    %v8901 = vshrl.u32 %v8900, 7
    %v8902 = vsub.s32 %v8899, %v8901
    %v8903 = vrot.slane %v8881, %v8902
    %v8905 = vunpack.c.l.s4 1966171168
    %v8906 = vunpack.c.0.s8 %v8905
    %v8907 = vlaneseq
    %v8908 = vshrl.u32 %v8907, 7
    %v8909 = vsub.s32 %v8906, %v8908
    %v8910 = vrot.slane %v8882, %v8909
    %v8911 = vcombine.low %v8889, %v8896
    %v8912 = vcombine.low %v8903, %v8910
    %v8914 = vunpack.c.l.s4 1966171168
    %v8915 = vunpack.c.0.s8 %v8914
    %v8916 = vlaneseq
    %v8917 = vshrl.u32 %v8916, 7
    %v8918 = vsub.s32 %v8915, %v8917
    %v8919 = vrot.slane %v8911, %v8918
    %v8921 = vunpack.c.l.s4 1966171168
    %v8922 = vunpack.c.0.s8 %v8921
    %v8923 = vlaneseq
    %v8924 = vshrl.u32 %v8923, 7
    %v8925 = vsub.s32 %v8922, %v8924
    %v8926 = vrot.slane %v8912, %v8925
    %v8927 = vcombine.low %v8919, %v8926
    %v8928 = vcombine.low %v5815, %v5829
    %v8929 = vcombine.low %v5837, %v5839
    %v8930 = vcombine.low %v5822, %v5836
    %v8931 = vcombine.low %v5838, %v5840
    %v8933 = vunpack.c.l.s4 1966171168
    %v8934 = vunpack.c.0.s8 %v8933
    %v8935 = vlaneseq
    %v8936 = vshrl.u32 %v8935, 7
    %v8937 = vsub.s32 %v8934, %v8936
    %v8938 = vrot.slane %v8928, %v8937
    %v8940 = vunpack.c.l.s4 1966171168
    %v8941 = vunpack.c.0.s8 %v8940
    %v8942 = vlaneseq
    %v8943 = vshrl.u32 %v8942, 7
    %v8944 = vsub.s32 %v8941, %v8943
    %v8945 = vrot.slane %v8929, %v8944
    %v8947 = vunpack.c.l.s4 1966171168
    %v8948 = vunpack.c.0.s8 %v8947
    %v8949 = vlaneseq
    %v8950 = vshrl.u32 %v8949, 7
    %v8951 = vsub.s32 %v8948, %v8950
    %v8952 = vrot.slane %v8930, %v8951
    %v8954 = vunpack.c.l.s4 1966171168
    %v8955 = vunpack.c.0.s8 %v8954
    %v8956 = vlaneseq
    %v8957 = vshrl.u32 %v8956, 7
    %v8958 = vsub.s32 %v8955, %v8957
    %v8959 = vrot.slane %v8931, %v8958
    %v8960 = vcombine.low %v8938, %v8945
    %v8961 = vcombine.low %v8952, %v8959
    %v8963 = vunpack.c.l.s4 1966171168
    %v8964 = vunpack.c.0.s8 %v8963
    %v8965 = vlaneseq
    %v8966 = vshrl.u32 %v8965, 7
    %v8967 = vsub.s32 %v8964, %v8966
    %v8968 = vrot.slane %v8960, %v8967
    %v8970 = vunpack.c.l.s4 1966171168
    %v8971 = vunpack.c.0.s8 %v8970
    %v8972 = vlaneseq
    %v8973 = vshrl.u32 %v8972, 7
    %v8974 = vsub.s32 %v8971, %v8973
    %v8975 = vrot.slane %v8961, %v8974
    %v8976 = vcombine.low %v8968, %v8975
    %v8977 = vcombine.low %v5864, %v5878
    %v8978 = vcombine.low %v5886, %v5888
    %v8979 = vcombine.low %v5871, %v5885
    %v8980 = vcombine.low %v5887, %v5889
    %v8982 = vunpack.c.l.s4 1966171168
    %v8983 = vunpack.c.0.s8 %v8982
    %v8984 = vlaneseq
    %v8985 = vshrl.u32 %v8984, 7
    %v8986 = vsub.s32 %v8983, %v8985
    %v8987 = vrot.slane %v8977, %v8986
    %v8989 = vunpack.c.l.s4 1966171168
    %v8990 = vunpack.c.0.s8 %v8989
    %v8991 = vlaneseq
    %v8992 = vshrl.u32 %v8991, 7
    %v8993 = vsub.s32 %v8990, %v8992
    %v8994 = vrot.slane %v8978, %v8993
    %v8996 = vunpack.c.l.s4 1966171168
    %v8997 = vunpack.c.0.s8 %v8996
    %v8998 = vlaneseq
    %v8999 = vshrl.u32 %v8998, 7
    %v9000 = vsub.s32 %v8997, %v8999
    %v9001 = vrot.slane %v8979, %v9000
    %v9003 = vunpack.c.l.s4 1966171168
    %v9004 = vunpack.c.0.s8 %v9003
    %v9005 = vlaneseq
    %v9006 = vshrl.u32 %v9005, 7
    %v9007 = vsub.s32 %v9004, %v9006
    %v9008 = vrot.slane %v8980, %v9007
    %v9009 = vcombine.low %v8987, %v8994
    %v9010 = vcombine.low %v9001, %v9008
    %v9012 = vunpack.c.l.s4 1966171168
    %v9013 = vunpack.c.0.s8 %v9012
    %v9014 = vlaneseq
    %v9015 = vshrl.u32 %v9014, 7
    %v9016 = vsub.s32 %v9013, %v9015
    %v9017 = vrot.slane %v9009, %v9016
    %v9019 = vunpack.c.l.s4 1966171168
    %v9020 = vunpack.c.0.s8 %v9019
    %v9021 = vlaneseq
    %v9022 = vshrl.u32 %v9021, 7
    %v9023 = vsub.s32 %v9020, %v9022
    %v9024 = vrot.slane %v9010, %v9023
    %v9025 = vcombine.low %v9017, %v9024
    %v9026 = vcombine.low %v5913, %v5927
    %v9027 = vcombine.low %v5935, %v5937
    %v9028 = vcombine.low %v5920, %v5934
    %v9029 = vcombine.low %v5936, %v5938
    %v9031 = vunpack.c.l.s4 1966171168
    %v9032 = vunpack.c.0.s8 %v9031
    %v9033 = vlaneseq
    %v9034 = vshrl.u32 %v9033, 7
    %v9035 = vsub.s32 %v9032, %v9034
    %v9036 = vrot.slane %v9026, %v9035
    %v9038 = vunpack.c.l.s4 1966171168
    %v9039 = vunpack.c.0.s8 %v9038
    %v9040 = vlaneseq
    %v9041 = vshrl.u32 %v9040, 7
    %v9042 = vsub.s32 %v9039, %v9041
    %v9043 = vrot.slane %v9027, %v9042
    %v9045 = vunpack.c.l.s4 1966171168
    %v9046 = vunpack.c.0.s8 %v9045
    %v9047 = vlaneseq
    %v9048 = vshrl.u32 %v9047, 7
    %v9049 = vsub.s32 %v9046, %v9048
    %v9050 = vrot.slane %v9028, %v9049
    %v9052 = vunpack.c.l.s4 1966171168
    %v9053 = vunpack.c.0.s8 %v9052
    %v9054 = vlaneseq
    %v9055 = vshrl.u32 %v9054, 7
    %v9056 = vsub.s32 %v9053, %v9055
    %v9057 = vrot.slane %v9029, %v9056
    %v9058 = vcombine.low %v9036, %v9043
    %v9059 = vcombine.low %v9050, %v9057
    %v9061 = vunpack.c.l.s4 1966171168
    %v9062 = vunpack.c.0.s8 %v9061
    %v9063 = vlaneseq
    %v9064 = vshrl.u32 %v9063, 7
    %v9065 = vsub.s32 %v9062, %v9064
    %v9066 = vrot.slane %v9058, %v9065
    %v9068 = vunpack.c.l.s4 1966171168
    %v9069 = vunpack.c.0.s8 %v9068
    %v9070 = vlaneseq
    %v9071 = vshrl.u32 %v9070, 7
    %v9072 = vsub.s32 %v9069, %v9071
    %v9073 = vrot.slane %v9059, %v9072
    %v9074 = vcombine.low %v9066, %v9073
    %v9075 = vcombine.low %v5962, %v5976
    %v9076 = vcombine.low %v5984, %v5986
    %v9077 = vcombine.low %v5969, %v5983
    %v9078 = vcombine.low %v5985, %v5987
    %v9080 = vunpack.c.l.s4 1966171168
    %v9081 = vunpack.c.0.s8 %v9080
    %v9082 = vlaneseq
    %v9083 = vshrl.u32 %v9082, 7
    %v9084 = vsub.s32 %v9081, %v9083
    %v9085 = vrot.slane %v9075, %v9084
    %v9087 = vunpack.c.l.s4 1966171168
    %v9088 = vunpack.c.0.s8 %v9087
    %v9089 = vlaneseq
    %v9090 = vshrl.u32 %v9089, 7
    %v9091 = vsub.s32 %v9088, %v9090
    %v9092 = vrot.slane %v9076, %v9091
    %v9094 = vunpack.c.l.s4 1966171168
    %v9095 = vunpack.c.0.s8 %v9094
    %v9096 = vlaneseq
    %v9097 = vshrl.u32 %v9096, 7
    %v9098 = vsub.s32 %v9095, %v9097
    %v9099 = vrot.slane %v9077, %v9098
    %v9101 = vunpack.c.l.s4 1966171168
    %v9102 = vunpack.c.0.s8 %v9101
    %v9103 = vlaneseq
    %v9104 = vshrl.u32 %v9103, 7
    %v9105 = vsub.s32 %v9102, %v9104
    %v9106 = vrot.slane %v9078, %v9105
    %v9107 = vcombine.low %v9085, %v9092
    %v9108 = vcombine.low %v9099, %v9106
    %v9110 = vunpack.c.l.s4 1966171168
    %v9111 = vunpack.c.0.s8 %v9110
    %v9112 = vlaneseq
    %v9113 = vshrl.u32 %v9112, 7
    %v9114 = vsub.s32 %v9111, %v9113
    %v9115 = vrot.slane %v9107, %v9114
    %v9117 = vunpack.c.l.s4 1966171168
    %v9118 = vunpack.c.0.s8 %v9117
    %v9119 = vlaneseq
    %v9120 = vshrl.u32 %v9119, 7
    %v9121 = vsub.s32 %v9118, %v9120
    %v9122 = vrot.slane %v9108, %v9121
    %v9123 = vcombine.low %v9115, %v9122
    %v9124 = vcombine.low %v6011, %v6025
    %v9125 = vcombine.low %v6033, %v6035
    %v9126 = vcombine.low %v6018, %v6032
    %v9127 = vcombine.low %v6034, %v6036
    %v9129 = vunpack.c.l.s4 1966171168
    %v9130 = vunpack.c.0.s8 %v9129
    %v9131 = vlaneseq
    %v9132 = vshrl.u32 %v9131, 7
    %v9133 = vsub.s32 %v9130, %v9132
    %v9134 = vrot.slane %v9124, %v9133
    %v9136 = vunpack.c.l.s4 1966171168
    %v9137 = vunpack.c.0.s8 %v9136
    %v9138 = vlaneseq
    %v9139 = vshrl.u32 %v9138, 7
    %v9140 = vsub.s32 %v9137, %v9139
    %v9141 = vrot.slane %v9125, %v9140
    %v9143 = vunpack.c.l.s4 1966171168
    %v9144 = vunpack.c.0.s8 %v9143
    %v9145 = vlaneseq
    %v9146 = vshrl.u32 %v9145, 7
    %v9147 = vsub.s32 %v9144, %v9146
    %v9148 = vrot.slane %v9126, %v9147
    %v9150 = vunpack.c.l.s4 1966171168
    %v9151 = vunpack.c.0.s8 %v9150
    %v9152 = vlaneseq
    %v9153 = vshrl.u32 %v9152, 7
    %v9154 = vsub.s32 %v9151, %v9153
    %v9155 = vrot.slane %v9127, %v9154
    %v9156 = vcombine.low %v9134, %v9141
    %v9157 = vcombine.low %v9148, %v9155
    %v9159 = vunpack.c.l.s4 1966171168
    %v9160 = vunpack.c.0.s8 %v9159
    %v9161 = vlaneseq
    %v9162 = vshrl.u32 %v9161, 7
    %v9163 = vsub.s32 %v9160, %v9162
    %v9164 = vrot.slane %v9156, %v9163
    %v9166 = vunpack.c.l.s4 1966171168
    %v9167 = vunpack.c.0.s8 %v9166
    %v9168 = vlaneseq
    %v9169 = vshrl.u32 %v9168, 7
    %v9170 = vsub.s32 %v9167, %v9169
    %v9171 = vrot.slane %v9157, %v9170
    %v9172 = vcombine.low %v9164, %v9171
    %v9173 = vcombine.low %v6060, %v6074
    %v9174 = vcombine.low %v6082, %v6084
    %v9175 = vcombine.low %v6067, %v6081
    %v9176 = vcombine.low %v6083, %v6085
    %v9178 = vunpack.c.l.s4 1966171168
    %v9179 = vunpack.c.0.s8 %v9178
    %v9180 = vlaneseq
    %v9181 = vshrl.u32 %v9180, 7
    %v9182 = vsub.s32 %v9179, %v9181
    %v9183 = vrot.slane %v9173, %v9182
    %v9185 = vunpack.c.l.s4 1966171168
    %v9186 = vunpack.c.0.s8 %v9185
    %v9187 = vlaneseq
    %v9188 = vshrl.u32 %v9187, 7
    %v9189 = vsub.s32 %v9186, %v9188
    %v9190 = vrot.slane %v9174, %v9189
    %v9192 = vunpack.c.l.s4 1966171168
    %v9193 = vunpack.c.0.s8 %v9192
    %v9194 = vlaneseq
    %v9195 = vshrl.u32 %v9194, 7
    %v9196 = vsub.s32 %v9193, %v9195
    %v9197 = vrot.slane %v9175, %v9196
    %v9199 = vunpack.c.l.s4 1966171168
    %v9200 = vunpack.c.0.s8 %v9199
    %v9201 = vlaneseq
    %v9202 = vshrl.u32 %v9201, 7
    %v9203 = vsub.s32 %v9200, %v9202
    %v9204 = vrot.slane %v9176, %v9203
    %v9205 = vcombine.low %v9183, %v9190
    %v9206 = vcombine.low %v9197, %v9204
    %v9208 = vunpack.c.l.s4 1966171168
    %v9209 = vunpack.c.0.s8 %v9208
    %v9210 = vlaneseq
    %v9211 = vshrl.u32 %v9210, 7
    %v9212 = vsub.s32 %v9209, %v9211
    %v9213 = vrot.slane %v9205, %v9212
    %v9215 = vunpack.c.l.s4 1966171168
    %v9216 = vunpack.c.0.s8 %v9215
    %v9217 = vlaneseq
    %v9218 = vshrl.u32 %v9217, 7
    %v9219 = vsub.s32 %v9216, %v9218
    %v9220 = vrot.slane %v9206, %v9219
    %v9221 = vcombine.low %v9213, %v9220
    %9222 = vset.pattern.permute.xlu0 0
    %9223 = vperm.xlu0 %9222, %v6134
    %v9224 = vpop.permute.xlu0 %9223
    %9225 = vset.pattern.permute.xlu0 0
    %9226 = vperm.xlu0 %9225, %v6183
    %v9227 = vpop.permute.xlu0 %9226
    %9228 = vset.pattern.permute.xlu0 0
    %9229 = vperm.xlu0 %9228, %v6232
    %v9230 = vpop.permute.xlu0 %9229
    %9231 = vset.pattern.permute.xlu0 0
    %9232 = vperm.xlu0 %9231, %v6281
    %v9233 = vpop.permute.xlu0 %9232
    %9234 = vset.pattern.permute.xlu0 0
    %9235 = vperm.xlu0 %9234, %v6330
    %v9236 = vpop.permute.xlu0 %9235
    %9237 = vset.pattern.permute.xlu0 0
    %9238 = vperm.xlu0 %9237, %v6379
    %v9239 = vpop.permute.xlu0 %9238
    %9240 = vset.pattern.permute.xlu0 0
    %9241 = vperm.xlu0 %9240, %v6428
    %v9242 = vpop.permute.xlu0 %9241
    %9243 = vset.pattern.permute.xlu0 0
    %9244 = vperm.xlu0 %9243, %v6477
    %v9245 = vpop.permute.xlu0 %9244
    %9246 = vset.pattern.permute.xlu0 0
    %9247 = vperm.xlu0 %9246, %v6526
    %v9248 = vpop.permute.xlu0 %9247
    %9249 = vset.pattern.permute.xlu0 0
    %9250 = vperm.xlu0 %9249, %v6575
    %v9251 = vpop.permute.xlu0 %9250
    %9252 = vset.pattern.permute.xlu0 0
    %9253 = vperm.xlu0 %9252, %v6624
    %v9254 = vpop.permute.xlu0 %9253
    %9255 = vset.pattern.permute.xlu0 0
    %9256 = vperm.xlu0 %9255, %v6673
    %v9257 = vpop.permute.xlu0 %9256
    %9258 = vset.pattern.permute.xlu0 0
    %9259 = vperm.xlu0 %9258, %v6722
    %v9260 = vpop.permute.xlu0 %9259
    %9261 = vset.pattern.permute.xlu0 0
    %9262 = vperm.xlu0 %9261, %v6771
    %v9263 = vpop.permute.xlu0 %9262
    %9264 = vset.pattern.permute.xlu0 0
    %9265 = vperm.xlu0 %9264, %v6820
    %v9266 = vpop.permute.xlu0 %9265
    %9267 = vset.pattern.permute.xlu0 0
    %9268 = vperm.xlu0 %9267, %v6869
    %v9269 = vpop.permute.xlu0 %9268
    %9270 = vset.pattern.permute.xlu0 0
    %9271 = vperm.xlu0 %9270, %v6918
    %v9272 = vpop.permute.xlu0 %9271
    %9273 = vset.pattern.permute.xlu0 0
    %9274 = vperm.xlu0 %9273, %v6967
    %v9275 = vpop.permute.xlu0 %9274
    %9276 = vset.pattern.permute.xlu0 0
    %9277 = vperm.xlu0 %9276, %v7016
    %v9278 = vpop.permute.xlu0 %9277
    %9279 = vset.pattern.permute.xlu0 0
    %9280 = vperm.xlu0 %9279, %v7065
    %v9281 = vpop.permute.xlu0 %9280
    %9282 = vset.pattern.permute.xlu0 0
    %9283 = vperm.xlu0 %9282, %v7114
    %v9284 = vpop.permute.xlu0 %9283
    %9285 = vset.pattern.permute.xlu0 0
    %9286 = vperm.xlu0 %9285, %v7163
    %v9287 = vpop.permute.xlu0 %9286
    %9288 = vset.pattern.permute.xlu0 0
    %9289 = vperm.xlu0 %9288, %v7212
    %v9290 = vpop.permute.xlu0 %9289
    %9291 = vset.pattern.permute.xlu0 0
    %9292 = vperm.xlu0 %9291, %v7261
    %v9293 = vpop.permute.xlu0 %9292
    %9294 = vset.pattern.permute.xlu0 0
    %9295 = vperm.xlu0 %9294, %v7310
    %v9296 = vpop.permute.xlu0 %9295
    %9297 = vset.pattern.permute.xlu0 0
    %9298 = vperm.xlu0 %9297, %v7359
    %v9299 = vpop.permute.xlu0 %9298
    %9300 = vset.pattern.permute.xlu0 0
    %9301 = vperm.xlu0 %9300, %v7408
    %v9302 = vpop.permute.xlu0 %9301
    %9303 = vset.pattern.permute.xlu0 0
    %9304 = vperm.xlu0 %9303, %v7457
    %v9305 = vpop.permute.xlu0 %9304
    %9306 = vset.pattern.permute.xlu0 0
    %9307 = vperm.xlu0 %9306, %v7506
    %v9308 = vpop.permute.xlu0 %9307
    %9309 = vset.pattern.permute.xlu0 0
    %9310 = vperm.xlu0 %9309, %v7555
    %v9311 = vpop.permute.xlu0 %9310
    %9312 = vset.pattern.permute.xlu0 0
    %9313 = vperm.xlu0 %9312, %v7604
    %v9314 = vpop.permute.xlu0 %9313
    %9315 = vset.pattern.permute.xlu0 0
    %9316 = vperm.xlu0 %9315, %v7653
    %v9317 = vpop.permute.xlu0 %9316
    %9318 = vset.pattern.permute.xlu0 0
    %9319 = vperm.xlu0 %9318, %v7702
    %v9320 = vpop.permute.xlu0 %9319
    %9321 = vset.pattern.permute.xlu0 0
    %9322 = vperm.xlu0 %9321, %v7751
    %v9323 = vpop.permute.xlu0 %9322
    %9324 = vset.pattern.permute.xlu0 0
    %9325 = vperm.xlu0 %9324, %v7800
    %v9326 = vpop.permute.xlu0 %9325
    %9327 = vset.pattern.permute.xlu0 0
    %9328 = vperm.xlu0 %9327, %v7849
    %v9329 = vpop.permute.xlu0 %9328
    %9330 = vset.pattern.permute.xlu0 0
    %9331 = vperm.xlu0 %9330, %v7898
    %v9332 = vpop.permute.xlu0 %9331
    %9333 = vset.pattern.permute.xlu0 0
    %9334 = vperm.xlu0 %9333, %v7947
    %v9335 = vpop.permute.xlu0 %9334
    %9336 = vset.pattern.permute.xlu0 0
    %9337 = vperm.xlu0 %9336, %v7996
    %v9338 = vpop.permute.xlu0 %9337
    %9339 = vset.pattern.permute.xlu0 0
    %9340 = vperm.xlu0 %9339, %v8045
    %v9341 = vpop.permute.xlu0 %9340
    %9342 = vset.pattern.permute.xlu0 0
    %9343 = vperm.xlu0 %9342, %v8094
    %v9344 = vpop.permute.xlu0 %9343
    %9345 = vset.pattern.permute.xlu0 0
    %9346 = vperm.xlu0 %9345, %v8143
    %v9347 = vpop.permute.xlu0 %9346
    %9348 = vset.pattern.permute.xlu0 0
    %9349 = vperm.xlu0 %9348, %v8192
    %v9350 = vpop.permute.xlu0 %9349
    %9351 = vset.pattern.permute.xlu0 0
    %9352 = vperm.xlu0 %9351, %v8241
    %v9353 = vpop.permute.xlu0 %9352
    %9354 = vset.pattern.permute.xlu0 0
    %9355 = vperm.xlu0 %9354, %v8290
    %v9356 = vpop.permute.xlu0 %9355
    %9357 = vset.pattern.permute.xlu0 0
    %9358 = vperm.xlu0 %9357, %v8339
    %v9359 = vpop.permute.xlu0 %9358
    %9360 = vset.pattern.permute.xlu0 0
    %9361 = vperm.xlu0 %9360, %v8388
    %v9362 = vpop.permute.xlu0 %9361
    %9363 = vset.pattern.permute.xlu0 0
    %9364 = vperm.xlu0 %9363, %v8437
    %v9365 = vpop.permute.xlu0 %9364
    %9366 = vset.pattern.permute.xlu0 0
    %9367 = vperm.xlu0 %9366, %v8486
    %v9368 = vpop.permute.xlu0 %9367
    %9369 = vset.pattern.permute.xlu0 0
    %9370 = vperm.xlu0 %9369, %v8535
    %v9371 = vpop.permute.xlu0 %9370
    %9372 = vset.pattern.permute.xlu0 0
    %9373 = vperm.xlu0 %9372, %v8584
    %v9374 = vpop.permute.xlu0 %9373
    %9375 = vset.pattern.permute.xlu0 0
    %9376 = vperm.xlu0 %9375, %v8633
    %v9377 = vpop.permute.xlu0 %9376
    %9378 = vset.pattern.permute.xlu0 0
    %9379 = vperm.xlu0 %9378, %v8682
    %v9380 = vpop.permute.xlu0 %9379
    %9381 = vset.pattern.permute.xlu0 0
    %9382 = vperm.xlu0 %9381, %v8731
    %v9383 = vpop.permute.xlu0 %9382
    %9384 = vset.pattern.permute.xlu0 0
    %9385 = vperm.xlu0 %9384, %v8780
    %v9386 = vpop.permute.xlu0 %9385
    %9387 = vset.pattern.permute.xlu0 0
    %9388 = vperm.xlu0 %9387, %v8829
    %v9389 = vpop.permute.xlu0 %9388
    %9390 = vset.pattern.permute.xlu0 0
    %9391 = vperm.xlu0 %9390, %v8878
    %v9392 = vpop.permute.xlu0 %9391
    %9393 = vset.pattern.permute.xlu0 0
    %9394 = vperm.xlu0 %9393, %v8927
    %v9395 = vpop.permute.xlu0 %9394
    %9396 = vset.pattern.permute.xlu0 0
    %9397 = vperm.xlu0 %9396, %v8976
    %v9398 = vpop.permute.xlu0 %9397
    %9399 = vset.pattern.permute.xlu0 0
    %9400 = vperm.xlu0 %9399, %v9025
    %v9401 = vpop.permute.xlu0 %9400
    %9402 = vset.pattern.permute.xlu0 0
    %9403 = vperm.xlu0 %9402, %v9074
    %v9404 = vpop.permute.xlu0 %9403
    %9405 = vset.pattern.permute.xlu0 0
    %9406 = vperm.xlu0 %9405, %v9123
    %v9407 = vpop.permute.xlu0 %9406
    %9408 = vset.pattern.permute.xlu0 0
    %9409 = vperm.xlu0 %9408, %v9172
    %v9410 = vpop.permute.xlu0 %9409
    %9411 = vset.pattern.permute.xlu0 0
    %9412 = vperm.xlu0 %9411, %v9221
    %v9413 = vpop.permute.xlu0 %9412
    %v9414 = vlaneseq
    %v9415 = vand.u32 %v9414, 127
    %v9416 = vlaneseq
    %v9417 = vshrl.u32 %v9416, 7
    %v9418 = vsub.s32 %v9415, %v9417
    %v9419 = vrot.slane %v9224, %v9418
    %v9420 = vadd.s32 %v9415, 4294967288
    %v9421 = vlaneseq
    %v9422 = vshrl.u32 %v9421, 7
    %v9423 = vsub.s32 %v9420, %v9422
    %v9424 = vrot.slane %v9227, %v9423
    %vm9425 = vcmask 130112
    %v9426 = vsel %vm9425, %v9424, %v9419
    %v9427 = vadd.s32 %v9415, 4294967280
    %v9428 = vlaneseq
    %v9429 = vshrl.u32 %v9428, 7
    %v9430 = vsub.s32 %v9427, %v9429
    %v9431 = vrot.slane %v9230, %v9430
    %vm9432 = vcmask 195712
    %v9433 = vsel %vm9432, %v9431, %v9426
    %v9434 = vadd.s32 %v9415, 4294967272
    %v9435 = vlaneseq
    %v9436 = vshrl.u32 %v9435, 7
    %v9437 = vsub.s32 %v9434, %v9436
    %v9438 = vrot.slane %v9233, %v9437
    %vm9439 = vcmask 261312
    %v9440 = vsel %vm9439, %v9438, %v9433
    %v9441 = vadd.s32 %v9415, 4294967264
    %v9442 = vlaneseq
    %v9443 = vshrl.u32 %v9442, 7
    %v9444 = vsub.s32 %v9441, %v9443
    %v9445 = vrot.slane %v9236, %v9444
    %vm9446 = vcmask 326912
    %v9447 = vsel %vm9446, %v9445, %v9440
    %v9448 = vadd.s32 %v9415, 4294967256
    %v9449 = vlaneseq
    %v9450 = vshrl.u32 %v9449, 7
    %v9451 = vsub.s32 %v9448, %v9450
    %v9452 = vrot.slane %v9239, %v9451
    %vm9453 = vcmask 392512
    %v9454 = vsel %vm9453, %v9452, %v9447
    %v9455 = vadd.s32 %v9415, 4294967248
    %v9456 = vlaneseq
    %v9457 = vshrl.u32 %v9456, 7
    %v9458 = vsub.s32 %v9455, %v9457
    %v9459 = vrot.slane %v9242, %v9458
    %vm9460 = vcmask 458112
    %v9461 = vsel %vm9460, %v9459, %v9454
    %v9462 = vadd.s32 %v9415, 4294967240
    %v9463 = vlaneseq
    %v9464 = vshrl.u32 %v9463, 7
    %v9465 = vsub.s32 %v9462, %v9464
    %v9466 = vrot.slane %v9245, %v9465
    %vm9467 = vcmask 523712
    %v9468 = vsel %vm9467, %v9466, %v9461
    %v9469 = vadd.s32 %v9415, 4294967232
    %v9470 = vlaneseq
    %v9471 = vshrl.u32 %v9470, 7
    %v9472 = vsub.s32 %v9469, %v9471
    %v9473 = vrot.slane %v9248, %v9472
    %vm9474 = vcmask 589312
    %v9475 = vsel %vm9474, %v9473, %v9468
    %v9476 = vadd.s32 %v9415, 4294967224
    %v9477 = vlaneseq
    %v9478 = vshrl.u32 %v9477, 7
    %v9479 = vsub.s32 %v9476, %v9478
    %v9480 = vrot.slane %v9251, %v9479
    %vm9481 = vcmask 654912
    %v9482 = vsel %vm9481, %v9480, %v9475
    %v9483 = vadd.s32 %v9415, 4294967216
    %v9484 = vlaneseq
    %v9485 = vshrl.u32 %v9484, 7
    %v9486 = vsub.s32 %v9483, %v9485
    %v9487 = vrot.slane %v9254, %v9486
    %vm9488 = vcmask 720512
    %v9489 = vsel %vm9488, %v9487, %v9482
    %v9490 = vadd.s32 %v9415, 4294967208
    %v9491 = vlaneseq
    %v9492 = vshrl.u32 %v9491, 7
    %v9493 = vsub.s32 %v9490, %v9492
    %v9494 = vrot.slane %v9257, %v9493
    %vm9495 = vcmask 786112
    %v9496 = vsel %vm9495, %v9494, %v9489
    %v9497 = vadd.s32 %v9415, 4294967200
    %v9498 = vlaneseq
    %v9499 = vshrl.u32 %v9498, 7
    %v9500 = vsub.s32 %v9497, %v9499
    %v9501 = vrot.slane %v9260, %v9500
    %vm9502 = vcmask 851712
    %v9503 = vsel %vm9502, %v9501, %v9496
    %v9504 = vadd.s32 %v9415, 4294967192
    %v9505 = vlaneseq
    %v9506 = vshrl.u32 %v9505, 7
    %v9507 = vsub.s32 %v9504, %v9506
    %v9508 = vrot.slane %v9263, %v9507
    %vm9509 = vcmask 917312
    %v9510 = vsel %vm9509, %v9508, %v9503
    %v9511 = vadd.s32 %v9415, 4294967184
    %v9512 = vlaneseq
    %v9513 = vshrl.u32 %v9512, 7
    %v9514 = vsub.s32 %v9511, %v9513
    %v9515 = vrot.slane %v9266, %v9514
    %vm9516 = vcmask 982912
    %v9517 = vsel %vm9516, %v9515, %v9510
    %v9518 = vadd.s32 %v9415, 4294967176
    %v9519 = vlaneseq
    %v9520 = vshrl.u32 %v9519, 7
    %v9521 = vsub.s32 %v9518, %v9520
    %v9522 = vrot.slane %v9269, %v9521
    %vm9523 = vcmask 1048512
    %v9524 = vsel %vm9523, %v9522, %v9517
    %v9525 = vlaneseq
    %v9526 = vshrl.u32 %v9525, 7
    %v9527 = vsub.s32 %v9415, %v9526
    %v9528 = vrot.slane %v9272, %v9527
    %v9529 = vlaneseq
    %v9530 = vshrl.u32 %v9529, 7
    %v9531 = vsub.s32 %v9420, %v9530
    %v9532 = vrot.slane %v9275, %v9531
    %v9533 = vsel %vm9425, %v9532, %v9528
    %v9534 = vlaneseq
    %v9535 = vshrl.u32 %v9534, 7
    %v9536 = vsub.s32 %v9427, %v9535
    %v9537 = vrot.slane %v9278, %v9536
    %v9538 = vsel %vm9432, %v9537, %v9533
    %v9539 = vlaneseq
    %v9540 = vshrl.u32 %v9539, 7
    %v9541 = vsub.s32 %v9434, %v9540
    %v9542 = vrot.slane %v9281, %v9541
    %v9543 = vsel %vm9439, %v9542, %v9538
    %v9544 = vlaneseq
    %v9545 = vshrl.u32 %v9544, 7
    %v9546 = vsub.s32 %v9441, %v9545
    %v9547 = vrot.slane %v9284, %v9546
    %v9548 = vsel %vm9446, %v9547, %v9543
    %v9549 = vlaneseq
    %v9550 = vshrl.u32 %v9549, 7
    %v9551 = vsub.s32 %v9448, %v9550
    %v9552 = vrot.slane %v9287, %v9551
    %v9553 = vsel %vm9453, %v9552, %v9548
    %v9554 = vlaneseq
    %v9555 = vshrl.u32 %v9554, 7
    %v9556 = vsub.s32 %v9455, %v9555
    %v9557 = vrot.slane %v9290, %v9556
    %v9558 = vsel %vm9460, %v9557, %v9553
    %v9559 = vlaneseq
    %v9560 = vshrl.u32 %v9559, 7
    %v9561 = vsub.s32 %v9462, %v9560
    %v9562 = vrot.slane %v9293, %v9561
    %v9563 = vsel %vm9467, %v9562, %v9558
    %v9564 = vlaneseq
    %v9565 = vshrl.u32 %v9564, 7
    %v9566 = vsub.s32 %v9469, %v9565
    %v9567 = vrot.slane %v9296, %v9566
    %v9568 = vsel %vm9474, %v9567, %v9563
    %v9569 = vlaneseq
    %v9570 = vshrl.u32 %v9569, 7
    %v9571 = vsub.s32 %v9476, %v9570
    %v9572 = vrot.slane %v9299, %v9571
    %v9573 = vsel %vm9481, %v9572, %v9568
    %v9574 = vlaneseq
    %v9575 = vshrl.u32 %v9574, 7
    %v9576 = vsub.s32 %v9483, %v9575
    %v9577 = vrot.slane %v9302, %v9576
    %v9578 = vsel %vm9488, %v9577, %v9573
    %v9579 = vlaneseq
    %v9580 = vshrl.u32 %v9579, 7
    %v9581 = vsub.s32 %v9490, %v9580
    %v9582 = vrot.slane %v9305, %v9581
    %v9583 = vsel %vm9495, %v9582, %v9578
    %v9584 = vlaneseq
    %v9585 = vshrl.u32 %v9584, 7
    %v9586 = vsub.s32 %v9497, %v9585
    %v9587 = vrot.slane %v9308, %v9586
    %v9588 = vsel %vm9502, %v9587, %v9583
    %v9589 = vlaneseq
    %v9590 = vshrl.u32 %v9589, 7
    %v9591 = vsub.s32 %v9504, %v9590
    %v9592 = vrot.slane %v9311, %v9591
    %v9593 = vsel %vm9509, %v9592, %v9588
    %v9594 = vlaneseq
    %v9595 = vshrl.u32 %v9594, 7
    %v9596 = vsub.s32 %v9511, %v9595
    %v9597 = vrot.slane %v9314, %v9596
    %v9598 = vsel %vm9516, %v9597, %v9593
    %v9599 = vlaneseq
    %v9600 = vshrl.u32 %v9599, 7
    %v9601 = vsub.s32 %v9518, %v9600
    %v9602 = vrot.slane %v9317, %v9601
    %v9603 = vsel %vm9523, %v9602, %v9598
    %v9604 = vlaneseq
    %v9605 = vshrl.u32 %v9604, 7
    %v9606 = vsub.s32 %v9415, %v9605
    %v9607 = vrot.slane %v9320, %v9606
    %v9608 = vlaneseq
    %v9609 = vshrl.u32 %v9608, 7
    %v9610 = vsub.s32 %v9420, %v9609
    %v9611 = vrot.slane %v9323, %v9610
    %v9612 = vsel %vm9425, %v9611, %v9607
    %v9613 = vlaneseq
    %v9614 = vshrl.u32 %v9613, 7
    %v9615 = vsub.s32 %v9427, %v9614
    %v9616 = vrot.slane %v9326, %v9615
    %v9617 = vsel %vm9432, %v9616, %v9612
    %v9618 = vlaneseq
    %v9619 = vshrl.u32 %v9618, 7
    %v9620 = vsub.s32 %v9434, %v9619
    %v9621 = vrot.slane %v9329, %v9620
    %v9622 = vsel %vm9439, %v9621, %v9617
    %v9623 = vlaneseq
    %v9624 = vshrl.u32 %v9623, 7
    %v9625 = vsub.s32 %v9441, %v9624
    %v9626 = vrot.slane %v9332, %v9625
    %v9627 = vsel %vm9446, %v9626, %v9622
    %v9628 = vlaneseq
    %v9629 = vshrl.u32 %v9628, 7
    %v9630 = vsub.s32 %v9448, %v9629
    %v9631 = vrot.slane %v9335, %v9630
    %v9632 = vsel %vm9453, %v9631, %v9627
    %v9633 = vlaneseq
    %v9634 = vshrl.u32 %v9633, 7
    %v9635 = vsub.s32 %v9455, %v9634
    %v9636 = vrot.slane %v9338, %v9635
    %v9637 = vsel %vm9460, %v9636, %v9632
    %v9638 = vlaneseq
    %v9639 = vshrl.u32 %v9638, 7
    %v9640 = vsub.s32 %v9462, %v9639
    %v9641 = vrot.slane %v9341, %v9640
    %v9642 = vsel %vm9467, %v9641, %v9637
    %v9643 = vlaneseq
    %v9644 = vshrl.u32 %v9643, 7
    %v9645 = vsub.s32 %v9469, %v9644
    %v9646 = vrot.slane %v9344, %v9645
    %v9647 = vsel %vm9474, %v9646, %v9642
    %v9648 = vlaneseq
    %v9649 = vshrl.u32 %v9648, 7
    %v9650 = vsub.s32 %v9476, %v9649
    %v9651 = vrot.slane %v9347, %v9650
    %v9652 = vsel %vm9481, %v9651, %v9647
    %v9653 = vlaneseq
    %v9654 = vshrl.u32 %v9653, 7
    %v9655 = vsub.s32 %v9483, %v9654
    %v9656 = vrot.slane %v9350, %v9655
    %v9657 = vsel %vm9488, %v9656, %v9652
    %v9658 = vlaneseq
    %v9659 = vshrl.u32 %v9658, 7
    %v9660 = vsub.s32 %v9490, %v9659
    %v9661 = vrot.slane %v9353, %v9660
    %v9662 = vsel %vm9495, %v9661, %v9657
    %v9663 = vlaneseq
    %v9664 = vshrl.u32 %v9663, 7
    %v9665 = vsub.s32 %v9497, %v9664
    %v9666 = vrot.slane %v9356, %v9665
    %v9667 = vsel %vm9502, %v9666, %v9662
    %v9668 = vlaneseq
    %v9669 = vshrl.u32 %v9668, 7
    %v9670 = vsub.s32 %v9504, %v9669
    %v9671 = vrot.slane %v9359, %v9670
    %v9672 = vsel %vm9509, %v9671, %v9667
    %v9673 = vlaneseq
    %v9674 = vshrl.u32 %v9673, 7
    %v9675 = vsub.s32 %v9511, %v9674
    %v9676 = vrot.slane %v9362, %v9675
    %v9677 = vsel %vm9516, %v9676, %v9672
    %v9678 = vlaneseq
    %v9679 = vshrl.u32 %v9678, 7
    %v9680 = vsub.s32 %v9518, %v9679
    %v9681 = vrot.slane %v9365, %v9680
    %v9682 = vsel %vm9523, %v9681, %v9677
    %v9683 = vlaneseq
    %v9684 = vshrl.u32 %v9683, 7
    %v9685 = vsub.s32 %v9415, %v9684
    %v9686 = vrot.slane %v9368, %v9685
    %v9687 = vlaneseq
    %v9688 = vshrl.u32 %v9687, 7
    %v9689 = vsub.s32 %v9420, %v9688
    %v9690 = vrot.slane %v9371, %v9689
    %v9691 = vsel %vm9425, %v9690, %v9686
    %v9692 = vlaneseq
    %v9693 = vshrl.u32 %v9692, 7
    %v9694 = vsub.s32 %v9427, %v9693
    %v9695 = vrot.slane %v9374, %v9694
    %v9696 = vsel %vm9432, %v9695, %v9691
    %v9697 = vlaneseq
    %v9698 = vshrl.u32 %v9697, 7
    %v9699 = vsub.s32 %v9434, %v9698
    %v9700 = vrot.slane %v9377, %v9699
    %v9701 = vsel %vm9439, %v9700, %v9696
    %v9702 = vlaneseq
    %v9703 = vshrl.u32 %v9702, 7
    %v9704 = vsub.s32 %v9441, %v9703
    %v9705 = vrot.slane %v9380, %v9704
    %v9706 = vsel %vm9446, %v9705, %v9701
    %v9707 = vlaneseq
    %v9708 = vshrl.u32 %v9707, 7
    %v9709 = vsub.s32 %v9448, %v9708
    %v9710 = vrot.slane %v9383, %v9709
    %v9711 = vsel %vm9453, %v9710, %v9706
    %v9712 = vlaneseq
    %v9713 = vshrl.u32 %v9712, 7
    %v9714 = vsub.s32 %v9455, %v9713
    %v9715 = vrot.slane %v9386, %v9714
    %v9716 = vsel %vm9460, %v9715, %v9711
    %v9717 = vlaneseq
    %v9718 = vshrl.u32 %v9717, 7
    %v9719 = vsub.s32 %v9462, %v9718
    %v9720 = vrot.slane %v9389, %v9719
    %v9721 = vsel %vm9467, %v9720, %v9716
    %v9722 = vlaneseq
    %v9723 = vshrl.u32 %v9722, 7
    %v9724 = vsub.s32 %v9469, %v9723
    %v9725 = vrot.slane %v9392, %v9724
    %v9726 = vsel %vm9474, %v9725, %v9721
    %v9727 = vlaneseq
    %v9728 = vshrl.u32 %v9727, 7
    %v9729 = vsub.s32 %v9476, %v9728
    %v9730 = vrot.slane %v9395, %v9729
    %v9731 = vsel %vm9481, %v9730, %v9726
    %v9732 = vlaneseq
    %v9733 = vshrl.u32 %v9732, 7
    %v9734 = vsub.s32 %v9483, %v9733
    %v9735 = vrot.slane %v9398, %v9734
    %v9736 = vsel %vm9488, %v9735, %v9731
    %v9737 = vlaneseq
    %v9738 = vshrl.u32 %v9737, 7
    %v9739 = vsub.s32 %v9490, %v9738
    %v9740 = vrot.slane %v9401, %v9739
    %v9741 = vsel %vm9495, %v9740, %v9736
    %v9742 = vlaneseq
    %v9743 = vshrl.u32 %v9742, 7
    %v9744 = vsub.s32 %v9497, %v9743
    %v9745 = vrot.slane %v9404, %v9744
    %v9746 = vsel %vm9502, %v9745, %v9741
    %v9747 = vlaneseq
    %v9748 = vshrl.u32 %v9747, 7
    %v9749 = vsub.s32 %v9504, %v9748
    %v9750 = vrot.slane %v9407, %v9749
    %v9751 = vsel %vm9509, %v9750, %v9746
    %v9752 = vlaneseq
    %v9753 = vshrl.u32 %v9752, 7
    %v9754 = vsub.s32 %v9511, %v9753
    %v9755 = vrot.slane %v9410, %v9754
    %v9756 = vsel %vm9516, %v9755, %v9751
    %v9757 = vlaneseq
    %v9758 = vshrl.u32 %v9757, 7
    %v9759 = vsub.s32 %v9518, %v9758
    %v9760 = vrot.slane %v9413, %v9759
    %v9761 = vsel %vm9523, %v9760, %v9756
    %v9762 = vcombine.low %v9524, %v9603
    %v9763 = vcombine.low %v9682, %v9761
    %v9765 = vunpack.c.l.s4 1966171168
    %v9766 = vunpack.c.0.s8 %v9765
    %v9767 = vlaneseq
    %v9768 = vshrl.u32 %v9767, 7
    %v9769 = vsub.s32 %v9766, %v9768
    %v9770 = vrot.slane %v9762, %v9769
    %v9772 = vunpack.c.l.s4 1966171168
    %v9773 = vunpack.c.0.s8 %v9772
    %v9774 = vlaneseq
    %v9775 = vshrl.u32 %v9774, 7
    %v9776 = vsub.s32 %v9773, %v9775
    %v9777 = vrot.slane %v9763, %v9776
    %v9778 = vcombine.low %v9770, %v9777
    %v9780 = vunpack.c.l.s4 1966171168
    %v9781 = vunpack.c.0.s8 %v9780
    %v9782 = vlaneseq
    %v9783 = vshrl.u32 %v9782, 7
    %v9784 = vsub.s32 %v9781, %v9783
    %v9785 = vrot.slane %v9778, %v9784
    %v9787 = vlaneseq
    %vm9788 = vcmp.ge.s32.totalorder %v9787, 0
    %vm9789 = vcmp.lt.s32.totalorder %v9787, 512
    %vm9790 = vmand %vm9788, %vm9789
    %9791 = vst.msk [vmem:[#allocation10] sm:$0xf] %vm9790, %v9785
    // Predicated region
    $region38: #{tpu_custom_call.1} parent=1 // pred_check
      _
    $region39: #{tpu_custom_call.1} parent=1 // pred_check_branch
      %9793 = sbr.rel (0) target = $region41
    $region40: #{tpu_custom_call.1} parent=1 // pred_region
      %s9795 = ssub.s32 64, 64
      %9796 = vsyncadd [#allocation4], %s9795
      %s9798 = sshll.u32 [#allocation10], 4
      %s9799 = int_to_ptr.vmem [resolvable:$true] %s9798
      %9801 = dma.vmem_to_hbm [thread:$0]  %s9799, 64, %s5, [#allocation4]
    $region41: #{tpu_custom_call.1} parent=1 // pred_fallthru
      _
    // Predicated region
    $region42: #{tpu_custom_call.1} parent=1 // pred_check
      _
    $region43: #{tpu_custom_call.1} parent=1 // pred_check_branch
      %9803 = sbr.rel (0) target = $region45
    $region44: #{tpu_custom_call.1} parent=1 // pred_region
      %9804 = dma.done [#allocation4], 64
    $region45: #{tpu_custom_call.1} parent=1 // pred_fallthru
      _
    %9805 = vsyncpa [#allocation3], 1
    %9806 = vsyncpa [#allocation6], 1
    %9807 = vsyncpa [#allocation9], 1
    %9808 = vsyncpa [#allocation4], 1

</llo_original>
